<compile_context>
chip_gen: v7x
topology: tpu7x:2x2x1
jax: 0.10.0
libtpu: 0.0.40
codegen_flags: <defaults>
</compile_context>

<pallas_src>
import functools
import math

import jax
import jax.numpy as jnp
from jax import lax
from jax.experimental import pallas as pl
from jax.experimental.pallas import tpu as pltpu


# ---------------------------------------------------------------------------
# small helpers
# ---------------------------------------------------------------------------
def _pick_chunk(n, cap, quantum=1):
    """Largest divisor of n that is <= cap (and a multiple of `quantum` when
    it is a proper sub-block); falls back to n (full extent) if none."""
    if n <= cap:
        return n
    for d in range(cap, 0, -1):
        if n % d == 0 and d % quantum == 0:
            return d
    return n


# ---------------------------------------------------------------------------
# Kernel 1: hoisted input projection  gx = sum_k x_k @ W_k   (one big matmul)
# ---------------------------------------------------------------------------
def _proj_kernel(*refs, n_in):
    x_refs = refs[:n_in]
    w_refs = refs[n_in:2 * n_in]
    o_ref = refs[2 * n_in]
    acc = jnp.dot(x_refs[0][...], w_refs[0][...],
                  preferred_element_type=jnp.float32)
    for k in range(1, n_in):
        acc = acc + jnp.dot(x_refs[k][...], w_refs[k][...],
                            preferred_element_type=jnp.float32)
    o_ref[...] = acc.astype(o_ref.dtype)


def input_projection_pallas(xs, ws):
    """xs: list of (M, in_k) f32; ws: list of (in_k, G) f32.
    Returns (M, G) = sum_k xs[k] @ ws[k]  (the per-sequence gate projection).
    Keeping the previous layer's fwd/bwd outputs as separate xs streams (with
    row-split weights) avoids ever concatenating activations in HBM."""
    n_in = len(xs)
    M = xs[0].shape[0]
    G = ws[0].shape[1]
    rm = _pick_chunk(M, 512, quantum=8)          # rows per grid step
    grid = (M // rm,)

    in_specs = [pl.BlockSpec((rm, xs[k].shape[1]), lambda i: (i, 0))
                for k in range(n_in)]
    in_specs += [pl.BlockSpec(ws[k].shape, lambda i: (0, 0))
                 for k in range(n_in)]
    out_spec = pl.BlockSpec((rm, G), lambda i: (i, 0))

    return pl.pallas_call(
        functools.partial(_proj_kernel, n_in=n_in),
        out_shape=jax.ShapeDtypeStruct((M, G), jnp.float32),
        grid_spec=pltpu.PrefetchScalarGridSpec(
            num_scalar_prefetch=0,
            grid=grid,
            in_specs=in_specs,
            out_specs=out_spec,
        ),
        compiler_params=pltpu.CompilerParams(
            dimension_semantics=("parallel",)),
    )(*xs, *ws)


# ---------------------------------------------------------------------------
# Kernel 2: fused (bi)LSTM recurrence over timestep chunks (+ fused final FC)
# ---------------------------------------------------------------------------
def _lstm_rec_kernel(*refs, ndir, with_fc, T, H):
    # ---- unpack refs: inputs, outputs, scratch (order fixed by the specs) --
    idx = 0
    gx_refs = refs[idx:idx + ndir]; idx += ndir      # (T, B, 4H) per direction
    wh_refs = refs[idx:idx + ndir]; idx += ndir      # (H, 4H)    per direction
    b_refs = refs[idx:idx + ndir]; idx += ndir       # (1, 4H)    per direction
    if with_fc:
        wfc_refs = refs[idx:idx + ndir]; idx += ndir  # (H, O)    per direction
        bfc_ref = refs[idx]; idx += 1                 # (1, O)
    out_refs = refs[idx:idx + ndir]; idx += ndir      # (T, B, H) per direction
    if with_fc:
        logits_ref = refs[idx]; idx += 1              # (B, O)
    h_scs = refs[idx:idx + ndir]; idx += ndir         # (B, H) carried state
    c_scs = refs[idx:idx + ndir]; idx += ndir         # (B, H) carried state

    g = pl.program_id(0)
    nc = pl.num_programs(0)

    @pl.when(g == 0)
    def _():
        for s in (*h_scs, *c_scs):
            s[...] = jnp.zeros_like(s)

    # Hoist constant loads out of the unrolled timestep loop.
    wh = [w[...] for w in wh_refs]
    bias = [b[...] for b in b_refs]

    def cell(gates, c_prev):
        i_g = jax.nn.sigmoid(gates[:, 0 * H:1 * H])
        f_g = jax.nn.sigmoid(gates[:, 1 * H:2 * H])
        g_g = jnp.tanh(gates[:, 2 * H:3 * H])
        o_g = jax.nn.sigmoid(gates[:, 3 * H:4 * H])
        c_new = f_g * c_prev + i_g * g_g
        h_new = o_g * jnp.tanh(c_new)
        return h_new, c_new

    def step(u, carry):
        # Both directions advance in lockstep inside the same body so the
        # scheduler can overlap their MXU pushes with the EUP activations.
        for d in range(ndir):
            # forward walks the chunk 0..T-1; the backward direction's block
            # is time-reversed (index_map), so it walks T-1..0 locally.
            lu = u if d == 0 else T - 1 - u
            gates = (jnp.dot(h_scs[d][...], wh[d],
                             preferred_element_type=jnp.float32)
                     + gx_refs[d][lu] + bias[d])
            h_new, c_new = cell(gates, c_scs[d][...])
            h_scs[d][...] = h_new
            c_scs[d][...] = c_new
            out_refs[d][lu] = h_new.astype(out_refs[d].dtype)
        return carry

    lax.fori_loop(0, T, step, 0, unroll=True)

    if with_fc:
        # Final Linear fused into the last grid step: by now h_scs hold the
        # forward state after t=S-1 and the backward state after t=0.
        @pl.when(g == nc - 1)
        def _():
            logits = bfc_ref[...].astype(jnp.float32)
            for d in range(ndir):
                logits = logits + jnp.dot(h_scs[d][...], wfc_refs[d][...],
                                          preferred_element_type=jnp.float32)
            logits_ref[...] = logits.astype(logits_ref.dtype)


def lstm_recurrent_pallas(gx, w_hh_list, b_list, hidden_dim, *, fc=None,
                          time_chunk=64):
    """Recurrent part of one (bi)LSTM layer.

    gx:        (S, B, ndir*4H) precomputed input projections
               (fwd gate columns first, then bwd gate columns).
    w_hh_list: ndir tensors (H, 4H);  b_list: ndir tensors (1, 4H).
    fc:        optional ([ndir x (H, O)], (1, O)) -> also emit fused logits.
    Returns a tuple: ndir sequence outputs (S, B, H) [+ logits (B, O)].
    """
    S, B, G = gx.shape
    ndir = len(w_hh_list)
    H = hidden_dim
    assert G == ndir * 4 * H
    T = _pick_chunk(S, time_chunk)           # timesteps per grid step
    nc = S // T
    with_fc = fc is not None

    def gx_map(d):
        if d == 0:
            return lambda g: (g, 0, 0)                # forward chunks
        return lambda g: (nc - 1 - g, 0, 1)           # bwd: reversed time,
                                                      #      2nd half of cols
    def out_map(d):
        if d == 0:
            return lambda g: (g, 0, 0)
        return lambda g: (nc - 1 - g, 0, 0)

    in_specs = [pl.BlockSpec((T, B, 4 * H), gx_map(d)) for d in range(ndir)]
    in_specs += [pl.BlockSpec((H, 4 * H), lambda g: (0, 0))
                 for _ in range(ndir)]
    in_specs += [pl.BlockSpec((1, 4 * H), lambda g: (0, 0))
                 for _ in range(ndir)]
    inputs = [gx] * ndir + list(w_hh_list) + list(b_list)

    out_shapes = [jax.ShapeDtypeStruct((S, B, H), jnp.float32)
                  for _ in range(ndir)]
    out_specs = [pl.BlockSpec((T, B, H), out_map(d)) for d in range(ndir)]

    if with_fc:
        wfc_list, bfc = fc
        O = bfc.shape[-1]
        in_specs += [pl.BlockSpec((H, O), lambda g: (0, 0))
                     for _ in range(ndir)]
        in_specs += [pl.BlockSpec((1, O), lambda g: (0, 0))]
        inputs += list(wfc_list) + [bfc]
        out_shapes.append(jax.ShapeDtypeStruct((B, O), jnp.float32))
        out_specs.append(pl.BlockSpec((B, O), lambda g: (0, 0)))

    scratch = ([pltpu.VMEM((B, H), jnp.float32) for _ in range(ndir)]   # h
               + [pltpu.VMEM((B, H), jnp.float32) for _ in range(ndir)])  # c

    kernel = functools.partial(_lstm_rec_kernel, ndir=ndir, with_fc=with_fc,
                               T=T, H=H)
    outs = pl.pallas_call(
        kernel,
        out_shape=tuple(out_shapes),
        grid_spec=pltpu.PrefetchScalarGridSpec(
            num_scalar_prefetch=0,
            grid=(nc,),
            in_specs=in_specs,
            out_specs=out_specs,
            scratch_shapes=scratch,
        ),
        compiler_params=pltpu.CompilerParams(
            dimension_semantics=("arbitrary",)),      # state carried over time
    )(*inputs)
    if not isinstance(outs, (tuple, list)):
        outs = (outs,)
    return outs


# ---------------------------------------------------------------------------
# Parameter init (deterministic, PyTorch-like shapes)
# ---------------------------------------------------------------------------
def init_params(key, vocab_size, embedding_dim, hidden_dim, output_dim,
                n_layers, bidirectional):
    num_directions = 2 if bidirectional else 1
    k = 1.0 / math.sqrt(hidden_dim)

    key, sub = jax.random.split(key)
    params = {
        "embedding": jax.random.normal(
            sub, (vocab_size, embedding_dim), jnp.float32) * 0.1
    }

    layers = []
    for layer in range(n_layers):
        in_dim = embedding_dim if layer == 0 else hidden_dim * num_directions
        dirs = []
        for _d in range(num_directions):
            key, k1, k2, k3, k4 = jax.random.split(key, 5)
            w_ih = jax.random.uniform(k1, (in_dim, 4 * hidden_dim),
                                      jnp.float32, -k, k)
            w_hh = jax.random.uniform(k2, (hidden_dim, 4 * hidden_dim),
                                      jnp.float32, -k, k)
            b_ih = jax.random.uniform(k3, (4 * hidden_dim,), jnp.float32, -k, k)
            b_hh = jax.random.uniform(k4, (4 * hidden_dim,), jnp.float32, -k, k)
            dirs.append((w_ih, w_hh, (b_ih + b_hh).reshape(1, 4 * hidden_dim)))
        layers.append(dirs)
    params["lstm"] = layers

    fc_in = hidden_dim * num_directions
    kf = 1.0 / math.sqrt(fc_in)
    key, k1, k2 = jax.random.split(key, 3)
    params["fc_w"] = jax.random.uniform(k1, (fc_in, output_dim),
                                        jnp.float32, -kf, kf)
    params["fc_b"] = jax.random.uniform(k2, (output_dim,), jnp.float32, -kf, kf)
    return params


# ---------------------------------------------------------------------------
# Forward pass (glue in JAX, hot path in Pallas)
# ---------------------------------------------------------------------------
def rnn_forward(params, text, hidden_dim, n_layers, bidirectional):
    S, B = text.shape
    H = hidden_dim
    ndir = 2 if bidirectional else 1

    # Embedding gather (no clean Pallas equivalent at this scale -> jnp.take);
    # dropout is identity in eval mode.
    x = jnp.take(params["embedding"], text, axis=0)          # (S, B, E)
    streams = [x.reshape(S * B, x.shape[-1])]                # (S*B, E)

    fc_w = params["fc_w"]
    fc_b = params["fc_b"].reshape(1, -1)

    logits = None
    for layer in range(n_layers):
        dirs = params["lstm"][layer]

        # Hoisted input projection: both directions' W_ih fused column-wise,
        # rows split per input stream (so previous fwd/bwd outputs are never
        # concatenated in HBM).
        w_ih_cat = jnp.concatenate([d[0] for d in dirs], axis=1)  # (in, 4H*ndir)
        w_parts, off = [], 0
        for s in streams:
            k = s.shape[1]
            w_parts.append(w_ih_cat[off:off + k, :])
            off += k
        gx = input_projection_pallas(streams, w_parts)        # (S*B, ndir*4H)
        gx = gx.reshape(S, B, ndir * 4 * H)

        w_hh_list = [d[1] for d in dirs]
        b_list = [d[2] for d in dirs]

        fc = None
        if layer == n_layers - 1:
            wfc_list = [fc_w[d * H:(d + 1) * H, :] for d in range(ndir)]
            fc = (wfc_list, fc_b)

        outs = lstm_recurrent_pallas(gx, w_hh_list, b_list, H, fc=fc)
        if layer == n_layers - 1:
            logits = outs[ndir]                               # fused FC output
        else:
            streams = [o.reshape(S * B, H) for o in outs[:ndir]]
    return logits


# ---------------------------------------------------------------------------
# Pure-JAX reference (lax.scan LSTM) for correctness check
# ---------------------------------------------------------------------------
def _lstm_layer_ref(x, w_ih, w_hh, b, hidden_dim):
    S, B, _ = x.shape

    def step(carry, x_t):
        h, c = carry
        gates = x_t @ w_ih + h @ w_hh + b
        i, f, g, o = jnp.split(gates, 4, axis=-1)
        i = jax.nn.sigmoid(i)
        f = jax.nn.sigmoid(f)
        g = jnp.tanh(g)
        o = jax.nn.sigmoid(o)
        c = f * c + i * g
        h = o * jnp.tanh(c)
        return (h, c), h

    init = (jnp.zeros((B, hidden_dim), jnp.float32),
            jnp.zeros((B, hidden_dim), jnp.float32))
    _, out = jax.lax.scan(step, init, x)
    return out


def rnn_forward_ref(params, text, hidden_dim, n_layers, bidirectional):
    x = jnp.take(params["embedding"], text, axis=0)
    h_fwd_final = None
    h_bwd_final = None
    for layer in range(n_layers):
        dirs = params["lstm"][layer]
        w_ih, w_hh, b = dirs[0]
        out_fwd = _lstm_layer_ref(x, w_ih, w_hh, b, hidden_dim)
        h_fwd_final = out_fwd[-1]
        if bidirectional:
            w_ih_b, w_hh_b, b_b = dirs[1]
            out_bwd = _lstm_layer_ref(x[::-1], w_ih_b, w_hh_b, b_b,
                                      hidden_dim)[::-1]
            h_bwd_final = out_bwd[0]
            x = jnp.concatenate([out_fwd, out_bwd], axis=-1)
        else:
            x = out_fwd
    if bidirectional:
        hidden = jnp.concatenate([h_fwd_final, h_bwd_final], axis=1)
    else:
        hidden = h_fwd_final
    return hidden @ params["fc_w"] + params["fc_b"]


# ---------------------------------------------------------------------------
if __name__ == "__main__":
    vocab_size, embedding_dim, hidden_dim, output_dim = 50, 16, 32, 5
    seq_len, batch = 8, 2

    key = jax.random.PRNGKey(0)
    key, pkey, tkey = jax.random.split(key, 3)
    text = jax.random.randint(tkey, (seq_len, batch), 0, vocab_size,
                              dtype=jnp.int32)

    # --- bidirectional, 2-layer (matches the PyTorch module config) --------
    n_layers, bidirectional = 2, True
    params = init_params(pkey, vocab_size, embedding_dim, hidden_dim,
                         output_dim, n_layers, bidirectional)
    fwd = jax.jit(functools.partial(rnn_forward, hidden_dim=hidden_dim,
                                    n_layers=n_layers,
                                    bidirectional=bidirectional))
    out = jax.block_until_ready(fwd(params, text))
    ref = rnn_forward_ref(params, text, hidden_dim, n_layers, bidirectional)
    assert out.shape == (batch, output_dim), out.shape
    assert jnp.allclose(out, ref, rtol=1e-3, atol=1e-3), \
        f"bidirectional mismatch: max abs err {jnp.max(jnp.abs(out - ref))}"

    # --- unidirectional, 1-layer sanity check of the same kernels ----------
    params_u = init_params(jax.random.PRNGKey(1), vocab_size, embedding_dim,
                           hidden_dim, output_dim, 1, False)
    out_u = jax.block_until_ready(
        rnn_forward(params_u, text, hidden_dim, 1, False))
    ref_u = rnn_forward_ref(params_u, text, hidden_dim, 1, False)
    assert jnp.allclose(out_u, ref_u, rtol=1e-3, atol=1e-3), \
        f"unidirectional mismatch: max abs err {jnp.max(jnp.abs(out_u - ref_u))}"

    print("KERNEL_OK")
</pallas_src>

<mosaic_0001>
module attributes {stable_mosaic.version = 11 : i64} {
  func.func @_proj_kernel(%arg0: i32, %arg1: memref<16x32xf32, #tpu.memory_space<vmem>>, %arg2: memref<16x32xf32, #tpu.memory_space<vmem>>, %arg3: memref<32x256xf32, #tpu.memory_space<vmem>>, %arg4: memref<32x256xf32, #tpu.memory_space<vmem>>, %arg5: memref<16x256xf32, #tpu.memory_space<vmem>>) attributes {dimension_semantics = [#tpu.dimension_semantics<parallel>], iteration_bounds = array<i64: 1>, scalar_prefetch = 0 : i64, scratch_operands = 0 : i64, tpu.core_type = #tpu.core_type<tc>, window_params = [{transform_indices = @transform_0, window_bounds = array<i64: 16, 32>}, {transform_indices = @transform_1, window_bounds = array<i64: 16, 32>}, {pipeline_mode = #tpu.pipeline_mode<synchronous>, transform_indices = @transform_2, window_bounds = array<i64: 32, 256>}, {pipeline_mode = #tpu.pipeline_mode<synchronous>, transform_indices = @transform_3, window_bounds = array<i64: 32, 256>}, {transform_indices = @transform_4, window_bounds = array<i64: 16, 256>}]} {
    %c0 = arith.constant 0 : index
    %c0_0 = arith.constant 0 : index
    %0 = vector.load %arg1[%c0, %c0_0] : memref<16x32xf32, #tpu.memory_space<vmem>>, vector<16x32xf32>
    %c0_1 = arith.constant 0 : index
    %c0_2 = arith.constant 0 : index
    %1 = vector.load %arg3[%c0_1, %c0_2] : memref<32x256xf32, #tpu.memory_space<vmem>>, vector<32x256xf32>
    %cst = arith.constant dense<0.000000e+00> : vector<16x256xf32>
    %2 = tpu.matmul %0, %1, %cst {dimension_numbers = #tpu.dot_dimension_numbers<[1], [0], [0], [1], [0, 0, 1, 1], [], []>} : vector<16x32xf32>, vector<32x256xf32>, vector<16x256xf32> -> vector<16x256xf32>
    %c0_3 = arith.constant 0 : index
    %c0_4 = arith.constant 0 : index
    %3 = vector.load %arg2[%c0_3, %c0_4] : memref<16x32xf32, #tpu.memory_space<vmem>>, vector<16x32xf32>
    %c0_5 = arith.constant 0 : index
    %c0_6 = arith.constant 0 : index
    %4 = vector.load %arg4[%c0_5, %c0_6] : memref<32x256xf32, #tpu.memory_space<vmem>>, vector<32x256xf32>
    %cst_7 = arith.constant dense<0.000000e+00> : vector<16x256xf32>
    %5 = tpu.matmul %3, %4, %cst_7 {dimension_numbers = #tpu.dot_dimension_numbers<[1], [0], [0], [1], [0, 0, 1, 1], [], []>} : vector<16x32xf32>, vector<32x256xf32>, vector<16x256xf32> -> vector<16x256xf32>
    %6 = arith.addf %2, %5 : vector<16x256xf32>
    %c0_8 = arith.constant 0 : index
    %c0_9 = arith.constant 0 : index
    %7 = vector.load %arg5[%c0_8, %c0_9] : memref<16x256xf32, #tpu.memory_space<vmem>>, vector<16x256xf32>
    tpu.vector_store %arg5[%c0_8, %c0_9], %6 {strides = array<i32>} : memref<16x256xf32, #tpu.memory_space<vmem>>, vector<16x256xf32>,
    return
  }
  func.func @transform_0(%arg0: i32) -> (i32, i32) {
    %c0_i32 = arith.constant 0 : i32
    %c0_i32_0 = arith.constant 0 : i32
    return %arg0, %c0_i32 : i32, i32
  }
  func.func @transform_1(%arg0: i32) -> (i32, i32) {
    %c0_i32 = arith.constant 0 : i32
    %c0_i32_0 = arith.constant 0 : i32
    return %arg0, %c0_i32 : i32, i32
  }
  func.func @transform_2(%arg0: i32) -> (i32, i32) {
    %c0_i32 = arith.constant 0 : i32
    %c0_i32_0 = arith.constant 0 : i32
    %c0_i32_1 = arith.constant 0 : i32
    return %c0_i32, %c0_i32_0 : i32, i32
  }
  func.func @transform_3(%arg0: i32) -> (i32, i32) {
    %c0_i32 = arith.constant 0 : i32
    %c0_i32_0 = arith.constant 0 : i32
    %c0_i32_1 = arith.constant 0 : i32
    return %c0_i32, %c0_i32_0 : i32, i32
  }
  func.func @transform_4(%arg0: i32) -> (i32, i32) {
    %c0_i32 = arith.constant 0 : i32
    %c0_i32_0 = arith.constant 0 : i32
    return %arg0, %c0_i32 : i32, i32
  }
}

module attributes {stable_mosaic.version = 11 : i64} {
  func.func @_proj_kernel(%arg0: i32, %arg1: memref<16x16xf32, #tpu.memory_space<vmem>>, %arg2: memref<16x256xf32, #tpu.memory_space<vmem>>, %arg3: memref<16x256xf32, #tpu.memory_space<vmem>>) attributes {dimension_semantics = [#tpu.dimension_semantics<parallel>], iteration_bounds = array<i64: 1>, scalar_prefetch = 0 : i64, scratch_operands = 0 : i64, tpu.core_type = #tpu.core_type<tc>, window_params = [{transform_indices = @transform_0, window_bounds = array<i64: 16, 16>}, {pipeline_mode = #tpu.pipeline_mode<synchronous>, transform_indices = @transform_1, window_bounds = array<i64: 16, 256>}, {transform_indices = @transform_2, window_bounds = array<i64: 16, 256>}]} {
    %c0 = arith.constant 0 : index
    %c0_0 = arith.constant 0 : index
    %0 = vector.load %arg1[%c0, %c0_0] : memref<16x16xf32, #tpu.memory_space<vmem>>, vector<16x16xf32>
    %c0_1 = arith.constant 0 : index
    %c0_2 = arith.constant 0 : index
    %1 = vector.load %arg2[%c0_1, %c0_2] : memref<16x256xf32, #tpu.memory_space<vmem>>, vector<16x256xf32>
    %cst = arith.constant dense<0.000000e+00> : vector<16x256xf32>
    %2 = tpu.matmul %0, %1, %cst {dimension_numbers = #tpu.dot_dimension_numbers<[1], [0], [0], [1], [0, 0, 1, 1], [], []>} : vector<16x16xf32>, vector<16x256xf32>, vector<16x256xf32> -> vector<16x256xf32>
    %c0_3 = arith.constant 0 : index
    %c0_4 = arith.constant 0 : index
    %3 = vector.load %arg3[%c0_3, %c0_4] : memref<16x256xf32, #tpu.memory_space<vmem>>, vector<16x256xf32>
    tpu.vector_store %arg3[%c0_3, %c0_4], %2 {strides = array<i32>} : memref<16x256xf32, #tpu.memory_space<vmem>>, vector<16x256xf32>,
    return
  }
  func.func @transform_0(%arg0: i32) -> (i32, i32) {
    %c0_i32 = arith.constant 0 : i32
    %c0_i32_0 = arith.constant 0 : i32
    return %arg0, %c0_i32 : i32, i32
  }
  func.func @transform_1(%arg0: i32) -> (i32, i32) {
    %c0_i32 = arith.constant 0 : i32
    %c0_i32_0 = arith.constant 0 : i32
    %c0_i32_1 = arith.constant 0 : i32
    return %c0_i32, %c0_i32_0 : i32, i32
  }
  func.func @transform_2(%arg0: i32) -> (i32, i32) {
    %c0_i32 = arith.constant 0 : i32
    %c0_i32_0 = arith.constant 0 : i32
    return %arg0, %c0_i32 : i32, i32
  }
}

module attributes {stable_mosaic.version = 11 : i64} {
  func.func @_lstm_rec_kernel(%arg0: i32, %arg1: memref<8x2x128xf32, #tpu.memory_space<vmem>>, %arg2: memref<8x2x128xf32, #tpu.memory_space<vmem>>, %arg3: memref<32x128xf32, #tpu.memory_space<vmem>>, %arg4: memref<32x128xf32, #tpu.memory_space<vmem>>, %arg5: memref<1x128xf32, #tpu.memory_space<vmem>>, %arg6: memref<1x128xf32, #tpu.memory_space<vmem>>, %arg7: memref<8x2x32xf32, #tpu.memory_space<vmem>>, %arg8: memref<8x2x32xf32, #tpu.memory_space<vmem>>, %arg9: memref<2x32xf32, #tpu.memory_space<vmem>>, %arg10: memref<2x32xf32, #tpu.memory_space<vmem>>, %arg11: memref<2x32xf32, #tpu.memory_space<vmem>>, %arg12: memref<2x32xf32, #tpu.memory_space<vmem>>) attributes {dimension_semantics = [#tpu.dimension_semantics<arbitrary>], iteration_bounds = array<i64: 1>, scalar_prefetch = 0 : i64, scratch_operands = 4 : i64, tpu.core_type = #tpu.core_type<tc>, window_params = [{transform_indices = @transform_0, window_bounds = array<i64: 8, 2, 128>}, {transform_indices = @transform_1, window_bounds = array<i64: 8, 2, 128>}, {pipeline_mode = #tpu.pipeline_mode<synchronous>, transform_indices = @transform_2, window_bounds = array<i64: 32, 128>}, {pipeline_mode = #tpu.pipeline_mode<synchronous>, transform_indices = @transform_3, window_bounds = array<i64: 32, 128>}, {pipeline_mode = #tpu.pipeline_mode<synchronous>, transform_indices = @transform_4, window_bounds = array<i64: 1, 128>}, {pipeline_mode = #tpu.pipeline_mode<synchronous>, transform_indices = @transform_5, window_bounds = array<i64: 1, 128>}, {transform_indices = @transform_6, window_bounds = array<i64: 8, 2, 32>}, {transform_indices = @transform_7, window_bounds = array<i64: 8, 2, 32>}]} {
    %c0_i32 = arith.constant 0 : i32
    %0 = arith.cmpi eq, %arg0, %c0_i32 : i32
    %1 = arith.extui %0 : i1 to i32
    %c0_i32_0 = arith.constant 0 : i32
    %2 = arith.cmpi ne, %1, %c0_i32_0 : i32
    scf.if %2 {
      %cst_272 = arith.constant 0.000000e+00 : f32
      %655 = vector.broadcast %cst_272 : f32 to vector<2x32xf32>
      %c0_273 = arith.constant 0 : index
      %c0_274 = arith.constant 0 : index
      %656 = vector.load %arg9[%c0_273, %c0_274] : memref<2x32xf32, #tpu.memory_space<vmem>>, vector<2x32xf32>
      tpu.vector_store %arg9[%c0_273, %c0_274], %655 {strides = array<i32>} : memref<2x32xf32, #tpu.memory_space<vmem>>, vector<2x32xf32>,
      %cst_275 = arith.constant 0.000000e+00 : f32
      %657 = vector.broadcast %cst_275 : f32 to vector<2x32xf32>
      %c0_276 = arith.constant 0 : index
      %c0_277 = arith.constant 0 : index
      %658 = vector.load %arg10[%c0_276, %c0_277] : memref<2x32xf32, #tpu.memory_space<vmem>>, vector<2x32xf32>
      tpu.vector_store %arg10[%c0_276, %c0_277], %657 {strides = array<i32>} : memref<2x32xf32, #tpu.memory_space<vmem>>, vector<2x32xf32>,
      %cst_278 = arith.constant 0.000000e+00 : f32
      %659 = vector.broadcast %cst_278 : f32 to vector<2x32xf32>
      %c0_279 = arith.constant 0 : index
      %c0_280 = arith.constant 0 : index
      %660 = vector.load %arg11[%c0_279, %c0_280] : memref<2x32xf32, #tpu.memory_space<vmem>>, vector<2x32xf32>
      tpu.vector_store %arg11[%c0_279, %c0_280], %659 {strides = array<i32>} : memref<2x32xf32, #tpu.memory_space<vmem>>, vector<2x32xf32>,
      %cst_281 = arith.constant 0.000000e+00 : f32
      %661 = vector.broadcast %cst_281 : f32 to vector<2x32xf32>
      %c0_282 = arith.constant 0 : index
      %c0_283 = arith.constant 0 : index
      %662 = vector.load %arg12[%c0_282, %c0_283] : memref<2x32xf32, #tpu.memory_space<vmem>>, vector<2x32xf32>
      tpu.vector_store %arg12[%c0_282, %c0_283], %661 {strides = array<i32>} : memref<2x32xf32, #tpu.memory_space<vmem>>, vector<2x32xf32>,
    } else {
    }
    %c0 = arith.constant 0 : index
    %c0_1 = arith.constant 0 : index
    %3 = vector.load %arg3[%c0, %c0_1] : memref<32x128xf32, #tpu.memory_space<vmem>>, vector<32x128xf32>
    %c0_2 = arith.constant 0 : index
    %c0_3 = arith.constant 0 : index
    %4 = vector.load %arg4[%c0_2, %c0_3] : memref<32x128xf32, #tpu.memory_space<vmem>>, vector<32x128xf32>
    %c0_4 = arith.constant 0 : index
    %c0_5 = arith.constant 0 : index
    %5 = vector.load %arg5[%c0_4, %c0_5] : memref<1x128xf32, #tpu.memory_space<vmem>>, vector<1x128xf32>
    %c0_6 = arith.constant 0 : index
    %c0_7 = arith.constant 0 : index
    %6 = vector.load %arg6[%c0_6, %c0_7] : memref<1x128xf32, #tpu.memory_space<vmem>>, vector<1x128xf32>
    %c0_i32_8 = arith.constant 0 : i32
    %c0_9 = arith.constant 0 : index
    %c0_10 = arith.constant 0 : index
    %7 = vector.load %arg9[%c0_9, %c0_10] : memref<2x32xf32, #tpu.memory_space<vmem>>, vector<2x32xf32>
    %cst = arith.constant dense<0.000000e+00> : vector<2x128xf32>
    %8 = tpu.matmul %7, %3, %cst {dimension_numbers = #tpu.dot_dimension_numbers<[1], [0], [0], [1], [0, 0, 1, 1], [], []>} : vector<2x32xf32>, vector<32x128xf32>, vector<2x128xf32> -> vector<2x128xf32>
    %9 = arith.index_cast %c0_i32_8 : i32 to index
    %c0_11 = arith.constant 0 : index
    %c0_12 = arith.constant 0 : index
    %10 = vector.load %arg1[%9, %c0_11, %c0_12] : memref<8x2x128xf32, #tpu.memory_space<vmem>>, vector<1x2x128xf32>
    %11 = vector.shape_cast %10 : vector<1x2x128xf32> to vector<2x128xf32>
    %12 = arith.addf %8, %11 : vector<2x128xf32>
    %13 = vector.broadcast %5 : vector<1x128xf32> to vector<2x128xf32>
    %14 = arith.addf %12, %13 : vector<2x128xf32>
    %c0_13 = arith.constant 0 : index
    %c0_14 = arith.constant 0 : index
    %15 = vector.load %arg11[%c0_13, %c0_14] : memref<2x32xf32, #tpu.memory_space<vmem>>, vector<2x32xf32>
    %16 = vector.extract_strided_slice %14 {offsets = [0, 0], sizes = [2, 32], strides = [1, 1]} : vector<2x128xf32> to vector<2x32xf32>
    %17 = arith.negf %16 : vector<2x32xf32>
    %18 = math.exp %17 : vector<2x32xf32>
    %cst_15 = arith.constant 1.000000e+00 : f32
    %19 = vector.broadcast %cst_15 : f32 to vector<2x32xf32>
    %20 = arith.addf %19, %18 : vector<2x32xf32>
    %21 = arith.divf %19, %20 : vector<2x32xf32>
    %22 = vector.extract_strided_slice %14 {offsets = [0, 32], sizes = [2, 32], strides = [1, 1]} : vector<2x128xf32> to vector<2x32xf32>
    %23 = arith.negf %22 : vector<2x32xf32>
    %24 = math.exp %23 : vector<2x32xf32>
    %cst_16 = arith.constant 1.000000e+00 : f32
    %25 = vector.broadcast %cst_16 : f32 to vector<2x32xf32>
    %26 = arith.addf %25, %24 : vector<2x32xf32>
    %27 = arith.divf %25, %26 : vector<2x32xf32>
    %28 = vector.extract_strided_slice %14 {offsets = [0, 64], sizes = [2, 32], strides = [1, 1]} : vector<2x128xf32> to vector<2x32xf32>
    %29 = math.tanh %28 : vector<2x32xf32>
    %30 = vector.extract_strided_slice %14 {offsets = [0, 96], sizes = [2, 32], strides = [1, 1]} : vector<2x128xf32> to vector<2x32xf32>
    %31 = arith.negf %30 : vector<2x32xf32>
    %32 = math.exp %31 : vector<2x32xf32>
    %cst_17 = arith.constant 1.000000e+00 : f32
    %33 = vector.broadcast %cst_17 : f32 to vector<2x32xf32>
    %34 = arith.addf %33, %32 : vector<2x32xf32>
    %35 = arith.divf %33, %34 : vector<2x32xf32>
    %36 = arith.mulf %27, %15 : vector<2x32xf32>
    %37 = arith.mulf %21, %29 : vector<2x32xf32>
    %38 = arith.addf %36, %37 : vector<2x32xf32>
    %39 = math.tanh %38 : vector<2x32xf32>
    %40 = arith.mulf %35, %39 : vector<2x32xf32>
    %c0_18 = arith.constant 0 : index
    %c0_19 = arith.constant 0 : index
    %41 = vector.load %arg9[%c0_18, %c0_19] : memref<2x32xf32, #tpu.memory_space<vmem>>, vector<2x32xf32>
    tpu.vector_store %arg9[%c0_18, %c0_19], %40 {strides = array<i32>} : memref<2x32xf32, #tpu.memory_space<vmem>>, vector<2x32xf32>,
    %c0_20 = arith.constant 0 : index
    %c0_21 = arith.constant 0 : index
    %42 = vector.load %arg11[%c0_20, %c0_21] : memref<2x32xf32, #tpu.memory_space<vmem>>, vector<2x32xf32>
    tpu.vector_store %arg11[%c0_20, %c0_21], %38 {strides = array<i32>} : memref<2x32xf32, #tpu.memory_space<vmem>>, vector<2x32xf32>,
    %43 = arith.index_cast %c0_i32_8 : i32 to index
    %c0_22 = arith.constant 0 : index
    %c0_23 = arith.constant 0 : index
    %44 = vector.load %arg7[%43, %c0_22, %c0_23] : memref<8x2x32xf32, #tpu.memory_space<vmem>>, vector<1x2x32xf32>
    %45 = vector.shape_cast %44 : vector<1x2x32xf32> to vector<2x32xf32>
    %46 = vector.shape_cast %40 : vector<2x32xf32> to vector<1x2x32xf32>
    tpu.vector_store %arg7[%43, %c0_22, %c0_23], %46 {strides = array<i32>} : memref<8x2x32xf32, #tpu.memory_space<vmem>>, vector<1x2x32xf32>,
    %c7_i32 = arith.constant 7 : i32
    %47 = arith.subi %c7_i32, %c0_i32_8 : i32
    %c0_24 = arith.constant 0 : index
    %c0_25 = arith.constant 0 : index
    %48 = vector.load %arg10[%c0_24, %c0_25] : memref<2x32xf32, #tpu.memory_space<vmem>>, vector<2x32xf32>
    %cst_26 = arith.constant dense<0.000000e+00> : vector<2x128xf32>
    %49 = tpu.matmul %48, %4, %cst_26 {dimension_numbers = #tpu.dot_dimension_numbers<[1], [0], [0], [1], [0, 0, 1, 1], [], []>} : vector<2x32xf32>, vector<32x128xf32>, vector<2x128xf32> -> vector<2x128xf32>
    %50 = arith.index_cast %47 : i32 to index
    %c0_27 = arith.constant 0 : index
    %c0_28 = arith.constant 0 : index
    %51 = vector.load %arg2[%50, %c0_27, %c0_28] : memref<8x2x128xf32, #tpu.memory_space<vmem>>, vector<1x2x128xf32>
    %52 = vector.shape_cast %51 : vector<1x2x128xf32> to vector<2x128xf32>
    %53 = arith.addf %49, %52 : vector<2x128xf32>
    %54 = vector.broadcast %6 : vector<1x128xf32> to vector<2x128xf32>
    %55 = arith.addf %53, %54 : vector<2x128xf32>
    %c0_29 = arith.constant 0 : index
    %c0_30 = arith.constant 0 : index
    %56 = vector.load %arg12[%c0_29, %c0_30] : memref<2x32xf32, #tpu.memory_space<vmem>>, vector<2x32xf32>
    %57 = vector.extract_strided_slice %55 {offsets = [0, 0], sizes = [2, 32], strides = [1, 1]} : vector<2x128xf32> to vector<2x32xf32>
    %58 = arith.negf %57 : vector<2x32xf32>
    %59 = math.exp %58 : vector<2x32xf32>
    %cst_31 = arith.constant 1.000000e+00 : f32
    %60 = vector.broadcast %cst_31 : f32 to vector<2x32xf32>
    %61 = arith.addf %60, %59 : vector<2x32xf32>
    %62 = arith.divf %60, %61 : vector<2x32xf32>
    %63 = vector.extract_strided_slice %55 {offsets = [0, 32], sizes = [2, 32], strides = [1, 1]} : vector<2x128xf32> to vector<2x32xf32>
    %64 = arith.negf %63 : vector<2x32xf32>
    %65 = math.exp %64 : vector<2x32xf32>
    %cst_32 = arith.constant 1.000000e+00 : f32
    %66 = vector.broadcast %cst_32 : f32 to vector<2x32xf32>
    %67 = arith.addf %66, %65 : vector<2x32xf32>
    %68 = arith.divf %66, %67 : vector<2x32xf32>
    %69 = vector.extract_strided_slice %55 {offsets = [0, 64], sizes = [2, 32], strides = [1, 1]} : vector<2x128xf32> to vector<2x32xf32>
    %70 = math.tanh %69 : vector<2x32xf32>
    %71 = vector.extract_strided_slice %55 {offsets = [0, 96], sizes = [2, 32], strides = [1, 1]} : vector<2x128xf32> to vector<2x32xf32>
    %72 = arith.negf %71 : vector<2x32xf32>
    %73 = math.exp %72 : vector<2x32xf32>
    %cst_33 = arith.constant 1.000000e+00 : f32
    %74 = vector.broadcast %cst_33 : f32 to vector<2x32xf32>
    %75 = arith.addf %74, %73 : vector<2x32xf32>
    %76 = arith.divf %74, %75 : vector<2x32xf32>
    %77 = arith.mulf %68, %56 : vector<2x32xf32>
    %78 = arith.mulf %62, %70 : vector<2x32xf32>
    %79 = arith.addf %77, %78 : vector<2x32xf32>
    %80 = math.tanh %79 : vector<2x32xf32>
    %81 = arith.mulf %76, %80 : vector<2x32xf32>
    %c0_34 = arith.constant 0 : index
    %c0_35 = arith.constant 0 : index
    %82 = vector.load %arg10[%c0_34, %c0_35] : memref<2x32xf32, #tpu.memory_space<vmem>>, vector<2x32xf32>
    tpu.vector_store %arg10[%c0_34, %c0_35], %81 {strides = array<i32>} : memref<2x32xf32, #tpu.memory_space<vmem>>, vector<2x32xf32>,
    %c0_36 = arith.constant 0 : index
    %c0_37 = arith.constant 0 : index
    %83 = vector.load %arg12[%c0_36, %c0_37] : memref<2x32xf32, #tpu.memory_space<vmem>>, vector<2x32xf32>
    tpu.vector_store %arg12[%c0_36, %c0_37], %79 {strides = array<i32>} : memref<2x32xf32, #tpu.memory_space<vmem>>, vector<2x32xf32>,
    %84 = arith.index_cast %47 : i32 to index
    %c0_38 = arith.constant 0 : index
    %c0_39 = arith.constant 0 : index
    %85 = vector.load %arg8[%84, %c0_38, %c0_39] : memref<8x2x32xf32, #tpu.memory_space<vmem>>, vector<1x2x32xf32>
    %86 = vector.shape_cast %85 : vector<1x2x32xf32> to vector<2x32xf32>
    %87 = vector.shape_cast %81 : vector<2x32xf32> to vector<1x2x32xf32>
    tpu.vector_store %arg8[%84, %c0_38, %c0_39], %87 {strides = array<i32>} : memref<8x2x32xf32, #tpu.memory_space<vmem>>, vector<1x2x32xf32>,
    %c1_i32 = arith.constant 1 : i32
    %c0_40 = arith.constant 0 : index
    %c0_41 = arith.constant 0 : index
    %88 = vector.load %arg9[%c0_40, %c0_41] : memref<2x32xf32, #tpu.memory_space<vmem>>, vector<2x32xf32>
    %cst_42 = arith.constant dense<0.000000e+00> : vector<2x128xf32>
    %89 = tpu.matmul %88, %3, %cst_42 {dimension_numbers = #tpu.dot_dimension_numbers<[1], [0], [0], [1], [0, 0, 1, 1], [], []>} : vector<2x32xf32>, vector<32x128xf32>, vector<2x128xf32> -> vector<2x128xf32>
    %90 = arith.index_cast %c1_i32 : i32 to index
    %c0_43 = arith.constant 0 : index
    %c0_44 = arith.constant 0 : index
    %91 = vector.load %arg1[%90, %c0_43, %c0_44] : memref<8x2x128xf32, #tpu.memory_space<vmem>>, vector<1x2x128xf32>
    %92 = vector.shape_cast %91 : vector<1x2x128xf32> to vector<2x128xf32>
    %93 = arith.addf %89, %92 : vector<2x128xf32>
    %94 = vector.broadcast %5 : vector<1x128xf32> to vector<2x128xf32>
    %95 = arith.addf %93, %94 : vector<2x128xf32>
    %c0_45 = arith.constant 0 : index
    %c0_46 = arith.constant 0 : index
    %96 = vector.load %arg11[%c0_45, %c0_46] : memref<2x32xf32, #tpu.memory_space<vmem>>, vector<2x32xf32>
    %97 = vector.extract_strided_slice %95 {offsets = [0, 0], sizes = [2, 32], strides = [1, 1]} : vector<2x128xf32> to vector<2x32xf32>
    %98 = arith.negf %97 : vector<2x32xf32>
    %99 = math.exp %98 : vector<2x32xf32>
    %cst_47 = arith.constant 1.000000e+00 : f32
    %100 = vector.broadcast %cst_47 : f32 to vector<2x32xf32>
    %101 = arith.addf %100, %99 : vector<2x32xf32>
    %102 = arith.divf %100, %101 : vector<2x32xf32>
    %103 = vector.extract_strided_slice %95 {offsets = [0, 32], sizes = [2, 32], strides = [1, 1]} : vector<2x128xf32> to vector<2x32xf32>
    %104 = arith.negf %103 : vector<2x32xf32>
    %105 = math.exp %104 : vector<2x32xf32>
    %cst_48 = arith.constant 1.000000e+00 : f32
    %106 = vector.broadcast %cst_48 : f32 to vector<2x32xf32>
    %107 = arith.addf %106, %105 : vector<2x32xf32>
    %108 = arith.divf %106, %107 : vector<2x32xf32>
    %109 = vector.extract_strided_slice %95 {offsets = [0, 64], sizes = [2, 32], strides = [1, 1]} : vector<2x128xf32> to vector<2x32xf32>
    %110 = math.tanh %109 : vector<2x32xf32>
    %111 = vector.extract_strided_slice %95 {offsets = [0, 96], sizes = [2, 32], strides = [1, 1]} : vector<2x128xf32> to vector<2x32xf32>
    %112 = arith.negf %111 : vector<2x32xf32>
    %113 = math.exp %112 : vector<2x32xf32>
    %cst_49 = arith.constant 1.000000e+00 : f32
    %114 = vector.broadcast %cst_49 : f32 to vector<2x32xf32>
    %115 = arith.addf %114, %113 : vector<2x32xf32>
    %116 = arith.divf %114, %115 : vector<2x32xf32>
    %117 = arith.mulf %108, %96 : vector<2x32xf32>
    %118 = arith.mulf %102, %110 : vector<2x32xf32>
    %119 = arith.addf %117, %118 : vector<2x32xf32>
    %120 = math.tanh %119 : vector<2x32xf32>
    %121 = arith.mulf %116, %120 : vector<2x32xf32>
    %c0_50 = arith.constant 0 : index
    %c0_51 = arith.constant 0 : index
    %122 = vector.load %arg9[%c0_50, %c0_51] : memref<2x32xf32, #tpu.memory_space<vmem>>, vector<2x32xf32>
    tpu.vector_store %arg9[%c0_50, %c0_51], %121 {strides = array<i32>} : memref<2x32xf32, #tpu.memory_space<vmem>>, vector<2x32xf32>,
    %c0_52 = arith.constant 0 : index
    %c0_53 = arith.constant 0 : index
    %123 = vector.load %arg11[%c0_52, %c0_53] : memref<2x32xf32, #tpu.memory_space<vmem>>, vector<2x32xf32>
    tpu.vector_store %arg11[%c0_52, %c0_53], %119 {strides = array<i32>} : memref<2x32xf32, #tpu.memory_space<vmem>>, vector<2x32xf32>,
    %124 = arith.index_cast %c1_i32 : i32 to index
    %c0_54 = arith.constant 0 : index
    %c0_55 = arith.constant 0 : index
    %125 = vector.load %arg7[%124, %c0_54, %c0_55] : memref<8x2x32xf32, #tpu.memory_space<vmem>>, vector<1x2x32xf32>
    %126 = vector.shape_cast %125 : vector<1x2x32xf32> to vector<2x32xf32>
    %127 = vector.shape_cast %121 : vector<2x32xf32> to vector<1x2x32xf32>
    tpu.vector_store %arg7[%124, %c0_54, %c0_55], %127 {strides = array<i32>} : memref<8x2x32xf32, #tpu.memory_space<vmem>>, vector<1x2x32xf32>,
    %c7_i32_56 = arith.constant 7 : i32
    %128 = arith.subi %c7_i32_56, %c1_i32 : i32
    %c0_57 = arith.constant 0 : index
    %c0_58 = arith.constant 0 : index
    %129 = vector.load %arg10[%c0_57, %c0_58] : memref<2x32xf32, #tpu.memory_space<vmem>>, vector<2x32xf32>
    %cst_59 = arith.constant dense<0.000000e+00> : vector<2x128xf32>
    %130 = tpu.matmul %129, %4, %cst_59 {dimension_numbers = #tpu.dot_dimension_numbers<[1], [0], [0], [1], [0, 0, 1, 1], [], []>} : vector<2x32xf32>, vector<32x128xf32>, vector<2x128xf32> -> vector<2x128xf32>
    %131 = arith.index_cast %128 : i32 to index
    %c0_60 = arith.constant 0 : index
    %c0_61 = arith.constant 0 : index
    %132 = vector.load %arg2[%131, %c0_60, %c0_61] : memref<8x2x128xf32, #tpu.memory_space<vmem>>, vector<1x2x128xf32>
    %133 = vector.shape_cast %132 : vector<1x2x128xf32> to vector<2x128xf32>
    %134 = arith.addf %130, %133 : vector<2x128xf32>
    %135 = vector.broadcast %6 : vector<1x128xf32> to vector<2x128xf32>
    %136 = arith.addf %134, %135 : vector<2x128xf32>
    %c0_62 = arith.constant 0 : index
    %c0_63 = arith.constant 0 : index
    %137 = vector.load %arg12[%c0_62, %c0_63] : memref<2x32xf32, #tpu.memory_space<vmem>>, vector<2x32xf32>
    %138 = vector.extract_strided_slice %136 {offsets = [0, 0], sizes = [2, 32], strides = [1, 1]} : vector<2x128xf32> to vector<2x32xf32>
    %139 = arith.negf %138 : vector<2x32xf32>
    %140 = math.exp %139 : vector<2x32xf32>
    %cst_64 = arith.constant 1.000000e+00 : f32
    %141 = vector.broadcast %cst_64 : f32 to vector<2x32xf32>
    %142 = arith.addf %141, %140 : vector<2x32xf32>
    %143 = arith.divf %141, %142 : vector<2x32xf32>
    %144 = vector.extract_strided_slice %136 {offsets = [0, 32], sizes = [2, 32], strides = [1, 1]} : vector<2x128xf32> to vector<2x32xf32>
    %145 = arith.negf %144 : vector<2x32xf32>
    %146 = math.exp %145 : vector<2x32xf32>
    %cst_65 = arith.constant 1.000000e+00 : f32
    %147 = vector.broadcast %cst_65 : f32 to vector<2x32xf32>
    %148 = arith.addf %147, %146 : vector<2x32xf32>
    %149 = arith.divf %147, %148 : vector<2x32xf32>
    %150 = vector.extract_strided_slice %136 {offsets = [0, 64], sizes = [2, 32], strides = [1, 1]} : vector<2x128xf32> to vector<2x32xf32>
    %151 = math.tanh %150 : vector<2x32xf32>
    %152 = vector.extract_strided_slice %136 {offsets = [0, 96], sizes = [2, 32], strides = [1, 1]} : vector<2x128xf32> to vector<2x32xf32>
    %153 = arith.negf %152 : vector<2x32xf32>
    %154 = math.exp %153 : vector<2x32xf32>
    %cst_66 = arith.constant 1.000000e+00 : f32
    %155 = vector.broadcast %cst_66 : f32 to vector<2x32xf32>
    %156 = arith.addf %155, %154 : vector<2x32xf32>
    %157 = arith.divf %155, %156 : vector<2x32xf32>
    %158 = arith.mulf %149, %137 : vector<2x32xf32>
    %159 = arith.mulf %143, %151 : vector<2x32xf32>
    %160 = arith.addf %158, %159 : vector<2x32xf32>
    %161 = math.tanh %160 : vector<2x32xf32>
    %162 = arith.mulf %157, %161 : vector<2x32xf32>
    %c0_67 = arith.constant 0 : index
    %c0_68 = arith.constant 0 : index
    %163 = vector.load %arg10[%c0_67, %c0_68] : memref<2x32xf32, #tpu.memory_space<vmem>>, vector<2x32xf32>
    tpu.vector_store %arg10[%c0_67, %c0_68], %162 {strides = array<i32>} : memref<2x32xf32, #tpu.memory_space<vmem>>, vector<2x32xf32>,
    %c0_69 = arith.constant 0 : index
    %c0_70 = arith.constant 0 : index
    %164 = vector.load %arg12[%c0_69, %c0_70] : memref<2x32xf32, #tpu.memory_space<vmem>>, vector<2x32xf32>
    tpu.vector_store %arg12[%c0_69, %c0_70], %160 {strides = array<i32>} : memref<2x32xf32, #tpu.memory_space<vmem>>, vector<2x32xf32>,
    %165 = arith.index_cast %128 : i32 to index
    %c0_71 = arith.constant 0 : index
    %c0_72 = arith.constant 0 : index
    %166 = vector.load %arg8[%165, %c0_71, %c0_72] : memref<8x2x32xf32, #tpu.memory_space<vmem>>, vector<1x2x32xf32>
    %167 = vector.shape_cast %166 : vector<1x2x32xf32> to vector<2x32xf32>
    %168 = vector.shape_cast %162 : vector<2x32xf32> to vector<1x2x32xf32>
    tpu.vector_store %arg8[%165, %c0_71, %c0_72], %168 {strides = array<i32>} : memref<8x2x32xf32, #tpu.memory_space<vmem>>, vector<1x2x32xf32>,
    %c2_i32 = arith.constant 2 : i32
    %c0_73 = arith.constant 0 : index
    %c0_74 = arith.constant 0 : index
    %169 = vector.load %arg9[%c0_73, %c0_74] : memref<2x32xf32, #tpu.memory_space<vmem>>, vector<2x32xf32>
    %cst_75 = arith.constant dense<0.000000e+00> : vector<2x128xf32>
    %170 = tpu.matmul %169, %3, %cst_75 {dimension_numbers = #tpu.dot_dimension_numbers<[1], [0], [0], [1], [0, 0, 1, 1], [], []>} : vector<2x32xf32>, vector<32x128xf32>, vector<2x128xf32> -> vector<2x128xf32>
    %171 = arith.index_cast %c2_i32 : i32 to index
    %c0_76 = arith.constant 0 : index
    %c0_77 = arith.constant 0 : index
    %172 = vector.load %arg1[%171, %c0_76, %c0_77] : memref<8x2x128xf32, #tpu.memory_space<vmem>>, vector<1x2x128xf32>
    %173 = vector.shape_cast %172 : vector<1x2x128xf32> to vector<2x128xf32>
    %174 = arith.addf %170, %173 : vector<2x128xf32>
    %175 = vector.broadcast %5 : vector<1x128xf32> to vector<2x128xf32>
    %176 = arith.addf %174, %175 : vector<2x128xf32>
    %c0_78 = arith.constant 0 : index
    %c0_79 = arith.constant 0 : index
    %177 = vector.load %arg11[%c0_78, %c0_79] : memref<2x32xf32, #tpu.memory_space<vmem>>, vector<2x32xf32>
    %178 = vector.extract_strided_slice %176 {offsets = [0, 0], sizes = [2, 32], strides = [1, 1]} : vector<2x128xf32> to vector<2x32xf32>
    %179 = arith.negf %178 : vector<2x32xf32>
    %180 = math.exp %179 : vector<2x32xf32>
    %cst_80 = arith.constant 1.000000e+00 : f32
    %181 = vector.broadcast %cst_80 : f32 to vector<2x32xf32>
    %182 = arith.addf %181, %180 : vector<2x32xf32>
    %183 = arith.divf %181, %182 : vector<2x32xf32>
    %184 = vector.extract_strided_slice %176 {offsets = [0, 32], sizes = [2, 32], strides = [1, 1]} : vector<2x128xf32> to vector<2x32xf32>
    %185 = arith.negf %184 : vector<2x32xf32>
    %186 = math.exp %185 : vector<2x32xf32>
    %cst_81 = arith.constant 1.000000e+00 : f32
    %187 = vector.broadcast %cst_81 : f32 to vector<2x32xf32>
    %188 = arith.addf %187, %186 : vector<2x32xf32>
    %189 = arith.divf %187, %188 : vector<2x32xf32>
    %190 = vector.extract_strided_slice %176 {offsets = [0, 64], sizes = [2, 32], strides = [1, 1]} : vector<2x128xf32> to vector<2x32xf32>
    %191 = math.tanh %190 : vector<2x32xf32>
    %192 = vector.extract_strided_slice %176 {offsets = [0, 96], sizes = [2, 32], strides = [1, 1]} : vector<2x128xf32> to vector<2x32xf32>
    %193 = arith.negf %192 : vector<2x32xf32>
    %194 = math.exp %193 : vector<2x32xf32>
    %cst_82 = arith.constant 1.000000e+00 : f32
    %195 = vector.broadcast %cst_82 : f32 to vector<2x32xf32>
    %196 = arith.addf %195, %194 : vector<2x32xf32>
    %197 = arith.divf %195, %196 : vector<2x32xf32>
    %198 = arith.mulf %189, %177 : vector<2x32xf32>
    %199 = arith.mulf %183, %191 : vector<2x32xf32>
    %200 = arith.addf %198, %199 : vector<2x32xf32>
    %201 = math.tanh %200 : vector<2x32xf32>
    %202 = arith.mulf %197, %201 : vector<2x32xf32>
    %c0_83 = arith.constant 0 : index
    %c0_84 = arith.constant 0 : index
    %203 = vector.load %arg9[%c0_83, %c0_84] : memref<2x32xf32, #tpu.memory_space<vmem>>, vector<2x32xf32>
    tpu.vector_store %arg9[%c0_83, %c0_84], %202 {strides = array<i32>} : memref<2x32xf32, #tpu.memory_space<vmem>>, vector<2x32xf32>,
    %c0_85 = arith.constant 0 : index
    %c0_86 = arith.constant 0 : index
    %204 = vector.load %arg11[%c0_85, %c0_86] : memref<2x32xf32, #tpu.memory_space<vmem>>, vector<2x32xf32>
    tpu.vector_store %arg11[%c0_85, %c0_86], %200 {strides = array<i32>} : memref<2x32xf32, #tpu.memory_space<vmem>>, vector<2x32xf32>,
    %205 = arith.index_cast %c2_i32 : i32 to index
    %c0_87 = arith.constant 0 : index
    %c0_88 = arith.constant 0 : index
    %206 = vector.load %arg7[%205, %c0_87, %c0_88] : memref<8x2x32xf32, #tpu.memory_space<vmem>>, vector<1x2x32xf32>
    %207 = vector.shape_cast %206 : vector<1x2x32xf32> to vector<2x32xf32>
    %208 = vector.shape_cast %202 : vector<2x32xf32> to vector<1x2x32xf32>
    tpu.vector_store %arg7[%205, %c0_87, %c0_88], %208 {strides = array<i32>} : memref<8x2x32xf32, #tpu.memory_space<vmem>>, vector<1x2x32xf32>,
    %c7_i32_89 = arith.constant 7 : i32
    %209 = arith.subi %c7_i32_89, %c2_i32 : i32
    %c0_90 = arith.constant 0 : index
    %c0_91 = arith.constant 0 : index
    %210 = vector.load %arg10[%c0_90, %c0_91] : memref<2x32xf32, #tpu.memory_space<vmem>>, vector<2x32xf32>
    %cst_92 = arith.constant dense<0.000000e+00> : vector<2x128xf32>
    %211 = tpu.matmul %210, %4, %cst_92 {dimension_numbers = #tpu.dot_dimension_numbers<[1], [0], [0], [1], [0, 0, 1, 1], [], []>} : vector<2x32xf32>, vector<32x128xf32>, vector<2x128xf32> -> vector<2x128xf32>
    %212 = arith.index_cast %209 : i32 to index
    %c0_93 = arith.constant 0 : index
    %c0_94 = arith.constant 0 : index
    %213 = vector.load %arg2[%212, %c0_93, %c0_94] : memref<8x2x128xf32, #tpu.memory_space<vmem>>, vector<1x2x128xf32>
    %214 = vector.shape_cast %213 : vector<1x2x128xf32> to vector<2x128xf32>
    %215 = arith.addf %211, %214 : vector<2x128xf32>
    %216 = vector.broadcast %6 : vector<1x128xf32> to vector<2x128xf32>
    %217 = arith.addf %215, %216 : vector<2x128xf32>
    %c0_95 = arith.constant 0 : index
    %c0_96 = arith.constant 0 : index
    %218 = vector.load %arg12[%c0_95, %c0_96] : memref<2x32xf32, #tpu.memory_space<vmem>>, vector<2x32xf32>
    %219 = vector.extract_strided_slice %217 {offsets = [0, 0], sizes = [2, 32], strides = [1, 1]} : vector<2x128xf32> to vector<2x32xf32>
    %220 = arith.negf %219 : vector<2x32xf32>
    %221 = math.exp %220 : vector<2x32xf32>
    %cst_97 = arith.constant 1.000000e+00 : f32
    %222 = vector.broadcast %cst_97 : f32 to vector<2x32xf32>
    %223 = arith.addf %222, %221 : vector<2x32xf32>
    %224 = arith.divf %222, %223 : vector<2x32xf32>
    %225 = vector.extract_strided_slice %217 {offsets = [0, 32], sizes = [2, 32], strides = [1, 1]} : vector<2x128xf32> to vector<2x32xf32>
    %226 = arith.negf %225 : vector<2x32xf32>
    %227 = math.exp %226 : vector<2x32xf32>
    %cst_98 = arith.constant 1.000000e+00 : f32
    %228 = vector.broadcast %cst_98 : f32 to vector<2x32xf32>
    %229 = arith.addf %228, %227 : vector<2x32xf32>
    %230 = arith.divf %228, %229 : vector<2x32xf32>
    %231 = vector.extract_strided_slice %217 {offsets = [0, 64], sizes = [2, 32], strides = [1, 1]} : vector<2x128xf32> to vector<2x32xf32>
    %232 = math.tanh %231 : vector<2x32xf32>
    %233 = vector.extract_strided_slice %217 {offsets = [0, 96], sizes = [2, 32], strides = [1, 1]} : vector<2x128xf32> to vector<2x32xf32>
    %234 = arith.negf %233 : vector<2x32xf32>
    %235 = math.exp %234 : vector<2x32xf32>
    %cst_99 = arith.constant 1.000000e+00 : f32
    %236 = vector.broadcast %cst_99 : f32 to vector<2x32xf32>
    %237 = arith.addf %236, %235 : vector<2x32xf32>
    %238 = arith.divf %236, %237 : vector<2x32xf32>
    %239 = arith.mulf %230, %218 : vector<2x32xf32>
    %240 = arith.mulf %224, %232 : vector<2x32xf32>
    %241 = arith.addf %239, %240 : vector<2x32xf32>
    %242 = math.tanh %241 : vector<2x32xf32>
    %243 = arith.mulf %238, %242 : vector<2x32xf32>
    %c0_100 = arith.constant 0 : index
    %c0_101 = arith.constant 0 : index
    %244 = vector.load %arg10[%c0_100, %c0_101] : memref<2x32xf32, #tpu.memory_space<vmem>>, vector<2x32xf32>
    tpu.vector_store %arg10[%c0_100, %c0_101], %243 {strides = array<i32>} : memref<2x32xf32, #tpu.memory_space<vmem>>, vector<2x32xf32>,
    %c0_102 = arith.constant 0 : index
    %c0_103 = arith.constant 0 : index
    %245 = vector.load %arg12[%c0_102, %c0_103] : memref<2x32xf32, #tpu.memory_space<vmem>>, vector<2x32xf32>
    tpu.vector_store %arg12[%c0_102, %c0_103], %241 {strides = array<i32>} : memref<2x32xf32, #tpu.memory_space<vmem>>, vector<2x32xf32>,
    %246 = arith.index_cast %209 : i32 to index
    %c0_104 = arith.constant 0 : index
    %c0_105 = arith.constant 0 : index
    %247 = vector.load %arg8[%246, %c0_104, %c0_105] : memref<8x2x32xf32, #tpu.memory_space<vmem>>, vector<1x2x32xf32>
    %248 = vector.shape_cast %247 : vector<1x2x32xf32> to vector<2x32xf32>
    %249 = vector.shape_cast %243 : vector<2x32xf32> to vector<1x2x32xf32>
    tpu.vector_store %arg8[%246, %c0_104, %c0_105], %249 {strides = array<i32>} : memref<8x2x32xf32, #tpu.memory_space<vmem>>, vector<1x2x32xf32>,
    %c3_i32 = arith.constant 3 : i32
    %c0_106 = arith.constant 0 : index
    %c0_107 = arith.constant 0 : index
    %250 = vector.load %arg9[%c0_106, %c0_107] : memref<2x32xf32, #tpu.memory_space<vmem>>, vector<2x32xf32>
    %cst_108 = arith.constant dense<0.000000e+00> : vector<2x128xf32>
    %251 = tpu.matmul %250, %3, %cst_108 {dimension_numbers = #tpu.dot_dimension_numbers<[1], [0], [0], [1], [0, 0, 1, 1], [], []>} : vector<2x32xf32>, vector<32x128xf32>, vector<2x128xf32> -> vector<2x128xf32>
    %252 = arith.index_cast %c3_i32 : i32 to index
    %c0_109 = arith.constant 0 : index
    %c0_110 = arith.constant 0 : index
    %253 = vector.load %arg1[%252, %c0_109, %c0_110] : memref<8x2x128xf32, #tpu.memory_space<vmem>>, vector<1x2x128xf32>
    %254 = vector.shape_cast %253 : vector<1x2x128xf32> to vector<2x128xf32>
    %255 = arith.addf %251, %254 : vector<2x128xf32>
    %256 = vector.broadcast %5 : vector<1x128xf32> to vector<2x128xf32>
    %257 = arith.addf %255, %256 : vector<2x128xf32>
    %c0_111 = arith.constant 0 : index
    %c0_112 = arith.constant 0 : index
    %258 = vector.load %arg11[%c0_111, %c0_112] : memref<2x32xf32, #tpu.memory_space<vmem>>, vector<2x32xf32>
    %259 = vector.extract_strided_slice %257 {offsets = [0, 0], sizes = [2, 32], strides = [1, 1]} : vector<2x128xf32> to vector<2x32xf32>
    %260 = arith.negf %259 : vector<2x32xf32>
    %261 = math.exp %260 : vector<2x32xf32>
    %cst_113 = arith.constant 1.000000e+00 : f32
    %262 = vector.broadcast %cst_113 : f32 to vector<2x32xf32>
    %263 = arith.addf %262, %261 : vector<2x32xf32>
    %264 = arith.divf %262, %263 : vector<2x32xf32>
    %265 = vector.extract_strided_slice %257 {offsets = [0, 32], sizes = [2, 32], strides = [1, 1]} : vector<2x128xf32> to vector<2x32xf32>
    %266 = arith.negf %265 : vector<2x32xf32>
    %267 = math.exp %266 : vector<2x32xf32>
    %cst_114 = arith.constant 1.000000e+00 : f32
    %268 = vector.broadcast %cst_114 : f32 to vector<2x32xf32>
    %269 = arith.addf %268, %267 : vector<2x32xf32>
    %270 = arith.divf %268, %269 : vector<2x32xf32>
    %271 = vector.extract_strided_slice %257 {offsets = [0, 64], sizes = [2, 32], strides = [1, 1]} : vector<2x128xf32> to vector<2x32xf32>
    %272 = math.tanh %271 : vector<2x32xf32>
    %273 = vector.extract_strided_slice %257 {offsets = [0, 96], sizes = [2, 32], strides = [1, 1]} : vector<2x128xf32> to vector<2x32xf32>
    %274 = arith.negf %273 : vector<2x32xf32>
    %275 = math.exp %274 : vector<2x32xf32>
    %cst_115 = arith.constant 1.000000e+00 : f32
    %276 = vector.broadcast %cst_115 : f32 to vector<2x32xf32>
    %277 = arith.addf %276, %275 : vector<2x32xf32>
    %278 = arith.divf %276, %277 : vector<2x32xf32>
    %279 = arith.mulf %270, %258 : vector<2x32xf32>
    %280 = arith.mulf %264, %272 : vector<2x32xf32>
    %281 = arith.addf %279, %280 : vector<2x32xf32>
    %282 = math.tanh %281 : vector<2x32xf32>
    %283 = arith.mulf %278, %282 : vector<2x32xf32>
    %c0_116 = arith.constant 0 : index
    %c0_117 = arith.constant 0 : index
    %284 = vector.load %arg9[%c0_116, %c0_117] : memref<2x32xf32, #tpu.memory_space<vmem>>, vector<2x32xf32>
    tpu.vector_store %arg9[%c0_116, %c0_117], %283 {strides = array<i32>} : memref<2x32xf32, #tpu.memory_space<vmem>>, vector<2x32xf32>,
    %c0_118 = arith.constant 0 : index
    %c0_119 = arith.constant 0 : index
    %285 = vector.load %arg11[%c0_118, %c0_119] : memref<2x32xf32, #tpu.memory_space<vmem>>, vector<2x32xf32>
    tpu.vector_store %arg11[%c0_118, %c0_119], %281 {strides = array<i32>} : memref<2x32xf32, #tpu.memory_space<vmem>>, vector<2x32xf32>,
    %286 = arith.index_cast %c3_i32 : i32 to index
    %c0_120 = arith.constant 0 : index
    %c0_121 = arith.constant 0 : index
    %287 = vector.load %arg7[%286, %c0_120, %c0_121] : memref<8x2x32xf32, #tpu.memory_space<vmem>>, vector<1x2x32xf32>
    %288 = vector.shape_cast %287 : vector<1x2x32xf32> to vector<2x32xf32>
    %289 = vector.shape_cast %283 : vector<2x32xf32> to vector<1x2x32xf32>
    tpu.vector_store %arg7[%286, %c0_120, %c0_121], %289 {strides = array<i32>} : memref<8x2x32xf32, #tpu.memory_space<vmem>>, vector<1x2x32xf32>,
    %c7_i32_122 = arith.constant 7 : i32
    %290 = arith.subi %c7_i32_122, %c3_i32 : i32
    %c0_123 = arith.constant 0 : index
    %c0_124 = arith.constant 0 : index
    %291 = vector.load %arg10[%c0_123, %c0_124] : memref<2x32xf32, #tpu.memory_space<vmem>>, vector<2x32xf32>
    %cst_125 = arith.constant dense<0.000000e+00> : vector<2x128xf32>
    %292 = tpu.matmul %291, %4, %cst_125 {dimension_numbers = #tpu.dot_dimension_numbers<[1], [0], [0], [1], [0, 0, 1, 1], [], []>} : vector<2x32xf32>, vector<32x128xf32>, vector<2x128xf32> -> vector<2x128xf32>
    %293 = arith.index_cast %290 : i32 to index
    %c0_126 = arith.constant 0 : index
    %c0_127 = arith.constant 0 : index
    %294 = vector.load %arg2[%293, %c0_126, %c0_127] : memref<8x2x128xf32, #tpu.memory_space<vmem>>, vector<1x2x128xf32>
    %295 = vector.shape_cast %294 : vector<1x2x128xf32> to vector<2x128xf32>
    %296 = arith.addf %292, %295 : vector<2x128xf32>
    %297 = vector.broadcast %6 : vector<1x128xf32> to vector<2x128xf32>
    %298 = arith.addf %296, %297 : vector<2x128xf32>
    %c0_128 = arith.constant 0 : index
    %c0_129 = arith.constant 0 : index
    %299 = vector.load %arg12[%c0_128, %c0_129] : memref<2x32xf32, #tpu.memory_space<vmem>>, vector<2x32xf32>
    %300 = vector.extract_strided_slice %298 {offsets = [0, 0], sizes = [2, 32], strides = [1, 1]} : vector<2x128xf32> to vector<2x32xf32>
    %301 = arith.negf %300 : vector<2x32xf32>
    %302 = math.exp %301 : vector<2x32xf32>
    %cst_130 = arith.constant 1.000000e+00 : f32
    %303 = vector.broadcast %cst_130 : f32 to vector<2x32xf32>
    %304 = arith.addf %303, %302 : vector<2x32xf32>
    %305 = arith.divf %303, %304 : vector<2x32xf32>
    %306 = vector.extract_strided_slice %298 {offsets = [0, 32], sizes = [2, 32], strides = [1, 1]} : vector<2x128xf32> to vector<2x32xf32>
    %307 = arith.negf %306 : vector<2x32xf32>
    %308 = math.exp %307 : vector<2x32xf32>
    %cst_131 = arith.constant 1.000000e+00 : f32
    %309 = vector.broadcast %cst_131 : f32 to vector<2x32xf32>
    %310 = arith.addf %309, %308 : vector<2x32xf32>
    %311 = arith.divf %309, %310 : vector<2x32xf32>
    %312 = vector.extract_strided_slice %298 {offsets = [0, 64], sizes = [2, 32], strides = [1, 1]} : vector<2x128xf32> to vector<2x32xf32>
    %313 = math.tanh %312 : vector<2x32xf32>
    %314 = vector.extract_strided_slice %298 {offsets = [0, 96], sizes = [2, 32], strides = [1, 1]} : vector<2x128xf32> to vector<2x32xf32>
    %315 = arith.negf %314 : vector<2x32xf32>
    %316 = math.exp %315 : vector<2x32xf32>
    %cst_132 = arith.constant 1.000000e+00 : f32
    %317 = vector.broadcast %cst_132 : f32 to vector<2x32xf32>
    %318 = arith.addf %317, %316 : vector<2x32xf32>
    %319 = arith.divf %317, %318 : vector<2x32xf32>
    %320 = arith.mulf %311, %299 : vector<2x32xf32>
    %321 = arith.mulf %305, %313 : vector<2x32xf32>
    %322 = arith.addf %320, %321 : vector<2x32xf32>
    %323 = math.tanh %322 : vector<2x32xf32>
    %324 = arith.mulf %319, %323 : vector<2x32xf32>
    %c0_133 = arith.constant 0 : index
    %c0_134 = arith.constant 0 : index
    %325 = vector.load %arg10[%c0_133, %c0_134] : memref<2x32xf32, #tpu.memory_space<vmem>>, vector<2x32xf32>
    tpu.vector_store %arg10[%c0_133, %c0_134], %324 {strides = array<i32>} : memref<2x32xf32, #tpu.memory_space<vmem>>, vector<2x32xf32>,
    %c0_135 = arith.constant 0 : index
    %c0_136 = arith.constant 0 : index
    %326 = vector.load %arg12[%c0_135, %c0_136] : memref<2x32xf32, #tpu.memory_space<vmem>>, vector<2x32xf32>
    tpu.vector_store %arg12[%c0_135, %c0_136], %322 {strides = array<i32>} : memref<2x32xf32, #tpu.memory_space<vmem>>, vector<2x32xf32>,
    %327 = arith.index_cast %290 : i32 to index
    %c0_137 = arith.constant 0 : index
    %c0_138 = arith.constant 0 : index
    %328 = vector.load %arg8[%327, %c0_137, %c0_138] : memref<8x2x32xf32, #tpu.memory_space<vmem>>, vector<1x2x32xf32>
    %329 = vector.shape_cast %328 : vector<1x2x32xf32> to vector<2x32xf32>
    %330 = vector.shape_cast %324 : vector<2x32xf32> to vector<1x2x32xf32>
    tpu.vector_store %arg8[%327, %c0_137, %c0_138], %330 {strides = array<i32>} : memref<8x2x32xf32, #tpu.memory_space<vmem>>, vector<1x2x32xf32>,
    %c4_i32 = arith.constant 4 : i32
    %c0_139 = arith.constant 0 : index
    %c0_140 = arith.constant 0 : index
    %331 = vector.load %arg9[%c0_139, %c0_140] : memref<2x32xf32, #tpu.memory_space<vmem>>, vector<2x32xf32>
    %cst_141 = arith.constant dense<0.000000e+00> : vector<2x128xf32>
    %332 = tpu.matmul %331, %3, %cst_141 {dimension_numbers = #tpu.dot_dimension_numbers<[1], [0], [0], [1], [0, 0, 1, 1], [], []>} : vector<2x32xf32>, vector<32x128xf32>, vector<2x128xf32> -> vector<2x128xf32>
    %333 = arith.index_cast %c4_i32 : i32 to index
    %c0_142 = arith.constant 0 : index
    %c0_143 = arith.constant 0 : index
    %334 = vector.load %arg1[%333, %c0_142, %c0_143] : memref<8x2x128xf32, #tpu.memory_space<vmem>>, vector<1x2x128xf32>
    %335 = vector.shape_cast %334 : vector<1x2x128xf32> to vector<2x128xf32>
    %336 = arith.addf %332, %335 : vector<2x128xf32>
    %337 = vector.broadcast %5 : vector<1x128xf32> to vector<2x128xf32>
    %338 = arith.addf %336, %337 : vector<2x128xf32>
    %c0_144 = arith.constant 0 : index
    %c0_145 = arith.constant 0 : index
    %339 = vector.load %arg11[%c0_144, %c0_145] : memref<2x32xf32, #tpu.memory_space<vmem>>, vector<2x32xf32>
    %340 = vector.extract_strided_slice %338 {offsets = [0, 0], sizes = [2, 32], strides = [1, 1]} : vector<2x128xf32> to vector<2x32xf32>
    %341 = arith.negf %340 : vector<2x32xf32>
    %342 = math.exp %341 : vector<2x32xf32>
    %cst_146 = arith.constant 1.000000e+00 : f32
    %343 = vector.broadcast %cst_146 : f32 to vector<2x32xf32>
    %344 = arith.addf %343, %342 : vector<2x32xf32>
    %345 = arith.divf %343, %344 : vector<2x32xf32>
    %346 = vector.extract_strided_slice %338 {offsets = [0, 32], sizes = [2, 32], strides = [1, 1]} : vector<2x128xf32> to vector<2x32xf32>
    %347 = arith.negf %346 : vector<2x32xf32>
    %348 = math.exp %347 : vector<2x32xf32>
    %cst_147 = arith.constant 1.000000e+00 : f32
    %349 = vector.broadcast %cst_147 : f32 to vector<2x32xf32>
    %350 = arith.addf %349, %348 : vector<2x32xf32>
    %351 = arith.divf %349, %350 : vector<2x32xf32>
    %352 = vector.extract_strided_slice %338 {offsets = [0, 64], sizes = [2, 32], strides = [1, 1]} : vector<2x128xf32> to vector<2x32xf32>
    %353 = math.tanh %352 : vector<2x32xf32>
    %354 = vector.extract_strided_slice %338 {offsets = [0, 96], sizes = [2, 32], strides = [1, 1]} : vector<2x128xf32> to vector<2x32xf32>
    %355 = arith.negf %354 : vector<2x32xf32>
    %356 = math.exp %355 : vector<2x32xf32>
    %cst_148 = arith.constant 1.000000e+00 : f32
    %357 = vector.broadcast %cst_148 : f32 to vector<2x32xf32>
    %358 = arith.addf %357, %356 : vector<2x32xf32>
    %359 = arith.divf %357, %358 : vector<2x32xf32>
    %360 = arith.mulf %351, %339 : vector<2x32xf32>
    %361 = arith.mulf %345, %353 : vector<2x32xf32>
    %362 = arith.addf %360, %361 : vector<2x32xf32>
    %363 = math.tanh %362 : vector<2x32xf32>
    %364 = arith.mulf %359, %363 : vector<2x32xf32>
    %c0_149 = arith.constant 0 : index
    %c0_150 = arith.constant 0 : index
    %365 = vector.load %arg9[%c0_149, %c0_150] : memref<2x32xf32, #tpu.memory_space<vmem>>, vector<2x32xf32>
    tpu.vector_store %arg9[%c0_149, %c0_150], %364 {strides = array<i32>} : memref<2x32xf32, #tpu.memory_space<vmem>>, vector<2x32xf32>,
    %c0_151 = arith.constant 0 : index
    %c0_152 = arith.constant 0 : index
    %366 = vector.load %arg11[%c0_151, %c0_152] : memref<2x32xf32, #tpu.memory_space<vmem>>, vector<2x32xf32>
    tpu.vector_store %arg11[%c0_151, %c0_152], %362 {strides = array<i32>} : memref<2x32xf32, #tpu.memory_space<vmem>>, vector<2x32xf32>,
    %367 = arith.index_cast %c4_i32 : i32 to index
    %c0_153 = arith.constant 0 : index
    %c0_154 = arith.constant 0 : index
    %368 = vector.load %arg7[%367, %c0_153, %c0_154] : memref<8x2x32xf32, #tpu.memory_space<vmem>>, vector<1x2x32xf32>
    %369 = vector.shape_cast %368 : vector<1x2x32xf32> to vector<2x32xf32>
    %370 = vector.shape_cast %364 : vector<2x32xf32> to vector<1x2x32xf32>
    tpu.vector_store %arg7[%367, %c0_153, %c0_154], %370 {strides = array<i32>} : memref<8x2x32xf32, #tpu.memory_space<vmem>>, vector<1x2x32xf32>,
    %c7_i32_155 = arith.constant 7 : i32
    %371 = arith.subi %c7_i32_155, %c4_i32 : i32
    %c0_156 = arith.constant 0 : index
    %c0_157 = arith.constant 0 : index
    %372 = vector.load %arg10[%c0_156, %c0_157] : memref<2x32xf32, #tpu.memory_space<vmem>>, vector<2x32xf32>
    %cst_158 = arith.constant dense<0.000000e+00> : vector<2x128xf32>
    %373 = tpu.matmul %372, %4, %cst_158 {dimension_numbers = #tpu.dot_dimension_numbers<[1], [0], [0], [1], [0, 0, 1, 1], [], []>} : vector<2x32xf32>, vector<32x128xf32>, vector<2x128xf32> -> vector<2x128xf32>
    %374 = arith.index_cast %371 : i32 to index
    %c0_159 = arith.constant 0 : index
    %c0_160 = arith.constant 0 : index
    %375 = vector.load %arg2[%374, %c0_159, %c0_160] : memref<8x2x128xf32, #tpu.memory_space<vmem>>, vector<1x2x128xf32>
    %376 = vector.shape_cast %375 : vector<1x2x128xf32> to vector<2x128xf32>
    %377 = arith.addf %373, %376 : vector<2x128xf32>
    %378 = vector.broadcast %6 : vector<1x128xf32> to vector<2x128xf32>
    %379 = arith.addf %377, %378 : vector<2x128xf32>
    %c0_161 = arith.constant 0 : index
    %c0_162 = arith.constant 0 : index
    %380 = vector.load %arg12[%c0_161, %c0_162] : memref<2x32xf32, #tpu.memory_space<vmem>>, vector<2x32xf32>
    %381 = vector.extract_strided_slice %379 {offsets = [0, 0], sizes = [2, 32], strides = [1, 1]} : vector<2x128xf32> to vector<2x32xf32>
    %382 = arith.negf %381 : vector<2x32xf32>
    %383 = math.exp %382 : vector<2x32xf32>
    %cst_163 = arith.constant 1.000000e+00 : f32
    %384 = vector.broadcast %cst_163 : f32 to vector<2x32xf32>
    %385 = arith.addf %384, %383 : vector<2x32xf32>
    %386 = arith.divf %384, %385 : vector<2x32xf32>
    %387 = vector.extract_strided_slice %379 {offsets = [0, 32], sizes = [2, 32], strides = [1, 1]} : vector<2x128xf32> to vector<2x32xf32>
    %388 = arith.negf %387 : vector<2x32xf32>
    %389 = math.exp %388 : vector<2x32xf32>
    %cst_164 = arith.constant 1.000000e+00 : f32
    %390 = vector.broadcast %cst_164 : f32 to vector<2x32xf32>
    %391 = arith.addf %390, %389 : vector<2x32xf32>
    %392 = arith.divf %390, %391 : vector<2x32xf32>
    %393 = vector.extract_strided_slice %379 {offsets = [0, 64], sizes = [2, 32], strides = [1, 1]} : vector<2x128xf32> to vector<2x32xf32>
    %394 = math.tanh %393 : vector<2x32xf32>
    %395 = vector.extract_strided_slice %379 {offsets = [0, 96], sizes = [2, 32], strides = [1, 1]} : vector<2x128xf32> to vector<2x32xf32>
    %396 = arith.negf %395 : vector<2x32xf32>
    %397 = math.exp %396 : vector<2x32xf32>
    %cst_165 = arith.constant 1.000000e+00 : f32
    %398 = vector.broadcast %cst_165 : f32 to vector<2x32xf32>
    %399 = arith.addf %398, %397 : vector<2x32xf32>
    %400 = arith.divf %398, %399 : vector<2x32xf32>
    %401 = arith.mulf %392, %380 : vector<2x32xf32>
    %402 = arith.mulf %386, %394 : vector<2x32xf32>
    %403 = arith.addf %401, %402 : vector<2x32xf32>
    %404 = math.tanh %403 : vector<2x32xf32>
    %405 = arith.mulf %400, %404 : vector<2x32xf32>
    %c0_166 = arith.constant 0 : index
    %c0_167 = arith.constant 0 : index
    %406 = vector.load %arg10[%c0_166, %c0_167] : memref<2x32xf32, #tpu.memory_space<vmem>>, vector<2x32xf32>
    tpu.vector_store %arg10[%c0_166, %c0_167], %405 {strides = array<i32>} : memref<2x32xf32, #tpu.memory_space<vmem>>, vector<2x32xf32>,
    %c0_168 = arith.constant 0 : index
    %c0_169 = arith.constant 0 : index
    %407 = vector.load %arg12[%c0_168, %c0_169] : memref<2x32xf32, #tpu.memory_space<vmem>>, vector<2x32xf32>
    tpu.vector_store %arg12[%c0_168, %c0_169], %403 {strides = array<i32>} : memref<2x32xf32, #tpu.memory_space<vmem>>, vector<2x32xf32>,
    %408 = arith.index_cast %371 : i32 to index
    %c0_170 = arith.constant 0 : index
    %c0_171 = arith.constant 0 : index
    %409 = vector.load %arg8[%408, %c0_170, %c0_171] : memref<8x2x32xf32, #tpu.memory_space<vmem>>, vector<1x2x32xf32>
    %410 = vector.shape_cast %409 : vector<1x2x32xf32> to vector<2x32xf32>
    %411 = vector.shape_cast %405 : vector<2x32xf32> to vector<1x2x32xf32>
    tpu.vector_store %arg8[%408, %c0_170, %c0_171], %411 {strides = array<i32>} : memref<8x2x32xf32, #tpu.memory_space<vmem>>, vector<1x2x32xf32>,
    %c5_i32 = arith.constant 5 : i32
    %c0_172 = arith.constant 0 : index
    %c0_173 = arith.constant 0 : index
    %412 = vector.load %arg9[%c0_172, %c0_173] : memref<2x32xf32, #tpu.memory_space<vmem>>, vector<2x32xf32>
    %cst_174 = arith.constant dense<0.000000e+00> : vector<2x128xf32>
    %413 = tpu.matmul %412, %3, %cst_174 {dimension_numbers = #tpu.dot_dimension_numbers<[1], [0], [0], [1], [0, 0, 1, 1], [], []>} : vector<2x32xf32>, vector<32x128xf32>, vector<2x128xf32> -> vector<2x128xf32>
    %414 = arith.index_cast %c5_i32 : i32 to index
    %c0_175 = arith.constant 0 : index
    %c0_176 = arith.constant 0 : index
    %415 = vector.load %arg1[%414, %c0_175, %c0_176] : memref<8x2x128xf32, #tpu.memory_space<vmem>>, vector<1x2x128xf32>
    %416 = vector.shape_cast %415 : vector<1x2x128xf32> to vector<2x128xf32>
    %417 = arith.addf %413, %416 : vector<2x128xf32>
    %418 = vector.broadcast %5 : vector<1x128xf32> to vector<2x128xf32>
    %419 = arith.addf %417, %418 : vector<2x128xf32>
    %c0_177 = arith.constant 0 : index
    %c0_178 = arith.constant 0 : index
    %420 = vector.load %arg11[%c0_177, %c0_178] : memref<2x32xf32, #tpu.memory_space<vmem>>, vector<2x32xf32>
    %421 = vector.extract_strided_slice %419 {offsets = [0, 0], sizes = [2, 32], strides = [1, 1]} : vector<2x128xf32> to vector<2x32xf32>
    %422 = arith.negf %421 : vector<2x32xf32>
    %423 = math.exp %422 : vector<2x32xf32>
    %cst_179 = arith.constant 1.000000e+00 : f32
    %424 = vector.broadcast %cst_179 : f32 to vector<2x32xf32>
    %425 = arith.addf %424, %423 : vector<2x32xf32>
    %426 = arith.divf %424, %425 : vector<2x32xf32>
    %427 = vector.extract_strided_slice %419 {offsets = [0, 32], sizes = [2, 32], strides = [1, 1]} : vector<2x128xf32> to vector<2x32xf32>
    %428 = arith.negf %427 : vector<2x32xf32>
    %429 = math.exp %428 : vector<2x32xf32>
    %cst_180 = arith.constant 1.000000e+00 : f32
    %430 = vector.broadcast %cst_180 : f32 to vector<2x32xf32>
    %431 = arith.addf %430, %429 : vector<2x32xf32>
    %432 = arith.divf %430, %431 : vector<2x32xf32>
    %433 = vector.extract_strided_slice %419 {offsets = [0, 64], sizes = [2, 32], strides = [1, 1]} : vector<2x128xf32> to vector<2x32xf32>
    %434 = math.tanh %433 : vector<2x32xf32>
    %435 = vector.extract_strided_slice %419 {offsets = [0, 96], sizes = [2, 32], strides = [1, 1]} : vector<2x128xf32> to vector<2x32xf32>
    %436 = arith.negf %435 : vector<2x32xf32>
    %437 = math.exp %436 : vector<2x32xf32>
    %cst_181 = arith.constant 1.000000e+00 : f32
    %438 = vector.broadcast %cst_181 : f32 to vector<2x32xf32>
    %439 = arith.addf %438, %437 : vector<2x32xf32>
    %440 = arith.divf %438, %439 : vector<2x32xf32>
    %441 = arith.mulf %432, %420 : vector<2x32xf32>
    %442 = arith.mulf %426, %434 : vector<2x32xf32>
    %443 = arith.addf %441, %442 : vector<2x32xf32>
    %444 = math.tanh %443 : vector<2x32xf32>
    %445 = arith.mulf %440, %444 : vector<2x32xf32>
    %c0_182 = arith.constant 0 : index
    %c0_183 = arith.constant 0 : index
    %446 = vector.load %arg9[%c0_182, %c0_183] : memref<2x32xf32, #tpu.memory_space<vmem>>, vector<2x32xf32>
    tpu.vector_store %arg9[%c0_182, %c0_183], %445 {strides = array<i32>} : memref<2x32xf32, #tpu.memory_space<vmem>>, vector<2x32xf32>,
    %c0_184 = arith.constant 0 : index
    %c0_185 = arith.constant 0 : index
    %447 = vector.load %arg11[%c0_184, %c0_185] : memref<2x32xf32, #tpu.memory_space<vmem>>, vector<2x32xf32>
    tpu.vector_store %arg11[%c0_184, %c0_185], %443 {strides = array<i32>} : memref<2x32xf32, #tpu.memory_space<vmem>>, vector<2x32xf32>,
    %448 = arith.index_cast %c5_i32 : i32 to index
    %c0_186 = arith.constant 0 : index
    %c0_187 = arith.constant 0 : index
    %449 = vector.load %arg7[%448, %c0_186, %c0_187] : memref<8x2x32xf32, #tpu.memory_space<vmem>>, vector<1x2x32xf32>
    %450 = vector.shape_cast %449 : vector<1x2x32xf32> to vector<2x32xf32>
    %451 = vector.shape_cast %445 : vector<2x32xf32> to vector<1x2x32xf32>
    tpu.vector_store %arg7[%448, %c0_186, %c0_187], %451 {strides = array<i32>} : memref<8x2x32xf32, #tpu.memory_space<vmem>>, vector<1x2x32xf32>,
    %c7_i32_188 = arith.constant 7 : i32
    %452 = arith.subi %c7_i32_188, %c5_i32 : i32
    %c0_189 = arith.constant 0 : index
    %c0_190 = arith.constant 0 : index
    %453 = vector.load %arg10[%c0_189, %c0_190] : memref<2x32xf32, #tpu.memory_space<vmem>>, vector<2x32xf32>
    %cst_191 = arith.constant dense<0.000000e+00> : vector<2x128xf32>
    %454 = tpu.matmul %453, %4, %cst_191 {dimension_numbers = #tpu.dot_dimension_numbers<[1], [0], [0], [1], [0, 0, 1, 1], [], []>} : vector<2x32xf32>, vector<32x128xf32>, vector<2x128xf32> -> vector<2x128xf32>
    %455 = arith.index_cast %452 : i32 to index
    %c0_192 = arith.constant 0 : index
    %c0_193 = arith.constant 0 : index
    %456 = vector.load %arg2[%455, %c0_192, %c0_193] : memref<8x2x128xf32, #tpu.memory_space<vmem>>, vector<1x2x128xf32>
    %457 = vector.shape_cast %456 : vector<1x2x128xf32> to vector<2x128xf32>
    %458 = arith.addf %454, %457 : vector<2x128xf32>
    %459 = vector.broadcast %6 : vector<1x128xf32> to vector<2x128xf32>
    %460 = arith.addf %458, %459 : vector<2x128xf32>
    %c0_194 = arith.constant 0 : index
    %c0_195 = arith.constant 0 : index
    %461 = vector.load %arg12[%c0_194, %c0_195] : memref<2x32xf32, #tpu.memory_space<vmem>>, vector<2x32xf32>
    %462 = vector.extract_strided_slice %460 {offsets = [0, 0], sizes = [2, 32], strides = [1, 1]} : vector<2x128xf32> to vector<2x32xf32>
    %463 = arith.negf %462 : vector<2x32xf32>
    %464 = math.exp %463 : vector<2x32xf32>
    %cst_196 = arith.constant 1.000000e+00 : f32
    %465 = vector.broadcast %cst_196 : f32 to vector<2x32xf32>
    %466 = arith.addf %465, %464 : vector<2x32xf32>
    %467 = arith.divf %465, %466 : vector<2x32xf32>
    %468 = vector.extract_strided_slice %460 {offsets = [0, 32], sizes = [2, 32], strides = [1, 1]} : vector<2x128xf32> to vector<2x32xf32>
    %469 = arith.negf %468 : vector<2x32xf32>
    %470 = math.exp %469 : vector<2x32xf32>
    %cst_197 = arith.constant 1.000000e+00 : f32
    %471 = vector.broadcast %cst_197 : f32 to vector<2x32xf32>
    %472 = arith.addf %471, %470 : vector<2x32xf32>
    %473 = arith.divf %471, %472 : vector<2x32xf32>
    %474 = vector.extract_strided_slice %460 {offsets = [0, 64], sizes = [2, 32], strides = [1, 1]} : vector<2x128xf32> to vector<2x32xf32>
    %475 = math.tanh %474 : vector<2x32xf32>
    %476 = vector.extract_strided_slice %460 {offsets = [0, 96], sizes = [2, 32], strides = [1, 1]} : vector<2x128xf32> to vector<2x32xf32>
    %477 = arith.negf %476 : vector<2x32xf32>
    %478 = math.exp %477 : vector<2x32xf32>
    %cst_198 = arith.constant 1.000000e+00 : f32
    %479 = vector.broadcast %cst_198 : f32 to vector<2x32xf32>
    %480 = arith.addf %479, %478 : vector<2x32xf32>
    %481 = arith.divf %479, %480 : vector<2x32xf32>
    %482 = arith.mulf %473, %461 : vector<2x32xf32>
    %483 = arith.mulf %467, %475 : vector<2x32xf32>
    %484 = arith.addf %482, %483 : vector<2x32xf32>
    %485 = math.tanh %484 : vector<2x32xf32>
    %486 = arith.mulf %481, %485 : vector<2x32xf32>
    %c0_199 = arith.constant 0 : index
    %c0_200 = arith.constant 0 : index
    %487 = vector.load %arg10[%c0_199, %c0_200] : memref<2x32xf32, #tpu.memory_space<vmem>>, vector<2x32xf32>
    tpu.vector_store %arg10[%c0_199, %c0_200], %486 {strides = array<i32>} : memref<2x32xf32, #tpu.memory_space<vmem>>, vector<2x32xf32>,
    %c0_201 = arith.constant 0 : index
    %c0_202 = arith.constant 0 : index
    %488 = vector.load %arg12[%c0_201, %c0_202] : memref<2x32xf32, #tpu.memory_space<vmem>>, vector<2x32xf32>
    tpu.vector_store %arg12[%c0_201, %c0_202], %484 {strides = array<i32>} : memref<2x32xf32, #tpu.memory_space<vmem>>, vector<2x32xf32>,
    %489 = arith.index_cast %452 : i32 to index
    %c0_203 = arith.constant 0 : index
    %c0_204 = arith.constant 0 : index
    %490 = vector.load %arg8[%489, %c0_203, %c0_204] : memref<8x2x32xf32, #tpu.memory_space<vmem>>, vector<1x2x32xf32>
    %491 = vector.shape_cast %490 : vector<1x2x32xf32> to vector<2x32xf32>
    %492 = vector.shape_cast %486 : vector<2x32xf32> to vector<1x2x32xf32>
    tpu.vector_store %arg8[%489, %c0_203, %c0_204], %492 {strides = array<i32>} : memref<8x2x32xf32, #tpu.memory_space<vmem>>, vector<1x2x32xf32>,
    %c6_i32 = arith.constant 6 : i32
    %c0_205 = arith.constant 0 : index
    %c0_206 = arith.constant 0 : index
    %493 = vector.load %arg9[%c0_205, %c0_206] : memref<2x32xf32, #tpu.memory_space<vmem>>, vector<2x32xf32>
    %cst_207 = arith.constant dense<0.000000e+00> : vector<2x128xf32>
    %494 = tpu.matmul %493, %3, %cst_207 {dimension_numbers = #tpu.dot_dimension_numbers<[1], [0], [0], [1], [0, 0, 1, 1], [], []>} : vector<2x32xf32>, vector<32x128xf32>, vector<2x128xf32> -> vector<2x128xf32>
    %495 = arith.index_cast %c6_i32 : i32 to index
    %c0_208 = arith.constant 0 : index
    %c0_209 = arith.constant 0 : index
    %496 = vector.load %arg1[%495, %c0_208, %c0_209] : memref<8x2x128xf32, #tpu.memory_space<vmem>>, vector<1x2x128xf32>
    %497 = vector.shape_cast %496 : vector<1x2x128xf32> to vector<2x128xf32>
    %498 = arith.addf %494, %497 : vector<2x128xf32>
    %499 = vector.broadcast %5 : vector<1x128xf32> to vector<2x128xf32>
    %500 = arith.addf %498, %499 : vector<2x128xf32>
    %c0_210 = arith.constant 0 : index
    %c0_211 = arith.constant 0 : index
    %501 = vector.load %arg11[%c0_210, %c0_211] : memref<2x32xf32, #tpu.memory_space<vmem>>, vector<2x32xf32>
    %502 = vector.extract_strided_slice %500 {offsets = [0, 0], sizes = [2, 32], strides = [1, 1]} : vector<2x128xf32> to vector<2x32xf32>
    %503 = arith.negf %502 : vector<2x32xf32>
    %504 = math.exp %503 : vector<2x32xf32>
    %cst_212 = arith.constant 1.000000e+00 : f32
    %505 = vector.broadcast %cst_212 : f32 to vector<2x32xf32>
    %506 = arith.addf %505, %504 : vector<2x32xf32>
    %507 = arith.divf %505, %506 : vector<2x32xf32>
    %508 = vector.extract_strided_slice %500 {offsets = [0, 32], sizes = [2, 32], strides = [1, 1]} : vector<2x128xf32> to vector<2x32xf32>
    %509 = arith.negf %508 : vector<2x32xf32>
    %510 = math.exp %509 : vector<2x32xf32>
    %cst_213 = arith.constant 1.000000e+00 : f32
    %511 = vector.broadcast %cst_213 : f32 to vector<2x32xf32>
    %512 = arith.addf %511, %510 : vector<2x32xf32>
    %513 = arith.divf %511, %512 : vector<2x32xf32>
    %514 = vector.extract_strided_slice %500 {offsets = [0, 64], sizes = [2, 32], strides = [1, 1]} : vector<2x128xf32> to vector<2x32xf32>
    %515 = math.tanh %514 : vector<2x32xf32>
    %516 = vector.extract_strided_slice %500 {offsets = [0, 96], sizes = [2, 32], strides = [1, 1]} : vector<2x128xf32> to vector<2x32xf32>
    %517 = arith.negf %516 : vector<2x32xf32>
    %518 = math.exp %517 : vector<2x32xf32>
    %cst_214 = arith.constant 1.000000e+00 : f32
    %519 = vector.broadcast %cst_214 : f32 to vector<2x32xf32>
    %520 = arith.addf %519, %518 : vector<2x32xf32>
    %521 = arith.divf %519, %520 : vector<2x32xf32>
    %522 = arith.mulf %513, %501 : vector<2x32xf32>
    %523 = arith.mulf %507, %515 : vector<2x32xf32>
    %524 = arith.addf %522, %523 : vector<2x32xf32>
    %525 = math.tanh %524 : vector<2x32xf32>
    %526 = arith.mulf %521, %525 : vector<2x32xf32>
    %c0_215 = arith.constant 0 : index
    %c0_216 = arith.constant 0 : index
    %527 = vector.load %arg9[%c0_215, %c0_216] : memref<2x32xf32, #tpu.memory_space<vmem>>, vector<2x32xf32>
    tpu.vector_store %arg9[%c0_215, %c0_216], %526 {strides = array<i32>} : memref<2x32xf32, #tpu.memory_space<vmem>>, vector<2x32xf32>,
    %c0_217 = arith.constant 0 : index
    %c0_218 = arith.constant 0 : index
    %528 = vector.load %arg11[%c0_217, %c0_218] : memref<2x32xf32, #tpu.memory_space<vmem>>, vector<2x32xf32>
    tpu.vector_store %arg11[%c0_217, %c0_218], %524 {strides = array<i32>} : memref<2x32xf32, #tpu.memory_space<vmem>>, vector<2x32xf32>,
    %529 = arith.index_cast %c6_i32 : i32 to index
    %c0_219 = arith.constant 0 : index
    %c0_220 = arith.constant 0 : index
    %530 = vector.load %arg7[%529, %c0_219, %c0_220] : memref<8x2x32xf32, #tpu.memory_space<vmem>>, vector<1x2x32xf32>
    %531 = vector.shape_cast %530 : vector<1x2x32xf32> to vector<2x32xf32>
    %532 = vector.shape_cast %526 : vector<2x32xf32> to vector<1x2x32xf32>
    tpu.vector_store %arg7[%529, %c0_219, %c0_220], %532 {strides = array<i32>} : memref<8x2x32xf32, #tpu.memory_space<vmem>>, vector<1x2x32xf32>,
    %c7_i32_221 = arith.constant 7 : i32
    %533 = arith.subi %c7_i32_221, %c6_i32 : i32
    %c0_222 = arith.constant 0 : index
    %c0_223 = arith.constant 0 : index
    %534 = vector.load %arg10[%c0_222, %c0_223] : memref<2x32xf32, #tpu.memory_space<vmem>>, vector<2x32xf32>
    %cst_224 = arith.constant dense<0.000000e+00> : vector<2x128xf32>
    %535 = tpu.matmul %534, %4, %cst_224 {dimension_numbers = #tpu.dot_dimension_numbers<[1], [0], [0], [1], [0, 0, 1, 1], [], []>} : vector<2x32xf32>, vector<32x128xf32>, vector<2x128xf32> -> vector<2x128xf32>
    %536 = arith.index_cast %533 : i32 to index
    %c0_225 = arith.constant 0 : index
    %c0_226 = arith.constant 0 : index
    %537 = vector.load %arg2[%536, %c0_225, %c0_226] : memref<8x2x128xf32, #tpu.memory_space<vmem>>, vector<1x2x128xf32>
    %538 = vector.shape_cast %537 : vector<1x2x128xf32> to vector<2x128xf32>
    %539 = arith.addf %535, %538 : vector<2x128xf32>
    %540 = vector.broadcast %6 : vector<1x128xf32> to vector<2x128xf32>
    %541 = arith.addf %539, %540 : vector<2x128xf32>
    %c0_227 = arith.constant 0 : index
    %c0_228 = arith.constant 0 : index
    %542 = vector.load %arg12[%c0_227, %c0_228] : memref<2x32xf32, #tpu.memory_space<vmem>>, vector<2x32xf32>
    %543 = vector.extract_strided_slice %541 {offsets = [0, 0], sizes = [2, 32], strides = [1, 1]} : vector<2x128xf32> to vector<2x32xf32>
    %544 = arith.negf %543 : vector<2x32xf32>
    %545 = math.exp %544 : vector<2x32xf32>
    %cst_229 = arith.constant 1.000000e+00 : f32
    %546 = vector.broadcast %cst_229 : f32 to vector<2x32xf32>
    %547 = arith.addf %546, %545 : vector<2x32xf32>
    %548 = arith.divf %546, %547 : vector<2x32xf32>
    %549 = vector.extract_strided_slice %541 {offsets = [0, 32], sizes = [2, 32], strides = [1, 1]} : vector<2x128xf32> to vector<2x32xf32>
    %550 = arith.negf %549 : vector<2x32xf32>
    %551 = math.exp %550 : vector<2x32xf32>
    %cst_230 = arith.constant 1.000000e+00 : f32
    %552 = vector.broadcast %cst_230 : f32 to vector<2x32xf32>
    %553 = arith.addf %552, %551 : vector<2x32xf32>
    %554 = arith.divf %552, %553 : vector<2x32xf32>
    %555 = vector.extract_strided_slice %541 {offsets = [0, 64], sizes = [2, 32], strides = [1, 1]} : vector<2x128xf32> to vector<2x32xf32>
    %556 = math.tanh %555 : vector<2x32xf32>
    %557 = vector.extract_strided_slice %541 {offsets = [0, 96], sizes = [2, 32], strides = [1, 1]} : vector<2x128xf32> to vector<2x32xf32>
    %558 = arith.negf %557 : vector<2x32xf32>
    %559 = math.exp %558 : vector<2x32xf32>
    %cst_231 = arith.constant 1.000000e+00 : f32
    %560 = vector.broadcast %cst_231 : f32 to vector<2x32xf32>
    %561 = arith.addf %560, %559 : vector<2x32xf32>
    %562 = arith.divf %560, %561 : vector<2x32xf32>
    %563 = arith.mulf %554, %542 : vector<2x32xf32>
    %564 = arith.mulf %548, %556 : vector<2x32xf32>
    %565 = arith.addf %563, %564 : vector<2x32xf32>
    %566 = math.tanh %565 : vector<2x32xf32>
    %567 = arith.mulf %562, %566 : vector<2x32xf32>
    %c0_232 = arith.constant 0 : index
    %c0_233 = arith.constant 0 : index
    %568 = vector.load %arg10[%c0_232, %c0_233] : memref<2x32xf32, #tpu.memory_space<vmem>>, vector<2x32xf32>
    tpu.vector_store %arg10[%c0_232, %c0_233], %567 {strides = array<i32>} : memref<2x32xf32, #tpu.memory_space<vmem>>, vector<2x32xf32>,
    %c0_234 = arith.constant 0 : index
    %c0_235 = arith.constant 0 : index
    %569 = vector.load %arg12[%c0_234, %c0_235] : memref<2x32xf32, #tpu.memory_space<vmem>>, vector<2x32xf32>
    tpu.vector_store %arg12[%c0_234, %c0_235], %565 {strides = array<i32>} : memref<2x32xf32, #tpu.memory_space<vmem>>, vector<2x32xf32>,
    %570 = arith.index_cast %533 : i32 to index
    %c0_236 = arith.constant 0 : index
    %c0_237 = arith.constant 0 : index
    %571 = vector.load %arg8[%570, %c0_236, %c0_237] : memref<8x2x32xf32, #tpu.memory_space<vmem>>, vector<1x2x32xf32>
    %572 = vector.shape_cast %571 : vector<1x2x32xf32> to vector<2x32xf32>
    %573 = vector.shape_cast %567 : vector<2x32xf32> to vector<1x2x32xf32>
    tpu.vector_store %arg8[%570, %c0_236, %c0_237], %573 {strides = array<i32>} : memref<8x2x32xf32, #tpu.memory_space<vmem>>, vector<1x2x32xf32>,
    %c7_i32_238 = arith.constant 7 : i32
    %c0_239 = arith.constant 0 : index
    %c0_240 = arith.constant 0 : index
    %574 = vector.load %arg9[%c0_239, %c0_240] : memref<2x32xf32, #tpu.memory_space<vmem>>, vector<2x32xf32>
    %cst_241 = arith.constant dense<0.000000e+00> : vector<2x128xf32>
    %575 = tpu.matmul %574, %3, %cst_241 {dimension_numbers = #tpu.dot_dimension_numbers<[1], [0], [0], [1], [0, 0, 1, 1], [], []>} : vector<2x32xf32>, vector<32x128xf32>, vector<2x128xf32> -> vector<2x128xf32>
    %576 = arith.index_cast %c7_i32_238 : i32 to index
    %c0_242 = arith.constant 0 : index
    %c0_243 = arith.constant 0 : index
    %577 = vector.load %arg1[%576, %c0_242, %c0_243] : memref<8x2x128xf32, #tpu.memory_space<vmem>>, vector<1x2x128xf32>
    %578 = vector.shape_cast %577 : vector<1x2x128xf32> to vector<2x128xf32>
    %579 = arith.addf %575, %578 : vector<2x128xf32>
    %580 = vector.broadcast %5 : vector<1x128xf32> to vector<2x128xf32>
    %581 = arith.addf %579, %580 : vector<2x128xf32>
    %c0_244 = arith.constant 0 : index
    %c0_245 = arith.constant 0 : index
    %582 = vector.load %arg11[%c0_244, %c0_245] : memref<2x32xf32, #tpu.memory_space<vmem>>, vector<2x32xf32>
    %583 = vector.extract_strided_slice %581 {offsets = [0, 0], sizes = [2, 32], strides = [1, 1]} : vector<2x128xf32> to vector<2x32xf32>
    %584 = arith.negf %583 : vector<2x32xf32>
    %585 = math.exp %584 : vector<2x32xf32>
    %cst_246 = arith.constant 1.000000e+00 : f32
    %586 = vector.broadcast %cst_246 : f32 to vector<2x32xf32>
    %587 = arith.addf %586, %585 : vector<2x32xf32>
    %588 = arith.divf %586, %587 : vector<2x32xf32>
    %589 = vector.extract_strided_slice %581 {offsets = [0, 32], sizes = [2, 32], strides = [1, 1]} : vector<2x128xf32> to vector<2x32xf32>
    %590 = arith.negf %589 : vector<2x32xf32>
    %591 = math.exp %590 : vector<2x32xf32>
    %cst_247 = arith.constant 1.000000e+00 : f32
    %592 = vector.broadcast %cst_247 : f32 to vector<2x32xf32>
    %593 = arith.addf %592, %591 : vector<2x32xf32>
    %594 = arith.divf %592, %593 : vector<2x32xf32>
    %595 = vector.extract_strided_slice %581 {offsets = [0, 64], sizes = [2, 32], strides = [1, 1]} : vector<2x128xf32> to vector<2x32xf32>
    %596 = math.tanh %595 : vector<2x32xf32>
    %597 = vector.extract_strided_slice %581 {offsets = [0, 96], sizes = [2, 32], strides = [1, 1]} : vector<2x128xf32> to vector<2x32xf32>
    %598 = arith.negf %597 : vector<2x32xf32>
    %599 = math.exp %598 : vector<2x32xf32>
    %cst_248 = arith.constant 1.000000e+00 : f32
    %600 = vector.broadcast %cst_248 : f32 to vector<2x32xf32>
    %601 = arith.addf %600, %599 : vector<2x32xf32>
    %602 = arith.divf %600, %601 : vector<2x32xf32>
    %603 = arith.mulf %594, %582 : vector<2x32xf32>
    %604 = arith.mulf %588, %596 : vector<2x32xf32>
    %605 = arith.addf %603, %604 : vector<2x32xf32>
    %606 = math.tanh %605 : vector<2x32xf32>
    %607 = arith.mulf %602, %606 : vector<2x32xf32>
    %c0_249 = arith.constant 0 : index
    %c0_250 = arith.constant 0 : index
    %608 = vector.load %arg9[%c0_249, %c0_250] : memref<2x32xf32, #tpu.memory_space<vmem>>, vector<2x32xf32>
    tpu.vector_store %arg9[%c0_249, %c0_250], %607 {strides = array<i32>} : memref<2x32xf32, #tpu.memory_space<vmem>>, vector<2x32xf32>,
    %c0_251 = arith.constant 0 : index
    %c0_252 = arith.constant 0 : index
    %609 = vector.load %arg11[%c0_251, %c0_252] : memref<2x32xf32, #tpu.memory_space<vmem>>, vector<2x32xf32>
    tpu.vector_store %arg11[%c0_251, %c0_252], %605 {strides = array<i32>} : memref<2x32xf32, #tpu.memory_space<vmem>>, vector<2x32xf32>,
    %610 = arith.index_cast %c7_i32_238 : i32 to index
    %c0_253 = arith.constant 0 : index
    %c0_254 = arith.constant 0 : index
    %611 = vector.load %arg7[%610, %c0_253, %c0_254] : memref<8x2x32xf32, #tpu.memory_space<vmem>>, vector<1x2x32xf32>
    %612 = vector.shape_cast %611 : vector<1x2x32xf32> to vector<2x32xf32>
    %613 = vector.shape_cast %607 : vector<2x32xf32> to vector<1x2x32xf32>
    tpu.vector_store %arg7[%610, %c0_253, %c0_254], %613 {strides = array<i32>} : memref<8x2x32xf32, #tpu.memory_space<vmem>>, vector<1x2x32xf32>,
    %c7_i32_255 = arith.constant 7 : i32
    %614 = arith.subi %c7_i32_255, %c7_i32_238 : i32
    %c0_256 = arith.constant 0 : index
    %c0_257 = arith.constant 0 : index
    %615 = vector.load %arg10[%c0_256, %c0_257] : memref<2x32xf32, #tpu.memory_space<vmem>>, vector<2x32xf32>
    %cst_258 = arith.constant dense<0.000000e+00> : vector<2x128xf32>
    %616 = tpu.matmul %615, %4, %cst_258 {dimension_numbers = #tpu.dot_dimension_numbers<[1], [0], [0], [1], [0, 0, 1, 1], [], []>} : vector<2x32xf32>, vector<32x128xf32>, vector<2x128xf32> -> vector<2x128xf32>
    %617 = arith.index_cast %614 : i32 to index
    %c0_259 = arith.constant 0 : index
    %c0_260 = arith.constant 0 : index
    %618 = vector.load %arg2[%617, %c0_259, %c0_260] : memref<8x2x128xf32, #tpu.memory_space<vmem>>, vector<1x2x128xf32>
    %619 = vector.shape_cast %618 : vector<1x2x128xf32> to vector<2x128xf32>
    %620 = arith.addf %616, %619 : vector<2x128xf32>
    %621 = vector.broadcast %6 : vector<1x128xf32> to vector<2x128xf32>
    %622 = arith.addf %620, %621 : vector<2x128xf32>
    %c0_261 = arith.constant 0 : index
    %c0_262 = arith.constant 0 : index
    %623 = vector.load %arg12[%c0_261, %c0_262] : memref<2x32xf32, #tpu.memory_space<vmem>>, vector<2x32xf32>
    %624 = vector.extract_strided_slice %622 {offsets = [0, 0], sizes = [2, 32], strides = [1, 1]} : vector<2x128xf32> to vector<2x32xf32>
    %625 = arith.negf %624 : vector<2x32xf32>
    %626 = math.exp %625 : vector<2x32xf32>
    %cst_263 = arith.constant 1.000000e+00 : f32
    %627 = vector.broadcast %cst_263 : f32 to vector<2x32xf32>
    %628 = arith.addf %627, %626 : vector<2x32xf32>
    %629 = arith.divf %627, %628 : vector<2x32xf32>
    %630 = vector.extract_strided_slice %622 {offsets = [0, 32], sizes = [2, 32], strides = [1, 1]} : vector<2x128xf32> to vector<2x32xf32>
    %631 = arith.negf %630 : vector<2x32xf32>
    %632 = math.exp %631 : vector<2x32xf32>
    %cst_264 = arith.constant 1.000000e+00 : f32
    %633 = vector.broadcast %cst_264 : f32 to vector<2x32xf32>
    %634 = arith.addf %633, %632 : vector<2x32xf32>
    %635 = arith.divf %633, %634 : vector<2x32xf32>
    %636 = vector.extract_strided_slice %622 {offsets = [0, 64], sizes = [2, 32], strides = [1, 1]} : vector<2x128xf32> to vector<2x32xf32>
    %637 = math.tanh %636 : vector<2x32xf32>
    %638 = vector.extract_strided_slice %622 {offsets = [0, 96], sizes = [2, 32], strides = [1, 1]} : vector<2x128xf32> to vector<2x32xf32>
    %639 = arith.negf %638 : vector<2x32xf32>
    %640 = math.exp %639 : vector<2x32xf32>
    %cst_265 = arith.constant 1.000000e+00 : f32
    %641 = vector.broadcast %cst_265 : f32 to vector<2x32xf32>
    %642 = arith.addf %641, %640 : vector<2x32xf32>
    %643 = arith.divf %641, %642 : vector<2x32xf32>
    %644 = arith.mulf %635, %623 : vector<2x32xf32>
    %645 = arith.mulf %629, %637 : vector<2x32xf32>
    %646 = arith.addf %644, %645 : vector<2x32xf32>
    %647 = math.tanh %646 : vector<2x32xf32>
    %648 = arith.mulf %643, %647 : vector<2x32xf32>
    %c0_266 = arith.constant 0 : index
    %c0_267 = arith.constant 0 : index
    %649 = vector.load %arg10[%c0_266, %c0_267] : memref<2x32xf32, #tpu.memory_space<vmem>>, vector<2x32xf32>
    tpu.vector_store %arg10[%c0_266, %c0_267], %648 {strides = array<i32>} : memref<2x32xf32, #tpu.memory_space<vmem>>, vector<2x32xf32>,
    %c0_268 = arith.constant 0 : index
    %c0_269 = arith.constant 0 : index
    %650 = vector.load %arg12[%c0_268, %c0_269] : memref<2x32xf32, #tpu.memory_space<vmem>>, vector<2x32xf32>
    tpu.vector_store %arg12[%c0_268, %c0_269], %646 {strides = array<i32>} : memref<2x32xf32, #tpu.memory_space<vmem>>, vector<2x32xf32>,
    %651 = arith.index_cast %614 : i32 to index
    %c0_270 = arith.constant 0 : index
    %c0_271 = arith.constant 0 : index
    %652 = vector.load %arg8[%651, %c0_270, %c0_271] : memref<8x2x32xf32, #tpu.memory_space<vmem>>, vector<1x2x32xf32>
    %653 = vector.shape_cast %652 : vector<1x2x32xf32> to vector<2x32xf32>
    %654 = vector.shape_cast %648 : vector<2x32xf32> to vector<1x2x32xf32>
    tpu.vector_store %arg8[%651, %c0_270, %c0_271], %654 {strides = array<i32>} : memref<8x2x32xf32, #tpu.memory_space<vmem>>, vector<1x2x32xf32>,
    %c8_i32 = arith.constant 8 : i32
    return
  }
  func.func @transform_0(%arg0: i32) -> (i32, i32, i32) {
    %c0_i32 = arith.constant 0 : i32
    %c0_i32_0 = arith.constant 0 : i32
    %c0_i32_1 = arith.constant 0 : i32
    return %arg0, %c0_i32, %c0_i32_0 : i32, i32, i32
  }
  func.func @transform_1(%arg0: i32) -> (i32, i32, i32) {
    %c0_i32 = arith.constant 0 : i32
    %0 = arith.subi %c0_i32, %arg0 : i32
    %c0_i32_0 = arith.constant 0 : i32
    %c1_i32 = arith.constant 1 : i32
    %c0_i32_1 = arith.constant 0 : i32
    return %0, %c0_i32_0, %c1_i32 : i32, i32, i32
  }
  func.func @transform_2(%arg0: i32) -> (i32, i32) {
    %c0_i32 = arith.constant 0 : i32
    %c0_i32_0 = arith.constant 0 : i32
    %c0_i32_1 = arith.constant 0 : i32
    return %c0_i32, %c0_i32_0 : i32, i32
  }
  func.func @transform_3(%arg0: i32) -> (i32, i32) {
    %c0_i32 = arith.constant 0 : i32
    %c0_i32_0 = arith.constant 0 : i32
    %c0_i32_1 = arith.constant 0 : i32
    return %c0_i32, %c0_i32_0 : i32, i32
  }
  func.func @transform_4(%arg0: i32) -> (i32, i32) {
    %c0_i32 = arith.constant 0 : i32
    %c0_i32_0 = arith.constant 0 : i32
    %c0_i32_1 = arith.constant 0 : i32
    return %c0_i32, %c0_i32_0 : i32, i32
  }
  func.func @transform_5(%arg0: i32) -> (i32, i32) {
    %c0_i32 = arith.constant 0 : i32
    %c0_i32_0 = arith.constant 0 : i32
    %c0_i32_1 = arith.constant 0 : i32
    return %c0_i32, %c0_i32_0 : i32, i32
  }
  func.func @transform_6(%arg0: i32) -> (i32, i32, i32) {
    %c0_i32 = arith.constant 0 : i32
    %c0_i32_0 = arith.constant 0 : i32
    %c0_i32_1 = arith.constant 0 : i32
    return %arg0, %c0_i32, %c0_i32_0 : i32, i32, i32
  }
  func.func @transform_7(%arg0: i32) -> (i32, i32, i32) {
    %c0_i32 = arith.constant 0 : i32
    %0 = arith.subi %c0_i32, %arg0 : i32
    %c0_i32_0 = arith.constant 0 : i32
    %c0_i32_1 = arith.constant 0 : i32
    %c0_i32_2 = arith.constant 0 : i32
    return %0, %c0_i32_0, %c0_i32_1 : i32, i32, i32
  }
}

module attributes {stable_mosaic.version = 11 : i64} {
  func.func @_lstm_rec_kernel(%arg0: i32, %arg1: memref<8x2x128xf32, #tpu.memory_space<vmem>>, %arg2: memref<8x2x128xf32, #tpu.memory_space<vmem>>, %arg3: memref<32x128xf32, #tpu.memory_space<vmem>>, %arg4: memref<32x128xf32, #tpu.memory_space<vmem>>, %arg5: memref<1x128xf32, #tpu.memory_space<vmem>>, %arg6: memref<1x128xf32, #tpu.memory_space<vmem>>, %arg7: memref<32x5xf32, #tpu.memory_space<vmem>>, %arg8: memref<32x5xf32, #tpu.memory_space<vmem>>, %arg9: memref<1x5xf32, #tpu.memory_space<vmem>>, %arg10: memref<8x2x32xf32, #tpu.memory_space<vmem>>, %arg11: memref<8x2x32xf32, #tpu.memory_space<vmem>>, %arg12: memref<2x5xf32, #tpu.memory_space<vmem>>, %arg13: memref<2x32xf32, #tpu.memory_space<vmem>>, %arg14: memref<2x32xf32, #tpu.memory_space<vmem>>, %arg15: memref<2x32xf32, #tpu.memory_space<vmem>>, %arg16: memref<2x32xf32, #tpu.memory_space<vmem>>) attributes {dimension_semantics = [#tpu.dimension_semantics<arbitrary>], iteration_bounds = array<i64: 1>, scalar_prefetch = 0 : i64, scratch_operands = 4 : i64, tpu.core_type = #tpu.core_type<tc>, window_params = [{transform_indices = @transform_0, window_bounds = array<i64: 8, 2, 128>}, {transform_indices = @transform_1, window_bounds = array<i64: 8, 2, 128>}, {pipeline_mode = #tpu.pipeline_mode<synchronous>, transform_indices = @transform_2, window_bounds = array<i64: 32, 128>}, {pipeline_mode = #tpu.pipeline_mode<synchronous>, transform_indices = @transform_3, window_bounds = array<i64: 32, 128>}, {pipeline_mode = #tpu.pipeline_mode<synchronous>, transform_indices = @transform_4, window_bounds = array<i64: 1, 128>}, {pipeline_mode = #tpu.pipeline_mode<synchronous>, transform_indices = @transform_5, window_bounds = array<i64: 1, 128>}, {pipeline_mode = #tpu.pipeline_mode<synchronous>, transform_indices = @transform_6, window_bounds = array<i64: 32, 5>}, {pipeline_mode = #tpu.pipeline_mode<synchronous>, transform_indices = @transform_7, window_bounds = array<i64: 32, 5>}, {pipeline_mode = #tpu.pipeline_mode<synchronous>, transform_indices = @transform_8, window_bounds = array<i64: 1, 5>}, {transform_indices = @transform_9, window_bounds = array<i64: 8, 2, 32>}, {transform_indices = @transform_10, window_bounds = array<i64: 8, 2, 32>}, {pipeline_mode = #tpu.pipeline_mode<synchronous>, transform_indices = @transform_11, window_bounds = array<i64: 2, 5>}]} {
    %c0_i32 = arith.constant 0 : i32
    %0 = arith.cmpi eq, %arg0, %c0_i32 : i32
    %1 = arith.extui %0 : i1 to i32
    %c0_i32_0 = arith.constant 0 : i32
    %2 = arith.cmpi ne, %1, %c0_i32_0 : i32
    scf.if %2 {
      %cst_274 = arith.constant 0.000000e+00 : f32
      %658 = vector.broadcast %cst_274 : f32 to vector<2x32xf32>
      %c0_275 = arith.constant 0 : index
      %c0_276 = arith.constant 0 : index
      %659 = vector.load %arg13[%c0_275, %c0_276] : memref<2x32xf32, #tpu.memory_space<vmem>>, vector<2x32xf32>
      tpu.vector_store %arg13[%c0_275, %c0_276], %658 {strides = array<i32>} : memref<2x32xf32, #tpu.memory_space<vmem>>, vector<2x32xf32>,
      %cst_277 = arith.constant 0.000000e+00 : f32
      %660 = vector.broadcast %cst_277 : f32 to vector<2x32xf32>
      %c0_278 = arith.constant 0 : index
      %c0_279 = arith.constant 0 : index
      %661 = vector.load %arg14[%c0_278, %c0_279] : memref<2x32xf32, #tpu.memory_space<vmem>>, vector<2x32xf32>
      tpu.vector_store %arg14[%c0_278, %c0_279], %660 {strides = array<i32>} : memref<2x32xf32, #tpu.memory_space<vmem>>, vector<2x32xf32>,
      %cst_280 = arith.constant 0.000000e+00 : f32
      %662 = vector.broadcast %cst_280 : f32 to vector<2x32xf32>
      %c0_281 = arith.constant 0 : index
      %c0_282 = arith.constant 0 : index
      %663 = vector.load %arg15[%c0_281, %c0_282] : memref<2x32xf32, #tpu.memory_space<vmem>>, vector<2x32xf32>
      tpu.vector_store %arg15[%c0_281, %c0_282], %662 {strides = array<i32>} : memref<2x32xf32, #tpu.memory_space<vmem>>, vector<2x32xf32>,
      %cst_283 = arith.constant 0.000000e+00 : f32
      %664 = vector.broadcast %cst_283 : f32 to vector<2x32xf32>
      %c0_284 = arith.constant 0 : index
      %c0_285 = arith.constant 0 : index
      %665 = vector.load %arg16[%c0_284, %c0_285] : memref<2x32xf32, #tpu.memory_space<vmem>>, vector<2x32xf32>
      tpu.vector_store %arg16[%c0_284, %c0_285], %664 {strides = array<i32>} : memref<2x32xf32, #tpu.memory_space<vmem>>, vector<2x32xf32>,
    } else {
    }
    %c0 = arith.constant 0 : index
    %c0_1 = arith.constant 0 : index
    %3 = vector.load %arg3[%c0, %c0_1] : memref<32x128xf32, #tpu.memory_space<vmem>>, vector<32x128xf32>
    %c0_2 = arith.constant 0 : index
    %c0_3 = arith.constant 0 : index
    %4 = vector.load %arg4[%c0_2, %c0_3] : memref<32x128xf32, #tpu.memory_space<vmem>>, vector<32x128xf32>
    %c0_4 = arith.constant 0 : index
    %c0_5 = arith.constant 0 : index
    %5 = vector.load %arg5[%c0_4, %c0_5] : memref<1x128xf32, #tpu.memory_space<vmem>>, vector<1x128xf32>
    %c0_6 = arith.constant 0 : index
    %c0_7 = arith.constant 0 : index
    %6 = vector.load %arg6[%c0_6, %c0_7] : memref<1x128xf32, #tpu.memory_space<vmem>>, vector<1x128xf32>
    %c0_i32_8 = arith.constant 0 : i32
    %c0_9 = arith.constant 0 : index
    %c0_10 = arith.constant 0 : index
    %7 = vector.load %arg13[%c0_9, %c0_10] : memref<2x32xf32, #tpu.memory_space<vmem>>, vector<2x32xf32>
    %cst = arith.constant dense<0.000000e+00> : vector<2x128xf32>
    %8 = tpu.matmul %7, %3, %cst {dimension_numbers = #tpu.dot_dimension_numbers<[1], [0], [0], [1], [0, 0, 1, 1], [], []>} : vector<2x32xf32>, vector<32x128xf32>, vector<2x128xf32> -> vector<2x128xf32>
    %9 = arith.index_cast %c0_i32_8 : i32 to index
    %c0_11 = arith.constant 0 : index
    %c0_12 = arith.constant 0 : index
    %10 = vector.load %arg1[%9, %c0_11, %c0_12] : memref<8x2x128xf32, #tpu.memory_space<vmem>>, vector<1x2x128xf32>
    %11 = vector.shape_cast %10 : vector<1x2x128xf32> to vector<2x128xf32>
    %12 = arith.addf %8, %11 : vector<2x128xf32>
    %13 = vector.broadcast %5 : vector<1x128xf32> to vector<2x128xf32>
    %14 = arith.addf %12, %13 : vector<2x128xf32>
    %c0_13 = arith.constant 0 : index
    %c0_14 = arith.constant 0 : index
    %15 = vector.load %arg15[%c0_13, %c0_14] : memref<2x32xf32, #tpu.memory_space<vmem>>, vector<2x32xf32>
    %16 = vector.extract_strided_slice %14 {offsets = [0, 0], sizes = [2, 32], strides = [1, 1]} : vector<2x128xf32> to vector<2x32xf32>
    %17 = arith.negf %16 : vector<2x32xf32>
    %18 = math.exp %17 : vector<2x32xf32>
    %cst_15 = arith.constant 1.000000e+00 : f32
    %19 = vector.broadcast %cst_15 : f32 to vector<2x32xf32>
    %20 = arith.addf %19, %18 : vector<2x32xf32>
    %21 = arith.divf %19, %20 : vector<2x32xf32>
    %22 = vector.extract_strided_slice %14 {offsets = [0, 32], sizes = [2, 32], strides = [1, 1]} : vector<2x128xf32> to vector<2x32xf32>
    %23 = arith.negf %22 : vector<2x32xf32>
    %24 = math.exp %23 : vector<2x32xf32>
    %cst_16 = arith.constant 1.000000e+00 : f32
    %25 = vector.broadcast %cst_16 : f32 to vector<2x32xf32>
    %26 = arith.addf %25, %24 : vector<2x32xf32>
    %27 = arith.divf %25, %26 : vector<2x32xf32>
    %28 = vector.extract_strided_slice %14 {offsets = [0, 64], sizes = [2, 32], strides = [1, 1]} : vector<2x128xf32> to vector<2x32xf32>
    %29 = math.tanh %28 : vector<2x32xf32>
    %30 = vector.extract_strided_slice %14 {offsets = [0, 96], sizes = [2, 32], strides = [1, 1]} : vector<2x128xf32> to vector<2x32xf32>
    %31 = arith.negf %30 : vector<2x32xf32>
    %32 = math.exp %31 : vector<2x32xf32>
    %cst_17 = arith.constant 1.000000e+00 : f32
    %33 = vector.broadcast %cst_17 : f32 to vector<2x32xf32>
    %34 = arith.addf %33, %32 : vector<2x32xf32>
    %35 = arith.divf %33, %34 : vector<2x32xf32>
    %36 = arith.mulf %27, %15 : vector<2x32xf32>
    %37 = arith.mulf %21, %29 : vector<2x32xf32>
    %38 = arith.addf %36, %37 : vector<2x32xf32>
    %39 = math.tanh %38 : vector<2x32xf32>
    %40 = arith.mulf %35, %39 : vector<2x32xf32>
    %c0_18 = arith.constant 0 : index
    %c0_19 = arith.constant 0 : index
    %41 = vector.load %arg13[%c0_18, %c0_19] : memref<2x32xf32, #tpu.memory_space<vmem>>, vector<2x32xf32>
    tpu.vector_store %arg13[%c0_18, %c0_19], %40 {strides = array<i32>} : memref<2x32xf32, #tpu.memory_space<vmem>>, vector<2x32xf32>,
    %c0_20 = arith.constant 0 : index
    %c0_21 = arith.constant 0 : index
    %42 = vector.load %arg15[%c0_20, %c0_21] : memref<2x32xf32, #tpu.memory_space<vmem>>, vector<2x32xf32>
    tpu.vector_store %arg15[%c0_20, %c0_21], %38 {strides = array<i32>} : memref<2x32xf32, #tpu.memory_space<vmem>>, vector<2x32xf32>,
    %43 = arith.index_cast %c0_i32_8 : i32 to index
    %c0_22 = arith.constant 0 : index
    %c0_23 = arith.constant 0 : index
    %44 = vector.load %arg10[%43, %c0_22, %c0_23] : memref<8x2x32xf32, #tpu.memory_space<vmem>>, vector<1x2x32xf32>
    %45 = vector.shape_cast %44 : vector<1x2x32xf32> to vector<2x32xf32>
    %46 = vector.shape_cast %40 : vector<2x32xf32> to vector<1x2x32xf32>
    tpu.vector_store %arg10[%43, %c0_22, %c0_23], %46 {strides = array<i32>} : memref<8x2x32xf32, #tpu.memory_space<vmem>>, vector<1x2x32xf32>,
    %c7_i32 = arith.constant 7 : i32
    %47 = arith.subi %c7_i32, %c0_i32_8 : i32
    %c0_24 = arith.constant 0 : index
    %c0_25 = arith.constant 0 : index
    %48 = vector.load %arg14[%c0_24, %c0_25] : memref<2x32xf32, #tpu.memory_space<vmem>>, vector<2x32xf32>
    %cst_26 = arith.constant dense<0.000000e+00> : vector<2x128xf32>
    %49 = tpu.matmul %48, %4, %cst_26 {dimension_numbers = #tpu.dot_dimension_numbers<[1], [0], [0], [1], [0, 0, 1, 1], [], []>} : vector<2x32xf32>, vector<32x128xf32>, vector<2x128xf32> -> vector<2x128xf32>
    %50 = arith.index_cast %47 : i32 to index
    %c0_27 = arith.constant 0 : index
    %c0_28 = arith.constant 0 : index
    %51 = vector.load %arg2[%50, %c0_27, %c0_28] : memref<8x2x128xf32, #tpu.memory_space<vmem>>, vector<1x2x128xf32>
    %52 = vector.shape_cast %51 : vector<1x2x128xf32> to vector<2x128xf32>
    %53 = arith.addf %49, %52 : vector<2x128xf32>
    %54 = vector.broadcast %6 : vector<1x128xf32> to vector<2x128xf32>
    %55 = arith.addf %53, %54 : vector<2x128xf32>
    %c0_29 = arith.constant 0 : index
    %c0_30 = arith.constant 0 : index
    %56 = vector.load %arg16[%c0_29, %c0_30] : memref<2x32xf32, #tpu.memory_space<vmem>>, vector<2x32xf32>
    %57 = vector.extract_strided_slice %55 {offsets = [0, 0], sizes = [2, 32], strides = [1, 1]} : vector<2x128xf32> to vector<2x32xf32>
    %58 = arith.negf %57 : vector<2x32xf32>
    %59 = math.exp %58 : vector<2x32xf32>
    %cst_31 = arith.constant 1.000000e+00 : f32
    %60 = vector.broadcast %cst_31 : f32 to vector<2x32xf32>
    %61 = arith.addf %60, %59 : vector<2x32xf32>
    %62 = arith.divf %60, %61 : vector<2x32xf32>
    %63 = vector.extract_strided_slice %55 {offsets = [0, 32], sizes = [2, 32], strides = [1, 1]} : vector<2x128xf32> to vector<2x32xf32>
    %64 = arith.negf %63 : vector<2x32xf32>
    %65 = math.exp %64 : vector<2x32xf32>
    %cst_32 = arith.constant 1.000000e+00 : f32
    %66 = vector.broadcast %cst_32 : f32 to vector<2x32xf32>
    %67 = arith.addf %66, %65 : vector<2x32xf32>
    %68 = arith.divf %66, %67 : vector<2x32xf32>
    %69 = vector.extract_strided_slice %55 {offsets = [0, 64], sizes = [2, 32], strides = [1, 1]} : vector<2x128xf32> to vector<2x32xf32>
    %70 = math.tanh %69 : vector<2x32xf32>
    %71 = vector.extract_strided_slice %55 {offsets = [0, 96], sizes = [2, 32], strides = [1, 1]} : vector<2x128xf32> to vector<2x32xf32>
    %72 = arith.negf %71 : vector<2x32xf32>
    %73 = math.exp %72 : vector<2x32xf32>
    %cst_33 = arith.constant 1.000000e+00 : f32
    %74 = vector.broadcast %cst_33 : f32 to vector<2x32xf32>
    %75 = arith.addf %74, %73 : vector<2x32xf32>
    %76 = arith.divf %74, %75 : vector<2x32xf32>
    %77 = arith.mulf %68, %56 : vector<2x32xf32>
    %78 = arith.mulf %62, %70 : vector<2x32xf32>
    %79 = arith.addf %77, %78 : vector<2x32xf32>
    %80 = math.tanh %79 : vector<2x32xf32>
    %81 = arith.mulf %76, %80 : vector<2x32xf32>
    %c0_34 = arith.constant 0 : index
    %c0_35 = arith.constant 0 : index
    %82 = vector.load %arg14[%c0_34, %c0_35] : memref<2x32xf32, #tpu.memory_space<vmem>>, vector<2x32xf32>
    tpu.vector_store %arg14[%c0_34, %c0_35], %81 {strides = array<i32>} : memref<2x32xf32, #tpu.memory_space<vmem>>, vector<2x32xf32>,
    %c0_36 = arith.constant 0 : index
    %c0_37 = arith.constant 0 : index
    %83 = vector.load %arg16[%c0_36, %c0_37] : memref<2x32xf32, #tpu.memory_space<vmem>>, vector<2x32xf32>
    tpu.vector_store %arg16[%c0_36, %c0_37], %79 {strides = array<i32>} : memref<2x32xf32, #tpu.memory_space<vmem>>, vector<2x32xf32>,
    %84 = arith.index_cast %47 : i32 to index
    %c0_38 = arith.constant 0 : index
    %c0_39 = arith.constant 0 : index
    %85 = vector.load %arg11[%84, %c0_38, %c0_39] : memref<8x2x32xf32, #tpu.memory_space<vmem>>, vector<1x2x32xf32>
    %86 = vector.shape_cast %85 : vector<1x2x32xf32> to vector<2x32xf32>
    %87 = vector.shape_cast %81 : vector<2x32xf32> to vector<1x2x32xf32>
    tpu.vector_store %arg11[%84, %c0_38, %c0_39], %87 {strides = array<i32>} : memref<8x2x32xf32, #tpu.memory_space<vmem>>, vector<1x2x32xf32>,
    %c1_i32 = arith.constant 1 : i32
    %c0_40 = arith.constant 0 : index
    %c0_41 = arith.constant 0 : index
    %88 = vector.load %arg13[%c0_40, %c0_41] : memref<2x32xf32, #tpu.memory_space<vmem>>, vector<2x32xf32>
    %cst_42 = arith.constant dense<0.000000e+00> : vector<2x128xf32>
    %89 = tpu.matmul %88, %3, %cst_42 {dimension_numbers = #tpu.dot_dimension_numbers<[1], [0], [0], [1], [0, 0, 1, 1], [], []>} : vector<2x32xf32>, vector<32x128xf32>, vector<2x128xf32> -> vector<2x128xf32>
    %90 = arith.index_cast %c1_i32 : i32 to index
    %c0_43 = arith.constant 0 : index
    %c0_44 = arith.constant 0 : index
    %91 = vector.load %arg1[%90, %c0_43, %c0_44] : memref<8x2x128xf32, #tpu.memory_space<vmem>>, vector<1x2x128xf32>
    %92 = vector.shape_cast %91 : vector<1x2x128xf32> to vector<2x128xf32>
    %93 = arith.addf %89, %92 : vector<2x128xf32>
    %94 = vector.broadcast %5 : vector<1x128xf32> to vector<2x128xf32>
    %95 = arith.addf %93, %94 : vector<2x128xf32>
    %c0_45 = arith.constant 0 : index
    %c0_46 = arith.constant 0 : index
    %96 = vector.load %arg15[%c0_45, %c0_46] : memref<2x32xf32, #tpu.memory_space<vmem>>, vector<2x32xf32>
    %97 = vector.extract_strided_slice %95 {offsets = [0, 0], sizes = [2, 32], strides = [1, 1]} : vector<2x128xf32> to vector<2x32xf32>
    %98 = arith.negf %97 : vector<2x32xf32>
    %99 = math.exp %98 : vector<2x32xf32>
    %cst_47 = arith.constant 1.000000e+00 : f32
    %100 = vector.broadcast %cst_47 : f32 to vector<2x32xf32>
    %101 = arith.addf %100, %99 : vector<2x32xf32>
    %102 = arith.divf %100, %101 : vector<2x32xf32>
    %103 = vector.extract_strided_slice %95 {offsets = [0, 32], sizes = [2, 32], strides = [1, 1]} : vector<2x128xf32> to vector<2x32xf32>
    %104 = arith.negf %103 : vector<2x32xf32>
    %105 = math.exp %104 : vector<2x32xf32>
    %cst_48 = arith.constant 1.000000e+00 : f32
    %106 = vector.broadcast %cst_48 : f32 to vector<2x32xf32>
    %107 = arith.addf %106, %105 : vector<2x32xf32>
    %108 = arith.divf %106, %107 : vector<2x32xf32>
    %109 = vector.extract_strided_slice %95 {offsets = [0, 64], sizes = [2, 32], strides = [1, 1]} : vector<2x128xf32> to vector<2x32xf32>
    %110 = math.tanh %109 : vector<2x32xf32>
    %111 = vector.extract_strided_slice %95 {offsets = [0, 96], sizes = [2, 32], strides = [1, 1]} : vector<2x128xf32> to vector<2x32xf32>
    %112 = arith.negf %111 : vector<2x32xf32>
    %113 = math.exp %112 : vector<2x32xf32>
    %cst_49 = arith.constant 1.000000e+00 : f32
    %114 = vector.broadcast %cst_49 : f32 to vector<2x32xf32>
    %115 = arith.addf %114, %113 : vector<2x32xf32>
    %116 = arith.divf %114, %115 : vector<2x32xf32>
    %117 = arith.mulf %108, %96 : vector<2x32xf32>
    %118 = arith.mulf %102, %110 : vector<2x32xf32>
    %119 = arith.addf %117, %118 : vector<2x32xf32>
    %120 = math.tanh %119 : vector<2x32xf32>
    %121 = arith.mulf %116, %120 : vector<2x32xf32>
    %c0_50 = arith.constant 0 : index
    %c0_51 = arith.constant 0 : index
    %122 = vector.load %arg13[%c0_50, %c0_51] : memref<2x32xf32, #tpu.memory_space<vmem>>, vector<2x32xf32>
    tpu.vector_store %arg13[%c0_50, %c0_51], %121 {strides = array<i32>} : memref<2x32xf32, #tpu.memory_space<vmem>>, vector<2x32xf32>,
    %c0_52 = arith.constant 0 : index
    %c0_53 = arith.constant 0 : index
    %123 = vector.load %arg15[%c0_52, %c0_53] : memref<2x32xf32, #tpu.memory_space<vmem>>, vector<2x32xf32>
    tpu.vector_store %arg15[%c0_52, %c0_53], %119 {strides = array<i32>} : memref<2x32xf32, #tpu.memory_space<vmem>>, vector<2x32xf32>,
    %124 = arith.index_cast %c1_i32 : i32 to index
    %c0_54 = arith.constant 0 : index
    %c0_55 = arith.constant 0 : index
    %125 = vector.load %arg10[%124, %c0_54, %c0_55] : memref<8x2x32xf32, #tpu.memory_space<vmem>>, vector<1x2x32xf32>
    %126 = vector.shape_cast %125 : vector<1x2x32xf32> to vector<2x32xf32>
    %127 = vector.shape_cast %121 : vector<2x32xf32> to vector<1x2x32xf32>
    tpu.vector_store %arg10[%124, %c0_54, %c0_55], %127 {strides = array<i32>} : memref<8x2x32xf32, #tpu.memory_space<vmem>>, vector<1x2x32xf32>,
    %c7_i32_56 = arith.constant 7 : i32
    %128 = arith.subi %c7_i32_56, %c1_i32 : i32
    %c0_57 = arith.constant 0 : index
    %c0_58 = arith.constant 0 : index
    %129 = vector.load %arg14[%c0_57, %c0_58] : memref<2x32xf32, #tpu.memory_space<vmem>>, vector<2x32xf32>
    %cst_59 = arith.constant dense<0.000000e+00> : vector<2x128xf32>
    %130 = tpu.matmul %129, %4, %cst_59 {dimension_numbers = #tpu.dot_dimension_numbers<[1], [0], [0], [1], [0, 0, 1, 1], [], []>} : vector<2x32xf32>, vector<32x128xf32>, vector<2x128xf32> -> vector<2x128xf32>
    %131 = arith.index_cast %128 : i32 to index
    %c0_60 = arith.constant 0 : index
    %c0_61 = arith.constant 0 : index
    %132 = vector.load %arg2[%131, %c0_60, %c0_61] : memref<8x2x128xf32, #tpu.memory_space<vmem>>, vector<1x2x128xf32>
    %133 = vector.shape_cast %132 : vector<1x2x128xf32> to vector<2x128xf32>
    %134 = arith.addf %130, %133 : vector<2x128xf32>
    %135 = vector.broadcast %6 : vector<1x128xf32> to vector<2x128xf32>
    %136 = arith.addf %134, %135 : vector<2x128xf32>
    %c0_62 = arith.constant 0 : index
    %c0_63 = arith.constant 0 : index
    %137 = vector.load %arg16[%c0_62, %c0_63] : memref<2x32xf32, #tpu.memory_space<vmem>>, vector<2x32xf32>
    %138 = vector.extract_strided_slice %136 {offsets = [0, 0], sizes = [2, 32], strides = [1, 1]} : vector<2x128xf32> to vector<2x32xf32>
    %139 = arith.negf %138 : vector<2x32xf32>
    %140 = math.exp %139 : vector<2x32xf32>
    %cst_64 = arith.constant 1.000000e+00 : f32
    %141 = vector.broadcast %cst_64 : f32 to vector<2x32xf32>
    %142 = arith.addf %141, %140 : vector<2x32xf32>
    %143 = arith.divf %141, %142 : vector<2x32xf32>
    %144 = vector.extract_strided_slice %136 {offsets = [0, 32], sizes = [2, 32], strides = [1, 1]} : vector<2x128xf32> to vector<2x32xf32>
    %145 = arith.negf %144 : vector<2x32xf32>
    %146 = math.exp %145 : vector<2x32xf32>
    %cst_65 = arith.constant 1.000000e+00 : f32
    %147 = vector.broadcast %cst_65 : f32 to vector<2x32xf32>
    %148 = arith.addf %147, %146 : vector<2x32xf32>
    %149 = arith.divf %147, %148 : vector<2x32xf32>
    %150 = vector.extract_strided_slice %136 {offsets = [0, 64], sizes = [2, 32], strides = [1, 1]} : vector<2x128xf32> to vector<2x32xf32>
    %151 = math.tanh %150 : vector<2x32xf32>
    %152 = vector.extract_strided_slice %136 {offsets = [0, 96], sizes = [2, 32], strides = [1, 1]} : vector<2x128xf32> to vector<2x32xf32>
    %153 = arith.negf %152 : vector<2x32xf32>
    %154 = math.exp %153 : vector<2x32xf32>
    %cst_66 = arith.constant 1.000000e+00 : f32
    %155 = vector.broadcast %cst_66 : f32 to vector<2x32xf32>
    %156 = arith.addf %155, %154 : vector<2x32xf32>
    %157 = arith.divf %155, %156 : vector<2x32xf32>
    %158 = arith.mulf %149, %137 : vector<2x32xf32>
    %159 = arith.mulf %143, %151 : vector<2x32xf32>
    %160 = arith.addf %158, %159 : vector<2x32xf32>
    %161 = math.tanh %160 : vector<2x32xf32>
    %162 = arith.mulf %157, %161 : vector<2x32xf32>
    %c0_67 = arith.constant 0 : index
    %c0_68 = arith.constant 0 : index
    %163 = vector.load %arg14[%c0_67, %c0_68] : memref<2x32xf32, #tpu.memory_space<vmem>>, vector<2x32xf32>
    tpu.vector_store %arg14[%c0_67, %c0_68], %162 {strides = array<i32>} : memref<2x32xf32, #tpu.memory_space<vmem>>, vector<2x32xf32>,
    %c0_69 = arith.constant 0 : index
    %c0_70 = arith.constant 0 : index
    %164 = vector.load %arg16[%c0_69, %c0_70] : memref<2x32xf32, #tpu.memory_space<vmem>>, vector<2x32xf32>
    tpu.vector_store %arg16[%c0_69, %c0_70], %160 {strides = array<i32>} : memref<2x32xf32, #tpu.memory_space<vmem>>, vector<2x32xf32>,
    %165 = arith.index_cast %128 : i32 to index
    %c0_71 = arith.constant 0 : index
    %c0_72 = arith.constant 0 : index
    %166 = vector.load %arg11[%165, %c0_71, %c0_72] : memref<8x2x32xf32, #tpu.memory_space<vmem>>, vector<1x2x32xf32>
    %167 = vector.shape_cast %166 : vector<1x2x32xf32> to vector<2x32xf32>
    %168 = vector.shape_cast %162 : vector<2x32xf32> to vector<1x2x32xf32>
    tpu.vector_store %arg11[%165, %c0_71, %c0_72], %168 {strides = array<i32>} : memref<8x2x32xf32, #tpu.memory_space<vmem>>, vector<1x2x32xf32>,
    %c2_i32 = arith.constant 2 : i32
    %c0_73 = arith.constant 0 : index
    %c0_74 = arith.constant 0 : index
    %169 = vector.load %arg13[%c0_73, %c0_74] : memref<2x32xf32, #tpu.memory_space<vmem>>, vector<2x32xf32>
    %cst_75 = arith.constant dense<0.000000e+00> : vector<2x128xf32>
    %170 = tpu.matmul %169, %3, %cst_75 {dimension_numbers = #tpu.dot_dimension_numbers<[1], [0], [0], [1], [0, 0, 1, 1], [], []>} : vector<2x32xf32>, vector<32x128xf32>, vector<2x128xf32> -> vector<2x128xf32>
    %171 = arith.index_cast %c2_i32 : i32 to index
    %c0_76 = arith.constant 0 : index
    %c0_77 = arith.constant 0 : index
    %172 = vector.load %arg1[%171, %c0_76, %c0_77] : memref<8x2x128xf32, #tpu.memory_space<vmem>>, vector<1x2x128xf32>
    %173 = vector.shape_cast %172 : vector<1x2x128xf32> to vector<2x128xf32>
    %174 = arith.addf %170, %173 : vector<2x128xf32>
    %175 = vector.broadcast %5 : vector<1x128xf32> to vector<2x128xf32>
    %176 = arith.addf %174, %175 : vector<2x128xf32>
    %c0_78 = arith.constant 0 : index
    %c0_79 = arith.constant 0 : index
    %177 = vector.load %arg15[%c0_78, %c0_79] : memref<2x32xf32, #tpu.memory_space<vmem>>, vector<2x32xf32>
    %178 = vector.extract_strided_slice %176 {offsets = [0, 0], sizes = [2, 32], strides = [1, 1]} : vector<2x128xf32> to vector<2x32xf32>
    %179 = arith.negf %178 : vector<2x32xf32>
    %180 = math.exp %179 : vector<2x32xf32>
    %cst_80 = arith.constant 1.000000e+00 : f32
    %181 = vector.broadcast %cst_80 : f32 to vector<2x32xf32>
    %182 = arith.addf %181, %180 : vector<2x32xf32>
    %183 = arith.divf %181, %182 : vector<2x32xf32>
    %184 = vector.extract_strided_slice %176 {offsets = [0, 32], sizes = [2, 32], strides = [1, 1]} : vector<2x128xf32> to vector<2x32xf32>
    %185 = arith.negf %184 : vector<2x32xf32>
    %186 = math.exp %185 : vector<2x32xf32>
    %cst_81 = arith.constant 1.000000e+00 : f32
    %187 = vector.broadcast %cst_81 : f32 to vector<2x32xf32>
    %188 = arith.addf %187, %186 : vector<2x32xf32>
    %189 = arith.divf %187, %188 : vector<2x32xf32>
    %190 = vector.extract_strided_slice %176 {offsets = [0, 64], sizes = [2, 32], strides = [1, 1]} : vector<2x128xf32> to vector<2x32xf32>
    %191 = math.tanh %190 : vector<2x32xf32>
    %192 = vector.extract_strided_slice %176 {offsets = [0, 96], sizes = [2, 32], strides = [1, 1]} : vector<2x128xf32> to vector<2x32xf32>
    %193 = arith.negf %192 : vector<2x32xf32>
    %194 = math.exp %193 : vector<2x32xf32>
    %cst_82 = arith.constant 1.000000e+00 : f32
    %195 = vector.broadcast %cst_82 : f32 to vector<2x32xf32>
    %196 = arith.addf %195, %194 : vector<2x32xf32>
    %197 = arith.divf %195, %196 : vector<2x32xf32>
    %198 = arith.mulf %189, %177 : vector<2x32xf32>
    %199 = arith.mulf %183, %191 : vector<2x32xf32>
    %200 = arith.addf %198, %199 : vector<2x32xf32>
    %201 = math.tanh %200 : vector<2x32xf32>
    %202 = arith.mulf %197, %201 : vector<2x32xf32>
    %c0_83 = arith.constant 0 : index
    %c0_84 = arith.constant 0 : index
    %203 = vector.load %arg13[%c0_83, %c0_84] : memref<2x32xf32, #tpu.memory_space<vmem>>, vector<2x32xf32>
    tpu.vector_store %arg13[%c0_83, %c0_84], %202 {strides = array<i32>} : memref<2x32xf32, #tpu.memory_space<vmem>>, vector<2x32xf32>,
    %c0_85 = arith.constant 0 : index
    %c0_86 = arith.constant 0 : index
    %204 = vector.load %arg15[%c0_85, %c0_86] : memref<2x32xf32, #tpu.memory_space<vmem>>, vector<2x32xf32>
    tpu.vector_store %arg15[%c0_85, %c0_86], %200 {strides = array<i32>} : memref<2x32xf32, #tpu.memory_space<vmem>>, vector<2x32xf32>,
    %205 = arith.index_cast %c2_i32 : i32 to index
    %c0_87 = arith.constant 0 : index
    %c0_88 = arith.constant 0 : index
    %206 = vector.load %arg10[%205, %c0_87, %c0_88] : memref<8x2x32xf32, #tpu.memory_space<vmem>>, vector<1x2x32xf32>
    %207 = vector.shape_cast %206 : vector<1x2x32xf32> to vector<2x32xf32>
    %208 = vector.shape_cast %202 : vector<2x32xf32> to vector<1x2x32xf32>
    tpu.vector_store %arg10[%205, %c0_87, %c0_88], %208 {strides = array<i32>} : memref<8x2x32xf32, #tpu.memory_space<vmem>>, vector<1x2x32xf32>,
    %c7_i32_89 = arith.constant 7 : i32
    %209 = arith.subi %c7_i32_89, %c2_i32 : i32
    %c0_90 = arith.constant 0 : index
    %c0_91 = arith.constant 0 : index
    %210 = vector.load %arg14[%c0_90, %c0_91] : memref<2x32xf32, #tpu.memory_space<vmem>>, vector<2x32xf32>
    %cst_92 = arith.constant dense<0.000000e+00> : vector<2x128xf32>
    %211 = tpu.matmul %210, %4, %cst_92 {dimension_numbers = #tpu.dot_dimension_numbers<[1], [0], [0], [1], [0, 0, 1, 1], [], []>} : vector<2x32xf32>, vector<32x128xf32>, vector<2x128xf32> -> vector<2x128xf32>
    %212 = arith.index_cast %209 : i32 to index
    %c0_93 = arith.constant 0 : index
    %c0_94 = arith.constant 0 : index
    %213 = vector.load %arg2[%212, %c0_93, %c0_94] : memref<8x2x128xf32, #tpu.memory_space<vmem>>, vector<1x2x128xf32>
    %214 = vector.shape_cast %213 : vector<1x2x128xf32> to vector<2x128xf32>
    %215 = arith.addf %211, %214 : vector<2x128xf32>
    %216 = vector.broadcast %6 : vector<1x128xf32> to vector<2x128xf32>
    %217 = arith.addf %215, %216 : vector<2x128xf32>
    %c0_95 = arith.constant 0 : index
    %c0_96 = arith.constant 0 : index
    %218 = vector.load %arg16[%c0_95, %c0_96] : memref<2x32xf32, #tpu.memory_space<vmem>>, vector<2x32xf32>
    %219 = vector.extract_strided_slice %217 {offsets = [0, 0], sizes = [2, 32], strides = [1, 1]} : vector<2x128xf32> to vector<2x32xf32>
    %220 = arith.negf %219 : vector<2x32xf32>
    %221 = math.exp %220 : vector<2x32xf32>
    %cst_97 = arith.constant 1.000000e+00 : f32
    %222 = vector.broadcast %cst_97 : f32 to vector<2x32xf32>
    %223 = arith.addf %222, %221 : vector<2x32xf32>
    %224 = arith.divf %222, %223 : vector<2x32xf32>
    %225 = vector.extract_strided_slice %217 {offsets = [0, 32], sizes = [2, 32], strides = [1, 1]} : vector<2x128xf32> to vector<2x32xf32>
    %226 = arith.negf %225 : vector<2x32xf32>
    %227 = math.exp %226 : vector<2x32xf32>
    %cst_98 = arith.constant 1.000000e+00 : f32
    %228 = vector.broadcast %cst_98 : f32 to vector<2x32xf32>
    %229 = arith.addf %228, %227 : vector<2x32xf32>
    %230 = arith.divf %228, %229 : vector<2x32xf32>
    %231 = vector.extract_strided_slice %217 {offsets = [0, 64], sizes = [2, 32], strides = [1, 1]} : vector<2x128xf32> to vector<2x32xf32>
    %232 = math.tanh %231 : vector<2x32xf32>
    %233 = vector.extract_strided_slice %217 {offsets = [0, 96], sizes = [2, 32], strides = [1, 1]} : vector<2x128xf32> to vector<2x32xf32>
    %234 = arith.negf %233 : vector<2x32xf32>
    %235 = math.exp %234 : vector<2x32xf32>
    %cst_99 = arith.constant 1.000000e+00 : f32
    %236 = vector.broadcast %cst_99 : f32 to vector<2x32xf32>
    %237 = arith.addf %236, %235 : vector<2x32xf32>
    %238 = arith.divf %236, %237 : vector<2x32xf32>
    %239 = arith.mulf %230, %218 : vector<2x32xf32>
    %240 = arith.mulf %224, %232 : vector<2x32xf32>
    %241 = arith.addf %239, %240 : vector<2x32xf32>
    %242 = math.tanh %241 : vector<2x32xf32>
    %243 = arith.mulf %238, %242 : vector<2x32xf32>
    %c0_100 = arith.constant 0 : index
    %c0_101 = arith.constant 0 : index
    %244 = vector.load %arg14[%c0_100, %c0_101] : memref<2x32xf32, #tpu.memory_space<vmem>>, vector<2x32xf32>
    tpu.vector_store %arg14[%c0_100, %c0_101], %243 {strides = array<i32>} : memref<2x32xf32, #tpu.memory_space<vmem>>, vector<2x32xf32>,
    %c0_102 = arith.constant 0 : index
    %c0_103 = arith.constant 0 : index
    %245 = vector.load %arg16[%c0_102, %c0_103] : memref<2x32xf32, #tpu.memory_space<vmem>>, vector<2x32xf32>
    tpu.vector_store %arg16[%c0_102, %c0_103], %241 {strides = array<i32>} : memref<2x32xf32, #tpu.memory_space<vmem>>, vector<2x32xf32>,
    %246 = arith.index_cast %209 : i32 to index
    %c0_104 = arith.constant 0 : index
    %c0_105 = arith.constant 0 : index
    %247 = vector.load %arg11[%246, %c0_104, %c0_105] : memref<8x2x32xf32, #tpu.memory_space<vmem>>, vector<1x2x32xf32>
    %248 = vector.shape_cast %247 : vector<1x2x32xf32> to vector<2x32xf32>
    %249 = vector.shape_cast %243 : vector<2x32xf32> to vector<1x2x32xf32>
    tpu.vector_store %arg11[%246, %c0_104, %c0_105], %249 {strides = array<i32>} : memref<8x2x32xf32, #tpu.memory_space<vmem>>, vector<1x2x32xf32>,
    %c3_i32 = arith.constant 3 : i32
    %c0_106 = arith.constant 0 : index
    %c0_107 = arith.constant 0 : index
    %250 = vector.load %arg13[%c0_106, %c0_107] : memref<2x32xf32, #tpu.memory_space<vmem>>, vector<2x32xf32>
    %cst_108 = arith.constant dense<0.000000e+00> : vector<2x128xf32>
    %251 = tpu.matmul %250, %3, %cst_108 {dimension_numbers = #tpu.dot_dimension_numbers<[1], [0], [0], [1], [0, 0, 1, 1], [], []>} : vector<2x32xf32>, vector<32x128xf32>, vector<2x128xf32> -> vector<2x128xf32>
    %252 = arith.index_cast %c3_i32 : i32 to index
    %c0_109 = arith.constant 0 : index
    %c0_110 = arith.constant 0 : index
    %253 = vector.load %arg1[%252, %c0_109, %c0_110] : memref<8x2x128xf32, #tpu.memory_space<vmem>>, vector<1x2x128xf32>
    %254 = vector.shape_cast %253 : vector<1x2x128xf32> to vector<2x128xf32>
    %255 = arith.addf %251, %254 : vector<2x128xf32>
    %256 = vector.broadcast %5 : vector<1x128xf32> to vector<2x128xf32>
    %257 = arith.addf %255, %256 : vector<2x128xf32>
    %c0_111 = arith.constant 0 : index
    %c0_112 = arith.constant 0 : index
    %258 = vector.load %arg15[%c0_111, %c0_112] : memref<2x32xf32, #tpu.memory_space<vmem>>, vector<2x32xf32>
    %259 = vector.extract_strided_slice %257 {offsets = [0, 0], sizes = [2, 32], strides = [1, 1]} : vector<2x128xf32> to vector<2x32xf32>
    %260 = arith.negf %259 : vector<2x32xf32>
    %261 = math.exp %260 : vector<2x32xf32>
    %cst_113 = arith.constant 1.000000e+00 : f32
    %262 = vector.broadcast %cst_113 : f32 to vector<2x32xf32>
    %263 = arith.addf %262, %261 : vector<2x32xf32>
    %264 = arith.divf %262, %263 : vector<2x32xf32>
    %265 = vector.extract_strided_slice %257 {offsets = [0, 32], sizes = [2, 32], strides = [1, 1]} : vector<2x128xf32> to vector<2x32xf32>
    %266 = arith.negf %265 : vector<2x32xf32>
    %267 = math.exp %266 : vector<2x32xf32>
    %cst_114 = arith.constant 1.000000e+00 : f32
    %268 = vector.broadcast %cst_114 : f32 to vector<2x32xf32>
    %269 = arith.addf %268, %267 : vector<2x32xf32>
    %270 = arith.divf %268, %269 : vector<2x32xf32>
    %271 = vector.extract_strided_slice %257 {offsets = [0, 64], sizes = [2, 32], strides = [1, 1]} : vector<2x128xf32> to vector<2x32xf32>
    %272 = math.tanh %271 : vector<2x32xf32>
    %273 = vector.extract_strided_slice %257 {offsets = [0, 96], sizes = [2, 32], strides = [1, 1]} : vector<2x128xf32> to vector<2x32xf32>
    %274 = arith.negf %273 : vector<2x32xf32>
    %275 = math.exp %274 : vector<2x32xf32>
    %cst_115 = arith.constant 1.000000e+00 : f32
    %276 = vector.broadcast %cst_115 : f32 to vector<2x32xf32>
    %277 = arith.addf %276, %275 : vector<2x32xf32>
    %278 = arith.divf %276, %277 : vector<2x32xf32>
    %279 = arith.mulf %270, %258 : vector<2x32xf32>
    %280 = arith.mulf %264, %272 : vector<2x32xf32>
    %281 = arith.addf %279, %280 : vector<2x32xf32>
    %282 = math.tanh %281 : vector<2x32xf32>
    %283 = arith.mulf %278, %282 : vector<2x32xf32>
    %c0_116 = arith.constant 0 : index
    %c0_117 = arith.constant 0 : index
    %284 = vector.load %arg13[%c0_116, %c0_117] : memref<2x32xf32, #tpu.memory_space<vmem>>, vector<2x32xf32>
    tpu.vector_store %arg13[%c0_116, %c0_117], %283 {strides = array<i32>} : memref<2x32xf32, #tpu.memory_space<vmem>>, vector<2x32xf32>,
    %c0_118 = arith.constant 0 : index
    %c0_119 = arith.constant 0 : index
    %285 = vector.load %arg15[%c0_118, %c0_119] : memref<2x32xf32, #tpu.memory_space<vmem>>, vector<2x32xf32>
    tpu.vector_store %arg15[%c0_118, %c0_119], %281 {strides = array<i32>} : memref<2x32xf32, #tpu.memory_space<vmem>>, vector<2x32xf32>,
    %286 = arith.index_cast %c3_i32 : i32 to index
    %c0_120 = arith.constant 0 : index
    %c0_121 = arith.constant 0 : index
    %287 = vector.load %arg10[%286, %c0_120, %c0_121] : memref<8x2x32xf32, #tpu.memory_space<vmem>>, vector<1x2x32xf32>
    %288 = vector.shape_cast %287 : vector<1x2x32xf32> to vector<2x32xf32>
    %289 = vector.shape_cast %283 : vector<2x32xf32> to vector<1x2x32xf32>
    tpu.vector_store %arg10[%286, %c0_120, %c0_121], %289 {strides = array<i32>} : memref<8x2x32xf32, #tpu.memory_space<vmem>>, vector<1x2x32xf32>,
    %c7_i32_122 = arith.constant 7 : i32
    %290 = arith.subi %c7_i32_122, %c3_i32 : i32
    %c0_123 = arith.constant 0 : index
    %c0_124 = arith.constant 0 : index
    %291 = vector.load %arg14[%c0_123, %c0_124] : memref<2x32xf32, #tpu.memory_space<vmem>>, vector<2x32xf32>
    %cst_125 = arith.constant dense<0.000000e+00> : vector<2x128xf32>
    %292 = tpu.matmul %291, %4, %cst_125 {dimension_numbers = #tpu.dot_dimension_numbers<[1], [0], [0], [1], [0, 0, 1, 1], [], []>} : vector<2x32xf32>, vector<32x128xf32>, vector<2x128xf32> -> vector<2x128xf32>
    %293 = arith.index_cast %290 : i32 to index
    %c0_126 = arith.constant 0 : index
    %c0_127 = arith.constant 0 : index
    %294 = vector.load %arg2[%293, %c0_126, %c0_127] : memref<8x2x128xf32, #tpu.memory_space<vmem>>, vector<1x2x128xf32>
    %295 = vector.shape_cast %294 : vector<1x2x128xf32> to vector<2x128xf32>
    %296 = arith.addf %292, %295 : vector<2x128xf32>
    %297 = vector.broadcast %6 : vector<1x128xf32> to vector<2x128xf32>
    %298 = arith.addf %296, %297 : vector<2x128xf32>
    %c0_128 = arith.constant 0 : index
    %c0_129 = arith.constant 0 : index
    %299 = vector.load %arg16[%c0_128, %c0_129] : memref<2x32xf32, #tpu.memory_space<vmem>>, vector<2x32xf32>
    %300 = vector.extract_strided_slice %298 {offsets = [0, 0], sizes = [2, 32], strides = [1, 1]} : vector<2x128xf32> to vector<2x32xf32>
    %301 = arith.negf %300 : vector<2x32xf32>
    %302 = math.exp %301 : vector<2x32xf32>
    %cst_130 = arith.constant 1.000000e+00 : f32
    %303 = vector.broadcast %cst_130 : f32 to vector<2x32xf32>
    %304 = arith.addf %303, %302 : vector<2x32xf32>
    %305 = arith.divf %303, %304 : vector<2x32xf32>
    %306 = vector.extract_strided_slice %298 {offsets = [0, 32], sizes = [2, 32], strides = [1, 1]} : vector<2x128xf32> to vector<2x32xf32>
    %307 = arith.negf %306 : vector<2x32xf32>
    %308 = math.exp %307 : vector<2x32xf32>
    %cst_131 = arith.constant 1.000000e+00 : f32
    %309 = vector.broadcast %cst_131 : f32 to vector<2x32xf32>
    %310 = arith.addf %309, %308 : vector<2x32xf32>
    %311 = arith.divf %309, %310 : vector<2x32xf32>
    %312 = vector.extract_strided_slice %298 {offsets = [0, 64], sizes = [2, 32], strides = [1, 1]} : vector<2x128xf32> to vector<2x32xf32>
    %313 = math.tanh %312 : vector<2x32xf32>
    %314 = vector.extract_strided_slice %298 {offsets = [0, 96], sizes = [2, 32], strides = [1, 1]} : vector<2x128xf32> to vector<2x32xf32>
    %315 = arith.negf %314 : vector<2x32xf32>
    %316 = math.exp %315 : vector<2x32xf32>
    %cst_132 = arith.constant 1.000000e+00 : f32
    %317 = vector.broadcast %cst_132 : f32 to vector<2x32xf32>
    %318 = arith.addf %317, %316 : vector<2x32xf32>
    %319 = arith.divf %317, %318 : vector<2x32xf32>
    %320 = arith.mulf %311, %299 : vector<2x32xf32>
    %321 = arith.mulf %305, %313 : vector<2x32xf32>
    %322 = arith.addf %320, %321 : vector<2x32xf32>
    %323 = math.tanh %322 : vector<2x32xf32>
    %324 = arith.mulf %319, %323 : vector<2x32xf32>
    %c0_133 = arith.constant 0 : index
    %c0_134 = arith.constant 0 : index
    %325 = vector.load %arg14[%c0_133, %c0_134] : memref<2x32xf32, #tpu.memory_space<vmem>>, vector<2x32xf32>
    tpu.vector_store %arg14[%c0_133, %c0_134], %324 {strides = array<i32>} : memref<2x32xf32, #tpu.memory_space<vmem>>, vector<2x32xf32>,
    %c0_135 = arith.constant 0 : index
    %c0_136 = arith.constant 0 : index
    %326 = vector.load %arg16[%c0_135, %c0_136] : memref<2x32xf32, #tpu.memory_space<vmem>>, vector<2x32xf32>
    tpu.vector_store %arg16[%c0_135, %c0_136], %322 {strides = array<i32>} : memref<2x32xf32, #tpu.memory_space<vmem>>, vector<2x32xf32>,
    %327 = arith.index_cast %290 : i32 to index
    %c0_137 = arith.constant 0 : index
    %c0_138 = arith.constant 0 : index
    %328 = vector.load %arg11[%327, %c0_137, %c0_138] : memref<8x2x32xf32, #tpu.memory_space<vmem>>, vector<1x2x32xf32>
    %329 = vector.shape_cast %328 : vector<1x2x32xf32> to vector<2x32xf32>
    %330 = vector.shape_cast %324 : vector<2x32xf32> to vector<1x2x32xf32>
    tpu.vector_store %arg11[%327, %c0_137, %c0_138], %330 {strides = array<i32>} : memref<8x2x32xf32, #tpu.memory_space<vmem>>, vector<1x2x32xf32>,
    %c4_i32 = arith.constant 4 : i32
    %c0_139 = arith.constant 0 : index
    %c0_140 = arith.constant 0 : index
    %331 = vector.load %arg13[%c0_139, %c0_140] : memref<2x32xf32, #tpu.memory_space<vmem>>, vector<2x32xf32>
    %cst_141 = arith.constant dense<0.000000e+00> : vector<2x128xf32>
    %332 = tpu.matmul %331, %3, %cst_141 {dimension_numbers = #tpu.dot_dimension_numbers<[1], [0], [0], [1], [0, 0, 1, 1], [], []>} : vector<2x32xf32>, vector<32x128xf32>, vector<2x128xf32> -> vector<2x128xf32>
    %333 = arith.index_cast %c4_i32 : i32 to index
    %c0_142 = arith.constant 0 : index
    %c0_143 = arith.constant 0 : index
    %334 = vector.load %arg1[%333, %c0_142, %c0_143] : memref<8x2x128xf32, #tpu.memory_space<vmem>>, vector<1x2x128xf32>
    %335 = vector.shape_cast %334 : vector<1x2x128xf32> to vector<2x128xf32>
    %336 = arith.addf %332, %335 : vector<2x128xf32>
    %337 = vector.broadcast %5 : vector<1x128xf32> to vector<2x128xf32>
    %338 = arith.addf %336, %337 : vector<2x128xf32>
    %c0_144 = arith.constant 0 : index
    %c0_145 = arith.constant 0 : index
    %339 = vector.load %arg15[%c0_144, %c0_145] : memref<2x32xf32, #tpu.memory_space<vmem>>, vector<2x32xf32>
    %340 = vector.extract_strided_slice %338 {offsets = [0, 0], sizes = [2, 32], strides = [1, 1]} : vector<2x128xf32> to vector<2x32xf32>
    %341 = arith.negf %340 : vector<2x32xf32>
    %342 = math.exp %341 : vector<2x32xf32>
    %cst_146 = arith.constant 1.000000e+00 : f32
    %343 = vector.broadcast %cst_146 : f32 to vector<2x32xf32>
    %344 = arith.addf %343, %342 : vector<2x32xf32>
    %345 = arith.divf %343, %344 : vector<2x32xf32>
    %346 = vector.extract_strided_slice %338 {offsets = [0, 32], sizes = [2, 32], strides = [1, 1]} : vector<2x128xf32> to vector<2x32xf32>
    %347 = arith.negf %346 : vector<2x32xf32>
    %348 = math.exp %347 : vector<2x32xf32>
    %cst_147 = arith.constant 1.000000e+00 : f32
    %349 = vector.broadcast %cst_147 : f32 to vector<2x32xf32>
    %350 = arith.addf %349, %348 : vector<2x32xf32>
    %351 = arith.divf %349, %350 : vector<2x32xf32>
    %352 = vector.extract_strided_slice %338 {offsets = [0, 64], sizes = [2, 32], strides = [1, 1]} : vector<2x128xf32> to vector<2x32xf32>
    %353 = math.tanh %352 : vector<2x32xf32>
    %354 = vector.extract_strided_slice %338 {offsets = [0, 96], sizes = [2, 32], strides = [1, 1]} : vector<2x128xf32> to vector<2x32xf32>
    %355 = arith.negf %354 : vector<2x32xf32>
    %356 = math.exp %355 : vector<2x32xf32>
    %cst_148 = arith.constant 1.000000e+00 : f32
    %357 = vector.broadcast %cst_148 : f32 to vector<2x32xf32>
    %358 = arith.addf %357, %356 : vector<2x32xf32>
    %359 = arith.divf %357, %358 : vector<2x32xf32>
    %360 = arith.mulf %351, %339 : vector<2x32xf32>
    %361 = arith.mulf %345, %353 : vector<2x32xf32>
    %362 = arith.addf %360, %361 : vector<2x32xf32>
    %363 = math.tanh %362 : vector<2x32xf32>
    %364 = arith.mulf %359, %363 : vector<2x32xf32>
    %c0_149 = arith.constant 0 : index
    %c0_150 = arith.constant 0 : index
    %365 = vector.load %arg13[%c0_149, %c0_150] : memref<2x32xf32, #tpu.memory_space<vmem>>, vector<2x32xf32>
    tpu.vector_store %arg13[%c0_149, %c0_150], %364 {strides = array<i32>} : memref<2x32xf32, #tpu.memory_space<vmem>>, vector<2x32xf32>,
    %c0_151 = arith.constant 0 : index
    %c0_152 = arith.constant 0 : index
    %366 = vector.load %arg15[%c0_151, %c0_152] : memref<2x32xf32, #tpu.memory_space<vmem>>, vector<2x32xf32>
    tpu.vector_store %arg15[%c0_151, %c0_152], %362 {strides = array<i32>} : memref<2x32xf32, #tpu.memory_space<vmem>>, vector<2x32xf32>,
    %367 = arith.index_cast %c4_i32 : i32 to index
    %c0_153 = arith.constant 0 : index
    %c0_154 = arith.constant 0 : index
    %368 = vector.load %arg10[%367, %c0_153, %c0_154] : memref<8x2x32xf32, #tpu.memory_space<vmem>>, vector<1x2x32xf32>
    %369 = vector.shape_cast %368 : vector<1x2x32xf32> to vector<2x32xf32>
    %370 = vector.shape_cast %364 : vector<2x32xf32> to vector<1x2x32xf32>
    tpu.vector_store %arg10[%367, %c0_153, %c0_154], %370 {strides = array<i32>} : memref<8x2x32xf32, #tpu.memory_space<vmem>>, vector<1x2x32xf32>,
    %c7_i32_155 = arith.constant 7 : i32
    %371 = arith.subi %c7_i32_155, %c4_i32 : i32
    %c0_156 = arith.constant 0 : index
    %c0_157 = arith.constant 0 : index
    %372 = vector.load %arg14[%c0_156, %c0_157] : memref<2x32xf32, #tpu.memory_space<vmem>>, vector<2x32xf32>
    %cst_158 = arith.constant dense<0.000000e+00> : vector<2x128xf32>
    %373 = tpu.matmul %372, %4, %cst_158 {dimension_numbers = #tpu.dot_dimension_numbers<[1], [0], [0], [1], [0, 0, 1, 1], [], []>} : vector<2x32xf32>, vector<32x128xf32>, vector<2x128xf32> -> vector<2x128xf32>
    %374 = arith.index_cast %371 : i32 to index
    %c0_159 = arith.constant 0 : index
    %c0_160 = arith.constant 0 : index
    %375 = vector.load %arg2[%374, %c0_159, %c0_160] : memref<8x2x128xf32, #tpu.memory_space<vmem>>, vector<1x2x128xf32>
    %376 = vector.shape_cast %375 : vector<1x2x128xf32> to vector<2x128xf32>
    %377 = arith.addf %373, %376 : vector<2x128xf32>
    %378 = vector.broadcast %6 : vector<1x128xf32> to vector<2x128xf32>
    %379 = arith.addf %377, %378 : vector<2x128xf32>
    %c0_161 = arith.constant 0 : index
    %c0_162 = arith.constant 0 : index
    %380 = vector.load %arg16[%c0_161, %c0_162] : memref<2x32xf32, #tpu.memory_space<vmem>>, vector<2x32xf32>
    %381 = vector.extract_strided_slice %379 {offsets = [0, 0], sizes = [2, 32], strides = [1, 1]} : vector<2x128xf32> to vector<2x32xf32>
    %382 = arith.negf %381 : vector<2x32xf32>
    %383 = math.exp %382 : vector<2x32xf32>
    %cst_163 = arith.constant 1.000000e+00 : f32
    %384 = vector.broadcast %cst_163 : f32 to vector<2x32xf32>
    %385 = arith.addf %384, %383 : vector<2x32xf32>
    %386 = arith.divf %384, %385 : vector<2x32xf32>
    %387 = vector.extract_strided_slice %379 {offsets = [0, 32], sizes = [2, 32], strides = [1, 1]} : vector<2x128xf32> to vector<2x32xf32>
    %388 = arith.negf %387 : vector<2x32xf32>
    %389 = math.exp %388 : vector<2x32xf32>
    %cst_164 = arith.constant 1.000000e+00 : f32
    %390 = vector.broadcast %cst_164 : f32 to vector<2x32xf32>
    %391 = arith.addf %390, %389 : vector<2x32xf32>
    %392 = arith.divf %390, %391 : vector<2x32xf32>
    %393 = vector.extract_strided_slice %379 {offsets = [0, 64], sizes = [2, 32], strides = [1, 1]} : vector<2x128xf32> to vector<2x32xf32>
    %394 = math.tanh %393 : vector<2x32xf32>
    %395 = vector.extract_strided_slice %379 {offsets = [0, 96], sizes = [2, 32], strides = [1, 1]} : vector<2x128xf32> to vector<2x32xf32>
    %396 = arith.negf %395 : vector<2x32xf32>
    %397 = math.exp %396 : vector<2x32xf32>
    %cst_165 = arith.constant 1.000000e+00 : f32
    %398 = vector.broadcast %cst_165 : f32 to vector<2x32xf32>
    %399 = arith.addf %398, %397 : vector<2x32xf32>
    %400 = arith.divf %398, %399 : vector<2x32xf32>
    %401 = arith.mulf %392, %380 : vector<2x32xf32>
    %402 = arith.mulf %386, %394 : vector<2x32xf32>
    %403 = arith.addf %401, %402 : vector<2x32xf32>
    %404 = math.tanh %403 : vector<2x32xf32>
    %405 = arith.mulf %400, %404 : vector<2x32xf32>
    %c0_166 = arith.constant 0 : index
    %c0_167 = arith.constant 0 : index
    %406 = vector.load %arg14[%c0_166, %c0_167] : memref<2x32xf32, #tpu.memory_space<vmem>>, vector<2x32xf32>
    tpu.vector_store %arg14[%c0_166, %c0_167], %405 {strides = array<i32>} : memref<2x32xf32, #tpu.memory_space<vmem>>, vector<2x32xf32>,
    %c0_168 = arith.constant 0 : index
    %c0_169 = arith.constant 0 : index
    %407 = vector.load %arg16[%c0_168, %c0_169] : memref<2x32xf32, #tpu.memory_space<vmem>>, vector<2x32xf32>
    tpu.vector_store %arg16[%c0_168, %c0_169], %403 {strides = array<i32>} : memref<2x32xf32, #tpu.memory_space<vmem>>, vector<2x32xf32>,
    %408 = arith.index_cast %371 : i32 to index
    %c0_170 = arith.constant 0 : index
    %c0_171 = arith.constant 0 : index
    %409 = vector.load %arg11[%408, %c0_170, %c0_171] : memref<8x2x32xf32, #tpu.memory_space<vmem>>, vector<1x2x32xf32>
    %410 = vector.shape_cast %409 : vector<1x2x32xf32> to vector<2x32xf32>
    %411 = vector.shape_cast %405 : vector<2x32xf32> to vector<1x2x32xf32>
    tpu.vector_store %arg11[%408, %c0_170, %c0_171], %411 {strides = array<i32>} : memref<8x2x32xf32, #tpu.memory_space<vmem>>, vector<1x2x32xf32>,
    %c5_i32 = arith.constant 5 : i32
    %c0_172 = arith.constant 0 : index
    %c0_173 = arith.constant 0 : index
    %412 = vector.load %arg13[%c0_172, %c0_173] : memref<2x32xf32, #tpu.memory_space<vmem>>, vector<2x32xf32>
    %cst_174 = arith.constant dense<0.000000e+00> : vector<2x128xf32>
    %413 = tpu.matmul %412, %3, %cst_174 {dimension_numbers = #tpu.dot_dimension_numbers<[1], [0], [0], [1], [0, 0, 1, 1], [], []>} : vector<2x32xf32>, vector<32x128xf32>, vector<2x128xf32> -> vector<2x128xf32>
    %414 = arith.index_cast %c5_i32 : i32 to index
    %c0_175 = arith.constant 0 : index
    %c0_176 = arith.constant 0 : index
    %415 = vector.load %arg1[%414, %c0_175, %c0_176] : memref<8x2x128xf32, #tpu.memory_space<vmem>>, vector<1x2x128xf32>
    %416 = vector.shape_cast %415 : vector<1x2x128xf32> to vector<2x128xf32>
    %417 = arith.addf %413, %416 : vector<2x128xf32>
    %418 = vector.broadcast %5 : vector<1x128xf32> to vector<2x128xf32>
    %419 = arith.addf %417, %418 : vector<2x128xf32>
    %c0_177 = arith.constant 0 : index
    %c0_178 = arith.constant 0 : index
    %420 = vector.load %arg15[%c0_177, %c0_178] : memref<2x32xf32, #tpu.memory_space<vmem>>, vector<2x32xf32>
    %421 = vector.extract_strided_slice %419 {offsets = [0, 0], sizes = [2, 32], strides = [1, 1]} : vector<2x128xf32> to vector<2x32xf32>
    %422 = arith.negf %421 : vector<2x32xf32>
    %423 = math.exp %422 : vector<2x32xf32>
    %cst_179 = arith.constant 1.000000e+00 : f32
    %424 = vector.broadcast %cst_179 : f32 to vector<2x32xf32>
    %425 = arith.addf %424, %423 : vector<2x32xf32>
    %426 = arith.divf %424, %425 : vector<2x32xf32>
    %427 = vector.extract_strided_slice %419 {offsets = [0, 32], sizes = [2, 32], strides = [1, 1]} : vector<2x128xf32> to vector<2x32xf32>
    %428 = arith.negf %427 : vector<2x32xf32>
    %429 = math.exp %428 : vector<2x32xf32>
    %cst_180 = arith.constant 1.000000e+00 : f32
    %430 = vector.broadcast %cst_180 : f32 to vector<2x32xf32>
    %431 = arith.addf %430, %429 : vector<2x32xf32>
    %432 = arith.divf %430, %431 : vector<2x32xf32>
    %433 = vector.extract_strided_slice %419 {offsets = [0, 64], sizes = [2, 32], strides = [1, 1]} : vector<2x128xf32> to vector<2x32xf32>
    %434 = math.tanh %433 : vector<2x32xf32>
    %435 = vector.extract_strided_slice %419 {offsets = [0, 96], sizes = [2, 32], strides = [1, 1]} : vector<2x128xf32> to vector<2x32xf32>
    %436 = arith.negf %435 : vector<2x32xf32>
    %437 = math.exp %436 : vector<2x32xf32>
    %cst_181 = arith.constant 1.000000e+00 : f32
    %438 = vector.broadcast %cst_181 : f32 to vector<2x32xf32>
    %439 = arith.addf %438, %437 : vector<2x32xf32>
    %440 = arith.divf %438, %439 : vector<2x32xf32>
    %441 = arith.mulf %432, %420 : vector<2x32xf32>
    %442 = arith.mulf %426, %434 : vector<2x32xf32>
    %443 = arith.addf %441, %442 : vector<2x32xf32>
    %444 = math.tanh %443 : vector<2x32xf32>
    %445 = arith.mulf %440, %444 : vector<2x32xf32>
    %c0_182 = arith.constant 0 : index
    %c0_183 = arith.constant 0 : index
    %446 = vector.load %arg13[%c0_182, %c0_183] : memref<2x32xf32, #tpu.memory_space<vmem>>, vector<2x32xf32>
    tpu.vector_store %arg13[%c0_182, %c0_183], %445 {strides = array<i32>} : memref<2x32xf32, #tpu.memory_space<vmem>>, vector<2x32xf32>,
    %c0_184 = arith.constant 0 : index
    %c0_185 = arith.constant 0 : index
    %447 = vector.load %arg15[%c0_184, %c0_185] : memref<2x32xf32, #tpu.memory_space<vmem>>, vector<2x32xf32>
    tpu.vector_store %arg15[%c0_184, %c0_185], %443 {strides = array<i32>} : memref<2x32xf32, #tpu.memory_space<vmem>>, vector<2x32xf32>,
    %448 = arith.index_cast %c5_i32 : i32 to index
    %c0_186 = arith.constant 0 : index
    %c0_187 = arith.constant 0 : index
    %449 = vector.load %arg10[%448, %c0_186, %c0_187] : memref<8x2x32xf32, #tpu.memory_space<vmem>>, vector<1x2x32xf32>
    %450 = vector.shape_cast %449 : vector<1x2x32xf32> to vector<2x32xf32>
    %451 = vector.shape_cast %445 : vector<2x32xf32> to vector<1x2x32xf32>
    tpu.vector_store %arg10[%448, %c0_186, %c0_187], %451 {strides = array<i32>} : memref<8x2x32xf32, #tpu.memory_space<vmem>>, vector<1x2x32xf32>,
    %c7_i32_188 = arith.constant 7 : i32
    %452 = arith.subi %c7_i32_188, %c5_i32 : i32
    %c0_189 = arith.constant 0 : index
    %c0_190 = arith.constant 0 : index
    %453 = vector.load %arg14[%c0_189, %c0_190] : memref<2x32xf32, #tpu.memory_space<vmem>>, vector<2x32xf32>
    %cst_191 = arith.constant dense<0.000000e+00> : vector<2x128xf32>
    %454 = tpu.matmul %453, %4, %cst_191 {dimension_numbers = #tpu.dot_dimension_numbers<[1], [0], [0], [1], [0, 0, 1, 1], [], []>} : vector<2x32xf32>, vector<32x128xf32>, vector<2x128xf32> -> vector<2x128xf32>
    %455 = arith.index_cast %452 : i32 to index
    %c0_192 = arith.constant 0 : index
    %c0_193 = arith.constant 0 : index
    %456 = vector.load %arg2[%455, %c0_192, %c0_193] : memref<8x2x128xf32, #tpu.memory_space<vmem>>, vector<1x2x128xf32>
    %457 = vector.shape_cast %456 : vector<1x2x128xf32> to vector<2x128xf32>
    %458 = arith.addf %454, %457 : vector<2x128xf32>
    %459 = vector.broadcast %6 : vector<1x128xf32> to vector<2x128xf32>
    %460 = arith.addf %458, %459 : vector<2x128xf32>
    %c0_194 = arith.constant 0 : index
    %c0_195 = arith.constant 0 : index
    %461 = vector.load %arg16[%c0_194, %c0_195] : memref<2x32xf32, #tpu.memory_space<vmem>>, vector<2x32xf32>
    %462 = vector.extract_strided_slice %460 {offsets = [0, 0], sizes = [2, 32], strides = [1, 1]} : vector<2x128xf32> to vector<2x32xf32>
    %463 = arith.negf %462 : vector<2x32xf32>
    %464 = math.exp %463 : vector<2x32xf32>
    %cst_196 = arith.constant 1.000000e+00 : f32
    %465 = vector.broadcast %cst_196 : f32 to vector<2x32xf32>
    %466 = arith.addf %465, %464 : vector<2x32xf32>
    %467 = arith.divf %465, %466 : vector<2x32xf32>
    %468 = vector.extract_strided_slice %460 {offsets = [0, 32], sizes = [2, 32], strides = [1, 1]} : vector<2x128xf32> to vector<2x32xf32>
    %469 = arith.negf %468 : vector<2x32xf32>
    %470 = math.exp %469 : vector<2x32xf32>
    %cst_197 = arith.constant 1.000000e+00 : f32
    %471 = vector.broadcast %cst_197 : f32 to vector<2x32xf32>
    %472 = arith.addf %471, %470 : vector<2x32xf32>
    %473 = arith.divf %471, %472 : vector<2x32xf32>
    %474 = vector.extract_strided_slice %460 {offsets = [0, 64], sizes = [2, 32], strides = [1, 1]} : vector<2x128xf32> to vector<2x32xf32>
    %475 = math.tanh %474 : vector<2x32xf32>
    %476 = vector.extract_strided_slice %460 {offsets = [0, 96], sizes = [2, 32], strides = [1, 1]} : vector<2x128xf32> to vector<2x32xf32>
    %477 = arith.negf %476 : vector<2x32xf32>
    %478 = math.exp %477 : vector<2x32xf32>
    %cst_198 = arith.constant 1.000000e+00 : f32
    %479 = vector.broadcast %cst_198 : f32 to vector<2x32xf32>
    %480 = arith.addf %479, %478 : vector<2x32xf32>
    %481 = arith.divf %479, %480 : vector<2x32xf32>
    %482 = arith.mulf %473, %461 : vector<2x32xf32>
    %483 = arith.mulf %467, %475 : vector<2x32xf32>
    %484 = arith.addf %482, %483 : vector<2x32xf32>
    %485 = math.tanh %484 : vector<2x32xf32>
    %486 = arith.mulf %481, %485 : vector<2x32xf32>
    %c0_199 = arith.constant 0 : index
    %c0_200 = arith.constant 0 : index
    %487 = vector.load %arg14[%c0_199, %c0_200] : memref<2x32xf32, #tpu.memory_space<vmem>>, vector<2x32xf32>
    tpu.vector_store %arg14[%c0_199, %c0_200], %486 {strides = array<i32>} : memref<2x32xf32, #tpu.memory_space<vmem>>, vector<2x32xf32>,
    %c0_201 = arith.constant 0 : index
    %c0_202 = arith.constant 0 : index
    %488 = vector.load %arg16[%c0_201, %c0_202] : memref<2x32xf32, #tpu.memory_space<vmem>>, vector<2x32xf32>
    tpu.vector_store %arg16[%c0_201, %c0_202], %484 {strides = array<i32>} : memref<2x32xf32, #tpu.memory_space<vmem>>, vector<2x32xf32>,
    %489 = arith.index_cast %452 : i32 to index
    %c0_203 = arith.constant 0 : index
    %c0_204 = arith.constant 0 : index
    %490 = vector.load %arg11[%489, %c0_203, %c0_204] : memref<8x2x32xf32, #tpu.memory_space<vmem>>, vector<1x2x32xf32>
    %491 = vector.shape_cast %490 : vector<1x2x32xf32> to vector<2x32xf32>
    %492 = vector.shape_cast %486 : vector<2x32xf32> to vector<1x2x32xf32>
    tpu.vector_store %arg11[%489, %c0_203, %c0_204], %492 {strides = array<i32>} : memref<8x2x32xf32, #tpu.memory_space<vmem>>, vector<1x2x32xf32>,
    %c6_i32 = arith.constant 6 : i32
    %c0_205 = arith.constant 0 : index
    %c0_206 = arith.constant 0 : index
    %493 = vector.load %arg13[%c0_205, %c0_206] : memref<2x32xf32, #tpu.memory_space<vmem>>, vector<2x32xf32>
    %cst_207 = arith.constant dense<0.000000e+00> : vector<2x128xf32>
    %494 = tpu.matmul %493, %3, %cst_207 {dimension_numbers = #tpu.dot_dimension_numbers<[1], [0], [0], [1], [0, 0, 1, 1], [], []>} : vector<2x32xf32>, vector<32x128xf32>, vector<2x128xf32> -> vector<2x128xf32>
    %495 = arith.index_cast %c6_i32 : i32 to index
    %c0_208 = arith.constant 0 : index
    %c0_209 = arith.constant 0 : index
    %496 = vector.load %arg1[%495, %c0_208, %c0_209] : memref<8x2x128xf32, #tpu.memory_space<vmem>>, vector<1x2x128xf32>
    %497 = vector.shape_cast %496 : vector<1x2x128xf32> to vector<2x128xf32>
    %498 = arith.addf %494, %497 : vector<2x128xf32>
    %499 = vector.broadcast %5 : vector<1x128xf32> to vector<2x128xf32>
    %500 = arith.addf %498, %499 : vector<2x128xf32>
    %c0_210 = arith.constant 0 : index
    %c0_211 = arith.constant 0 : index
    %501 = vector.load %arg15[%c0_210, %c0_211] : memref<2x32xf32, #tpu.memory_space<vmem>>, vector<2x32xf32>
    %502 = vector.extract_strided_slice %500 {offsets = [0, 0], sizes = [2, 32], strides = [1, 1]} : vector<2x128xf32> to vector<2x32xf32>
    %503 = arith.negf %502 : vector<2x32xf32>
    %504 = math.exp %503 : vector<2x32xf32>
    %cst_212 = arith.constant 1.000000e+00 : f32
    %505 = vector.broadcast %cst_212 : f32 to vector<2x32xf32>
    %506 = arith.addf %505, %504 : vector<2x32xf32>
    %507 = arith.divf %505, %506 : vector<2x32xf32>
    %508 = vector.extract_strided_slice %500 {offsets = [0, 32], sizes = [2, 32], strides = [1, 1]} : vector<2x128xf32> to vector<2x32xf32>
    %509 = arith.negf %508 : vector<2x32xf32>
    %510 = math.exp %509 : vector<2x32xf32>
    %cst_213 = arith.constant 1.000000e+00 : f32
    %511 = vector.broadcast %cst_213 : f32 to vector<2x32xf32>
    %512 = arith.addf %511, %510 : vector<2x32xf32>
    %513 = arith.divf %511, %512 : vector<2x32xf32>
    %514 = vector.extract_strided_slice %500 {offsets = [0, 64], sizes = [2, 32], strides = [1, 1]} : vector<2x128xf32> to vector<2x32xf32>
    %515 = math.tanh %514 : vector<2x32xf32>
    %516 = vector.extract_strided_slice %500 {offsets = [0, 96], sizes = [2, 32], strides = [1, 1]} : vector<2x128xf32> to vector<2x32xf32>
    %517 = arith.negf %516 : vector<2x32xf32>
    %518 = math.exp %517 : vector<2x32xf32>
    %cst_214 = arith.constant 1.000000e+00 : f32
    %519 = vector.broadcast %cst_214 : f32 to vector<2x32xf32>
    %520 = arith.addf %519, %518 : vector<2x32xf32>
    %521 = arith.divf %519, %520 : vector<2x32xf32>
    %522 = arith.mulf %513, %501 : vector<2x32xf32>
    %523 = arith.mulf %507, %515 : vector<2x32xf32>
    %524 = arith.addf %522, %523 : vector<2x32xf32>
    %525 = math.tanh %524 : vector<2x32xf32>
    %526 = arith.mulf %521, %525 : vector<2x32xf32>
    %c0_215 = arith.constant 0 : index
    %c0_216 = arith.constant 0 : index
    %527 = vector.load %arg13[%c0_215, %c0_216] : memref<2x32xf32, #tpu.memory_space<vmem>>, vector<2x32xf32>
    tpu.vector_store %arg13[%c0_215, %c0_216], %526 {strides = array<i32>} : memref<2x32xf32, #tpu.memory_space<vmem>>, vector<2x32xf32>,
    %c0_217 = arith.constant 0 : index
    %c0_218 = arith.constant 0 : index
    %528 = vector.load %arg15[%c0_217, %c0_218] : memref<2x32xf32, #tpu.memory_space<vmem>>, vector<2x32xf32>
    tpu.vector_store %arg15[%c0_217, %c0_218], %524 {strides = array<i32>} : memref<2x32xf32, #tpu.memory_space<vmem>>, vector<2x32xf32>,
    %529 = arith.index_cast %c6_i32 : i32 to index
    %c0_219 = arith.constant 0 : index
    %c0_220 = arith.constant 0 : index
    %530 = vector.load %arg10[%529, %c0_219, %c0_220] : memref<8x2x32xf32, #tpu.memory_space<vmem>>, vector<1x2x32xf32>
    %531 = vector.shape_cast %530 : vector<1x2x32xf32> to vector<2x32xf32>
    %532 = vector.shape_cast %526 : vector<2x32xf32> to vector<1x2x32xf32>
    tpu.vector_store %arg10[%529, %c0_219, %c0_220], %532 {strides = array<i32>} : memref<8x2x32xf32, #tpu.memory_space<vmem>>, vector<1x2x32xf32>,
    %c7_i32_221 = arith.constant 7 : i32
    %533 = arith.subi %c7_i32_221, %c6_i32 : i32
    %c0_222 = arith.constant 0 : index
    %c0_223 = arith.constant 0 : index
    %534 = vector.load %arg14[%c0_222, %c0_223] : memref<2x32xf32, #tpu.memory_space<vmem>>, vector<2x32xf32>
    %cst_224 = arith.constant dense<0.000000e+00> : vector<2x128xf32>
    %535 = tpu.matmul %534, %4, %cst_224 {dimension_numbers = #tpu.dot_dimension_numbers<[1], [0], [0], [1], [0, 0, 1, 1], [], []>} : vector<2x32xf32>, vector<32x128xf32>, vector<2x128xf32> -> vector<2x128xf32>
    %536 = arith.index_cast %533 : i32 to index
    %c0_225 = arith.constant 0 : index
    %c0_226 = arith.constant 0 : index
    %537 = vector.load %arg2[%536, %c0_225, %c0_226] : memref<8x2x128xf32, #tpu.memory_space<vmem>>, vector<1x2x128xf32>
    %538 = vector.shape_cast %537 : vector<1x2x128xf32> to vector<2x128xf32>
    %539 = arith.addf %535, %538 : vector<2x128xf32>
    %540 = vector.broadcast %6 : vector<1x128xf32> to vector<2x128xf32>
    %541 = arith.addf %539, %540 : vector<2x128xf32>
    %c0_227 = arith.constant 0 : index
    %c0_228 = arith.constant 0 : index
    %542 = vector.load %arg16[%c0_227, %c0_228] : memref<2x32xf32, #tpu.memory_space<vmem>>, vector<2x32xf32>
    %543 = vector.extract_strided_slice %541 {offsets = [0, 0], sizes = [2, 32], strides = [1, 1]} : vector<2x128xf32> to vector<2x32xf32>
    %544 = arith.negf %543 : vector<2x32xf32>
    %545 = math.exp %544 : vector<2x32xf32>
    %cst_229 = arith.constant 1.000000e+00 : f32
    %546 = vector.broadcast %cst_229 : f32 to vector<2x32xf32>
    %547 = arith.addf %546, %545 : vector<2x32xf32>
    %548 = arith.divf %546, %547 : vector<2x32xf32>
    %549 = vector.extract_strided_slice %541 {offsets = [0, 32], sizes = [2, 32], strides = [1, 1]} : vector<2x128xf32> to vector<2x32xf32>
    %550 = arith.negf %549 : vector<2x32xf32>
    %551 = math.exp %550 : vector<2x32xf32>
    %cst_230 = arith.constant 1.000000e+00 : f32
    %552 = vector.broadcast %cst_230 : f32 to vector<2x32xf32>
    %553 = arith.addf %552, %551 : vector<2x32xf32>
    %554 = arith.divf %552, %553 : vector<2x32xf32>
    %555 = vector.extract_strided_slice %541 {offsets = [0, 64], sizes = [2, 32], strides = [1, 1]} : vector<2x128xf32> to vector<2x32xf32>
    %556 = math.tanh %555 : vector<2x32xf32>
    %557 = vector.extract_strided_slice %541 {offsets = [0, 96], sizes = [2, 32], strides = [1, 1]} : vector<2x128xf32> to vector<2x32xf32>
    %558 = arith.negf %557 : vector<2x32xf32>
    %559 = math.exp %558 : vector<2x32xf32>
    %cst_231 = arith.constant 1.000000e+00 : f32
    %560 = vector.broadcast %cst_231 : f32 to vector<2x32xf32>
    %561 = arith.addf %560, %559 : vector<2x32xf32>
    %562 = arith.divf %560, %561 : vector<2x32xf32>
    %563 = arith.mulf %554, %542 : vector<2x32xf32>
    %564 = arith.mulf %548, %556 : vector<2x32xf32>
    %565 = arith.addf %563, %564 : vector<2x32xf32>
    %566 = math.tanh %565 : vector<2x32xf32>
    %567 = arith.mulf %562, %566 : vector<2x32xf32>
    %c0_232 = arith.constant 0 : index
    %c0_233 = arith.constant 0 : index
    %568 = vector.load %arg14[%c0_232, %c0_233] : memref<2x32xf32, #tpu.memory_space<vmem>>, vector<2x32xf32>
    tpu.vector_store %arg14[%c0_232, %c0_233], %567 {strides = array<i32>} : memref<2x32xf32, #tpu.memory_space<vmem>>, vector<2x32xf32>,
    %c0_234 = arith.constant 0 : index
    %c0_235 = arith.constant 0 : index
    %569 = vector.load %arg16[%c0_234, %c0_235] : memref<2x32xf32, #tpu.memory_space<vmem>>, vector<2x32xf32>
    tpu.vector_store %arg16[%c0_234, %c0_235], %565 {strides = array<i32>} : memref<2x32xf32, #tpu.memory_space<vmem>>, vector<2x32xf32>,
    %570 = arith.index_cast %533 : i32 to index
    %c0_236 = arith.constant 0 : index
    %c0_237 = arith.constant 0 : index
    %571 = vector.load %arg11[%570, %c0_236, %c0_237] : memref<8x2x32xf32, #tpu.memory_space<vmem>>, vector<1x2x32xf32>
    %572 = vector.shape_cast %571 : vector<1x2x32xf32> to vector<2x32xf32>
    %573 = vector.shape_cast %567 : vector<2x32xf32> to vector<1x2x32xf32>
    tpu.vector_store %arg11[%570, %c0_236, %c0_237], %573 {strides = array<i32>} : memref<8x2x32xf32, #tpu.memory_space<vmem>>, vector<1x2x32xf32>,
    %c7_i32_238 = arith.constant 7 : i32
    %c0_239 = arith.constant 0 : index
    %c0_240 = arith.constant 0 : index
    %574 = vector.load %arg13[%c0_239, %c0_240] : memref<2x32xf32, #tpu.memory_space<vmem>>, vector<2x32xf32>
    %cst_241 = arith.constant dense<0.000000e+00> : vector<2x128xf32>
    %575 = tpu.matmul %574, %3, %cst_241 {dimension_numbers = #tpu.dot_dimension_numbers<[1], [0], [0], [1], [0, 0, 1, 1], [], []>} : vector<2x32xf32>, vector<32x128xf32>, vector<2x128xf32> -> vector<2x128xf32>
    %576 = arith.index_cast %c7_i32_238 : i32 to index
    %c0_242 = arith.constant 0 : index
    %c0_243 = arith.constant 0 : index
    %577 = vector.load %arg1[%576, %c0_242, %c0_243] : memref<8x2x128xf32, #tpu.memory_space<vmem>>, vector<1x2x128xf32>
    %578 = vector.shape_cast %577 : vector<1x2x128xf32> to vector<2x128xf32>
    %579 = arith.addf %575, %578 : vector<2x128xf32>
    %580 = vector.broadcast %5 : vector<1x128xf32> to vector<2x128xf32>
    %581 = arith.addf %579, %580 : vector<2x128xf32>
    %c0_244 = arith.constant 0 : index
    %c0_245 = arith.constant 0 : index
    %582 = vector.load %arg15[%c0_244, %c0_245] : memref<2x32xf32, #tpu.memory_space<vmem>>, vector<2x32xf32>
    %583 = vector.extract_strided_slice %581 {offsets = [0, 0], sizes = [2, 32], strides = [1, 1]} : vector<2x128xf32> to vector<2x32xf32>
    %584 = arith.negf %583 : vector<2x32xf32>
    %585 = math.exp %584 : vector<2x32xf32>
    %cst_246 = arith.constant 1.000000e+00 : f32
    %586 = vector.broadcast %cst_246 : f32 to vector<2x32xf32>
    %587 = arith.addf %586, %585 : vector<2x32xf32>
    %588 = arith.divf %586, %587 : vector<2x32xf32>
    %589 = vector.extract_strided_slice %581 {offsets = [0, 32], sizes = [2, 32], strides = [1, 1]} : vector<2x128xf32> to vector<2x32xf32>
    %590 = arith.negf %589 : vector<2x32xf32>
    %591 = math.exp %590 : vector<2x32xf32>
    %cst_247 = arith.constant 1.000000e+00 : f32
    %592 = vector.broadcast %cst_247 : f32 to vector<2x32xf32>
    %593 = arith.addf %592, %591 : vector<2x32xf32>
    %594 = arith.divf %592, %593 : vector<2x32xf32>
    %595 = vector.extract_strided_slice %581 {offsets = [0, 64], sizes = [2, 32], strides = [1, 1]} : vector<2x128xf32> to vector<2x32xf32>
    %596 = math.tanh %595 : vector<2x32xf32>
    %597 = vector.extract_strided_slice %581 {offsets = [0, 96], sizes = [2, 32], strides = [1, 1]} : vector<2x128xf32> to vector<2x32xf32>
    %598 = arith.negf %597 : vector<2x32xf32>
    %599 = math.exp %598 : vector<2x32xf32>
    %cst_248 = arith.constant 1.000000e+00 : f32
    %600 = vector.broadcast %cst_248 : f32 to vector<2x32xf32>
    %601 = arith.addf %600, %599 : vector<2x32xf32>
    %602 = arith.divf %600, %601 : vector<2x32xf32>
    %603 = arith.mulf %594, %582 : vector<2x32xf32>
    %604 = arith.mulf %588, %596 : vector<2x32xf32>
    %605 = arith.addf %603, %604 : vector<2x32xf32>
    %606 = math.tanh %605 : vector<2x32xf32>
    %607 = arith.mulf %602, %606 : vector<2x32xf32>
    %c0_249 = arith.constant 0 : index
    %c0_250 = arith.constant 0 : index
    %608 = vector.load %arg13[%c0_249, %c0_250] : memref<2x32xf32, #tpu.memory_space<vmem>>, vector<2x32xf32>
    tpu.vector_store %arg13[%c0_249, %c0_250], %607 {strides = array<i32>} : memref<2x32xf32, #tpu.memory_space<vmem>>, vector<2x32xf32>,
    %c0_251 = arith.constant 0 : index
    %c0_252 = arith.constant 0 : index
    %609 = vector.load %arg15[%c0_251, %c0_252] : memref<2x32xf32, #tpu.memory_space<vmem>>, vector<2x32xf32>
    tpu.vector_store %arg15[%c0_251, %c0_252], %605 {strides = array<i32>} : memref<2x32xf32, #tpu.memory_space<vmem>>, vector<2x32xf32>,
    %610 = arith.index_cast %c7_i32_238 : i32 to index
    %c0_253 = arith.constant 0 : index
    %c0_254 = arith.constant 0 : index
    %611 = vector.load %arg10[%610, %c0_253, %c0_254] : memref<8x2x32xf32, #tpu.memory_space<vmem>>, vector<1x2x32xf32>
    %612 = vector.shape_cast %611 : vector<1x2x32xf32> to vector<2x32xf32>
    %613 = vector.shape_cast %607 : vector<2x32xf32> to vector<1x2x32xf32>
    tpu.vector_store %arg10[%610, %c0_253, %c0_254], %613 {strides = array<i32>} : memref<8x2x32xf32, #tpu.memory_space<vmem>>, vector<1x2x32xf32>,
    %c7_i32_255 = arith.constant 7 : i32
    %614 = arith.subi %c7_i32_255, %c7_i32_238 : i32
    %c0_256 = arith.constant 0 : index
    %c0_257 = arith.constant 0 : index
    %615 = vector.load %arg14[%c0_256, %c0_257] : memref<2x32xf32, #tpu.memory_space<vmem>>, vector<2x32xf32>
    %cst_258 = arith.constant dense<0.000000e+00> : vector<2x128xf32>
    %616 = tpu.matmul %615, %4, %cst_258 {dimension_numbers = #tpu.dot_dimension_numbers<[1], [0], [0], [1], [0, 0, 1, 1], [], []>} : vector<2x32xf32>, vector<32x128xf32>, vector<2x128xf32> -> vector<2x128xf32>
    %617 = arith.index_cast %614 : i32 to index
    %c0_259 = arith.constant 0 : index
    %c0_260 = arith.constant 0 : index
    %618 = vector.load %arg2[%617, %c0_259, %c0_260] : memref<8x2x128xf32, #tpu.memory_space<vmem>>, vector<1x2x128xf32>
    %619 = vector.shape_cast %618 : vector<1x2x128xf32> to vector<2x128xf32>
    %620 = arith.addf %616, %619 : vector<2x128xf32>
    %621 = vector.broadcast %6 : vector<1x128xf32> to vector<2x128xf32>
    %622 = arith.addf %620, %621 : vector<2x128xf32>
    %c0_261 = arith.constant 0 : index
    %c0_262 = arith.constant 0 : index
    %623 = vector.load %arg16[%c0_261, %c0_262] : memref<2x32xf32, #tpu.memory_space<vmem>>, vector<2x32xf32>
    %624 = vector.extract_strided_slice %622 {offsets = [0, 0], sizes = [2, 32], strides = [1, 1]} : vector<2x128xf32> to vector<2x32xf32>
    %625 = arith.negf %624 : vector<2x32xf32>
    %626 = math.exp %625 : vector<2x32xf32>
    %cst_263 = arith.constant 1.000000e+00 : f32
    %627 = vector.broadcast %cst_263 : f32 to vector<2x32xf32>
    %628 = arith.addf %627, %626 : vector<2x32xf32>
    %629 = arith.divf %627, %628 : vector<2x32xf32>
    %630 = vector.extract_strided_slice %622 {offsets = [0, 32], sizes = [2, 32], strides = [1, 1]} : vector<2x128xf32> to vector<2x32xf32>
    %631 = arith.negf %630 : vector<2x32xf32>
    %632 = math.exp %631 : vector<2x32xf32>
    %cst_264 = arith.constant 1.000000e+00 : f32
    %633 = vector.broadcast %cst_264 : f32 to vector<2x32xf32>
    %634 = arith.addf %633, %632 : vector<2x32xf32>
    %635 = arith.divf %633, %634 : vector<2x32xf32>
    %636 = vector.extract_strided_slice %622 {offsets = [0, 64], sizes = [2, 32], strides = [1, 1]} : vector<2x128xf32> to vector<2x32xf32>
    %637 = math.tanh %636 : vector<2x32xf32>
    %638 = vector.extract_strided_slice %622 {offsets = [0, 96], sizes = [2, 32], strides = [1, 1]} : vector<2x128xf32> to vector<2x32xf32>
    %639 = arith.negf %638 : vector<2x32xf32>
    %640 = math.exp %639 : vector<2x32xf32>
    %cst_265 = arith.constant 1.000000e+00 : f32
    %641 = vector.broadcast %cst_265 : f32 to vector<2x32xf32>
    %642 = arith.addf %641, %640 : vector<2x32xf32>
    %643 = arith.divf %641, %642 : vector<2x32xf32>
    %644 = arith.mulf %635, %623 : vector<2x32xf32>
    %645 = arith.mulf %629, %637 : vector<2x32xf32>
    %646 = arith.addf %644, %645 : vector<2x32xf32>
    %647 = math.tanh %646 : vector<2x32xf32>
    %648 = arith.mulf %643, %647 : vector<2x32xf32>
    %c0_266 = arith.constant 0 : index
    %c0_267 = arith.constant 0 : index
    %649 = vector.load %arg14[%c0_266, %c0_267] : memref<2x32xf32, #tpu.memory_space<vmem>>, vector<2x32xf32>
    tpu.vector_store %arg14[%c0_266, %c0_267], %648 {strides = array<i32>} : memref<2x32xf32, #tpu.memory_space<vmem>>, vector<2x32xf32>,
    %c0_268 = arith.constant 0 : index
    %c0_269 = arith.constant 0 : index
    %650 = vector.load %arg16[%c0_268, %c0_269] : memref<2x32xf32, #tpu.memory_space<vmem>>, vector<2x32xf32>
    tpu.vector_store %arg16[%c0_268, %c0_269], %646 {strides = array<i32>} : memref<2x32xf32, #tpu.memory_space<vmem>>, vector<2x32xf32>,
    %651 = arith.index_cast %614 : i32 to index
    %c0_270 = arith.constant 0 : index
    %c0_271 = arith.constant 0 : index
    %652 = vector.load %arg11[%651, %c0_270, %c0_271] : memref<8x2x32xf32, #tpu.memory_space<vmem>>, vector<1x2x32xf32>
    %653 = vector.shape_cast %652 : vector<1x2x32xf32> to vector<2x32xf32>
    %654 = vector.shape_cast %648 : vector<2x32xf32> to vector<1x2x32xf32>
    tpu.vector_store %arg11[%651, %c0_270, %c0_271], %654 {strides = array<i32>} : memref<8x2x32xf32, #tpu.memory_space<vmem>>, vector<1x2x32xf32>,
    %c8_i32 = arith.constant 8 : i32
    %c0_i32_272 = arith.constant 0 : i32
    %655 = arith.cmpi eq, %arg0, %c0_i32_272 : i32
    %656 = arith.extui %655 : i1 to i32
    %c0_i32_273 = arith.constant 0 : i32
    %657 = arith.cmpi ne, %656, %c0_i32_273 : i32
    scf.if %657 {
      %c0_274 = arith.constant 0 : index
      %c0_275 = arith.constant 0 : index
      %658 = vector.load %arg9[%c0_274, %c0_275] : memref<1x5xf32, #tpu.memory_space<vmem>>, vector<1x5xf32>
      %c0_276 = arith.constant 0 : index
      %c0_277 = arith.constant 0 : index
      %659 = vector.load %arg13[%c0_276, %c0_277] : memref<2x32xf32, #tpu.memory_space<vmem>>, vector<2x32xf32>
      %c0_278 = arith.constant 0 : index
      %c0_279 = arith.constant 0 : index
      %660 = vector.load %arg7[%c0_278, %c0_279] : memref<32x5xf32, #tpu.memory_space<vmem>>, vector<32x5xf32>
      %cst_280 = arith.constant dense<0.000000e+00> : vector<2x5xf32>
      %661 = tpu.matmul %659, %660, %cst_280 {dimension_numbers = #tpu.dot_dimension_numbers<[1], [0], [0], [1], [0, 0, 1, 1], [], []>} : vector<2x32xf32>, vector<32x5xf32>, vector<2x5xf32> -> vector<2x5xf32>
      %662 = vector.broadcast %658 : vector<1x5xf32> to vector<2x5xf32>
      %663 = arith.addf %662, %661 : vector<2x5xf32>
      %c0_281 = arith.constant 0 : index
      %c0_282 = arith.constant 0 : index
      %664 = vector.load %arg14[%c0_281, %c0_282] : memref<2x32xf32, #tpu.memory_space<vmem>>, vector<2x32xf32>
      %c0_283 = arith.constant 0 : index
      %c0_284 = arith.constant 0 : index
      %665 = vector.load %arg8[%c0_283, %c0_284] : memref<32x5xf32, #tpu.memory_space<vmem>>, vector<32x5xf32>
      %cst_285 = arith.constant dense<0.000000e+00> : vector<2x5xf32>
      %666 = tpu.matmul %664, %665, %cst_285 {dimension_numbers = #tpu.dot_dimension_numbers<[1], [0], [0], [1], [0, 0, 1, 1], [], []>} : vector<2x32xf32>, vector<32x5xf32>, vector<2x5xf32> -> vector<2x5xf32>
      %667 = arith.addf %663, %666 : vector<2x5xf32>
      %c0_286 = arith.constant 0 : index
      %c0_287 = arith.constant 0 : index
      %668 = vector.load %arg12[%c0_286, %c0_287] : memref<2x5xf32, #tpu.memory_space<vmem>>, vector<2x5xf32>
      tpu.vector_store %arg12[%c0_286, %c0_287], %667 {strides = array<i32>} : memref<2x5xf32, #tpu.memory_space<vmem>>, vector<2x5xf32>,
    } else {
    }
    return
  }
  func.func @transform_0(%arg0: i32) -> (i32, i32, i32) {
    %c0_i32 = arith.constant 0 : i32
    %c0_i32_0 = arith.constant 0 : i32
    %c0_i32_1 = arith.constant 0 : i32
    return %arg0, %c0_i32, %c0_i32_0 : i32, i32, i32
  }
  func.func @transform_1(%arg0: i32) -> (i32, i32, i32) {
    %c0_i32 = arith.constant 0 : i32
    %0 = arith.subi %c0_i32, %arg0 : i32
    %c0_i32_0 = arith.constant 0 : i32
    %c1_i32 = arith.constant 1 : i32
    %c0_i32_1 = arith.constant 0 : i32
    return %0, %c0_i32_0, %c1_i32 : i32, i32, i32
  }
  func.func @transform_2(%arg0: i32) -> (i32, i32) {
    %c0_i32 = arith.constant 0 : i32
    %c0_i32_0 = arith.constant 0 : i32
    %c0_i32_1 = arith.constant 0 : i32
    return %c0_i32, %c0_i32_0 : i32, i32
  }
  func.func @transform_3(%arg0: i32) -> (i32, i32) {
    %c0_i32 = arith.constant 0 : i32
    %c0_i32_0 = arith.constant 0 : i32
    %c0_i32_1 = arith.constant 0 : i32
    return %c0_i32, %c0_i32_0 : i32, i32
  }
  func.func @transform_4(%arg0: i32) -> (i32, i32) {
    %c0_i32 = arith.constant 0 : i32
    %c0_i32_0 = arith.constant 0 : i32
    %c0_i32_1 = arith.constant 0 : i32
    return %c0_i32, %c0_i32_0 : i32, i32
  }
  func.func @transform_5(%arg0: i32) -> (i32, i32) {
    %c0_i32 = arith.constant 0 : i32
    %c0_i32_0 = arith.constant 0 : i32
    %c0_i32_1 = arith.constant 0 : i32
    return %c0_i32, %c0_i32_0 : i32, i32
  }
  func.func @transform_6(%arg0: i32) -> (i32, i32) {
    %c0_i32 = arith.constant 0 : i32
    %c0_i32_0 = arith.constant 0 : i32
    %c0_i32_1 = arith.constant 0 : i32
    return %c0_i32, %c0_i32_0 : i32, i32
  }
  func.func @transform_7(%arg0: i32) -> (i32, i32) {
    %c0_i32 = arith.constant 0 : i32
    %c0_i32_0 = arith.constant 0 : i32
    %c0_i32_1 = arith.constant 0 : i32
    return %c0_i32, %c0_i32_0 : i32, i32
  }
  func.func @transform_8(%arg0: i32) -> (i32, i32) {
    %c0_i32 = arith.constant 0 : i32
    %c0_i32_0 = arith.constant 0 : i32
    %c0_i32_1 = arith.constant 0 : i32
    return %c0_i32, %c0_i32_0 : i32, i32
  }
  func.func @transform_9(%arg0: i32) -> (i32, i32, i32) {
    %c0_i32 = arith.constant 0 : i32
    %c0_i32_0 = arith.constant 0 : i32
    %c0_i32_1 = arith.constant 0 : i32
    return %arg0, %c0_i32, %c0_i32_0 : i32, i32, i32
  }
  func.func @transform_10(%arg0: i32) -> (i32, i32, i32) {
    %c0_i32 = arith.constant 0 : i32
    %0 = arith.subi %c0_i32, %arg0 : i32
    %c0_i32_0 = arith.constant 0 : i32
    %c0_i32_1 = arith.constant 0 : i32
    %c0_i32_2 = arith.constant 0 : i32
    return %0, %c0_i32_0, %c0_i32_1 : i32, i32, i32
  }
  func.func @transform_11(%arg0: i32) -> (i32, i32) {
    %c0_i32 = arith.constant 0 : i32
    %c0_i32_0 = arith.constant 0 : i32
    %c0_i32_1 = arith.constant 0 : i32
    return %c0_i32, %c0_i32_0 : i32, i32
  }
}

</mosaic_0001>

<llo_original>
// kernel: rnn_forward.6
$region0: #{rnn_forward.6}
  #allocation0 [shape = 'u32[]', space=smem, size = 0x4, offset = 0x4, fixed_abs, tag = 'smem constant byte address 0x4 - core index']
  #allocation1 [shape = 'u32[144,128]{1,0:T(1,128)}', space=vmem, size = 0x12000, scoped, tag = 'internal scratch']
  %s0 = inlined_call_operand.vmem [shape: f32[16,32], index: 0, kind: input, shape index: {}]
  %s1 = inlined_call_operand.vmem [shape: f32[16,32], index: 1, kind: input, shape index: {}]
  %s2 = inlined_call_operand.vmem [shape: f32[32,256], index: 2, kind: input, shape index: {}]
  %s3 = inlined_call_operand.vmem [shape: f32[32,256], index: 3, kind: input, shape index: {}]
  %s4 = inlined_call_operand.vmem [shape: f32[16,256], index: 4, kind: output, shape index: {}]
  %s5 = sld [smem:[#allocation0]]
  $region26: #{rnn_forward.6} parent=0
    _
  %s7 = ssub.s32 1, %s5
  %s8 = scalar_select 0, %s7, %s5
  // Predicated region
  $region2: #{rnn_forward.6} parent=0 // pred_check
    _
  $region3: #{rnn_forward.6} parent=0 // pred_check_branch
    %10 = sbr.rel (0) target = $region5
  $region4: #{rnn_forward.6} parent=0 // pred_region
    _
  $region5: #{rnn_forward.6} parent=0 // pred_fallthru
    _
  // Predicated region
  $region6: #{rnn_forward.6} parent=0 // pred_check
    _
  $region7: #{rnn_forward.6} parent=0 // pred_check_branch
    %12 = sbr.rel (0) target = $region9
  $region8: #{rnn_forward.6} parent=0 // pred_region
    _
  $region9: #{rnn_forward.6} parent=0 // pred_fallthru
    _
  // Predicated region
  $region10: #{rnn_forward.6} parent=0 // pred_check
    _
  $region11: #{rnn_forward.6} parent=0 // pred_check_branch
    %14 = sbr.rel (0) target = $region13
  $region12: #{rnn_forward.6} parent=0 // pred_region
    _
  $region13: #{rnn_forward.6} parent=0 // pred_fallthru
    _
  // Predicated region
  $region14: #{rnn_forward.6} parent=0 // pred_check
    _
  $region15: #{rnn_forward.6} parent=0 // pred_check_branch
    %16 = sbr.rel (0) target = $region17
  $region16: #{rnn_forward.6} parent=0 // pred_region
    _
  $region17: #{rnn_forward.6} parent=0 // pred_fallthru
    _
  %v17 = vld [vmem:[%s0] sm:$0xff]
  %v18 = vld [vmem:[%s0 + $0x8] sm:$0xff]
  %v19 = vld [vmem:[%s2] sm:$0xff]
  %v20 = vld [vmem:[%s2 + $0x8] sm:$0xff]
  %v21 = vld [vmem:[%s2 + $0x10] sm:$0xff]
  %v22 = vld [vmem:[%s2 + $0x18] sm:$0xff]
  %v23 = vld [vmem:[%s2 + $0x20] sm:$0xff]
  %v24 = vld [vmem:[%s2 + $0x28] sm:$0xff]
  %v25 = vld [vmem:[%s2 + $0x30] sm:$0xff]
  %v26 = vld [vmem:[%s2 + $0x38] sm:$0xff]
  %v27 = vld [vmem:[%s1] sm:$0xff]
  %v28 = vld [vmem:[%s1 + $0x8] sm:$0xff]
  %v29 = vld [vmem:[%s3] sm:$0xff]
  %v30 = vld [vmem:[%s3 + $0x8] sm:$0xff]
  %v31 = vld [vmem:[%s3 + $0x10] sm:$0xff]
  %v32 = vld [vmem:[%s3 + $0x18] sm:$0xff]
  %v33 = vld [vmem:[%s3 + $0x20] sm:$0xff]
  %v34 = vld [vmem:[%s3 + $0x28] sm:$0xff]
  %v35 = vld [vmem:[%s3 + $0x30] sm:$0xff]
  %v36 = vld [vmem:[%s3 + $0x38] sm:$0xff]
  %vm37 = vcmask 261120
  %v39 = vsel %vm37, %v27, 0
  %v42 = vsel %vm37, %v28, 0
  %44 = vmatprep.subr.mxu0 %v30
  %45 = vmatpush1.msra.mxu0 %v29
  %46 = vmatprep.subr.mxu0 %v32
  %47 = vmatpush1.msra.mxu0 %v31
  %48 = vmatprep.subr.mxu0 %v34
  %49 = vmatpush1.msra.mxu0 %v33
  %50 = vmatprep.subr.mxu0 %v36
  %51 = vmatpush1.msra.mxu0 %v35
  %52 = vmatprep.subr.mxu0 0.0
  %53 = vmatpush1.msra.mxu0 0.0
  %54 = vmatprep.subr.mxu0 0.0
  %55 = vmatpush1.msra.mxu0 0.0
  %56 = vmatprep.subr.mxu0 0.0
  %57 = vmatpush1.msra.mxu0 0.0
  %58 = vmatprep.subr.mxu0 0.0
  %59 = vmatpush1.msra.mxu0 0.0
  %60 = vmatprep.subr.mxu0 0.0
  %61 = vmatpush1.msra.mxu0 0.0
  %62 = vmatprep.subr.mxu0 0.0
  %63 = vmatpush1.msra.mxu0 0.0
  %64 = vmatprep.subr.mxu0 0.0
  %65 = vmatpush1.msra.mxu0 0.0
  %66 = vmatprep.subr.mxu0 0.0
  %67 = vmatpush1.msra.mxu0 0.0
  %68 = vmatprep.subr.mxu0 0.0
  %69 = vmatpush1.msra.mxu0 0.0
  %70 = vmatprep.subr.mxu0 0.0
  %71 = vmatpush1.msra.mxu0 0.0
  %72 = vmatprep.subr.mxu0 0.0
  %73 = vmatpush1.msra.mxu0 0.0
  %74 = vmatprep.subr.mxu0 0.0
  %75 = vmatpush1.msra.mxu0 0.0
  %76 = vmatprep.subr.mxu0 0.0
  %77 = vmatpush1.msra.mxu0 0.0
  %78 = vmatprep.subr.mxu0 0.0
  %79 = vmatpush1.msra.mxu0 0.0
  %80 = vmatprep.subr.mxu0 0.0
  %81 = vmatpush1.msra.mxu0 0.0
  %82 = vmatprep.subr.mxu0 0.0
  %83 = vmatpush1.msra.mxu0 0.0
  %84 = vmatprep.subr.mxu0 0.0
  %85 = vmatpush1.msra.mxu0 0.0
  %86 = vmatprep.subr.mxu0 0.0
  %87 = vmatpush1.msra.mxu0 0.0
  %88 = vmatprep.subr.mxu0 0.0
  %89 = vmatpush1.msra.mxu0 0.0
  %90 = vmatprep.subr.mxu0 0.0
  %91 = vmatpush1.msra.mxu0 0.0
  %92 = vmatprep.subr.mxu0 0.0
  %93 = vmatpush1.msra.mxu0 0.0
  %94 = vmatprep.subr.mxu0 0.0
  %95 = vmatpush1.msra.mxu0 0.0
  %96 = vmatprep.subr.mxu0 0.0
  %97 = vmatpush1.msra.mxu0 0.0
  %98 = vmatprep.subr.mxu0 0.0
  %99 = vmatpush1.msra.mxu0 0.0
  %100 = vmatprep.subr.mxu0 0.0
  %101 = vmatpush1.msra.mxu0 0.0
  %102 = vmatprep.subr.mxu0 0.0
  %103 = vmatpush1.msra.mxu0 0.0
  %104 = vmatprep.subr.mxu0 0.0
  %105 = vmatpush1.msra.mxu0 0.0
  %106 = vmatprep.subr.mxu0 0.0
  %107 = vmatpush1.msra.mxu0 0.0
  %108 = vmatprep.mubr.f32.mxu0 0.0
  %109 = vmatmul.mubr.f32.gmra.mrb[0].mxu0 %v39
  %v110 = vpop.f32.mrb[0].mxu0
  %v111 = vadd.f32 0.0, %v110
  %v112 = vpop.f32.mrb[0].mxu0
  %v113 = vadd.f32 0.0, %v112
  %114 = vmatprep.mubr.f32.mxu0 0.0
  %115 = vmatmul.mubr.f32.gmra.mrb[0].mxu0 %v42
  %v116 = vpop.f32.mrb[0].mxu0
  %v117 = vadd.f32 0.0, %v116
  %v118 = vpop.f32.mrb[0].mxu0
  %v119 = vadd.f32 0.0, %v118
  %120 = vdwg.mxu0
  %v122 = vsel %vm37, %v17, 0
  %v125 = vsel %vm37, %v18, 0
  %127 = vmatprep.subr.mxu0 %v20
  %128 = vmatpush1.msra.mxu0 %v19
  %129 = vmatprep.subr.mxu0 %v22
  %130 = vmatpush1.msra.mxu0 %v21
  %131 = vmatprep.subr.mxu0 %v24
  %132 = vmatpush1.msra.mxu0 %v23
  %133 = vmatprep.subr.mxu0 %v26
  %134 = vmatpush1.msra.mxu0 %v25
  %135 = vmatprep.subr.mxu0 0.0
  %136 = vmatpush1.msra.mxu0 0.0
  %137 = vmatprep.subr.mxu0 0.0
  %138 = vmatpush1.msra.mxu0 0.0
  %139 = vmatprep.subr.mxu0 0.0
  %140 = vmatpush1.msra.mxu0 0.0
  %141 = vmatprep.subr.mxu0 0.0
  %142 = vmatpush1.msra.mxu0 0.0
  %143 = vmatprep.subr.mxu0 0.0
  %144 = vmatpush1.msra.mxu0 0.0
  %145 = vmatprep.subr.mxu0 0.0
  %146 = vmatpush1.msra.mxu0 0.0
  %147 = vmatprep.subr.mxu0 0.0
  %148 = vmatpush1.msra.mxu0 0.0
  %149 = vmatprep.subr.mxu0 0.0
  %150 = vmatpush1.msra.mxu0 0.0
  %151 = vmatprep.subr.mxu0 0.0
  %152 = vmatpush1.msra.mxu0 0.0
  %153 = vmatprep.subr.mxu0 0.0
  %154 = vmatpush1.msra.mxu0 0.0
  %155 = vmatprep.subr.mxu0 0.0
  %156 = vmatpush1.msra.mxu0 0.0
  %157 = vmatprep.subr.mxu0 0.0
  %158 = vmatpush1.msra.mxu0 0.0
  %159 = vmatprep.subr.mxu0 0.0
  %160 = vmatpush1.msra.mxu0 0.0
  %161 = vmatprep.subr.mxu0 0.0
  %162 = vmatpush1.msra.mxu0 0.0
  %163 = vmatprep.subr.mxu0 0.0
  %164 = vmatpush1.msra.mxu0 0.0
  %165 = vmatprep.subr.mxu0 0.0
  %166 = vmatpush1.msra.mxu0 0.0
  %167 = vmatprep.subr.mxu0 0.0
  %168 = vmatpush1.msra.mxu0 0.0
  %169 = vmatprep.subr.mxu0 0.0
  %170 = vmatpush1.msra.mxu0 0.0
  %171 = vmatprep.subr.mxu0 0.0
  %172 = vmatpush1.msra.mxu0 0.0
  %173 = vmatprep.subr.mxu0 0.0
  %174 = vmatpush1.msra.mxu0 0.0
  %175 = vmatprep.subr.mxu0 0.0
  %176 = vmatpush1.msra.mxu0 0.0
  %177 = vmatprep.subr.mxu0 0.0
  %178 = vmatpush1.msra.mxu0 0.0
  %179 = vmatprep.subr.mxu0 0.0
  %180 = vmatpush1.msra.mxu0 0.0
  %181 = vmatprep.subr.mxu0 0.0
  %182 = vmatpush1.msra.mxu0 0.0
  %183 = vmatprep.subr.mxu0 0.0
  %184 = vmatpush1.msra.mxu0 0.0
  %185 = vmatprep.subr.mxu0 0.0
  %186 = vmatpush1.msra.mxu0 0.0
  %187 = vmatprep.subr.mxu0 0.0
  %188 = vmatpush1.msra.mxu0 0.0
  %189 = vmatprep.subr.mxu0 0.0
  %190 = vmatpush1.msra.mxu0 0.0
  %191 = vmatprep.mubr.f32.mxu0 0.0
  %192 = vmatmul.mubr.f32.gmra.mrb[0].mxu0 %v122
  %v193 = vpop.f32.mrb[0].mxu0
  %v194 = vadd.f32 %v111, %v193
  %v195 = vpop.f32.mrb[0].mxu0
  %v196 = vadd.f32 %v113, %v195
  %197 = vmatprep.mubr.f32.mxu0 0.0
  %198 = vmatmul.mubr.f32.gmra.mrb[0].mxu0 %v125
  %v199 = vpop.f32.mrb[0].mxu0
  %v200 = vadd.f32 %v117, %v199
  %v201 = vpop.f32.mrb[0].mxu0
  %v202 = vadd.f32 %v119, %v201
  %203 = vdwg.mxu0
  %204 = vst [vmem:[%s4] sm:$0xff] %v194
  %205 = vst [vmem:[%s4 + $0x8] sm:$0xff] %v196
  %206 = vst [vmem:[%s4 + $0x10] sm:$0xff] %v200
  %207 = vst [vmem:[%s4 + $0x18] sm:$0xff] %v202
  // Predicated region
  $region18: #{rnn_forward.6} parent=0 // pred_check
    _
  $region19: #{rnn_forward.6} parent=0 // pred_check_branch
    %209 = sbr.rel (0) target = $region21
  $region20: #{rnn_forward.6} parent=0 // pred_region
    _
  $region21: #{rnn_forward.6} parent=0 // pred_fallthru
    _
  // Predicated region
  $region22: #{rnn_forward.6} parent=0 // pred_check
    _
  $region23: #{rnn_forward.6} parent=0 // pred_check_branch
    %211 = sbr.rel (0) target = $region25
  $region24: #{rnn_forward.6} parent=0 // pred_region
    _
  $region25: #{rnn_forward.6} parent=0 // pred_fallthru
    _

// kernel: rnn_forward.4
$region0: #{rnn_forward.4}
  #allocation0 [shape = 'u32[]', space=smem, size = 0x4, offset = 0x4, fixed_abs, tag = 'smem constant byte address 0x4 - core index']
  #allocation1 [shape = 'u32[144,128]{1,0:T(1,128)}', space=vmem, size = 0x12000, scoped, tag = 'internal scratch']
  %s0 = inlined_call_operand.vmem [shape: f32[16,16], index: 0, kind: input, shape index: {}]
  %s1 = inlined_call_operand.vmem [shape: f32[16,256], index: 1, kind: input, shape index: {}]
  %s2 = inlined_call_operand.vmem [shape: f32[16,256], index: 2, kind: output, shape index: {}]
  %s3 = sld [smem:[#allocation0]]
  $region18: #{rnn_forward.4} parent=0
    _
  %s5 = ssub.s32 1, %s3
  %s6 = scalar_select 0, %s5, %s3
  // Predicated region
  $region2: #{rnn_forward.4} parent=0 // pred_check
    _
  $region3: #{rnn_forward.4} parent=0 // pred_check_branch
    %8 = sbr.rel (0) target = $region5
  $region4: #{rnn_forward.4} parent=0 // pred_region
    _
  $region5: #{rnn_forward.4} parent=0 // pred_fallthru
    _
  // Predicated region
  $region6: #{rnn_forward.4} parent=0 // pred_check
    _
  $region7: #{rnn_forward.4} parent=0 // pred_check_branch
    %10 = sbr.rel (0) target = $region9
  $region8: #{rnn_forward.4} parent=0 // pred_region
    _
  $region9: #{rnn_forward.4} parent=0 // pred_fallthru
    _
  %v11 = vld [vmem:[%s0] sm:$0xff]
  %v12 = vld [vmem:[%s0 + $0x8] sm:$0xff]
  %v13 = vld [vmem:[%s1] sm:$0xff]
  %v14 = vld [vmem:[%s1 + $0x8] sm:$0xff]
  %v15 = vld [vmem:[%s1 + $0x10] sm:$0xff]
  %v16 = vld [vmem:[%s1 + $0x18] sm:$0xff]
  %vm17 = vcmask 130048
  %v19 = vsel %vm17, %v11, 0
  %v22 = vsel %vm17, %v12, 0
  %24 = vmatprep.subr.mxu0 %v14
  %25 = vmatpush1.msra.mxu0 %v13
  %26 = vmatprep.subr.mxu0 %v16
  %27 = vmatpush1.msra.mxu0 %v15
  %28 = vmatprep.subr.mxu0 0.0
  %29 = vmatpush1.msra.mxu0 0.0
  %30 = vmatprep.subr.mxu0 0.0
  %31 = vmatpush1.msra.mxu0 0.0
  %32 = vmatprep.subr.mxu0 0.0
  %33 = vmatpush1.msra.mxu0 0.0
  %34 = vmatprep.subr.mxu0 0.0
  %35 = vmatpush1.msra.mxu0 0.0
  %36 = vmatprep.subr.mxu0 0.0
  %37 = vmatpush1.msra.mxu0 0.0
  %38 = vmatprep.subr.mxu0 0.0
  %39 = vmatpush1.msra.mxu0 0.0
  %40 = vmatprep.subr.mxu0 0.0
  %41 = vmatpush1.msra.mxu0 0.0
  %42 = vmatprep.subr.mxu0 0.0
  %43 = vmatpush1.msra.mxu0 0.0
  %44 = vmatprep.subr.mxu0 0.0
  %45 = vmatpush1.msra.mxu0 0.0
  %46 = vmatprep.subr.mxu0 0.0
  %47 = vmatpush1.msra.mxu0 0.0
  %48 = vmatprep.subr.mxu0 0.0
  %49 = vmatpush1.msra.mxu0 0.0
  %50 = vmatprep.subr.mxu0 0.0
  %51 = vmatpush1.msra.mxu0 0.0
  %52 = vmatprep.subr.mxu0 0.0
  %53 = vmatpush1.msra.mxu0 0.0
  %54 = vmatprep.subr.mxu0 0.0
  %55 = vmatpush1.msra.mxu0 0.0
  %56 = vmatprep.subr.mxu0 0.0
  %57 = vmatpush1.msra.mxu0 0.0
  %58 = vmatprep.subr.mxu0 0.0
  %59 = vmatpush1.msra.mxu0 0.0
  %60 = vmatprep.subr.mxu0 0.0
  %61 = vmatpush1.msra.mxu0 0.0
  %62 = vmatprep.subr.mxu0 0.0
  %63 = vmatpush1.msra.mxu0 0.0
  %64 = vmatprep.subr.mxu0 0.0
  %65 = vmatpush1.msra.mxu0 0.0
  %66 = vmatprep.subr.mxu0 0.0
  %67 = vmatpush1.msra.mxu0 0.0
  %68 = vmatprep.subr.mxu0 0.0
  %69 = vmatpush1.msra.mxu0 0.0
  %70 = vmatprep.subr.mxu0 0.0
  %71 = vmatpush1.msra.mxu0 0.0
  %72 = vmatprep.subr.mxu0 0.0
  %73 = vmatpush1.msra.mxu0 0.0
  %74 = vmatprep.subr.mxu0 0.0
  %75 = vmatpush1.msra.mxu0 0.0
  %76 = vmatprep.subr.mxu0 0.0
  %77 = vmatpush1.msra.mxu0 0.0
  %78 = vmatprep.subr.mxu0 0.0
  %79 = vmatpush1.msra.mxu0 0.0
  %80 = vmatprep.subr.mxu0 0.0
  %81 = vmatpush1.msra.mxu0 0.0
  %82 = vmatprep.subr.mxu0 0.0
  %83 = vmatpush1.msra.mxu0 0.0
  %84 = vmatprep.subr.mxu0 0.0
  %85 = vmatpush1.msra.mxu0 0.0
  %86 = vmatprep.subr.mxu0 0.0
  %87 = vmatpush1.msra.mxu0 0.0
  %88 = vmatprep.mubr.f32.mxu0 0.0
  %89 = vmatmul.mubr.f32.gmra.mrb[0].mxu0 %v19
  %v90 = vpop.f32.mrb[0].mxu0
  %v91 = vadd.f32 0.0, %v90
  %v92 = vpop.f32.mrb[0].mxu0
  %v93 = vadd.f32 0.0, %v92
  %94 = vmatprep.mubr.f32.mxu0 0.0
  %95 = vmatmul.mubr.f32.gmra.mrb[0].mxu0 %v22
  %v96 = vpop.f32.mrb[0].mxu0
  %v97 = vadd.f32 0.0, %v96
  %v98 = vpop.f32.mrb[0].mxu0
  %v99 = vadd.f32 0.0, %v98
  %100 = vdwg.mxu0
  %101 = vst [vmem:[%s2] sm:$0xff] %v91
  %102 = vst [vmem:[%s2 + $0x8] sm:$0xff] %v93
  %103 = vst [vmem:[%s2 + $0x10] sm:$0xff] %v97
  %104 = vst [vmem:[%s2 + $0x18] sm:$0xff] %v99
  // Predicated region
  $region10: #{rnn_forward.4} parent=0 // pred_check
    _
  $region11: #{rnn_forward.4} parent=0 // pred_check_branch
    %106 = sbr.rel (0) target = $region13
  $region12: #{rnn_forward.4} parent=0 // pred_region
    _
  $region13: #{rnn_forward.4} parent=0 // pred_fallthru
    _
  // Predicated region
  $region14: #{rnn_forward.4} parent=0 // pred_check
    _
  $region15: #{rnn_forward.4} parent=0 // pred_check_branch
    %108 = sbr.rel (0) target = $region17
  $region16: #{rnn_forward.4} parent=0 // pred_region
    _
  $region17: #{rnn_forward.4} parent=0 // pred_fallthru
    _

// kernel: rnn_forward.5
$region0: #{rnn_forward.5}
  #allocation0 [shape = 'u32[]', space=smem, size = 0x4, offset = 0x4, fixed_abs, tag = 'smem constant byte address 0x4 - core index']
  #allocation1 [shape = 'u32[144,128]{1,0:T(1,128)}', space=vmem, size = 0x12000, scoped, tag = 'internal scratch']
  #allocation2 [shape = 'f32[2,32]{1,0:T(2,128)}', space=vmem, size = 0x400, scoped, tag = 'scratch operand']
  #allocation3 [shape = 'f32[2,32]{1,0:T(2,128)}', space=vmem, size = 0x400, scoped, tag = 'scratch operand']
  #allocation4 [shape = 'f32[2,32]{1,0:T(2,128)}', space=vmem, size = 0x400, scoped, tag = 'scratch operand']
  #allocation5 [shape = 'f32[2,32]{1,0:T(2,128)}', space=vmem, size = 0x400, scoped, tag = 'scratch operand']
  %s0 = inlined_call_operand.vmem [shape: f32[8,2,256], index: 0, kind: input, shape index: {}, may-alias: {0,1}]
  %s1 = inlined_call_operand.vmem [shape: f32[8,2,256], index: 1, kind: input, shape index: {}, may-alias: {0,1}]
  %s2 = inlined_call_operand.vmem [shape: f32[32,128], index: 2, kind: input, shape index: {}]
  %s3 = inlined_call_operand.vmem [shape: f32[32,128], index: 3, kind: input, shape index: {}]
  %s4 = inlined_call_operand.vmem [shape: f32[1,128], index: 4, kind: input, shape index: {}]
  %s5 = inlined_call_operand.vmem [shape: f32[1,128], index: 5, kind: input, shape index: {}]
  %s6 = inlined_call_operand.vmem [shape: f32[8,2,32], index: 6, kind: output, shape index: {0}]
  %s7 = inlined_call_operand.vmem [shape: f32[8,2,32], index: 7, kind: output, shape index: {1}]
  %8 = xla_tuple %s6, %s7
  %s9 = sld [smem:[#allocation0]]
  $region128: #{rnn_forward.5} parent=0
    _
  %s11 = ssub.s32 1, %s9
  %s12 = scalar_select 0, %s11, %s9
  $region1: #{rnn_forward.5} parent=0
    #allocation6 [shape = 'u8[8192]{0}', space=vmem, size = 0x2000, scoped, tag = 'input window, operand 0, single buffered']
    #allocation7 [shape = 'u8[8192]{0}', space=vmem, size = 0x2000, scoped, tag = 'input window, operand 1, single buffered']
    // Predicated region
    $region2: #{rnn_forward.5} parent=1 // pred_check
      _
    $region3: #{rnn_forward.5} parent=1 // pred_check_branch
      %14 = sbr.rel (0) target = $region5
    $region4: #{rnn_forward.5} parent=1 // pred_region
      // Predicated region
      $region6: #{rnn_forward.5} parent=4 // pred_check
        _
      $region7: #{rnn_forward.5} parent=4 // pred_check_branch
        %16 = sbr.rel (0) target = $region9
      $region8: #{rnn_forward.5} parent=4 // pred_region
        // Predicated region
        $region10: #{rnn_forward.5} parent=8 // pred_check
          _
        $region11: #{rnn_forward.5} parent=8 // pred_check_branch
          %18 = sbr.rel target = $region13
        $region12: #{rnn_forward.5} parent=8 // pred_region
          // Predicated region
          $region25: #{rnn_forward.5} parent=12 // pred_check
            _
          $region26: #{rnn_forward.5} parent=12 // pred_check_branch
            %47 = sbr.rel (0) target = $region28
          $region27: #{rnn_forward.5} parent=12 // pred_region
            loop: start=0, step=1, limit=1
            $region29: #{rnn_forward.5} parent=27 // loop_pre_header
              _
            $region30: #{rnn_forward.5} parent=27 // loop_header
              %s49 = sphi 0, %s53
              %p50 = scmp.ge.s32.totalorder %s49, 1
              %s54 = sphi %s0, %s0
              %s55 = sphi [#allocation6], [#allocation6]
            $region31: #{rnn_forward.5} parent=27 // loop_header_branch
              %52 = sbr.rel (%p50) target = $region35
            $region32: #{rnn_forward.5} parent=27 // loop_body
              _
            $region33: #{rnn_forward.5} parent=27 // loop_footer
              %s53 = sadd.s32 1, %s49
            $region34: #{rnn_forward.5} parent=27 // loop_footer_branch
              %48 = sbr.rel target = $region30
            $region35: #{rnn_forward.5} parent=27 // loop_exit
              _
            loop: start=0, step=1, limit=1
            $region36: #{rnn_forward.5} parent=27 // loop_pre_header
              _
            $region37: #{rnn_forward.5} parent=27 // loop_header
              %s58 = sphi 0, %s62
              %p59 = scmp.ge.s32.totalorder %s58, 1
              %s63 = sphi %s0, %s0
              %s64 = sphi [#allocation6], [#allocation6]
            $region38: #{rnn_forward.5} parent=27 // loop_header_branch
              %61 = sbr.rel (%p59) target = $region42
            $region39: #{rnn_forward.5} parent=27 // loop_body
              %v65 = vld [vmem:[%s63] sm:$0x3]
              %66 = vst [vmem:[%s64] sm:$0x3] %v65
              %v67 = vld [vmem:[%s63 + $0x4] sm:$0x3]
              %68 = vst [vmem:[%s64 + $0x2] sm:$0x3] %v67
              %v69 = vld [vmem:[%s63 + $0x8] sm:$0x3]
              %70 = vst [vmem:[%s64 + $0x4] sm:$0x3] %v69
              %v71 = vld [vmem:[%s63 + $0xc] sm:$0x3]
              %72 = vst [vmem:[%s64 + $0x6] sm:$0x3] %v71
              %v73 = vld [vmem:[%s63 + $0x10] sm:$0x3]
              %74 = vst [vmem:[%s64 + $0x8] sm:$0x3] %v73
              %v75 = vld [vmem:[%s63 + $0x14] sm:$0x3]
              %76 = vst [vmem:[%s64 + $0xa] sm:$0x3] %v75
              %v77 = vld [vmem:[%s63 + $0x18] sm:$0x3]
              %78 = vst [vmem:[%s64 + $0xc] sm:$0x3] %v77
              %v79 = vld [vmem:[%s63 + $0x1c] sm:$0x3]
              %80 = vst [vmem:[%s64 + $0xe] sm:$0x3] %v79
            $region40: #{rnn_forward.5} parent=27 // loop_footer
              %s62 = sadd.s32 1, %s58
            $region41: #{rnn_forward.5} parent=27 // loop_footer_branch
              %57 = sbr.rel target = $region37
            $region42: #{rnn_forward.5} parent=27 // loop_exit
              _
          $region28: #{rnn_forward.5} parent=12 // pred_fallthru
            _
        $region13: #{rnn_forward.5} parent=8 // pred_fallthru
          _
        // Predicated region
        $region14: #{rnn_forward.5} parent=8 // pred_check
          _
        $region15: #{rnn_forward.5} parent=8 // pred_check_branch
          %20 = sbr.rel (0) target = $region17
        $region16: #{rnn_forward.5} parent=8 // pred_region
          loop: start=0, step=1, limit=1
          $region18: #{rnn_forward.5} parent=16 // loop_pre_header
            _
          $region19: #{rnn_forward.5} parent=16 // loop_header
            %s23 = sphi 0, %s27
            %p24 = scmp.ge.s32.totalorder %s23, 1
            %s28 = sphi %s0, %s0
            %s29 = sphi [#allocation6], [#allocation6]
          $region20: #{rnn_forward.5} parent=16 // loop_header_branch
            %26 = sbr.rel (%p24) target = $region24
          $region21: #{rnn_forward.5} parent=16 // loop_body
            %v30 = vld [vmem:[%s28] sm:$0x3]
            %31 = vst [vmem:[%s29] sm:$0x3] %v30
            %v32 = vld [vmem:[%s28 + $0x4] sm:$0x3]
            %33 = vst [vmem:[%s29 + $0x2] sm:$0x3] %v32
            %v34 = vld [vmem:[%s28 + $0x8] sm:$0x3]
            %35 = vst [vmem:[%s29 + $0x4] sm:$0x3] %v34
            %v36 = vld [vmem:[%s28 + $0xc] sm:$0x3]
            %37 = vst [vmem:[%s29 + $0x6] sm:$0x3] %v36
            %v38 = vld [vmem:[%s28 + $0x10] sm:$0x3]
            %39 = vst [vmem:[%s29 + $0x8] sm:$0x3] %v38
            %v40 = vld [vmem:[%s28 + $0x14] sm:$0x3]
            %41 = vst [vmem:[%s29 + $0xa] sm:$0x3] %v40
            %v42 = vld [vmem:[%s28 + $0x18] sm:$0x3]
            %43 = vst [vmem:[%s29 + $0xc] sm:$0x3] %v42
            %v44 = vld [vmem:[%s28 + $0x1c] sm:$0x3]
            %45 = vst [vmem:[%s29 + $0xe] sm:$0x3] %v44
          $region22: #{rnn_forward.5} parent=16 // loop_footer
            %s27 = sadd.s32 1, %s23
          $region23: #{rnn_forward.5} parent=16 // loop_footer_branch
            %22 = sbr.rel target = $region19
          $region24: #{rnn_forward.5} parent=16 // loop_exit
            _
        $region17: #{rnn_forward.5} parent=8 // pred_fallthru
          _
      $region9: #{rnn_forward.5} parent=4 // pred_fallthru
        _
      %81 = vnop
    $region5: #{rnn_forward.5} parent=1 // pred_fallthru
      _
    // Predicated region
    $region43: #{rnn_forward.5} parent=1 // pred_check
      _
    $region44: #{rnn_forward.5} parent=1 // pred_check_branch
      %83 = sbr.rel (0) target = $region46
    $region45: #{rnn_forward.5} parent=1 // pred_region
      %s84 = ssub.s32 0, 0
      %s85 = smul.u32 8, %s84
      %s86 = smul.addr %s85, 2
      %s87 = sadd.s32 1, %s86
      %s88 = smul.addr %s87, 2
      %s89 = scalar_lea.vmem %s1, %s88
      // Predicated region
      $region47: #{rnn_forward.5} parent=45 // pred_check
        _
      $region48: #{rnn_forward.5} parent=45 // pred_check_branch
        %91 = sbr.rel (0) target = $region50
      $region49: #{rnn_forward.5} parent=45 // pred_region
        // Predicated region
        $region51: #{rnn_forward.5} parent=49 // pred_check
          _
        $region52: #{rnn_forward.5} parent=49 // pred_check_branch
          %93 = sbr.rel target = $region54
        $region53: #{rnn_forward.5} parent=49 // pred_region
          // Predicated region
          $region66: #{rnn_forward.5} parent=53 // pred_check
            _
          $region67: #{rnn_forward.5} parent=53 // pred_check_branch
            %122 = sbr.rel (0) target = $region69
          $region68: #{rnn_forward.5} parent=53 // pred_region
            loop: start=0, step=1, limit=1
            $region70: #{rnn_forward.5} parent=68 // loop_pre_header
              _
            $region71: #{rnn_forward.5} parent=68 // loop_header
              %s124 = sphi 0, %s128
              %p125 = scmp.ge.s32.totalorder %s124, 1
              %s129 = sphi %s89, %s89
              %s130 = sphi [#allocation7], [#allocation7]
            $region72: #{rnn_forward.5} parent=68 // loop_header_branch
              %127 = sbr.rel (%p125) target = $region76
            $region73: #{rnn_forward.5} parent=68 // loop_body
              _
            $region74: #{rnn_forward.5} parent=68 // loop_footer
              %s128 = sadd.s32 1, %s124
            $region75: #{rnn_forward.5} parent=68 // loop_footer_branch
              %123 = sbr.rel target = $region71
            $region76: #{rnn_forward.5} parent=68 // loop_exit
              _
            loop: start=0, step=1, limit=1
            $region77: #{rnn_forward.5} parent=68 // loop_pre_header
              _
            $region78: #{rnn_forward.5} parent=68 // loop_header
              %s133 = sphi 0, %s137
              %p134 = scmp.ge.s32.totalorder %s133, 1
              %s138 = sphi %s89, %s89
              %s139 = sphi [#allocation7], [#allocation7]
            $region79: #{rnn_forward.5} parent=68 // loop_header_branch
              %136 = sbr.rel (%p134) target = $region83
            $region80: #{rnn_forward.5} parent=68 // loop_body
              %v140 = vld [vmem:[%s138] sm:$0x3]
              %141 = vst [vmem:[%s139] sm:$0x3] %v140
              %v142 = vld [vmem:[%s138 + $0x4] sm:$0x3]
              %143 = vst [vmem:[%s139 + $0x2] sm:$0x3] %v142
              %v144 = vld [vmem:[%s138 + $0x8] sm:$0x3]
              %145 = vst [vmem:[%s139 + $0x4] sm:$0x3] %v144
              %v146 = vld [vmem:[%s138 + $0xc] sm:$0x3]
              %147 = vst [vmem:[%s139 + $0x6] sm:$0x3] %v146
              %v148 = vld [vmem:[%s138 + $0x10] sm:$0x3]
              %149 = vst [vmem:[%s139 + $0x8] sm:$0x3] %v148
              %v150 = vld [vmem:[%s138 + $0x14] sm:$0x3]
              %151 = vst [vmem:[%s139 + $0xa] sm:$0x3] %v150
              %v152 = vld [vmem:[%s138 + $0x18] sm:$0x3]
              %153 = vst [vmem:[%s139 + $0xc] sm:$0x3] %v152
              %v154 = vld [vmem:[%s138 + $0x1c] sm:$0x3]
              %155 = vst [vmem:[%s139 + $0xe] sm:$0x3] %v154
            $region81: #{rnn_forward.5} parent=68 // loop_footer
              %s137 = sadd.s32 1, %s133
            $region82: #{rnn_forward.5} parent=68 // loop_footer_branch
              %132 = sbr.rel target = $region78
            $region83: #{rnn_forward.5} parent=68 // loop_exit
              _
          $region69: #{rnn_forward.5} parent=53 // pred_fallthru
            _
        $region54: #{rnn_forward.5} parent=49 // pred_fallthru
          _
        // Predicated region
        $region55: #{rnn_forward.5} parent=49 // pred_check
          _
        $region56: #{rnn_forward.5} parent=49 // pred_check_branch
          %95 = sbr.rel (0) target = $region58
        $region57: #{rnn_forward.5} parent=49 // pred_region
          loop: start=0, step=1, limit=1
          $region59: #{rnn_forward.5} parent=57 // loop_pre_header
            _
          $region60: #{rnn_forward.5} parent=57 // loop_header
            %s98 = sphi 0, %s102
            %p99 = scmp.ge.s32.totalorder %s98, 1
            %s103 = sphi %s89, %s89
            %s104 = sphi [#allocation7], [#allocation7]
          $region61: #{rnn_forward.5} parent=57 // loop_header_branch
            %101 = sbr.rel (%p99) target = $region65
          $region62: #{rnn_forward.5} parent=57 // loop_body
            %v105 = vld [vmem:[%s103] sm:$0x3]
            %106 = vst [vmem:[%s104] sm:$0x3] %v105
            %v107 = vld [vmem:[%s103 + $0x4] sm:$0x3]
            %108 = vst [vmem:[%s104 + $0x2] sm:$0x3] %v107
            %v109 = vld [vmem:[%s103 + $0x8] sm:$0x3]
            %110 = vst [vmem:[%s104 + $0x4] sm:$0x3] %v109
            %v111 = vld [vmem:[%s103 + $0xc] sm:$0x3]
            %112 = vst [vmem:[%s104 + $0x6] sm:$0x3] %v111
            %v113 = vld [vmem:[%s103 + $0x10] sm:$0x3]
            %114 = vst [vmem:[%s104 + $0x8] sm:$0x3] %v113
            %v115 = vld [vmem:[%s103 + $0x14] sm:$0x3]
            %116 = vst [vmem:[%s104 + $0xa] sm:$0x3] %v115
            %v117 = vld [vmem:[%s103 + $0x18] sm:$0x3]
            %118 = vst [vmem:[%s104 + $0xc] sm:$0x3] %v117
            %v119 = vld [vmem:[%s103 + $0x1c] sm:$0x3]
            %120 = vst [vmem:[%s104 + $0xe] sm:$0x3] %v119
          $region63: #{rnn_forward.5} parent=57 // loop_footer
            %s102 = sadd.s32 1, %s98
          $region64: #{rnn_forward.5} parent=57 // loop_footer_branch
            %97 = sbr.rel target = $region60
          $region65: #{rnn_forward.5} parent=57 // loop_exit
            _
        $region58: #{rnn_forward.5} parent=49 // pred_fallthru
          _
      $region50: #{rnn_forward.5} parent=45 // pred_fallthru
        _
      %156 = vnop
    $region46: #{rnn_forward.5} parent=1 // pred_fallthru
      _
    // Predicated region
    $region84: #{rnn_forward.5} parent=1 // pred_check
      _
    $region85: #{rnn_forward.5} parent=1 // pred_check_branch
      %158 = sbr.rel (0) target = $region87
    $region86: #{rnn_forward.5} parent=1 // pred_region
      _
    $region87: #{rnn_forward.5} parent=1 // pred_fallthru
      _
    // Predicated region
    $region88: #{rnn_forward.5} parent=1 // pred_check
      _
    $region89: #{rnn_forward.5} parent=1 // pred_check_branch
      %160 = sbr.rel (0) target = $region91
    $region90: #{rnn_forward.5} parent=1 // pred_region
      _
    $region91: #{rnn_forward.5} parent=1 // pred_fallthru
      _
    // Predicated region
    $region92: #{rnn_forward.5} parent=1 // pred_check
      _
    $region93: #{rnn_forward.5} parent=1 // pred_check_branch
      %162 = sbr.rel (0) target = $region95
    $region94: #{rnn_forward.5} parent=1 // pred_region
      _
    $region95: #{rnn_forward.5} parent=1 // pred_fallthru
      _
    // Predicated region
    $region96: #{rnn_forward.5} parent=1 // pred_check
      _
    $region97: #{rnn_forward.5} parent=1 // pred_check_branch
      %164 = sbr.rel (0) target = $region99
    $region98: #{rnn_forward.5} parent=1 // pred_region
      _
    $region99: #{rnn_forward.5} parent=1 // pred_fallthru
      _
    // Predicated region
    $region100: #{rnn_forward.5} parent=1 // pred_check
      _
    $region101: #{rnn_forward.5} parent=1 // pred_check_branch
      %166 = sbr.rel (0) target = $region103
    $region102: #{rnn_forward.5} parent=1 // pred_region
      _
    $region103: #{rnn_forward.5} parent=1 // pred_fallthru
      _
    // Predicated region
    $region104: #{rnn_forward.5} parent=1 // pred_check
      _
    $region105: #{rnn_forward.5} parent=1 // pred_check_branch
      %168 = sbr.rel (0) target = $region107
    $region106: #{rnn_forward.5} parent=1 // pred_region
      _
    $region107: #{rnn_forward.5} parent=1 // pred_fallthru
      _
    %s169 = ssub.s32 0, 0
    %s170 = smul.u32 8, %s169
    %p171 = scmp.lt.s32.totalorder %s170, 7
    %s172 = scalar_select %p171, %s170, 7
    %s173 = smul.addr %s172, 2
    %s174 = scalar_lea.vmem %s7, %s173
    %s175 = ssub.s32 0, 0
    %s176 = smul.u32 8, %s175
    %s177 = ssub.s32 0, 0
    %s178 = smul.u32 8, %s177
    %p179 = scmp.lt.s32.totalorder %s178, 7
    %s180 = scalar_select %p179, %s178, 7
    %s181 = smul.addr %s180, 2
    %s182 = scalar_lea.vmem %s7, %s181
    %s183 = ssub.s32 0, 0
    %s184 = smul.u32 8, %s183
    %p185 = scmp.eq.s32.totalorder 0, 0
    // Predicated region
    $region108: #{rnn_forward.5} parent=1 // pred_check
      %p186 = pneg %p185
    $region109: #{rnn_forward.5} parent=1 // pred_check_branch
      %188 = sbr.rel (%p186) target = $region111
    $region110: #{rnn_forward.5} parent=1 // pred_region
      %vm189 = vcmask 254976
      %190 = vst.msk [vmem:[#allocation2] sm:$0x3] %vm189, 0.0
      %191 = vst.msk [vmem:[#allocation3] sm:$0x3] %vm189, 0.0
      %192 = vst.msk [vmem:[#allocation4] sm:$0x3] %vm189, 0.0
      %193 = vst.msk [vmem:[#allocation5] sm:$0x3] %vm189, 0.0
    $region111: #{rnn_forward.5} parent=1 // pred_fallthru
      _
    %v194 = vld [vmem:[%s2] sm:$0xff]
    %v195 = vld [vmem:[%s2 + $0x8] sm:$0xff]
    %v196 = vld [vmem:[%s2 + $0x10] sm:$0xff]
    %v197 = vld [vmem:[%s2 + $0x18] sm:$0xff]
    %v198 = vld [vmem:[%s3] sm:$0xff]
    %v199 = vld [vmem:[%s3 + $0x8] sm:$0xff]
    %v200 = vld [vmem:[%s3 + $0x10] sm:$0xff]
    %v201 = vld [vmem:[%s3 + $0x18] sm:$0xff]
    %v202 = vld [vmem:[%s4] sm:$0x1]
    %v203 = vld [vmem:[%s5] sm:$0x1]
    %v204 = vld [vmem:[#allocation2] sm:$0x3]
    %v205 = vld [vmem:[#allocation6] sm:$0x3]
    %vm206 = vcmask 261120
    %v208 = vsel %vm206, %v204, 0
    %210 = vmatprep.subr.mxu0 0.0
    %211 = vmatpush1.msra.mxu0 %v194
    %212 = vmatprep.subr.mxu0 0.0
    %213 = vmatpush1.msra.mxu0 %v195
    %214 = vmatprep.subr.mxu0 0.0
    %215 = vmatpush1.msra.mxu0 %v196
    %216 = vmatprep.subr.mxu0 0.0
    %217 = vmatpush1.msra.mxu0 %v197
    %218 = vmatprep.subr.mxu0 0.0
    %219 = vmatpush1.msra.mxu0 0.0
    %220 = vmatprep.subr.mxu0 0.0
    %221 = vmatpush1.msra.mxu0 0.0
    %222 = vmatprep.subr.mxu0 0.0
    %223 = vmatpush1.msra.mxu0 0.0
    %224 = vmatprep.subr.mxu0 0.0
    %225 = vmatpush1.msra.mxu0 0.0
    %226 = vmatprep.subr.mxu0 0.0
    %227 = vmatpush1.msra.mxu0 0.0
    %228 = vmatprep.subr.mxu0 0.0
    %229 = vmatpush1.msra.mxu0 0.0
    %230 = vmatprep.subr.mxu0 0.0
    %231 = vmatpush1.msra.mxu0 0.0
    %232 = vmatprep.subr.mxu0 0.0
    %233 = vmatpush1.msra.mxu0 0.0
    %234 = vmatprep.subr.mxu0 0.0
    %235 = vmatpush1.msra.mxu0 0.0
    %236 = vmatprep.subr.mxu0 0.0
    %237 = vmatpush1.msra.mxu0 0.0
    %238 = vmatprep.subr.mxu0 0.0
    %239 = vmatpush1.msra.mxu0 0.0
    %240 = vmatprep.subr.mxu0 0.0
    %241 = vmatpush1.msra.mxu0 0.0
    %242 = vmatprep.subr.mxu0 0.0
    %243 = vmatpush1.msra.mxu0 0.0
    %244 = vmatprep.subr.mxu0 0.0
    %245 = vmatpush1.msra.mxu0 0.0
    %246 = vmatprep.subr.mxu0 0.0
    %247 = vmatpush1.msra.mxu0 0.0
    %248 = vmatprep.subr.mxu0 0.0
    %249 = vmatpush1.msra.mxu0 0.0
    %250 = vmatprep.subr.mxu0 0.0
    %251 = vmatpush1.msra.mxu0 0.0
    %252 = vmatprep.subr.mxu0 0.0
    %253 = vmatpush1.msra.mxu0 0.0
    %254 = vmatprep.subr.mxu0 0.0
    %255 = vmatpush1.msra.mxu0 0.0
    %256 = vmatprep.subr.mxu0 0.0
    %257 = vmatpush1.msra.mxu0 0.0
    %258 = vmatprep.subr.mxu0 0.0
    %259 = vmatpush1.msra.mxu0 0.0
    %260 = vmatprep.subr.mxu0 0.0
    %261 = vmatpush1.msra.mxu0 0.0
    %262 = vmatprep.subr.mxu0 0.0
    %263 = vmatpush1.msra.mxu0 0.0
    %264 = vmatprep.subr.mxu0 0.0
    %265 = vmatpush1.msra.mxu0 0.0
    %266 = vmatprep.subr.mxu0 0.0
    %267 = vmatpush1.msra.mxu0 0.0
    %268 = vmatprep.subr.mxu0 0.0
    %269 = vmatpush1.msra.mxu0 0.0
    %270 = vmatprep.subr.mxu0 0.0
    %271 = vmatpush1.msra.mxu0 0.0
    %272 = vmatprep.subr.mxu0 0.0
    %273 = vmatpush1.msra.mxu0 0.0
    %274 = vmatprep.mubr.f32.mxu0 0.0
    %275 = vmatmul.mubr.f32.gmra.mrb[0].mxu0 %v208
    %v276 = vpop.f32.mrb[0].mxu0
    %v277 = vadd.f32 %v205, %v276
    %v278 = vpop.f32.mrb[0].mxu0
    %279 = vdwg.mxu0
    %v281 = vlaneseq
    %v282 = vshrl.u32 %v281, 7
    %v283 = vsub.s32 0, %v282
    %v284 = vrot.slane %v202, %v283
    %v286 = vadd.f32 %v277, %v284
    %v287 = vld [vmem:[#allocation4] sm:$0x3]
    %v288 = vxor.u32 %v286, 2147483648
    %v289 = vmul.f32 %v288, 1.442695
    %v290 = vpow.pop %v289
    %v291 = vadd.f32 %v290, 1.0
    %v292 = vrcp.pop %v291
    %v293 = vmul.f32 1.0, %v292
    %v294 = vtanh.pop %v286
    %296 = vrot.lane.b32.xlu0 %v287, 32
    %v297 = vpop.permute.xlu0 %296
    %v299 = vmul.f32 %v293, %v297
    %301 = vrot.lane.b32.xlu0 %v294, 64
    %v302 = vpop.permute.xlu0 %301
    %v304 = vmul.f32 %v293, %v302
    %306 = vrot.lane.b32.xlu0 %v304, 32
    %v307 = vpop.permute.xlu0 %306
    %v309 = vadd.f32 %v299, %v307
    %v310 = vtanh.pop %v309
    %312 = vrot.lane.b32.xlu0 %v310, 64
    %v313 = vpop.permute.xlu0 %312
    %v315 = vmul.f32 %v293, %v313
    %317 = vrot.lane.b32.xlu0 %v315, 32
    %v318 = vpop.permute.xlu0 %317
    %vm320 = vcmask 254976
    %321 = vst.msk [vmem:[#allocation2] sm:$0x3] %vm320, %v318
    %323 = vrot.lane.b32.xlu0 %v309, 96
    %v324 = vpop.permute.xlu0 %323
    %326 = vst.msk [vmem:[#allocation4] sm:$0x3] %vm320, %v324
    %327 = vst.msk [vmem:[%s6] sm:$0x3] %vm320, %v318
    %v328 = vld [vmem:[#allocation3] sm:$0x3]
    %s329 = scalar_lea.vmem [#allocation7], 14
    %v330 = vld [vmem:[%s329] sm:$0x3]
    %v332 = vsel %vm206, %v328, 0
    %334 = vmatprep.subr.mxu0 0.0
    %335 = vmatpush1.msra.mxu0 %v198
    %336 = vmatprep.subr.mxu0 0.0
    %337 = vmatpush1.msra.mxu0 %v199
    %338 = vmatprep.subr.mxu0 0.0
    %339 = vmatpush1.msra.mxu0 %v200
    %340 = vmatprep.subr.mxu0 0.0
    %341 = vmatpush1.msra.mxu0 %v201
    %342 = vmatprep.subr.mxu0 0.0
    %343 = vmatpush1.msra.mxu0 0.0
    %344 = vmatprep.subr.mxu0 0.0
    %345 = vmatpush1.msra.mxu0 0.0
    %346 = vmatprep.subr.mxu0 0.0
    %347 = vmatpush1.msra.mxu0 0.0
    %348 = vmatprep.subr.mxu0 0.0
    %349 = vmatpush1.msra.mxu0 0.0
    %350 = vmatprep.subr.mxu0 0.0
    %351 = vmatpush1.msra.mxu0 0.0
    %352 = vmatprep.subr.mxu0 0.0
    %353 = vmatpush1.msra.mxu0 0.0
    %354 = vmatprep.subr.mxu0 0.0
    %355 = vmatpush1.msra.mxu0 0.0
    %356 = vmatprep.subr.mxu0 0.0
    %357 = vmatpush1.msra.mxu0 0.0
    %358 = vmatprep.subr.mxu0 0.0
    %359 = vmatpush1.msra.mxu0 0.0
    %360 = vmatprep.subr.mxu0 0.0
    %361 = vmatpush1.msra.mxu0 0.0
    %362 = vmatprep.subr.mxu0 0.0
    %363 = vmatpush1.msra.mxu0 0.0
    %364 = vmatprep.subr.mxu0 0.0
    %365 = vmatpush1.msra.mxu0 0.0
    %366 = vmatprep.subr.mxu0 0.0
    %367 = vmatpush1.msra.mxu0 0.0
    %368 = vmatprep.subr.mxu0 0.0
    %369 = vmatpush1.msra.mxu0 0.0
    %370 = vmatprep.subr.mxu0 0.0
    %371 = vmatpush1.msra.mxu0 0.0
    %372 = vmatprep.subr.mxu0 0.0
    %373 = vmatpush1.msra.mxu0 0.0
    %374 = vmatprep.subr.mxu0 0.0
    %375 = vmatpush1.msra.mxu0 0.0
    %376 = vmatprep.subr.mxu0 0.0
    %377 = vmatpush1.msra.mxu0 0.0
    %378 = vmatprep.subr.mxu0 0.0
    %379 = vmatpush1.msra.mxu0 0.0
    %380 = vmatprep.subr.mxu0 0.0
    %381 = vmatpush1.msra.mxu0 0.0
    %382 = vmatprep.subr.mxu0 0.0
    %383 = vmatpush1.msra.mxu0 0.0
    %384 = vmatprep.subr.mxu0 0.0
    %385 = vmatpush1.msra.mxu0 0.0
    %386 = vmatprep.subr.mxu0 0.0
    %387 = vmatpush1.msra.mxu0 0.0
    %388 = vmatprep.subr.mxu0 0.0
    %389 = vmatpush1.msra.mxu0 0.0
    %390 = vmatprep.subr.mxu0 0.0
    %391 = vmatpush1.msra.mxu0 0.0
    %392 = vmatprep.subr.mxu0 0.0
    %393 = vmatpush1.msra.mxu0 0.0
    %394 = vmatprep.subr.mxu0 0.0
    %395 = vmatpush1.msra.mxu0 0.0
    %396 = vmatprep.subr.mxu0 0.0
    %397 = vmatpush1.msra.mxu0 0.0
    %398 = vmatprep.mubr.f32.mxu0 0.0
    %399 = vmatmul.mubr.f32.gmra.mrb[0].mxu0 %v332
    %v400 = vpop.f32.mrb[0].mxu0
    %v401 = vadd.f32 %v330, %v400
    %v402 = vpop.f32.mrb[0].mxu0
    %403 = vdwg.mxu0
    %v405 = vlaneseq
    %v406 = vshrl.u32 %v405, 7
    %v407 = vsub.s32 0, %v406
    %v408 = vrot.slane %v203, %v407
    %v410 = vadd.f32 %v401, %v408
    %v411 = vld [vmem:[#allocation5] sm:$0x3]
    %v412 = vxor.u32 %v410, 2147483648
    %v413 = vmul.f32 %v412, 1.442695
    %v414 = vpow.pop %v413
    %v415 = vadd.f32 %v414, 1.0
    %v416 = vrcp.pop %v415
    %v417 = vmul.f32 1.0, %v416
    %v418 = vtanh.pop %v410
    %420 = vrot.lane.b32.xlu0 %v411, 32
    %v421 = vpop.permute.xlu0 %420
    %v423 = vmul.f32 %v417, %v421
    %425 = vrot.lane.b32.xlu0 %v418, 64
    %v426 = vpop.permute.xlu0 %425
    %v428 = vmul.f32 %v417, %v426
    %430 = vrot.lane.b32.xlu0 %v428, 32
    %v431 = vpop.permute.xlu0 %430
    %v433 = vadd.f32 %v423, %v431
    %v434 = vtanh.pop %v433
    %436 = vrot.lane.b32.xlu0 %v434, 64
    %v437 = vpop.permute.xlu0 %436
    %v439 = vmul.f32 %v417, %v437
    %441 = vrot.lane.b32.xlu0 %v439, 32
    %v442 = vpop.permute.xlu0 %441
    %444 = vst.msk [vmem:[#allocation3] sm:$0x3] %vm320, %v442
    %446 = vrot.lane.b32.xlu0 %v433, 96
    %v447 = vpop.permute.xlu0 %446
    %449 = vst.msk [vmem:[#allocation5] sm:$0x3] %vm320, %v447
    %s450 = scalar_lea.vmem %s182, 14
    %451 = vst.msk [vmem:[%s450] sm:$0x3] %vm320, %v442
    %v452 = vld [vmem:[#allocation2] sm:$0x3]
    %s453 = scalar_lea.vmem [#allocation6], 2
    %v454 = vld [vmem:[%s453] sm:$0x3]
    %v456 = vsel %vm206, %v452, 0
    %458 = vmatprep.subr.mxu0 0.0
    %459 = vmatpush1.msra.mxu0 %v194
    %460 = vmatprep.subr.mxu0 0.0
    %461 = vmatpush1.msra.mxu0 %v195
    %462 = vmatprep.subr.mxu0 0.0
    %463 = vmatpush1.msra.mxu0 %v196
    %464 = vmatprep.subr.mxu0 0.0
    %465 = vmatpush1.msra.mxu0 %v197
    %466 = vmatprep.subr.mxu0 0.0
    %467 = vmatpush1.msra.mxu0 0.0
    %468 = vmatprep.subr.mxu0 0.0
    %469 = vmatpush1.msra.mxu0 0.0
    %470 = vmatprep.subr.mxu0 0.0
    %471 = vmatpush1.msra.mxu0 0.0
    %472 = vmatprep.subr.mxu0 0.0
    %473 = vmatpush1.msra.mxu0 0.0
    %474 = vmatprep.subr.mxu0 0.0
    %475 = vmatpush1.msra.mxu0 0.0
    %476 = vmatprep.subr.mxu0 0.0
    %477 = vmatpush1.msra.mxu0 0.0
    %478 = vmatprep.subr.mxu0 0.0
    %479 = vmatpush1.msra.mxu0 0.0
    %480 = vmatprep.subr.mxu0 0.0
    %481 = vmatpush1.msra.mxu0 0.0
    %482 = vmatprep.subr.mxu0 0.0
    %483 = vmatpush1.msra.mxu0 0.0
    %484 = vmatprep.subr.mxu0 0.0
    %485 = vmatpush1.msra.mxu0 0.0
    %486 = vmatprep.subr.mxu0 0.0
    %487 = vmatpush1.msra.mxu0 0.0
    %488 = vmatprep.subr.mxu0 0.0
    %489 = vmatpush1.msra.mxu0 0.0
    %490 = vmatprep.subr.mxu0 0.0
    %491 = vmatpush1.msra.mxu0 0.0
    %492 = vmatprep.subr.mxu0 0.0
    %493 = vmatpush1.msra.mxu0 0.0
    %494 = vmatprep.subr.mxu0 0.0
    %495 = vmatpush1.msra.mxu0 0.0
    %496 = vmatprep.subr.mxu0 0.0
    %497 = vmatpush1.msra.mxu0 0.0
    %498 = vmatprep.subr.mxu0 0.0
    %499 = vmatpush1.msra.mxu0 0.0
    %500 = vmatprep.subr.mxu0 0.0
    %501 = vmatpush1.msra.mxu0 0.0
    %502 = vmatprep.subr.mxu0 0.0
    %503 = vmatpush1.msra.mxu0 0.0
    %504 = vmatprep.subr.mxu0 0.0
    %505 = vmatpush1.msra.mxu0 0.0
    %506 = vmatprep.subr.mxu0 0.0
    %507 = vmatpush1.msra.mxu0 0.0
    %508 = vmatprep.subr.mxu0 0.0
    %509 = vmatpush1.msra.mxu0 0.0
    %510 = vmatprep.subr.mxu0 0.0
    %511 = vmatpush1.msra.mxu0 0.0
    %512 = vmatprep.subr.mxu0 0.0
    %513 = vmatpush1.msra.mxu0 0.0
    %514 = vmatprep.subr.mxu0 0.0
    %515 = vmatpush1.msra.mxu0 0.0
    %516 = vmatprep.subr.mxu0 0.0
    %517 = vmatpush1.msra.mxu0 0.0
    %518 = vmatprep.subr.mxu0 0.0
    %519 = vmatpush1.msra.mxu0 0.0
    %520 = vmatprep.subr.mxu0 0.0
    %521 = vmatpush1.msra.mxu0 0.0
    %522 = vmatprep.mubr.f32.mxu0 0.0
    %523 = vmatmul.mubr.f32.gmra.mrb[0].mxu0 %v456
    %v524 = vpop.f32.mrb[0].mxu0
    %v525 = vadd.f32 %v454, %v524
    %v526 = vpop.f32.mrb[0].mxu0
    %527 = vdwg.mxu0
    %v528 = vadd.f32 %v525, %v284
    %v529 = vld [vmem:[#allocation4] sm:$0x3]
    %v530 = vxor.u32 %v528, 2147483648
    %v531 = vmul.f32 %v530, 1.442695
    %v532 = vpow.pop %v531
    %v533 = vadd.f32 %v532, 1.0
    %v534 = vrcp.pop %v533
    %v535 = vmul.f32 1.0, %v534
    %v536 = vtanh.pop %v528
    %538 = vrot.lane.b32.xlu0 %v529, 32
    %v539 = vpop.permute.xlu0 %538
    %v541 = vmul.f32 %v535, %v539
    %543 = vrot.lane.b32.xlu0 %v536, 64
    %v544 = vpop.permute.xlu0 %543
    %v546 = vmul.f32 %v535, %v544
    %548 = vrot.lane.b32.xlu0 %v546, 32
    %v549 = vpop.permute.xlu0 %548
    %v551 = vadd.f32 %v541, %v549
    %v552 = vtanh.pop %v551
    %554 = vrot.lane.b32.xlu0 %v552, 64
    %v555 = vpop.permute.xlu0 %554
    %v557 = vmul.f32 %v535, %v555
    %559 = vrot.lane.b32.xlu0 %v557, 32
    %v560 = vpop.permute.xlu0 %559
    %562 = vst.msk [vmem:[#allocation2] sm:$0x3] %vm320, %v560
    %564 = vrot.lane.b32.xlu0 %v551, 96
    %v565 = vpop.permute.xlu0 %564
    %567 = vst.msk [vmem:[#allocation4] sm:$0x3] %vm320, %v565
    %s568 = scalar_lea.vmem %s6, 2
    %569 = vst.msk [vmem:[%s568] sm:$0x3] %vm320, %v560
    %v570 = vld [vmem:[#allocation3] sm:$0x3]
    %s571 = scalar_lea.vmem [#allocation7], 12
    %v572 = vld [vmem:[%s571] sm:$0x3]
    %v574 = vsel %vm206, %v570, 0
    %576 = vmatprep.subr.mxu0 0.0
    %577 = vmatpush1.msra.mxu0 %v198
    %578 = vmatprep.subr.mxu0 0.0
    %579 = vmatpush1.msra.mxu0 %v199
    %580 = vmatprep.subr.mxu0 0.0
    %581 = vmatpush1.msra.mxu0 %v200
    %582 = vmatprep.subr.mxu0 0.0
    %583 = vmatpush1.msra.mxu0 %v201
    %584 = vmatprep.subr.mxu0 0.0
    %585 = vmatpush1.msra.mxu0 0.0
    %586 = vmatprep.subr.mxu0 0.0
    %587 = vmatpush1.msra.mxu0 0.0
    %588 = vmatprep.subr.mxu0 0.0
    %589 = vmatpush1.msra.mxu0 0.0
    %590 = vmatprep.subr.mxu0 0.0
    %591 = vmatpush1.msra.mxu0 0.0
    %592 = vmatprep.subr.mxu0 0.0
    %593 = vmatpush1.msra.mxu0 0.0
    %594 = vmatprep.subr.mxu0 0.0
    %595 = vmatpush1.msra.mxu0 0.0
    %596 = vmatprep.subr.mxu0 0.0
    %597 = vmatpush1.msra.mxu0 0.0
    %598 = vmatprep.subr.mxu0 0.0
    %599 = vmatpush1.msra.mxu0 0.0
    %600 = vmatprep.subr.mxu0 0.0
    %601 = vmatpush1.msra.mxu0 0.0
    %602 = vmatprep.subr.mxu0 0.0
    %603 = vmatpush1.msra.mxu0 0.0
    %604 = vmatprep.subr.mxu0 0.0
    %605 = vmatpush1.msra.mxu0 0.0
    %606 = vmatprep.subr.mxu0 0.0
    %607 = vmatpush1.msra.mxu0 0.0
    %608 = vmatprep.subr.mxu0 0.0
    %609 = vmatpush1.msra.mxu0 0.0
    %610 = vmatprep.subr.mxu0 0.0
    %611 = vmatpush1.msra.mxu0 0.0
    %612 = vmatprep.subr.mxu0 0.0
    %613 = vmatpush1.msra.mxu0 0.0
    %614 = vmatprep.subr.mxu0 0.0
    %615 = vmatpush1.msra.mxu0 0.0
    %616 = vmatprep.subr.mxu0 0.0
    %617 = vmatpush1.msra.mxu0 0.0
    %618 = vmatprep.subr.mxu0 0.0
    %619 = vmatpush1.msra.mxu0 0.0
    %620 = vmatprep.subr.mxu0 0.0
    %621 = vmatpush1.msra.mxu0 0.0
    %622 = vmatprep.subr.mxu0 0.0
    %623 = vmatpush1.msra.mxu0 0.0
    %624 = vmatprep.subr.mxu0 0.0
    %625 = vmatpush1.msra.mxu0 0.0
    %626 = vmatprep.subr.mxu0 0.0
    %627 = vmatpush1.msra.mxu0 0.0
    %628 = vmatprep.subr.mxu0 0.0
    %629 = vmatpush1.msra.mxu0 0.0
    %630 = vmatprep.subr.mxu0 0.0
    %631 = vmatpush1.msra.mxu0 0.0
    %632 = vmatprep.subr.mxu0 0.0
    %633 = vmatpush1.msra.mxu0 0.0
    %634 = vmatprep.subr.mxu0 0.0
    %635 = vmatpush1.msra.mxu0 0.0
    %636 = vmatprep.subr.mxu0 0.0
    %637 = vmatpush1.msra.mxu0 0.0
    %638 = vmatprep.subr.mxu0 0.0
    %639 = vmatpush1.msra.mxu0 0.0
    %640 = vmatprep.mubr.f32.mxu0 0.0
    %641 = vmatmul.mubr.f32.gmra.mrb[0].mxu0 %v574
    %v642 = vpop.f32.mrb[0].mxu0
    %v643 = vadd.f32 %v572, %v642
    %v644 = vpop.f32.mrb[0].mxu0
    %645 = vdwg.mxu0
    %v646 = vadd.f32 %v643, %v408
    %v647 = vld [vmem:[#allocation5] sm:$0x3]
    %v648 = vxor.u32 %v646, 2147483648
    %v649 = vmul.f32 %v648, 1.442695
    %v650 = vpow.pop %v649
    %v651 = vadd.f32 %v650, 1.0
    %v652 = vrcp.pop %v651
    %v653 = vmul.f32 1.0, %v652
    %v654 = vtanh.pop %v646
    %656 = vrot.lane.b32.xlu0 %v647, 32
    %v657 = vpop.permute.xlu0 %656
    %v659 = vmul.f32 %v653, %v657
    %661 = vrot.lane.b32.xlu0 %v654, 64
    %v662 = vpop.permute.xlu0 %661
    %v664 = vmul.f32 %v653, %v662
    %666 = vrot.lane.b32.xlu0 %v664, 32
    %v667 = vpop.permute.xlu0 %666
    %v669 = vadd.f32 %v659, %v667
    %v670 = vtanh.pop %v669
    %672 = vrot.lane.b32.xlu0 %v670, 64
    %v673 = vpop.permute.xlu0 %672
    %v675 = vmul.f32 %v653, %v673
    %677 = vrot.lane.b32.xlu0 %v675, 32
    %v678 = vpop.permute.xlu0 %677
    %680 = vst.msk [vmem:[#allocation3] sm:$0x3] %vm320, %v678
    %682 = vrot.lane.b32.xlu0 %v669, 96
    %v683 = vpop.permute.xlu0 %682
    %685 = vst.msk [vmem:[#allocation5] sm:$0x3] %vm320, %v683
    %s686 = scalar_lea.vmem %s182, 12
    %687 = vst.msk [vmem:[%s686] sm:$0x3] %vm320, %v678
    %v688 = vld [vmem:[#allocation2] sm:$0x3]
    %s689 = scalar_lea.vmem [#allocation6], 4
    %v690 = vld [vmem:[%s689] sm:$0x3]
    %v692 = vsel %vm206, %v688, 0
    %694 = vmatprep.subr.mxu0 0.0
    %695 = vmatpush1.msra.mxu0 %v194
    %696 = vmatprep.subr.mxu0 0.0
    %697 = vmatpush1.msra.mxu0 %v195
    %698 = vmatprep.subr.mxu0 0.0
    %699 = vmatpush1.msra.mxu0 %v196
    %700 = vmatprep.subr.mxu0 0.0
    %701 = vmatpush1.msra.mxu0 %v197
    %702 = vmatprep.subr.mxu0 0.0
    %703 = vmatpush1.msra.mxu0 0.0
    %704 = vmatprep.subr.mxu0 0.0
    %705 = vmatpush1.msra.mxu0 0.0
    %706 = vmatprep.subr.mxu0 0.0
    %707 = vmatpush1.msra.mxu0 0.0
    %708 = vmatprep.subr.mxu0 0.0
    %709 = vmatpush1.msra.mxu0 0.0
    %710 = vmatprep.subr.mxu0 0.0
    %711 = vmatpush1.msra.mxu0 0.0
    %712 = vmatprep.subr.mxu0 0.0
    %713 = vmatpush1.msra.mxu0 0.0
    %714 = vmatprep.subr.mxu0 0.0
    %715 = vmatpush1.msra.mxu0 0.0
    %716 = vmatprep.subr.mxu0 0.0
    %717 = vmatpush1.msra.mxu0 0.0
    %718 = vmatprep.subr.mxu0 0.0
    %719 = vmatpush1.msra.mxu0 0.0
    %720 = vmatprep.subr.mxu0 0.0
    %721 = vmatpush1.msra.mxu0 0.0
    %722 = vmatprep.subr.mxu0 0.0
    %723 = vmatpush1.msra.mxu0 0.0
    %724 = vmatprep.subr.mxu0 0.0
    %725 = vmatpush1.msra.mxu0 0.0
    %726 = vmatprep.subr.mxu0 0.0
    %727 = vmatpush1.msra.mxu0 0.0
    %728 = vmatprep.subr.mxu0 0.0
    %729 = vmatpush1.msra.mxu0 0.0
    %730 = vmatprep.subr.mxu0 0.0
    %731 = vmatpush1.msra.mxu0 0.0
    %732 = vmatprep.subr.mxu0 0.0
    %733 = vmatpush1.msra.mxu0 0.0
    %734 = vmatprep.subr.mxu0 0.0
    %735 = vmatpush1.msra.mxu0 0.0
    %736 = vmatprep.subr.mxu0 0.0
    %737 = vmatpush1.msra.mxu0 0.0
    %738 = vmatprep.subr.mxu0 0.0
    %739 = vmatpush1.msra.mxu0 0.0
    %740 = vmatprep.subr.mxu0 0.0
    %741 = vmatpush1.msra.mxu0 0.0
    %742 = vmatprep.subr.mxu0 0.0
    %743 = vmatpush1.msra.mxu0 0.0
    %744 = vmatprep.subr.mxu0 0.0
    %745 = vmatpush1.msra.mxu0 0.0
    %746 = vmatprep.subr.mxu0 0.0
    %747 = vmatpush1.msra.mxu0 0.0
    %748 = vmatprep.subr.mxu0 0.0
    %749 = vmatpush1.msra.mxu0 0.0
    %750 = vmatprep.subr.mxu0 0.0
    %751 = vmatpush1.msra.mxu0 0.0
    %752 = vmatprep.subr.mxu0 0.0
    %753 = vmatpush1.msra.mxu0 0.0
    %754 = vmatprep.subr.mxu0 0.0
    %755 = vmatpush1.msra.mxu0 0.0
    %756 = vmatprep.subr.mxu0 0.0
    %757 = vmatpush1.msra.mxu0 0.0
    %758 = vmatprep.mubr.f32.mxu0 0.0
    %759 = vmatmul.mubr.f32.gmra.mrb[0].mxu0 %v692
    %v760 = vpop.f32.mrb[0].mxu0
    %v761 = vadd.f32 %v690, %v760
    %v762 = vpop.f32.mrb[0].mxu0
    %763 = vdwg.mxu0
    %v764 = vadd.f32 %v761, %v284
    %v765 = vld [vmem:[#allocation4] sm:$0x3]
    %v766 = vxor.u32 %v764, 2147483648
    %v767 = vmul.f32 %v766, 1.442695
    %v768 = vpow.pop %v767
    %v769 = vadd.f32 %v768, 1.0
    %v770 = vrcp.pop %v769
    %v771 = vmul.f32 1.0, %v770
    %v772 = vtanh.pop %v764
    %774 = vrot.lane.b32.xlu0 %v765, 32
    %v775 = vpop.permute.xlu0 %774
    %v777 = vmul.f32 %v771, %v775
    %779 = vrot.lane.b32.xlu0 %v772, 64
    %v780 = vpop.permute.xlu0 %779
    %v782 = vmul.f32 %v771, %v780
    %784 = vrot.lane.b32.xlu0 %v782, 32
    %v785 = vpop.permute.xlu0 %784
    %v787 = vadd.f32 %v777, %v785
    %v788 = vtanh.pop %v787
    %790 = vrot.lane.b32.xlu0 %v788, 64
    %v791 = vpop.permute.xlu0 %790
    %v793 = vmul.f32 %v771, %v791
    %795 = vrot.lane.b32.xlu0 %v793, 32
    %v796 = vpop.permute.xlu0 %795
    %798 = vst.msk [vmem:[#allocation2] sm:$0x3] %vm320, %v796
    %800 = vrot.lane.b32.xlu0 %v787, 96
    %v801 = vpop.permute.xlu0 %800
    %803 = vst.msk [vmem:[#allocation4] sm:$0x3] %vm320, %v801
    %s804 = scalar_lea.vmem %s6, 4
    %805 = vst.msk [vmem:[%s804] sm:$0x3] %vm320, %v796
    %v806 = vld [vmem:[#allocation3] sm:$0x3]
    %s807 = scalar_lea.vmem [#allocation7], 10
    %v808 = vld [vmem:[%s807] sm:$0x3]
    %v810 = vsel %vm206, %v806, 0
    %812 = vmatprep.subr.mxu0 0.0
    %813 = vmatpush1.msra.mxu0 %v198
    %814 = vmatprep.subr.mxu0 0.0
    %815 = vmatpush1.msra.mxu0 %v199
    %816 = vmatprep.subr.mxu0 0.0
    %817 = vmatpush1.msra.mxu0 %v200
    %818 = vmatprep.subr.mxu0 0.0
    %819 = vmatpush1.msra.mxu0 %v201
    %820 = vmatprep.subr.mxu0 0.0
    %821 = vmatpush1.msra.mxu0 0.0
    %822 = vmatprep.subr.mxu0 0.0
    %823 = vmatpush1.msra.mxu0 0.0
    %824 = vmatprep.subr.mxu0 0.0
    %825 = vmatpush1.msra.mxu0 0.0
    %826 = vmatprep.subr.mxu0 0.0
    %827 = vmatpush1.msra.mxu0 0.0
    %828 = vmatprep.subr.mxu0 0.0
    %829 = vmatpush1.msra.mxu0 0.0
    %830 = vmatprep.subr.mxu0 0.0
    %831 = vmatpush1.msra.mxu0 0.0
    %832 = vmatprep.subr.mxu0 0.0
    %833 = vmatpush1.msra.mxu0 0.0
    %834 = vmatprep.subr.mxu0 0.0
    %835 = vmatpush1.msra.mxu0 0.0
    %836 = vmatprep.subr.mxu0 0.0
    %837 = vmatpush1.msra.mxu0 0.0
    %838 = vmatprep.subr.mxu0 0.0
    %839 = vmatpush1.msra.mxu0 0.0
    %840 = vmatprep.subr.mxu0 0.0
    %841 = vmatpush1.msra.mxu0 0.0
    %842 = vmatprep.subr.mxu0 0.0
    %843 = vmatpush1.msra.mxu0 0.0
    %844 = vmatprep.subr.mxu0 0.0
    %845 = vmatpush1.msra.mxu0 0.0
    %846 = vmatprep.subr.mxu0 0.0
    %847 = vmatpush1.msra.mxu0 0.0
    %848 = vmatprep.subr.mxu0 0.0
    %849 = vmatpush1.msra.mxu0 0.0
    %850 = vmatprep.subr.mxu0 0.0
    %851 = vmatpush1.msra.mxu0 0.0
    %852 = vmatprep.subr.mxu0 0.0
    %853 = vmatpush1.msra.mxu0 0.0
    %854 = vmatprep.subr.mxu0 0.0
    %855 = vmatpush1.msra.mxu0 0.0
    %856 = vmatprep.subr.mxu0 0.0
    %857 = vmatpush1.msra.mxu0 0.0
    %858 = vmatprep.subr.mxu0 0.0
    %859 = vmatpush1.msra.mxu0 0.0
    %860 = vmatprep.subr.mxu0 0.0
    %861 = vmatpush1.msra.mxu0 0.0
    %862 = vmatprep.subr.mxu0 0.0
    %863 = vmatpush1.msra.mxu0 0.0
    %864 = vmatprep.subr.mxu0 0.0
    %865 = vmatpush1.msra.mxu0 0.0
    %866 = vmatprep.subr.mxu0 0.0
    %867 = vmatpush1.msra.mxu0 0.0
    %868 = vmatprep.subr.mxu0 0.0
    %869 = vmatpush1.msra.mxu0 0.0
    %870 = vmatprep.subr.mxu0 0.0
    %871 = vmatpush1.msra.mxu0 0.0
    %872 = vmatprep.subr.mxu0 0.0
    %873 = vmatpush1.msra.mxu0 0.0
    %874 = vmatprep.subr.mxu0 0.0
    %875 = vmatpush1.msra.mxu0 0.0
    %876 = vmatprep.mubr.f32.mxu0 0.0
    %877 = vmatmul.mubr.f32.gmra.mrb[0].mxu0 %v810
    %v878 = vpop.f32.mrb[0].mxu0
    %v879 = vadd.f32 %v808, %v878
    %v880 = vpop.f32.mrb[0].mxu0
    %881 = vdwg.mxu0
    %v882 = vadd.f32 %v879, %v408
    %v883 = vld [vmem:[#allocation5] sm:$0x3]
    %v884 = vxor.u32 %v882, 2147483648
    %v885 = vmul.f32 %v884, 1.442695
    %v886 = vpow.pop %v885
    %v887 = vadd.f32 %v886, 1.0
    %v888 = vrcp.pop %v887
    %v889 = vmul.f32 1.0, %v888
    %v890 = vtanh.pop %v882
    %892 = vrot.lane.b32.xlu0 %v883, 32
    %v893 = vpop.permute.xlu0 %892
    %v895 = vmul.f32 %v889, %v893
    %897 = vrot.lane.b32.xlu0 %v890, 64
    %v898 = vpop.permute.xlu0 %897
    %v900 = vmul.f32 %v889, %v898
    %902 = vrot.lane.b32.xlu0 %v900, 32
    %v903 = vpop.permute.xlu0 %902
    %v905 = vadd.f32 %v895, %v903
    %v906 = vtanh.pop %v905
    %908 = vrot.lane.b32.xlu0 %v906, 64
    %v909 = vpop.permute.xlu0 %908
    %v911 = vmul.f32 %v889, %v909
    %913 = vrot.lane.b32.xlu0 %v911, 32
    %v914 = vpop.permute.xlu0 %913
    %916 = vst.msk [vmem:[#allocation3] sm:$0x3] %vm320, %v914
    %918 = vrot.lane.b32.xlu0 %v905, 96
    %v919 = vpop.permute.xlu0 %918
    %921 = vst.msk [vmem:[#allocation5] sm:$0x3] %vm320, %v919
    %s922 = scalar_lea.vmem %s182, 10
    %923 = vst.msk [vmem:[%s922] sm:$0x3] %vm320, %v914
    %v924 = vld [vmem:[#allocation2] sm:$0x3]
    %s925 = scalar_lea.vmem [#allocation6], 6
    %v926 = vld [vmem:[%s925] sm:$0x3]
    %v928 = vsel %vm206, %v924, 0
    %930 = vmatprep.subr.mxu0 0.0
    %931 = vmatpush1.msra.mxu0 %v194
    %932 = vmatprep.subr.mxu0 0.0
    %933 = vmatpush1.msra.mxu0 %v195
    %934 = vmatprep.subr.mxu0 0.0
    %935 = vmatpush1.msra.mxu0 %v196
    %936 = vmatprep.subr.mxu0 0.0
    %937 = vmatpush1.msra.mxu0 %v197
    %938 = vmatprep.subr.mxu0 0.0
    %939 = vmatpush1.msra.mxu0 0.0
    %940 = vmatprep.subr.mxu0 0.0
    %941 = vmatpush1.msra.mxu0 0.0
    %942 = vmatprep.subr.mxu0 0.0
    %943 = vmatpush1.msra.mxu0 0.0
    %944 = vmatprep.subr.mxu0 0.0
    %945 = vmatpush1.msra.mxu0 0.0
    %946 = vmatprep.subr.mxu0 0.0
    %947 = vmatpush1.msra.mxu0 0.0
    %948 = vmatprep.subr.mxu0 0.0
    %949 = vmatpush1.msra.mxu0 0.0
    %950 = vmatprep.subr.mxu0 0.0
    %951 = vmatpush1.msra.mxu0 0.0
    %952 = vmatprep.subr.mxu0 0.0
    %953 = vmatpush1.msra.mxu0 0.0
    %954 = vmatprep.subr.mxu0 0.0
    %955 = vmatpush1.msra.mxu0 0.0
    %956 = vmatprep.subr.mxu0 0.0
    %957 = vmatpush1.msra.mxu0 0.0
    %958 = vmatprep.subr.mxu0 0.0
    %959 = vmatpush1.msra.mxu0 0.0
    %960 = vmatprep.subr.mxu0 0.0
    %961 = vmatpush1.msra.mxu0 0.0
    %962 = vmatprep.subr.mxu0 0.0
    %963 = vmatpush1.msra.mxu0 0.0
    %964 = vmatprep.subr.mxu0 0.0
    %965 = vmatpush1.msra.mxu0 0.0
    %966 = vmatprep.subr.mxu0 0.0
    %967 = vmatpush1.msra.mxu0 0.0
    %968 = vmatprep.subr.mxu0 0.0
    %969 = vmatpush1.msra.mxu0 0.0
    %970 = vmatprep.subr.mxu0 0.0
    %971 = vmatpush1.msra.mxu0 0.0
    %972 = vmatprep.subr.mxu0 0.0
    %973 = vmatpush1.msra.mxu0 0.0
    %974 = vmatprep.subr.mxu0 0.0
    %975 = vmatpush1.msra.mxu0 0.0
    %976 = vmatprep.subr.mxu0 0.0
    %977 = vmatpush1.msra.mxu0 0.0
    %978 = vmatprep.subr.mxu0 0.0
    %979 = vmatpush1.msra.mxu0 0.0
    %980 = vmatprep.subr.mxu0 0.0
    %981 = vmatpush1.msra.mxu0 0.0
    %982 = vmatprep.subr.mxu0 0.0
    %983 = vmatpush1.msra.mxu0 0.0
    %984 = vmatprep.subr.mxu0 0.0
    %985 = vmatpush1.msra.mxu0 0.0
    %986 = vmatprep.subr.mxu0 0.0
    %987 = vmatpush1.msra.mxu0 0.0
    %988 = vmatprep.subr.mxu0 0.0
    %989 = vmatpush1.msra.mxu0 0.0
    %990 = vmatprep.subr.mxu0 0.0
    %991 = vmatpush1.msra.mxu0 0.0
    %992 = vmatprep.subr.mxu0 0.0
    %993 = vmatpush1.msra.mxu0 0.0
    %994 = vmatprep.mubr.f32.mxu0 0.0
    %995 = vmatmul.mubr.f32.gmra.mrb[0].mxu0 %v928
    %v996 = vpop.f32.mrb[0].mxu0
    %v997 = vadd.f32 %v926, %v996
    %v998 = vpop.f32.mrb[0].mxu0
    %999 = vdwg.mxu0
    %v1000 = vadd.f32 %v997, %v284
    %v1001 = vld [vmem:[#allocation4] sm:$0x3]
    %v1002 = vxor.u32 %v1000, 2147483648
    %v1003 = vmul.f32 %v1002, 1.442695
    %v1004 = vpow.pop %v1003
    %v1005 = vadd.f32 %v1004, 1.0
    %v1006 = vrcp.pop %v1005
    %v1007 = vmul.f32 1.0, %v1006
    %v1008 = vtanh.pop %v1000
    %1010 = vrot.lane.b32.xlu0 %v1001, 32
    %v1011 = vpop.permute.xlu0 %1010
    %v1013 = vmul.f32 %v1007, %v1011
    %1015 = vrot.lane.b32.xlu0 %v1008, 64
    %v1016 = vpop.permute.xlu0 %1015
    %v1018 = vmul.f32 %v1007, %v1016
    %1020 = vrot.lane.b32.xlu0 %v1018, 32
    %v1021 = vpop.permute.xlu0 %1020
    %v1023 = vadd.f32 %v1013, %v1021
    %v1024 = vtanh.pop %v1023
    %1026 = vrot.lane.b32.xlu0 %v1024, 64
    %v1027 = vpop.permute.xlu0 %1026
    %v1029 = vmul.f32 %v1007, %v1027
    %1031 = vrot.lane.b32.xlu0 %v1029, 32
    %v1032 = vpop.permute.xlu0 %1031
    %1034 = vst.msk [vmem:[#allocation2] sm:$0x3] %vm320, %v1032
    %1036 = vrot.lane.b32.xlu0 %v1023, 96
    %v1037 = vpop.permute.xlu0 %1036
    %1039 = vst.msk [vmem:[#allocation4] sm:$0x3] %vm320, %v1037
    %s1040 = scalar_lea.vmem %s6, 6
    %1041 = vst.msk [vmem:[%s1040] sm:$0x3] %vm320, %v1032
    %v1042 = vld [vmem:[#allocation3] sm:$0x3]
    %s1043 = scalar_lea.vmem [#allocation7], 8
    %v1044 = vld [vmem:[%s1043] sm:$0x3]
    %v1046 = vsel %vm206, %v1042, 0
    %1048 = vmatprep.subr.mxu0 0.0
    %1049 = vmatpush1.msra.mxu0 %v198
    %1050 = vmatprep.subr.mxu0 0.0
    %1051 = vmatpush1.msra.mxu0 %v199
    %1052 = vmatprep.subr.mxu0 0.0
    %1053 = vmatpush1.msra.mxu0 %v200
    %1054 = vmatprep.subr.mxu0 0.0
    %1055 = vmatpush1.msra.mxu0 %v201
    %1056 = vmatprep.subr.mxu0 0.0
    %1057 = vmatpush1.msra.mxu0 0.0
    %1058 = vmatprep.subr.mxu0 0.0
    %1059 = vmatpush1.msra.mxu0 0.0
    %1060 = vmatprep.subr.mxu0 0.0
    %1061 = vmatpush1.msra.mxu0 0.0
    %1062 = vmatprep.subr.mxu0 0.0
    %1063 = vmatpush1.msra.mxu0 0.0
    %1064 = vmatprep.subr.mxu0 0.0
    %1065 = vmatpush1.msra.mxu0 0.0
    %1066 = vmatprep.subr.mxu0 0.0
    %1067 = vmatpush1.msra.mxu0 0.0
    %1068 = vmatprep.subr.mxu0 0.0
    %1069 = vmatpush1.msra.mxu0 0.0
    %1070 = vmatprep.subr.mxu0 0.0
    %1071 = vmatpush1.msra.mxu0 0.0
    %1072 = vmatprep.subr.mxu0 0.0
    %1073 = vmatpush1.msra.mxu0 0.0
    %1074 = vmatprep.subr.mxu0 0.0
    %1075 = vmatpush1.msra.mxu0 0.0
    %1076 = vmatprep.subr.mxu0 0.0
    %1077 = vmatpush1.msra.mxu0 0.0
    %1078 = vmatprep.subr.mxu0 0.0
    %1079 = vmatpush1.msra.mxu0 0.0
    %1080 = vmatprep.subr.mxu0 0.0
    %1081 = vmatpush1.msra.mxu0 0.0
    %1082 = vmatprep.subr.mxu0 0.0
    %1083 = vmatpush1.msra.mxu0 0.0
    %1084 = vmatprep.subr.mxu0 0.0
    %1085 = vmatpush1.msra.mxu0 0.0
    %1086 = vmatprep.subr.mxu0 0.0
    %1087 = vmatpush1.msra.mxu0 0.0
    %1088 = vmatprep.subr.mxu0 0.0
    %1089 = vmatpush1.msra.mxu0 0.0
    %1090 = vmatprep.subr.mxu0 0.0
    %1091 = vmatpush1.msra.mxu0 0.0
    %1092 = vmatprep.subr.mxu0 0.0
    %1093 = vmatpush1.msra.mxu0 0.0
    %1094 = vmatprep.subr.mxu0 0.0
    %1095 = vmatpush1.msra.mxu0 0.0
    %1096 = vmatprep.subr.mxu0 0.0
    %1097 = vmatpush1.msra.mxu0 0.0
    %1098 = vmatprep.subr.mxu0 0.0
    %1099 = vmatpush1.msra.mxu0 0.0
    %1100 = vmatprep.subr.mxu0 0.0
    %1101 = vmatpush1.msra.mxu0 0.0
    %1102 = vmatprep.subr.mxu0 0.0
    %1103 = vmatpush1.msra.mxu0 0.0
    %1104 = vmatprep.subr.mxu0 0.0
    %1105 = vmatpush1.msra.mxu0 0.0
    %1106 = vmatprep.subr.mxu0 0.0
    %1107 = vmatpush1.msra.mxu0 0.0
    %1108 = vmatprep.subr.mxu0 0.0
    %1109 = vmatpush1.msra.mxu0 0.0
    %1110 = vmatprep.subr.mxu0 0.0
    %1111 = vmatpush1.msra.mxu0 0.0
    %1112 = vmatprep.mubr.f32.mxu0 0.0
    %1113 = vmatmul.mubr.f32.gmra.mrb[0].mxu0 %v1046
    %v1114 = vpop.f32.mrb[0].mxu0
    %v1115 = vadd.f32 %v1044, %v1114
    %v1116 = vpop.f32.mrb[0].mxu0
    %1117 = vdwg.mxu0
    %v1118 = vadd.f32 %v1115, %v408
    %v1119 = vld [vmem:[#allocation5] sm:$0x3]
    %v1120 = vxor.u32 %v1118, 2147483648
    %v1121 = vmul.f32 %v1120, 1.442695
    %v1122 = vpow.pop %v1121
    %v1123 = vadd.f32 %v1122, 1.0
    %v1124 = vrcp.pop %v1123
    %v1125 = vmul.f32 1.0, %v1124
    %v1126 = vtanh.pop %v1118
    %1128 = vrot.lane.b32.xlu0 %v1119, 32
    %v1129 = vpop.permute.xlu0 %1128
    %v1131 = vmul.f32 %v1125, %v1129
    %1133 = vrot.lane.b32.xlu0 %v1126, 64
    %v1134 = vpop.permute.xlu0 %1133
    %v1136 = vmul.f32 %v1125, %v1134
    %1138 = vrot.lane.b32.xlu0 %v1136, 32
    %v1139 = vpop.permute.xlu0 %1138
    %v1141 = vadd.f32 %v1131, %v1139
    %v1142 = vtanh.pop %v1141
    %1144 = vrot.lane.b32.xlu0 %v1142, 64
    %v1145 = vpop.permute.xlu0 %1144
    %v1147 = vmul.f32 %v1125, %v1145
    %1149 = vrot.lane.b32.xlu0 %v1147, 32
    %v1150 = vpop.permute.xlu0 %1149
    %1152 = vst.msk [vmem:[#allocation3] sm:$0x3] %vm320, %v1150
    %1154 = vrot.lane.b32.xlu0 %v1141, 96
    %v1155 = vpop.permute.xlu0 %1154
    %1157 = vst.msk [vmem:[#allocation5] sm:$0x3] %vm320, %v1155
    %s1158 = scalar_lea.vmem %s182, 8
    %1159 = vst.msk [vmem:[%s1158] sm:$0x3] %vm320, %v1150
    %v1160 = vld [vmem:[#allocation2] sm:$0x3]
    %s1161 = scalar_lea.vmem [#allocation6], 8
    %v1162 = vld [vmem:[%s1161] sm:$0x3]
    %v1164 = vsel %vm206, %v1160, 0
    %1166 = vmatprep.subr.mxu0 0.0
    %1167 = vmatpush1.msra.mxu0 %v194
    %1168 = vmatprep.subr.mxu0 0.0
    %1169 = vmatpush1.msra.mxu0 %v195
    %1170 = vmatprep.subr.mxu0 0.0
    %1171 = vmatpush1.msra.mxu0 %v196
    %1172 = vmatprep.subr.mxu0 0.0
    %1173 = vmatpush1.msra.mxu0 %v197
    %1174 = vmatprep.subr.mxu0 0.0
    %1175 = vmatpush1.msra.mxu0 0.0
    %1176 = vmatprep.subr.mxu0 0.0
    %1177 = vmatpush1.msra.mxu0 0.0
    %1178 = vmatprep.subr.mxu0 0.0
    %1179 = vmatpush1.msra.mxu0 0.0
    %1180 = vmatprep.subr.mxu0 0.0
    %1181 = vmatpush1.msra.mxu0 0.0
    %1182 = vmatprep.subr.mxu0 0.0
    %1183 = vmatpush1.msra.mxu0 0.0
    %1184 = vmatprep.subr.mxu0 0.0
    %1185 = vmatpush1.msra.mxu0 0.0
    %1186 = vmatprep.subr.mxu0 0.0
    %1187 = vmatpush1.msra.mxu0 0.0
    %1188 = vmatprep.subr.mxu0 0.0
    %1189 = vmatpush1.msra.mxu0 0.0
    %1190 = vmatprep.subr.mxu0 0.0
    %1191 = vmatpush1.msra.mxu0 0.0
    %1192 = vmatprep.subr.mxu0 0.0
    %1193 = vmatpush1.msra.mxu0 0.0
    %1194 = vmatprep.subr.mxu0 0.0
    %1195 = vmatpush1.msra.mxu0 0.0
    %1196 = vmatprep.subr.mxu0 0.0
    %1197 = vmatpush1.msra.mxu0 0.0
    %1198 = vmatprep.subr.mxu0 0.0
    %1199 = vmatpush1.msra.mxu0 0.0
    %1200 = vmatprep.subr.mxu0 0.0
    %1201 = vmatpush1.msra.mxu0 0.0
    %1202 = vmatprep.subr.mxu0 0.0
    %1203 = vmatpush1.msra.mxu0 0.0
    %1204 = vmatprep.subr.mxu0 0.0
    %1205 = vmatpush1.msra.mxu0 0.0
    %1206 = vmatprep.subr.mxu0 0.0
    %1207 = vmatpush1.msra.mxu0 0.0
    %1208 = vmatprep.subr.mxu0 0.0
    %1209 = vmatpush1.msra.mxu0 0.0
    %1210 = vmatprep.subr.mxu0 0.0
    %1211 = vmatpush1.msra.mxu0 0.0
    %1212 = vmatprep.subr.mxu0 0.0
    %1213 = vmatpush1.msra.mxu0 0.0
    %1214 = vmatprep.subr.mxu0 0.0
    %1215 = vmatpush1.msra.mxu0 0.0
    %1216 = vmatprep.subr.mxu0 0.0
    %1217 = vmatpush1.msra.mxu0 0.0
    %1218 = vmatprep.subr.mxu0 0.0
    %1219 = vmatpush1.msra.mxu0 0.0
    %1220 = vmatprep.subr.mxu0 0.0
    %1221 = vmatpush1.msra.mxu0 0.0
    %1222 = vmatprep.subr.mxu0 0.0
    %1223 = vmatpush1.msra.mxu0 0.0
    %1224 = vmatprep.subr.mxu0 0.0
    %1225 = vmatpush1.msra.mxu0 0.0
    %1226 = vmatprep.subr.mxu0 0.0
    %1227 = vmatpush1.msra.mxu0 0.0
    %1228 = vmatprep.subr.mxu0 0.0
    %1229 = vmatpush1.msra.mxu0 0.0
    %1230 = vmatprep.mubr.f32.mxu0 0.0
    %1231 = vmatmul.mubr.f32.gmra.mrb[0].mxu0 %v1164
    %v1232 = vpop.f32.mrb[0].mxu0
    %v1233 = vadd.f32 %v1162, %v1232
    %v1234 = vpop.f32.mrb[0].mxu0
    %1235 = vdwg.mxu0
    %v1236 = vadd.f32 %v1233, %v284
    %v1237 = vld [vmem:[#allocation4] sm:$0x3]
    %v1238 = vxor.u32 %v1236, 2147483648
    %v1239 = vmul.f32 %v1238, 1.442695
    %v1240 = vpow.pop %v1239
    %v1241 = vadd.f32 %v1240, 1.0
    %v1242 = vrcp.pop %v1241
    %v1243 = vmul.f32 1.0, %v1242
    %v1244 = vtanh.pop %v1236
    %1246 = vrot.lane.b32.xlu0 %v1237, 32
    %v1247 = vpop.permute.xlu0 %1246
    %v1249 = vmul.f32 %v1243, %v1247
    %1251 = vrot.lane.b32.xlu0 %v1244, 64
    %v1252 = vpop.permute.xlu0 %1251
    %v1254 = vmul.f32 %v1243, %v1252
    %1256 = vrot.lane.b32.xlu0 %v1254, 32
    %v1257 = vpop.permute.xlu0 %1256
    %v1259 = vadd.f32 %v1249, %v1257
    %v1260 = vtanh.pop %v1259
    %1262 = vrot.lane.b32.xlu0 %v1260, 64
    %v1263 = vpop.permute.xlu0 %1262
    %v1265 = vmul.f32 %v1243, %v1263
    %1267 = vrot.lane.b32.xlu0 %v1265, 32
    %v1268 = vpop.permute.xlu0 %1267
    %1270 = vst.msk [vmem:[#allocation2] sm:$0x3] %vm320, %v1268
    %1272 = vrot.lane.b32.xlu0 %v1259, 96
    %v1273 = vpop.permute.xlu0 %1272
    %1275 = vst.msk [vmem:[#allocation4] sm:$0x3] %vm320, %v1273
    %s1276 = scalar_lea.vmem %s6, 8
    %1277 = vst.msk [vmem:[%s1276] sm:$0x3] %vm320, %v1268
    %v1278 = vld [vmem:[#allocation3] sm:$0x3]
    %s1279 = scalar_lea.vmem [#allocation7], 6
    %v1280 = vld [vmem:[%s1279] sm:$0x3]
    %v1282 = vsel %vm206, %v1278, 0
    %1284 = vmatprep.subr.mxu0 0.0
    %1285 = vmatpush1.msra.mxu0 %v198
    %1286 = vmatprep.subr.mxu0 0.0
    %1287 = vmatpush1.msra.mxu0 %v199
    %1288 = vmatprep.subr.mxu0 0.0
    %1289 = vmatpush1.msra.mxu0 %v200
    %1290 = vmatprep.subr.mxu0 0.0
    %1291 = vmatpush1.msra.mxu0 %v201
    %1292 = vmatprep.subr.mxu0 0.0
    %1293 = vmatpush1.msra.mxu0 0.0
    %1294 = vmatprep.subr.mxu0 0.0
    %1295 = vmatpush1.msra.mxu0 0.0
    %1296 = vmatprep.subr.mxu0 0.0
    %1297 = vmatpush1.msra.mxu0 0.0
    %1298 = vmatprep.subr.mxu0 0.0
    %1299 = vmatpush1.msra.mxu0 0.0
    %1300 = vmatprep.subr.mxu0 0.0
    %1301 = vmatpush1.msra.mxu0 0.0
    %1302 = vmatprep.subr.mxu0 0.0
    %1303 = vmatpush1.msra.mxu0 0.0
    %1304 = vmatprep.subr.mxu0 0.0
    %1305 = vmatpush1.msra.mxu0 0.0
    %1306 = vmatprep.subr.mxu0 0.0
    %1307 = vmatpush1.msra.mxu0 0.0
    %1308 = vmatprep.subr.mxu0 0.0
    %1309 = vmatpush1.msra.mxu0 0.0
    %1310 = vmatprep.subr.mxu0 0.0
    %1311 = vmatpush1.msra.mxu0 0.0
    %1312 = vmatprep.subr.mxu0 0.0
    %1313 = vmatpush1.msra.mxu0 0.0
    %1314 = vmatprep.subr.mxu0 0.0
    %1315 = vmatpush1.msra.mxu0 0.0
    %1316 = vmatprep.subr.mxu0 0.0
    %1317 = vmatpush1.msra.mxu0 0.0
    %1318 = vmatprep.subr.mxu0 0.0
    %1319 = vmatpush1.msra.mxu0 0.0
    %1320 = vmatprep.subr.mxu0 0.0
    %1321 = vmatpush1.msra.mxu0 0.0
    %1322 = vmatprep.subr.mxu0 0.0
    %1323 = vmatpush1.msra.mxu0 0.0
    %1324 = vmatprep.subr.mxu0 0.0
    %1325 = vmatpush1.msra.mxu0 0.0
    %1326 = vmatprep.subr.mxu0 0.0
    %1327 = vmatpush1.msra.mxu0 0.0
    %1328 = vmatprep.subr.mxu0 0.0
    %1329 = vmatpush1.msra.mxu0 0.0
    %1330 = vmatprep.subr.mxu0 0.0
    %1331 = vmatpush1.msra.mxu0 0.0
    %1332 = vmatprep.subr.mxu0 0.0
    %1333 = vmatpush1.msra.mxu0 0.0
    %1334 = vmatprep.subr.mxu0 0.0
    %1335 = vmatpush1.msra.mxu0 0.0
    %1336 = vmatprep.subr.mxu0 0.0
    %1337 = vmatpush1.msra.mxu0 0.0
    %1338 = vmatprep.subr.mxu0 0.0
    %1339 = vmatpush1.msra.mxu0 0.0
    %1340 = vmatprep.subr.mxu0 0.0
    %1341 = vmatpush1.msra.mxu0 0.0
    %1342 = vmatprep.subr.mxu0 0.0
    %1343 = vmatpush1.msra.mxu0 0.0
    %1344 = vmatprep.subr.mxu0 0.0
    %1345 = vmatpush1.msra.mxu0 0.0
    %1346 = vmatprep.subr.mxu0 0.0
    %1347 = vmatpush1.msra.mxu0 0.0
    %1348 = vmatprep.mubr.f32.mxu0 0.0
    %1349 = vmatmul.mubr.f32.gmra.mrb[0].mxu0 %v1282
    %v1350 = vpop.f32.mrb[0].mxu0
    %v1351 = vadd.f32 %v1280, %v1350
    %v1352 = vpop.f32.mrb[0].mxu0
    %1353 = vdwg.mxu0
    %v1354 = vadd.f32 %v1351, %v408
    %v1355 = vld [vmem:[#allocation5] sm:$0x3]
    %v1356 = vxor.u32 %v1354, 2147483648
    %v1357 = vmul.f32 %v1356, 1.442695
    %v1358 = vpow.pop %v1357
    %v1359 = vadd.f32 %v1358, 1.0
    %v1360 = vrcp.pop %v1359
    %v1361 = vmul.f32 1.0, %v1360
    %v1362 = vtanh.pop %v1354
    %1364 = vrot.lane.b32.xlu0 %v1355, 32
    %v1365 = vpop.permute.xlu0 %1364
    %v1367 = vmul.f32 %v1361, %v1365
    %1369 = vrot.lane.b32.xlu0 %v1362, 64
    %v1370 = vpop.permute.xlu0 %1369
    %v1372 = vmul.f32 %v1361, %v1370
    %1374 = vrot.lane.b32.xlu0 %v1372, 32
    %v1375 = vpop.permute.xlu0 %1374
    %v1377 = vadd.f32 %v1367, %v1375
    %v1378 = vtanh.pop %v1377
    %1380 = vrot.lane.b32.xlu0 %v1378, 64
    %v1381 = vpop.permute.xlu0 %1380
    %v1383 = vmul.f32 %v1361, %v1381
    %1385 = vrot.lane.b32.xlu0 %v1383, 32
    %v1386 = vpop.permute.xlu0 %1385
    %1388 = vst.msk [vmem:[#allocation3] sm:$0x3] %vm320, %v1386
    %1390 = vrot.lane.b32.xlu0 %v1377, 96
    %v1391 = vpop.permute.xlu0 %1390
    %1393 = vst.msk [vmem:[#allocation5] sm:$0x3] %vm320, %v1391
    %s1394 = scalar_lea.vmem %s182, 6
    %1395 = vst.msk [vmem:[%s1394] sm:$0x3] %vm320, %v1386
    %v1396 = vld [vmem:[#allocation2] sm:$0x3]
    %s1397 = scalar_lea.vmem [#allocation6], 10
    %v1398 = vld [vmem:[%s1397] sm:$0x3]
    %v1400 = vsel %vm206, %v1396, 0
    %1402 = vmatprep.subr.mxu0 0.0
    %1403 = vmatpush1.msra.mxu0 %v194
    %1404 = vmatprep.subr.mxu0 0.0
    %1405 = vmatpush1.msra.mxu0 %v195
    %1406 = vmatprep.subr.mxu0 0.0
    %1407 = vmatpush1.msra.mxu0 %v196
    %1408 = vmatprep.subr.mxu0 0.0
    %1409 = vmatpush1.msra.mxu0 %v197
    %1410 = vmatprep.subr.mxu0 0.0
    %1411 = vmatpush1.msra.mxu0 0.0
    %1412 = vmatprep.subr.mxu0 0.0
    %1413 = vmatpush1.msra.mxu0 0.0
    %1414 = vmatprep.subr.mxu0 0.0
    %1415 = vmatpush1.msra.mxu0 0.0
    %1416 = vmatprep.subr.mxu0 0.0
    %1417 = vmatpush1.msra.mxu0 0.0
    %1418 = vmatprep.subr.mxu0 0.0
    %1419 = vmatpush1.msra.mxu0 0.0
    %1420 = vmatprep.subr.mxu0 0.0
    %1421 = vmatpush1.msra.mxu0 0.0
    %1422 = vmatprep.subr.mxu0 0.0
    %1423 = vmatpush1.msra.mxu0 0.0
    %1424 = vmatprep.subr.mxu0 0.0
    %1425 = vmatpush1.msra.mxu0 0.0
    %1426 = vmatprep.subr.mxu0 0.0
    %1427 = vmatpush1.msra.mxu0 0.0
    %1428 = vmatprep.subr.mxu0 0.0
    %1429 = vmatpush1.msra.mxu0 0.0
    %1430 = vmatprep.subr.mxu0 0.0
    %1431 = vmatpush1.msra.mxu0 0.0
    %1432 = vmatprep.subr.mxu0 0.0
    %1433 = vmatpush1.msra.mxu0 0.0
    %1434 = vmatprep.subr.mxu0 0.0
    %1435 = vmatpush1.msra.mxu0 0.0
    %1436 = vmatprep.subr.mxu0 0.0
    %1437 = vmatpush1.msra.mxu0 0.0
    %1438 = vmatprep.subr.mxu0 0.0
    %1439 = vmatpush1.msra.mxu0 0.0
    %1440 = vmatprep.subr.mxu0 0.0
    %1441 = vmatpush1.msra.mxu0 0.0
    %1442 = vmatprep.subr.mxu0 0.0
    %1443 = vmatpush1.msra.mxu0 0.0
    %1444 = vmatprep.subr.mxu0 0.0
    %1445 = vmatpush1.msra.mxu0 0.0
    %1446 = vmatprep.subr.mxu0 0.0
    %1447 = vmatpush1.msra.mxu0 0.0
    %1448 = vmatprep.subr.mxu0 0.0
    %1449 = vmatpush1.msra.mxu0 0.0
    %1450 = vmatprep.subr.mxu0 0.0
    %1451 = vmatpush1.msra.mxu0 0.0
    %1452 = vmatprep.subr.mxu0 0.0
    %1453 = vmatpush1.msra.mxu0 0.0
    %1454 = vmatprep.subr.mxu0 0.0
    %1455 = vmatpush1.msra.mxu0 0.0
    %1456 = vmatprep.subr.mxu0 0.0
    %1457 = vmatpush1.msra.mxu0 0.0
    %1458 = vmatprep.subr.mxu0 0.0
    %1459 = vmatpush1.msra.mxu0 0.0
    %1460 = vmatprep.subr.mxu0 0.0
    %1461 = vmatpush1.msra.mxu0 0.0
    %1462 = vmatprep.subr.mxu0 0.0
    %1463 = vmatpush1.msra.mxu0 0.0
    %1464 = vmatprep.subr.mxu0 0.0
    %1465 = vmatpush1.msra.mxu0 0.0
    %1466 = vmatprep.mubr.f32.mxu0 0.0
    %1467 = vmatmul.mubr.f32.gmra.mrb[0].mxu0 %v1400
    %v1468 = vpop.f32.mrb[0].mxu0
    %v1469 = vadd.f32 %v1398, %v1468
    %v1470 = vpop.f32.mrb[0].mxu0
    %1471 = vdwg.mxu0
    %v1472 = vadd.f32 %v1469, %v284
    %v1473 = vld [vmem:[#allocation4] sm:$0x3]
    %v1474 = vxor.u32 %v1472, 2147483648
    %v1475 = vmul.f32 %v1474, 1.442695
    %v1476 = vpow.pop %v1475
    %v1477 = vadd.f32 %v1476, 1.0
    %v1478 = vrcp.pop %v1477
    %v1479 = vmul.f32 1.0, %v1478
    %v1480 = vtanh.pop %v1472
    %1482 = vrot.lane.b32.xlu0 %v1473, 32
    %v1483 = vpop.permute.xlu0 %1482
    %v1485 = vmul.f32 %v1479, %v1483
    %1487 = vrot.lane.b32.xlu0 %v1480, 64
    %v1488 = vpop.permute.xlu0 %1487
    %v1490 = vmul.f32 %v1479, %v1488
    %1492 = vrot.lane.b32.xlu0 %v1490, 32
    %v1493 = vpop.permute.xlu0 %1492
    %v1495 = vadd.f32 %v1485, %v1493
    %v1496 = vtanh.pop %v1495
    %1498 = vrot.lane.b32.xlu0 %v1496, 64
    %v1499 = vpop.permute.xlu0 %1498
    %v1501 = vmul.f32 %v1479, %v1499
    %1503 = vrot.lane.b32.xlu0 %v1501, 32
    %v1504 = vpop.permute.xlu0 %1503
    %1506 = vst.msk [vmem:[#allocation2] sm:$0x3] %vm320, %v1504
    %1508 = vrot.lane.b32.xlu0 %v1495, 96
    %v1509 = vpop.permute.xlu0 %1508
    %1511 = vst.msk [vmem:[#allocation4] sm:$0x3] %vm320, %v1509
    %s1512 = scalar_lea.vmem %s6, 10
    %1513 = vst.msk [vmem:[%s1512] sm:$0x3] %vm320, %v1504
    %v1514 = vld [vmem:[#allocation3] sm:$0x3]
    %s1515 = scalar_lea.vmem [#allocation7], 4
    %v1516 = vld [vmem:[%s1515] sm:$0x3]
    %v1518 = vsel %vm206, %v1514, 0
    %1520 = vmatprep.subr.mxu0 0.0
    %1521 = vmatpush1.msra.mxu0 %v198
    %1522 = vmatprep.subr.mxu0 0.0
    %1523 = vmatpush1.msra.mxu0 %v199
    %1524 = vmatprep.subr.mxu0 0.0
    %1525 = vmatpush1.msra.mxu0 %v200
    %1526 = vmatprep.subr.mxu0 0.0
    %1527 = vmatpush1.msra.mxu0 %v201
    %1528 = vmatprep.subr.mxu0 0.0
    %1529 = vmatpush1.msra.mxu0 0.0
    %1530 = vmatprep.subr.mxu0 0.0
    %1531 = vmatpush1.msra.mxu0 0.0
    %1532 = vmatprep.subr.mxu0 0.0
    %1533 = vmatpush1.msra.mxu0 0.0
    %1534 = vmatprep.subr.mxu0 0.0
    %1535 = vmatpush1.msra.mxu0 0.0
    %1536 = vmatprep.subr.mxu0 0.0
    %1537 = vmatpush1.msra.mxu0 0.0
    %1538 = vmatprep.subr.mxu0 0.0
    %1539 = vmatpush1.msra.mxu0 0.0
    %1540 = vmatprep.subr.mxu0 0.0
    %1541 = vmatpush1.msra.mxu0 0.0
    %1542 = vmatprep.subr.mxu0 0.0
    %1543 = vmatpush1.msra.mxu0 0.0
    %1544 = vmatprep.subr.mxu0 0.0
    %1545 = vmatpush1.msra.mxu0 0.0
    %1546 = vmatprep.subr.mxu0 0.0
    %1547 = vmatpush1.msra.mxu0 0.0
    %1548 = vmatprep.subr.mxu0 0.0
    %1549 = vmatpush1.msra.mxu0 0.0
    %1550 = vmatprep.subr.mxu0 0.0
    %1551 = vmatpush1.msra.mxu0 0.0
    %1552 = vmatprep.subr.mxu0 0.0
    %1553 = vmatpush1.msra.mxu0 0.0
    %1554 = vmatprep.subr.mxu0 0.0
    %1555 = vmatpush1.msra.mxu0 0.0
    %1556 = vmatprep.subr.mxu0 0.0
    %1557 = vmatpush1.msra.mxu0 0.0
    %1558 = vmatprep.subr.mxu0 0.0
    %1559 = vmatpush1.msra.mxu0 0.0
    %1560 = vmatprep.subr.mxu0 0.0
    %1561 = vmatpush1.msra.mxu0 0.0
    %1562 = vmatprep.subr.mxu0 0.0
    %1563 = vmatpush1.msra.mxu0 0.0
    %1564 = vmatprep.subr.mxu0 0.0
    %1565 = vmatpush1.msra.mxu0 0.0
    %1566 = vmatprep.subr.mxu0 0.0
    %1567 = vmatpush1.msra.mxu0 0.0
    %1568 = vmatprep.subr.mxu0 0.0
    %1569 = vmatpush1.msra.mxu0 0.0
    %1570 = vmatprep.subr.mxu0 0.0
    %1571 = vmatpush1.msra.mxu0 0.0
    %1572 = vmatprep.subr.mxu0 0.0
    %1573 = vmatpush1.msra.mxu0 0.0
    %1574 = vmatprep.subr.mxu0 0.0
    %1575 = vmatpush1.msra.mxu0 0.0
    %1576 = vmatprep.subr.mxu0 0.0
    %1577 = vmatpush1.msra.mxu0 0.0
    %1578 = vmatprep.subr.mxu0 0.0
    %1579 = vmatpush1.msra.mxu0 0.0
    %1580 = vmatprep.subr.mxu0 0.0
    %1581 = vmatpush1.msra.mxu0 0.0
    %1582 = vmatprep.subr.mxu0 0.0
    %1583 = vmatpush1.msra.mxu0 0.0
    %1584 = vmatprep.mubr.f32.mxu0 0.0
    %1585 = vmatmul.mubr.f32.gmra.mrb[0].mxu0 %v1518
    %v1586 = vpop.f32.mrb[0].mxu0
    %v1587 = vadd.f32 %v1516, %v1586
    %v1588 = vpop.f32.mrb[0].mxu0
    %1589 = vdwg.mxu0
    %v1590 = vadd.f32 %v1587, %v408
    %v1591 = vld [vmem:[#allocation5] sm:$0x3]
    %v1592 = vxor.u32 %v1590, 2147483648
    %v1593 = vmul.f32 %v1592, 1.442695
    %v1594 = vpow.pop %v1593
    %v1595 = vadd.f32 %v1594, 1.0
    %v1596 = vrcp.pop %v1595
    %v1597 = vmul.f32 1.0, %v1596
    %v1598 = vtanh.pop %v1590
    %1600 = vrot.lane.b32.xlu0 %v1591, 32
    %v1601 = vpop.permute.xlu0 %1600
    %v1603 = vmul.f32 %v1597, %v1601
    %1605 = vrot.lane.b32.xlu0 %v1598, 64
    %v1606 = vpop.permute.xlu0 %1605
    %v1608 = vmul.f32 %v1597, %v1606
    %1610 = vrot.lane.b32.xlu0 %v1608, 32
    %v1611 = vpop.permute.xlu0 %1610
    %v1613 = vadd.f32 %v1603, %v1611
    %v1614 = vtanh.pop %v1613
    %1616 = vrot.lane.b32.xlu0 %v1614, 64
    %v1617 = vpop.permute.xlu0 %1616
    %v1619 = vmul.f32 %v1597, %v1617
    %1621 = vrot.lane.b32.xlu0 %v1619, 32
    %v1622 = vpop.permute.xlu0 %1621
    %1624 = vst.msk [vmem:[#allocation3] sm:$0x3] %vm320, %v1622
    %1626 = vrot.lane.b32.xlu0 %v1613, 96
    %v1627 = vpop.permute.xlu0 %1626
    %1629 = vst.msk [vmem:[#allocation5] sm:$0x3] %vm320, %v1627
    %s1630 = scalar_lea.vmem %s182, 4
    %1631 = vst.msk [vmem:[%s1630] sm:$0x3] %vm320, %v1622
    %v1632 = vld [vmem:[#allocation2] sm:$0x3]
    %s1633 = scalar_lea.vmem [#allocation6], 12
    %v1634 = vld [vmem:[%s1633] sm:$0x3]
    %v1636 = vsel %vm206, %v1632, 0
    %1638 = vmatprep.subr.mxu0 0.0
    %1639 = vmatpush1.msra.mxu0 %v194
    %1640 = vmatprep.subr.mxu0 0.0
    %1641 = vmatpush1.msra.mxu0 %v195
    %1642 = vmatprep.subr.mxu0 0.0
    %1643 = vmatpush1.msra.mxu0 %v196
    %1644 = vmatprep.subr.mxu0 0.0
    %1645 = vmatpush1.msra.mxu0 %v197
    %1646 = vmatprep.subr.mxu0 0.0
    %1647 = vmatpush1.msra.mxu0 0.0
    %1648 = vmatprep.subr.mxu0 0.0
    %1649 = vmatpush1.msra.mxu0 0.0
    %1650 = vmatprep.subr.mxu0 0.0
    %1651 = vmatpush1.msra.mxu0 0.0
    %1652 = vmatprep.subr.mxu0 0.0
    %1653 = vmatpush1.msra.mxu0 0.0
    %1654 = vmatprep.subr.mxu0 0.0
    %1655 = vmatpush1.msra.mxu0 0.0
    %1656 = vmatprep.subr.mxu0 0.0
    %1657 = vmatpush1.msra.mxu0 0.0
    %1658 = vmatprep.subr.mxu0 0.0
    %1659 = vmatpush1.msra.mxu0 0.0
    %1660 = vmatprep.subr.mxu0 0.0
    %1661 = vmatpush1.msra.mxu0 0.0
    %1662 = vmatprep.subr.mxu0 0.0
    %1663 = vmatpush1.msra.mxu0 0.0
    %1664 = vmatprep.subr.mxu0 0.0
    %1665 = vmatpush1.msra.mxu0 0.0
    %1666 = vmatprep.subr.mxu0 0.0
    %1667 = vmatpush1.msra.mxu0 0.0
    %1668 = vmatprep.subr.mxu0 0.0
    %1669 = vmatpush1.msra.mxu0 0.0
    %1670 = vmatprep.subr.mxu0 0.0
    %1671 = vmatpush1.msra.mxu0 0.0
    %1672 = vmatprep.subr.mxu0 0.0
    %1673 = vmatpush1.msra.mxu0 0.0
    %1674 = vmatprep.subr.mxu0 0.0
    %1675 = vmatpush1.msra.mxu0 0.0
    %1676 = vmatprep.subr.mxu0 0.0
    %1677 = vmatpush1.msra.mxu0 0.0
    %1678 = vmatprep.subr.mxu0 0.0
    %1679 = vmatpush1.msra.mxu0 0.0
    %1680 = vmatprep.subr.mxu0 0.0
    %1681 = vmatpush1.msra.mxu0 0.0
    %1682 = vmatprep.subr.mxu0 0.0
    %1683 = vmatpush1.msra.mxu0 0.0
    %1684 = vmatprep.subr.mxu0 0.0
    %1685 = vmatpush1.msra.mxu0 0.0
    %1686 = vmatprep.subr.mxu0 0.0
    %1687 = vmatpush1.msra.mxu0 0.0
    %1688 = vmatprep.subr.mxu0 0.0
    %1689 = vmatpush1.msra.mxu0 0.0
    %1690 = vmatprep.subr.mxu0 0.0
    %1691 = vmatpush1.msra.mxu0 0.0
    %1692 = vmatprep.subr.mxu0 0.0
    %1693 = vmatpush1.msra.mxu0 0.0
    %1694 = vmatprep.subr.mxu0 0.0
    %1695 = vmatpush1.msra.mxu0 0.0
    %1696 = vmatprep.subr.mxu0 0.0
    %1697 = vmatpush1.msra.mxu0 0.0
    %1698 = vmatprep.subr.mxu0 0.0
    %1699 = vmatpush1.msra.mxu0 0.0
    %1700 = vmatprep.subr.mxu0 0.0
    %1701 = vmatpush1.msra.mxu0 0.0
    %1702 = vmatprep.mubr.f32.mxu0 0.0
    %1703 = vmatmul.mubr.f32.gmra.mrb[0].mxu0 %v1636
    %v1704 = vpop.f32.mrb[0].mxu0
    %v1705 = vadd.f32 %v1634, %v1704
    %v1706 = vpop.f32.mrb[0].mxu0
    %1707 = vdwg.mxu0
    %v1708 = vadd.f32 %v1705, %v284
    %v1709 = vld [vmem:[#allocation4] sm:$0x3]
    %v1710 = vxor.u32 %v1708, 2147483648
    %v1711 = vmul.f32 %v1710, 1.442695
    %v1712 = vpow.pop %v1711
    %v1713 = vadd.f32 %v1712, 1.0
    %v1714 = vrcp.pop %v1713
    %v1715 = vmul.f32 1.0, %v1714
    %v1716 = vtanh.pop %v1708
    %1718 = vrot.lane.b32.xlu0 %v1709, 32
    %v1719 = vpop.permute.xlu0 %1718
    %v1721 = vmul.f32 %v1715, %v1719
    %1723 = vrot.lane.b32.xlu0 %v1716, 64
    %v1724 = vpop.permute.xlu0 %1723
    %v1726 = vmul.f32 %v1715, %v1724
    %1728 = vrot.lane.b32.xlu0 %v1726, 32
    %v1729 = vpop.permute.xlu0 %1728
    %v1731 = vadd.f32 %v1721, %v1729
    %v1732 = vtanh.pop %v1731
    %1734 = vrot.lane.b32.xlu0 %v1732, 64
    %v1735 = vpop.permute.xlu0 %1734
    %v1737 = vmul.f32 %v1715, %v1735
    %1739 = vrot.lane.b32.xlu0 %v1737, 32
    %v1740 = vpop.permute.xlu0 %1739
    %1742 = vst.msk [vmem:[#allocation2] sm:$0x3] %vm320, %v1740
    %1744 = vrot.lane.b32.xlu0 %v1731, 96
    %v1745 = vpop.permute.xlu0 %1744
    %1747 = vst.msk [vmem:[#allocation4] sm:$0x3] %vm320, %v1745
    %s1748 = scalar_lea.vmem %s6, 12
    %1749 = vst.msk [vmem:[%s1748] sm:$0x3] %vm320, %v1740
    %v1750 = vld [vmem:[#allocation3] sm:$0x3]
    %s1751 = scalar_lea.vmem [#allocation7], 2
    %v1752 = vld [vmem:[%s1751] sm:$0x3]
    %v1754 = vsel %vm206, %v1750, 0
    %1756 = vmatprep.subr.mxu0 0.0
    %1757 = vmatpush1.msra.mxu0 %v198
    %1758 = vmatprep.subr.mxu0 0.0
    %1759 = vmatpush1.msra.mxu0 %v199
    %1760 = vmatprep.subr.mxu0 0.0
    %1761 = vmatpush1.msra.mxu0 %v200
    %1762 = vmatprep.subr.mxu0 0.0
    %1763 = vmatpush1.msra.mxu0 %v201
    %1764 = vmatprep.subr.mxu0 0.0
    %1765 = vmatpush1.msra.mxu0 0.0
    %1766 = vmatprep.subr.mxu0 0.0
    %1767 = vmatpush1.msra.mxu0 0.0
    %1768 = vmatprep.subr.mxu0 0.0
    %1769 = vmatpush1.msra.mxu0 0.0
    %1770 = vmatprep.subr.mxu0 0.0
    %1771 = vmatpush1.msra.mxu0 0.0
    %1772 = vmatprep.subr.mxu0 0.0
    %1773 = vmatpush1.msra.mxu0 0.0
    %1774 = vmatprep.subr.mxu0 0.0
    %1775 = vmatpush1.msra.mxu0 0.0
    %1776 = vmatprep.subr.mxu0 0.0
    %1777 = vmatpush1.msra.mxu0 0.0
    %1778 = vmatprep.subr.mxu0 0.0
    %1779 = vmatpush1.msra.mxu0 0.0
    %1780 = vmatprep.subr.mxu0 0.0
    %1781 = vmatpush1.msra.mxu0 0.0
    %1782 = vmatprep.subr.mxu0 0.0
    %1783 = vmatpush1.msra.mxu0 0.0
    %1784 = vmatprep.subr.mxu0 0.0
    %1785 = vmatpush1.msra.mxu0 0.0
    %1786 = vmatprep.subr.mxu0 0.0
    %1787 = vmatpush1.msra.mxu0 0.0
    %1788 = vmatprep.subr.mxu0 0.0
    %1789 = vmatpush1.msra.mxu0 0.0
    %1790 = vmatprep.subr.mxu0 0.0
    %1791 = vmatpush1.msra.mxu0 0.0
    %1792 = vmatprep.subr.mxu0 0.0
    %1793 = vmatpush1.msra.mxu0 0.0
    %1794 = vmatprep.subr.mxu0 0.0
    %1795 = vmatpush1.msra.mxu0 0.0
    %1796 = vmatprep.subr.mxu0 0.0
    %1797 = vmatpush1.msra.mxu0 0.0
    %1798 = vmatprep.subr.mxu0 0.0
    %1799 = vmatpush1.msra.mxu0 0.0
    %1800 = vmatprep.subr.mxu0 0.0
    %1801 = vmatpush1.msra.mxu0 0.0
    %1802 = vmatprep.subr.mxu0 0.0
    %1803 = vmatpush1.msra.mxu0 0.0
    %1804 = vmatprep.subr.mxu0 0.0
    %1805 = vmatpush1.msra.mxu0 0.0
    %1806 = vmatprep.subr.mxu0 0.0
    %1807 = vmatpush1.msra.mxu0 0.0
    %1808 = vmatprep.subr.mxu0 0.0
    %1809 = vmatpush1.msra.mxu0 0.0
    %1810 = vmatprep.subr.mxu0 0.0
    %1811 = vmatpush1.msra.mxu0 0.0
    %1812 = vmatprep.subr.mxu0 0.0
    %1813 = vmatpush1.msra.mxu0 0.0
    %1814 = vmatprep.subr.mxu0 0.0
    %1815 = vmatpush1.msra.mxu0 0.0
    %1816 = vmatprep.subr.mxu0 0.0
    %1817 = vmatpush1.msra.mxu0 0.0
    %1818 = vmatprep.subr.mxu0 0.0
    %1819 = vmatpush1.msra.mxu0 0.0
    %1820 = vmatprep.mubr.f32.mxu0 0.0
    %1821 = vmatmul.mubr.f32.gmra.mrb[0].mxu0 %v1754
    %v1822 = vpop.f32.mrb[0].mxu0
    %v1823 = vadd.f32 %v1752, %v1822
    %v1824 = vpop.f32.mrb[0].mxu0
    %1825 = vdwg.mxu0
    %v1826 = vadd.f32 %v1823, %v408
    %v1827 = vld [vmem:[#allocation5] sm:$0x3]
    %v1828 = vxor.u32 %v1826, 2147483648
    %v1829 = vmul.f32 %v1828, 1.442695
    %v1830 = vpow.pop %v1829
    %v1831 = vadd.f32 %v1830, 1.0
    %v1832 = vrcp.pop %v1831
    %v1833 = vmul.f32 1.0, %v1832
    %v1834 = vtanh.pop %v1826
    %1836 = vrot.lane.b32.xlu0 %v1827, 32
    %v1837 = vpop.permute.xlu0 %1836
    %v1839 = vmul.f32 %v1833, %v1837
    %1841 = vrot.lane.b32.xlu0 %v1834, 64
    %v1842 = vpop.permute.xlu0 %1841
    %v1844 = vmul.f32 %v1833, %v1842
    %1846 = vrot.lane.b32.xlu0 %v1844, 32
    %v1847 = vpop.permute.xlu0 %1846
    %v1849 = vadd.f32 %v1839, %v1847
    %v1850 = vtanh.pop %v1849
    %1852 = vrot.lane.b32.xlu0 %v1850, 64
    %v1853 = vpop.permute.xlu0 %1852
    %v1855 = vmul.f32 %v1833, %v1853
    %1857 = vrot.lane.b32.xlu0 %v1855, 32
    %v1858 = vpop.permute.xlu0 %1857
    %1860 = vst.msk [vmem:[#allocation3] sm:$0x3] %vm320, %v1858
    %1862 = vrot.lane.b32.xlu0 %v1849, 96
    %v1863 = vpop.permute.xlu0 %1862
    %1865 = vst.msk [vmem:[#allocation5] sm:$0x3] %vm320, %v1863
    %s1866 = scalar_lea.vmem %s182, 2
    %1867 = vst.msk [vmem:[%s1866] sm:$0x3] %vm320, %v1858
    %v1868 = vld [vmem:[#allocation2] sm:$0x3]
    %s1869 = scalar_lea.vmem [#allocation6], 14
    %v1870 = vld [vmem:[%s1869] sm:$0x3]
    %v1872 = vsel %vm206, %v1868, 0
    %1874 = vmatprep.subr.mxu0 0.0
    %1875 = vmatpush1.msra.mxu0 %v194
    %1876 = vmatprep.subr.mxu0 0.0
    %1877 = vmatpush1.msra.mxu0 %v195
    %1878 = vmatprep.subr.mxu0 0.0
    %1879 = vmatpush1.msra.mxu0 %v196
    %1880 = vmatprep.subr.mxu0 0.0
    %1881 = vmatpush1.msra.mxu0 %v197
    %1882 = vmatprep.subr.mxu0 0.0
    %1883 = vmatpush1.msra.mxu0 0.0
    %1884 = vmatprep.subr.mxu0 0.0
    %1885 = vmatpush1.msra.mxu0 0.0
    %1886 = vmatprep.subr.mxu0 0.0
    %1887 = vmatpush1.msra.mxu0 0.0
    %1888 = vmatprep.subr.mxu0 0.0
    %1889 = vmatpush1.msra.mxu0 0.0
    %1890 = vmatprep.subr.mxu0 0.0
    %1891 = vmatpush1.msra.mxu0 0.0
    %1892 = vmatprep.subr.mxu0 0.0
    %1893 = vmatpush1.msra.mxu0 0.0
    %1894 = vmatprep.subr.mxu0 0.0
    %1895 = vmatpush1.msra.mxu0 0.0
    %1896 = vmatprep.subr.mxu0 0.0
    %1897 = vmatpush1.msra.mxu0 0.0
    %1898 = vmatprep.subr.mxu0 0.0
    %1899 = vmatpush1.msra.mxu0 0.0
    %1900 = vmatprep.subr.mxu0 0.0
    %1901 = vmatpush1.msra.mxu0 0.0
    %1902 = vmatprep.subr.mxu0 0.0
    %1903 = vmatpush1.msra.mxu0 0.0
    %1904 = vmatprep.subr.mxu0 0.0
    %1905 = vmatpush1.msra.mxu0 0.0
    %1906 = vmatprep.subr.mxu0 0.0
    %1907 = vmatpush1.msra.mxu0 0.0
    %1908 = vmatprep.subr.mxu0 0.0
    %1909 = vmatpush1.msra.mxu0 0.0
    %1910 = vmatprep.subr.mxu0 0.0
    %1911 = vmatpush1.msra.mxu0 0.0
    %1912 = vmatprep.subr.mxu0 0.0
    %1913 = vmatpush1.msra.mxu0 0.0
    %1914 = vmatprep.subr.mxu0 0.0
    %1915 = vmatpush1.msra.mxu0 0.0
    %1916 = vmatprep.subr.mxu0 0.0
    %1917 = vmatpush1.msra.mxu0 0.0
    %1918 = vmatprep.subr.mxu0 0.0
    %1919 = vmatpush1.msra.mxu0 0.0
    %1920 = vmatprep.subr.mxu0 0.0
    %1921 = vmatpush1.msra.mxu0 0.0
    %1922 = vmatprep.subr.mxu0 0.0
    %1923 = vmatpush1.msra.mxu0 0.0
    %1924 = vmatprep.subr.mxu0 0.0
    %1925 = vmatpush1.msra.mxu0 0.0
    %1926 = vmatprep.subr.mxu0 0.0
    %1927 = vmatpush1.msra.mxu0 0.0
    %1928 = vmatprep.subr.mxu0 0.0
    %1929 = vmatpush1.msra.mxu0 0.0
    %1930 = vmatprep.subr.mxu0 0.0
    %1931 = vmatpush1.msra.mxu0 0.0
    %1932 = vmatprep.subr.mxu0 0.0
    %1933 = vmatpush1.msra.mxu0 0.0
    %1934 = vmatprep.subr.mxu0 0.0
    %1935 = vmatpush1.msra.mxu0 0.0
    %1936 = vmatprep.subr.mxu0 0.0
    %1937 = vmatpush1.msra.mxu0 0.0
    %1938 = vmatprep.mubr.f32.mxu0 0.0
    %1939 = vmatmul.mubr.f32.gmra.mrb[0].mxu0 %v1872
    %v1940 = vpop.f32.mrb[0].mxu0
    %v1941 = vadd.f32 %v1870, %v1940
    %v1942 = vpop.f32.mrb[0].mxu0
    %1943 = vdwg.mxu0
    %v1944 = vadd.f32 %v1941, %v284
    %v1945 = vld [vmem:[#allocation4] sm:$0x3]
    %v1946 = vxor.u32 %v1944, 2147483648
    %v1947 = vmul.f32 %v1946, 1.442695
    %v1948 = vpow.pop %v1947
    %v1949 = vadd.f32 %v1948, 1.0
    %v1950 = vrcp.pop %v1949
    %v1951 = vmul.f32 1.0, %v1950
    %v1952 = vtanh.pop %v1944
    %1954 = vrot.lane.b32.xlu0 %v1945, 32
    %v1955 = vpop.permute.xlu0 %1954
    %v1957 = vmul.f32 %v1951, %v1955
    %1959 = vrot.lane.b32.xlu0 %v1952, 64
    %v1960 = vpop.permute.xlu0 %1959
    %v1962 = vmul.f32 %v1951, %v1960
    %1964 = vrot.lane.b32.xlu0 %v1962, 32
    %v1965 = vpop.permute.xlu0 %1964
    %v1967 = vadd.f32 %v1957, %v1965
    %v1968 = vtanh.pop %v1967
    %1970 = vrot.lane.b32.xlu0 %v1968, 64
    %v1971 = vpop.permute.xlu0 %1970
    %v1973 = vmul.f32 %v1951, %v1971
    %1975 = vrot.lane.b32.xlu0 %v1973, 32
    %v1976 = vpop.permute.xlu0 %1975
    %1978 = vst.msk [vmem:[#allocation2] sm:$0x3] %vm320, %v1976
    %1980 = vrot.lane.b32.xlu0 %v1967, 96
    %v1981 = vpop.permute.xlu0 %1980
    %1983 = vst.msk [vmem:[#allocation4] sm:$0x3] %vm320, %v1981
    %s1984 = scalar_lea.vmem %s6, 14
    %1985 = vst.msk [vmem:[%s1984] sm:$0x3] %vm320, %v1976
    %v1986 = vld [vmem:[#allocation3] sm:$0x3]
    %v1987 = vld [vmem:[#allocation7] sm:$0x3]
    %v1989 = vsel %vm206, %v1986, 0
    %1991 = vmatprep.subr.mxu0 0.0
    %1992 = vmatpush1.msra.mxu0 %v198
    %1993 = vmatprep.subr.mxu0 0.0
    %1994 = vmatpush1.msra.mxu0 %v199
    %1995 = vmatprep.subr.mxu0 0.0
    %1996 = vmatpush1.msra.mxu0 %v200
    %1997 = vmatprep.subr.mxu0 0.0
    %1998 = vmatpush1.msra.mxu0 %v201
    %1999 = vmatprep.subr.mxu0 0.0
    %2000 = vmatpush1.msra.mxu0 0.0
    %2001 = vmatprep.subr.mxu0 0.0
    %2002 = vmatpush1.msra.mxu0 0.0
    %2003 = vmatprep.subr.mxu0 0.0
    %2004 = vmatpush1.msra.mxu0 0.0
    %2005 = vmatprep.subr.mxu0 0.0
    %2006 = vmatpush1.msra.mxu0 0.0
    %2007 = vmatprep.subr.mxu0 0.0
    %2008 = vmatpush1.msra.mxu0 0.0
    %2009 = vmatprep.subr.mxu0 0.0
    %2010 = vmatpush1.msra.mxu0 0.0
    %2011 = vmatprep.subr.mxu0 0.0
    %2012 = vmatpush1.msra.mxu0 0.0
    %2013 = vmatprep.subr.mxu0 0.0
    %2014 = vmatpush1.msra.mxu0 0.0
    %2015 = vmatprep.subr.mxu0 0.0
    %2016 = vmatpush1.msra.mxu0 0.0
    %2017 = vmatprep.subr.mxu0 0.0
    %2018 = vmatpush1.msra.mxu0 0.0
    %2019 = vmatprep.subr.mxu0 0.0
    %2020 = vmatpush1.msra.mxu0 0.0
    %2021 = vmatprep.subr.mxu0 0.0
    %2022 = vmatpush1.msra.mxu0 0.0
    %2023 = vmatprep.subr.mxu0 0.0
    %2024 = vmatpush1.msra.mxu0 0.0
    %2025 = vmatprep.subr.mxu0 0.0
    %2026 = vmatpush1.msra.mxu0 0.0
    %2027 = vmatprep.subr.mxu0 0.0
    %2028 = vmatpush1.msra.mxu0 0.0
    %2029 = vmatprep.subr.mxu0 0.0
    %2030 = vmatpush1.msra.mxu0 0.0
    %2031 = vmatprep.subr.mxu0 0.0
    %2032 = vmatpush1.msra.mxu0 0.0
    %2033 = vmatprep.subr.mxu0 0.0
    %2034 = vmatpush1.msra.mxu0 0.0
    %2035 = vmatprep.subr.mxu0 0.0
    %2036 = vmatpush1.msra.mxu0 0.0
    %2037 = vmatprep.subr.mxu0 0.0
    %2038 = vmatpush1.msra.mxu0 0.0
    %2039 = vmatprep.subr.mxu0 0.0
    %2040 = vmatpush1.msra.mxu0 0.0
    %2041 = vmatprep.subr.mxu0 0.0
    %2042 = vmatpush1.msra.mxu0 0.0
    %2043 = vmatprep.subr.mxu0 0.0
    %2044 = vmatpush1.msra.mxu0 0.0
    %2045 = vmatprep.subr.mxu0 0.0
    %2046 = vmatpush1.msra.mxu0 0.0
    %2047 = vmatprep.subr.mxu0 0.0
    %2048 = vmatpush1.msra.mxu0 0.0
    %2049 = vmatprep.subr.mxu0 0.0
    %2050 = vmatpush1.msra.mxu0 0.0
    %2051 = vmatprep.subr.mxu0 0.0
    %2052 = vmatpush1.msra.mxu0 0.0
    %2053 = vmatprep.subr.mxu0 0.0
    %2054 = vmatpush1.msra.mxu0 0.0
    %2055 = vmatprep.mubr.f32.mxu0 0.0
    %2056 = vmatmul.mubr.f32.gmra.mrb[0].mxu0 %v1989
    %v2057 = vpop.f32.mrb[0].mxu0
    %v2058 = vadd.f32 %v1987, %v2057
    %v2059 = vpop.f32.mrb[0].mxu0
    %2060 = vdwg.mxu0
    %v2061 = vadd.f32 %v2058, %v408
    %v2062 = vld [vmem:[#allocation5] sm:$0x3]
    %v2063 = vxor.u32 %v2061, 2147483648
    %v2064 = vmul.f32 %v2063, 1.442695
    %v2065 = vpow.pop %v2064
    %v2066 = vadd.f32 %v2065, 1.0
    %v2067 = vrcp.pop %v2066
    %v2068 = vmul.f32 1.0, %v2067
    %v2069 = vtanh.pop %v2061
    %2071 = vrot.lane.b32.xlu0 %v2062, 32
    %v2072 = vpop.permute.xlu0 %2071
    %v2074 = vmul.f32 %v2068, %v2072
    %2076 = vrot.lane.b32.xlu0 %v2069, 64
    %v2077 = vpop.permute.xlu0 %2076
    %v2079 = vmul.f32 %v2068, %v2077
    %2081 = vrot.lane.b32.xlu0 %v2079, 32
    %v2082 = vpop.permute.xlu0 %2081
    %v2084 = vadd.f32 %v2074, %v2082
    %v2085 = vtanh.pop %v2084
    %2087 = vrot.lane.b32.xlu0 %v2085, 64
    %v2088 = vpop.permute.xlu0 %2087
    %v2090 = vmul.f32 %v2068, %v2088
    %2092 = vrot.lane.b32.xlu0 %v2090, 32
    %v2093 = vpop.permute.xlu0 %2092
    %2095 = vst.msk [vmem:[#allocation3] sm:$0x3] %vm320, %v2093
    %2097 = vrot.lane.b32.xlu0 %v2084, 96
    %v2098 = vpop.permute.xlu0 %2097
    %2100 = vst.msk [vmem:[#allocation5] sm:$0x3] %vm320, %v2098
    %2101 = vst.msk [vmem:[%s182] sm:$0x3] %vm320, %v2093
    %s2102 = ssub.s32 0, 0
    %s2103 = smul.u32 8, %s2102
    %p2104 = scmp.lt.s32.totalorder %s2103, 7
    %s2105 = scalar_select %p2104, %s2103, 7
    %s2106 = smul.addr %s2105, 2
    %s2107 = scalar_lea.vmem %s7, %s2106
    // Predicated region
    $region112: #{rnn_forward.5} parent=1 // pred_check
      _
    $region113: #{rnn_forward.5} parent=1 // pred_check_branch
      %2109 = sbr.rel (0) target = $region115
    $region114: #{rnn_forward.5} parent=1 // pred_region
      _
    $region115: #{rnn_forward.5} parent=1 // pred_fallthru
      _
    // Predicated region
    $region116: #{rnn_forward.5} parent=1 // pred_check
      _
    $region117: #{rnn_forward.5} parent=1 // pred_check_branch
      %2111 = sbr.rel (0) target = $region119
    $region118: #{rnn_forward.5} parent=1 // pred_region
      %s2112 = ssub.s32 0, 0
      %s2113 = smul.u32 8, %s2112
    $region119: #{rnn_forward.5} parent=1 // pred_fallthru
      _
    // Predicated region
    $region120: #{rnn_forward.5} parent=1 // pred_check
      _
    $region121: #{rnn_forward.5} parent=1 // pred_check_branch
      %2115 = sbr.rel (0) target = $region123
    $region122: #{rnn_forward.5} parent=1 // pred_region
      _
    $region123: #{rnn_forward.5} parent=1 // pred_fallthru
      _
    // Predicated region
    $region124: #{rnn_forward.5} parent=1 // pred_check
      _
    $region125: #{rnn_forward.5} parent=1 // pred_check_branch
      %2117 = sbr.rel (0) target = $region127
    $region126: #{rnn_forward.5} parent=1 // pred_region
      %s2118 = ssub.s32 0, 0
      %s2119 = smul.u32 8, %s2118
      %p2120 = scmp.lt.s32.totalorder %s2119, 7
      %s2121 = scalar_select %p2120, %s2119, 7
      %s2122 = smul.addr %s2121, 2
      %s2123 = scalar_lea.vmem %s7, %s2122
    $region127: #{rnn_forward.5} parent=1 // pred_fallthru
      _

// kernel: rnn_forward.7
$region0: #{rnn_forward.7}
  #allocation0 [shape = 'u32[]', space=smem, size = 0x4, offset = 0x4, fixed_abs, tag = 'smem constant byte address 0x4 - core index']
  #allocation1 [shape = 'u32[144,128]{1,0:T(1,128)}', space=vmem, size = 0x12000, scoped, tag = 'internal scratch']
  #allocation2 [shape = 'f32[2,32]{1,0:T(2,128)}', space=vmem, size = 0x400, scoped, tag = 'scratch operand']
  #allocation3 [shape = 'f32[2,32]{1,0:T(2,128)}', space=vmem, size = 0x400, scoped, tag = 'scratch operand']
  #allocation4 [shape = 'f32[2,32]{1,0:T(2,128)}', space=vmem, size = 0x400, scoped, tag = 'scratch operand']
  #allocation5 [shape = 'f32[2,32]{1,0:T(2,128)}', space=vmem, size = 0x400, scoped, tag = 'scratch operand']
  %s0 = inlined_call_operand.vmem [shape: f32[8,2,256], index: 0, kind: input, shape index: {}, may-alias: {0,1}]
  %s1 = inlined_call_operand.vmem [shape: f32[8,2,256], index: 1, kind: input, shape index: {}, may-alias: {0,1}]
  %s2 = inlined_call_operand.vmem [shape: f32[32,128], index: 2, kind: input, shape index: {}]
  %s3 = inlined_call_operand.vmem [shape: f32[32,128], index: 3, kind: input, shape index: {}]
  %s4 = inlined_call_operand.vmem [shape: f32[1,128], index: 4, kind: input, shape index: {}]
  %s5 = inlined_call_operand.vmem [shape: f32[1,128], index: 5, kind: input, shape index: {}]
  %s6 = inlined_call_operand.vmem [shape: f32[32,5], index: 6, kind: input, shape index: {}]
  %s7 = inlined_call_operand.vmem [shape: f32[32,5], index: 7, kind: input, shape index: {}]
  %s8 = inlined_call_operand.vmem [shape: f32[1,5], index: 8, kind: input, shape index: {}]
  %s9 = inlined_call_operand.hbm [shape: f32[8,2,32], index: 9, kind: output, shape index: {0}]
  %s10 = inlined_call_operand.hbm [shape: f32[8,2,32], index: 10, kind: output, shape index: {1}]
  %s11 = inlined_call_operand.hbm [shape: f32[2,5], index: 11, kind: output, shape index: {2}]
  %12 = xla_tuple %s9, %s10, %s11
  %s13 = sld [smem:[#allocation0]]
  $region152: #{rnn_forward.7} parent=0
    _
  %s15 = ssub.s32 1, %s13
  %s16 = scalar_select 0, %s15, %s13
  $region1: #{rnn_forward.7} parent=0
    #allocation6 [shape = 'u8[8192]{0}', space=vmem, size = 0x2000, scoped, tag = 'input window, operand 0, single buffered']
    #allocation7 [shape = 'u8[8192]{0}', space=vmem, size = 0x2000, scoped, tag = 'input window, operand 1, single buffered']
    #allocation8 [shape = 'u8[8192]{0}', space=vmem, size = 0x2000, scoped, tag = 'output window, operand 0, single buffered']
    #allocation9 [shape = 's32[1]{0}', space=sflag, size = 0x4, scoped, tag = 'scoped memory for rnn_forward.7']
    #allocation10 [shape = 'u8[8192]{0}', space=vmem, size = 0x2000, scoped, tag = 'output window, operand 1, single buffered']
    #allocation11 [shape = 's32[1]{0}', space=sflag, size = 0x4, scoped, tag = 'scoped memory for rnn_forward.7']
    #allocation12 [shape = 'u8[1024]{0}', space=vmem, size = 0x400, scoped, tag = 'output window, operand 2, single buffered']
    %17 = vsyncpa [#allocation9], 0
    %18 = vsyncpa [#allocation11], 0
    // Predicated region
    $region2: #{rnn_forward.7} parent=1 // pred_check
      _
    $region3: #{rnn_forward.7} parent=1 // pred_check_branch
      %20 = sbr.rel (0) target = $region5
    $region4: #{rnn_forward.7} parent=1 // pred_region
      // Predicated region
      $region6: #{rnn_forward.7} parent=4 // pred_check
        _
      $region7: #{rnn_forward.7} parent=4 // pred_check_branch
        %22 = sbr.rel (0) target = $region9
      $region8: #{rnn_forward.7} parent=4 // pred_region
        // Predicated region
        $region10: #{rnn_forward.7} parent=8 // pred_check
          _
        $region11: #{rnn_forward.7} parent=8 // pred_check_branch
          %24 = sbr.rel target = $region13
        $region12: #{rnn_forward.7} parent=8 // pred_region
          // Predicated region
          $region25: #{rnn_forward.7} parent=12 // pred_check
            _
          $region26: #{rnn_forward.7} parent=12 // pred_check_branch
            %53 = sbr.rel (0) target = $region28
          $region27: #{rnn_forward.7} parent=12 // pred_region
            loop: start=0, step=1, limit=1
            $region29: #{rnn_forward.7} parent=27 // loop_pre_header
              _
            $region30: #{rnn_forward.7} parent=27 // loop_header
              %s55 = sphi 0, %s59
              %p56 = scmp.ge.s32.totalorder %s55, 1
              %s60 = sphi %s0, %s0
              %s61 = sphi [#allocation6], [#allocation6]
            $region31: #{rnn_forward.7} parent=27 // loop_header_branch
              %58 = sbr.rel (%p56) target = $region35
            $region32: #{rnn_forward.7} parent=27 // loop_body
              _
            $region33: #{rnn_forward.7} parent=27 // loop_footer
              %s59 = sadd.s32 1, %s55
            $region34: #{rnn_forward.7} parent=27 // loop_footer_branch
              %54 = sbr.rel target = $region30
            $region35: #{rnn_forward.7} parent=27 // loop_exit
              _
            loop: start=0, step=1, limit=1
            $region36: #{rnn_forward.7} parent=27 // loop_pre_header
              _
            $region37: #{rnn_forward.7} parent=27 // loop_header
              %s64 = sphi 0, %s68
              %p65 = scmp.ge.s32.totalorder %s64, 1
              %s69 = sphi %s0, %s0
              %s70 = sphi [#allocation6], [#allocation6]
            $region38: #{rnn_forward.7} parent=27 // loop_header_branch
              %67 = sbr.rel (%p65) target = $region42
            $region39: #{rnn_forward.7} parent=27 // loop_body
              %v71 = vld [vmem:[%s69] sm:$0x3]
              %72 = vst [vmem:[%s70] sm:$0x3] %v71
              %v73 = vld [vmem:[%s69 + $0x4] sm:$0x3]
              %74 = vst [vmem:[%s70 + $0x2] sm:$0x3] %v73
              %v75 = vld [vmem:[%s69 + $0x8] sm:$0x3]
              %76 = vst [vmem:[%s70 + $0x4] sm:$0x3] %v75
              %v77 = vld [vmem:[%s69 + $0xc] sm:$0x3]
              %78 = vst [vmem:[%s70 + $0x6] sm:$0x3] %v77
              %v79 = vld [vmem:[%s69 + $0x10] sm:$0x3]
              %80 = vst [vmem:[%s70 + $0x8] sm:$0x3] %v79
              %v81 = vld [vmem:[%s69 + $0x14] sm:$0x3]
              %82 = vst [vmem:[%s70 + $0xa] sm:$0x3] %v81
              %v83 = vld [vmem:[%s69 + $0x18] sm:$0x3]
              %84 = vst [vmem:[%s70 + $0xc] sm:$0x3] %v83
              %v85 = vld [vmem:[%s69 + $0x1c] sm:$0x3]
              %86 = vst [vmem:[%s70 + $0xe] sm:$0x3] %v85
            $region40: #{rnn_forward.7} parent=27 // loop_footer
              %s68 = sadd.s32 1, %s64
            $region41: #{rnn_forward.7} parent=27 // loop_footer_branch
              %63 = sbr.rel target = $region37
            $region42: #{rnn_forward.7} parent=27 // loop_exit
              _
          $region28: #{rnn_forward.7} parent=12 // pred_fallthru
            _
        $region13: #{rnn_forward.7} parent=8 // pred_fallthru
          _
        // Predicated region
        $region14: #{rnn_forward.7} parent=8 // pred_check
          _
        $region15: #{rnn_forward.7} parent=8 // pred_check_branch
          %26 = sbr.rel (0) target = $region17
        $region16: #{rnn_forward.7} parent=8 // pred_region
          loop: start=0, step=1, limit=1
          $region18: #{rnn_forward.7} parent=16 // loop_pre_header
            _
          $region19: #{rnn_forward.7} parent=16 // loop_header
            %s29 = sphi 0, %s33
            %p30 = scmp.ge.s32.totalorder %s29, 1
            %s34 = sphi %s0, %s0
            %s35 = sphi [#allocation6], [#allocation6]
          $region20: #{rnn_forward.7} parent=16 // loop_header_branch
            %32 = sbr.rel (%p30) target = $region24
          $region21: #{rnn_forward.7} parent=16 // loop_body
            %v36 = vld [vmem:[%s34] sm:$0x3]
            %37 = vst [vmem:[%s35] sm:$0x3] %v36
            %v38 = vld [vmem:[%s34 + $0x4] sm:$0x3]
            %39 = vst [vmem:[%s35 + $0x2] sm:$0x3] %v38
            %v40 = vld [vmem:[%s34 + $0x8] sm:$0x3]
            %41 = vst [vmem:[%s35 + $0x4] sm:$0x3] %v40
            %v42 = vld [vmem:[%s34 + $0xc] sm:$0x3]
            %43 = vst [vmem:[%s35 + $0x6] sm:$0x3] %v42
            %v44 = vld [vmem:[%s34 + $0x10] sm:$0x3]
            %45 = vst [vmem:[%s35 + $0x8] sm:$0x3] %v44
            %v46 = vld [vmem:[%s34 + $0x14] sm:$0x3]
            %47 = vst [vmem:[%s35 + $0xa] sm:$0x3] %v46
            %v48 = vld [vmem:[%s34 + $0x18] sm:$0x3]
            %49 = vst [vmem:[%s35 + $0xc] sm:$0x3] %v48
            %v50 = vld [vmem:[%s34 + $0x1c] sm:$0x3]
            %51 = vst [vmem:[%s35 + $0xe] sm:$0x3] %v50
          $region22: #{rnn_forward.7} parent=16 // loop_footer
            %s33 = sadd.s32 1, %s29
          $region23: #{rnn_forward.7} parent=16 // loop_footer_branch
            %28 = sbr.rel target = $region19
          $region24: #{rnn_forward.7} parent=16 // loop_exit
            _
        $region17: #{rnn_forward.7} parent=8 // pred_fallthru
          _
      $region9: #{rnn_forward.7} parent=4 // pred_fallthru
        _
      %87 = vnop
    $region5: #{rnn_forward.7} parent=1 // pred_fallthru
      _
    // Predicated region
    $region43: #{rnn_forward.7} parent=1 // pred_check
      _
    $region44: #{rnn_forward.7} parent=1 // pred_check_branch
      %89 = sbr.rel (0) target = $region46
    $region45: #{rnn_forward.7} parent=1 // pred_region
      %s90 = ssub.s32 0, 0
      %s91 = smul.u32 8, %s90
      %s92 = smul.addr %s91, 2
      %s93 = sadd.s32 1, %s92
      %s94 = smul.addr %s93, 2
      %s95 = scalar_lea.vmem %s1, %s94
      // Predicated region
      $region47: #{rnn_forward.7} parent=45 // pred_check
        _
      $region48: #{rnn_forward.7} parent=45 // pred_check_branch
        %97 = sbr.rel (0) target = $region50
      $region49: #{rnn_forward.7} parent=45 // pred_region
        // Predicated region
        $region51: #{rnn_forward.7} parent=49 // pred_check
          _
        $region52: #{rnn_forward.7} parent=49 // pred_check_branch
          %99 = sbr.rel target = $region54
        $region53: #{rnn_forward.7} parent=49 // pred_region
          // Predicated region
          $region66: #{rnn_forward.7} parent=53 // pred_check
            _
          $region67: #{rnn_forward.7} parent=53 // pred_check_branch
            %128 = sbr.rel (0) target = $region69
          $region68: #{rnn_forward.7} parent=53 // pred_region
            loop: start=0, step=1, limit=1
            $region70: #{rnn_forward.7} parent=68 // loop_pre_header
              _
            $region71: #{rnn_forward.7} parent=68 // loop_header
              %s130 = sphi 0, %s134
              %p131 = scmp.ge.s32.totalorder %s130, 1
              %s135 = sphi %s95, %s95
              %s136 = sphi [#allocation7], [#allocation7]
            $region72: #{rnn_forward.7} parent=68 // loop_header_branch
              %133 = sbr.rel (%p131) target = $region76
            $region73: #{rnn_forward.7} parent=68 // loop_body
              _
            $region74: #{rnn_forward.7} parent=68 // loop_footer
              %s134 = sadd.s32 1, %s130
            $region75: #{rnn_forward.7} parent=68 // loop_footer_branch
              %129 = sbr.rel target = $region71
            $region76: #{rnn_forward.7} parent=68 // loop_exit
              _
            loop: start=0, step=1, limit=1
            $region77: #{rnn_forward.7} parent=68 // loop_pre_header
              _
            $region78: #{rnn_forward.7} parent=68 // loop_header
              %s139 = sphi 0, %s143
              %p140 = scmp.ge.s32.totalorder %s139, 1
              %s144 = sphi %s95, %s95
              %s145 = sphi [#allocation7], [#allocation7]
            $region79: #{rnn_forward.7} parent=68 // loop_header_branch
              %142 = sbr.rel (%p140) target = $region83
            $region80: #{rnn_forward.7} parent=68 // loop_body
              %v146 = vld [vmem:[%s144] sm:$0x3]
              %147 = vst [vmem:[%s145] sm:$0x3] %v146
              %v148 = vld [vmem:[%s144 + $0x4] sm:$0x3]
              %149 = vst [vmem:[%s145 + $0x2] sm:$0x3] %v148
              %v150 = vld [vmem:[%s144 + $0x8] sm:$0x3]
              %151 = vst [vmem:[%s145 + $0x4] sm:$0x3] %v150
              %v152 = vld [vmem:[%s144 + $0xc] sm:$0x3]
              %153 = vst [vmem:[%s145 + $0x6] sm:$0x3] %v152
              %v154 = vld [vmem:[%s144 + $0x10] sm:$0x3]
              %155 = vst [vmem:[%s145 + $0x8] sm:$0x3] %v154
              %v156 = vld [vmem:[%s144 + $0x14] sm:$0x3]
              %157 = vst [vmem:[%s145 + $0xa] sm:$0x3] %v156
              %v158 = vld [vmem:[%s144 + $0x18] sm:$0x3]
              %159 = vst [vmem:[%s145 + $0xc] sm:$0x3] %v158
              %v160 = vld [vmem:[%s144 + $0x1c] sm:$0x3]
              %161 = vst [vmem:[%s145 + $0xe] sm:$0x3] %v160
            $region81: #{rnn_forward.7} parent=68 // loop_footer
              %s143 = sadd.s32 1, %s139
            $region82: #{rnn_forward.7} parent=68 // loop_footer_branch
              %138 = sbr.rel target = $region78
            $region83: #{rnn_forward.7} parent=68 // loop_exit
              _
          $region69: #{rnn_forward.7} parent=53 // pred_fallthru
            _
        $region54: #{rnn_forward.7} parent=49 // pred_fallthru
          _
        // Predicated region
        $region55: #{rnn_forward.7} parent=49 // pred_check
          _
        $region56: #{rnn_forward.7} parent=49 // pred_check_branch
          %101 = sbr.rel (0) target = $region58
        $region57: #{rnn_forward.7} parent=49 // pred_region
          loop: start=0, step=1, limit=1
          $region59: #{rnn_forward.7} parent=57 // loop_pre_header
            _
          $region60: #{rnn_forward.7} parent=57 // loop_header
            %s104 = sphi 0, %s108
            %p105 = scmp.ge.s32.totalorder %s104, 1
            %s109 = sphi %s95, %s95
            %s110 = sphi [#allocation7], [#allocation7]
          $region61: #{rnn_forward.7} parent=57 // loop_header_branch
            %107 = sbr.rel (%p105) target = $region65
          $region62: #{rnn_forward.7} parent=57 // loop_body
            %v111 = vld [vmem:[%s109] sm:$0x3]
            %112 = vst [vmem:[%s110] sm:$0x3] %v111
            %v113 = vld [vmem:[%s109 + $0x4] sm:$0x3]
            %114 = vst [vmem:[%s110 + $0x2] sm:$0x3] %v113
            %v115 = vld [vmem:[%s109 + $0x8] sm:$0x3]
            %116 = vst [vmem:[%s110 + $0x4] sm:$0x3] %v115
            %v117 = vld [vmem:[%s109 + $0xc] sm:$0x3]
            %118 = vst [vmem:[%s110 + $0x6] sm:$0x3] %v117
            %v119 = vld [vmem:[%s109 + $0x10] sm:$0x3]
            %120 = vst [vmem:[%s110 + $0x8] sm:$0x3] %v119
            %v121 = vld [vmem:[%s109 + $0x14] sm:$0x3]
            %122 = vst [vmem:[%s110 + $0xa] sm:$0x3] %v121
            %v123 = vld [vmem:[%s109 + $0x18] sm:$0x3]
            %124 = vst [vmem:[%s110 + $0xc] sm:$0x3] %v123
            %v125 = vld [vmem:[%s109 + $0x1c] sm:$0x3]
            %126 = vst [vmem:[%s110 + $0xe] sm:$0x3] %v125
          $region63: #{rnn_forward.7} parent=57 // loop_footer
            %s108 = sadd.s32 1, %s104
          $region64: #{rnn_forward.7} parent=57 // loop_footer_branch
            %103 = sbr.rel target = $region60
          $region65: #{rnn_forward.7} parent=57 // loop_exit
            _
        $region58: #{rnn_forward.7} parent=49 // pred_fallthru
          _
      $region50: #{rnn_forward.7} parent=45 // pred_fallthru
        _
      %162 = vnop
    $region46: #{rnn_forward.7} parent=1 // pred_fallthru
      _
    // Predicated region
    $region84: #{rnn_forward.7} parent=1 // pred_check
      _
    $region85: #{rnn_forward.7} parent=1 // pred_check_branch
      %164 = sbr.rel (0) target = $region87
    $region86: #{rnn_forward.7} parent=1 // pred_region
      _
    $region87: #{rnn_forward.7} parent=1 // pred_fallthru
      _
    // Predicated region
    $region88: #{rnn_forward.7} parent=1 // pred_check
      _
    $region89: #{rnn_forward.7} parent=1 // pred_check_branch
      %166 = sbr.rel (0) target = $region91
    $region90: #{rnn_forward.7} parent=1 // pred_region
      _
    $region91: #{rnn_forward.7} parent=1 // pred_fallthru
      _
    // Predicated region
    $region92: #{rnn_forward.7} parent=1 // pred_check
      _
    $region93: #{rnn_forward.7} parent=1 // pred_check_branch
      %168 = sbr.rel (0) target = $region95
    $region94: #{rnn_forward.7} parent=1 // pred_region
      _
    $region95: #{rnn_forward.7} parent=1 // pred_fallthru
      _
    // Predicated region
    $region96: #{rnn_forward.7} parent=1 // pred_check
      _
    $region97: #{rnn_forward.7} parent=1 // pred_check_branch
      %170 = sbr.rel (0) target = $region99
    $region98: #{rnn_forward.7} parent=1 // pred_region
      _
    $region99: #{rnn_forward.7} parent=1 // pred_fallthru
      _
    // Predicated region
    $region100: #{rnn_forward.7} parent=1 // pred_check
      _
    $region101: #{rnn_forward.7} parent=1 // pred_check_branch
      %172 = sbr.rel (0) target = $region103
    $region102: #{rnn_forward.7} parent=1 // pred_region
      _
    $region103: #{rnn_forward.7} parent=1 // pred_fallthru
      _
    // Predicated region
    $region104: #{rnn_forward.7} parent=1 // pred_check
      _
    $region105: #{rnn_forward.7} parent=1 // pred_check_branch
      %174 = sbr.rel (0) target = $region107
    $region106: #{rnn_forward.7} parent=1 // pred_region
      _
    $region107: #{rnn_forward.7} parent=1 // pred_fallthru
      _
    // Predicated region
    $region108: #{rnn_forward.7} parent=1 // pred_check
      _
    $region109: #{rnn_forward.7} parent=1 // pred_check_branch
      %176 = sbr.rel (0) target = $region111
    $region110: #{rnn_forward.7} parent=1 // pred_region
      _
    $region111: #{rnn_forward.7} parent=1 // pred_fallthru
      _
    // Predicated region
    $region112: #{rnn_forward.7} parent=1 // pred_check
      _
    $region113: #{rnn_forward.7} parent=1 // pred_check_branch
      %178 = sbr.rel (0) target = $region115
    $region114: #{rnn_forward.7} parent=1 // pred_region
      _
    $region115: #{rnn_forward.7} parent=1 // pred_fallthru
      _
    // Predicated region
    $region116: #{rnn_forward.7} parent=1 // pred_check
      _
    $region117: #{rnn_forward.7} parent=1 // pred_check_branch
      %180 = sbr.rel (0) target = $region119
    $region118: #{rnn_forward.7} parent=1 // pred_region
      _
    $region119: #{rnn_forward.7} parent=1 // pred_fallthru
      _
    %s181 = ssub.s32 0, 0
    %s182 = smul.u32 8, %s181
    %s183 = ssub.s32 0, 0
    %s184 = smul.u32 8, %s183
    %p185 = scmp.eq.s32.totalorder 0, 0
    // Predicated region
    $region120: #{rnn_forward.7} parent=1 // pred_check
      %p186 = pneg %p185
    $region121: #{rnn_forward.7} parent=1 // pred_check_branch
      %188 = sbr.rel (%p186) target = $region123
    $region122: #{rnn_forward.7} parent=1 // pred_region
      %vm189 = vcmask 254976
      %190 = vst.msk [vmem:[#allocation2] sm:$0x3] %vm189, 0.0
      %191 = vst.msk [vmem:[#allocation3] sm:$0x3] %vm189, 0.0
      %192 = vst.msk [vmem:[#allocation4] sm:$0x3] %vm189, 0.0
      %193 = vst.msk [vmem:[#allocation5] sm:$0x3] %vm189, 0.0
    $region123: #{rnn_forward.7} parent=1 // pred_fallthru
      _
    %v194 = vld [vmem:[%s2] sm:$0xff]
    %v195 = vld [vmem:[%s2 + $0x8] sm:$0xff]
    %v196 = vld [vmem:[%s2 + $0x10] sm:$0xff]
    %v197 = vld [vmem:[%s2 + $0x18] sm:$0xff]
    %v198 = vld [vmem:[%s3] sm:$0xff]
    %v199 = vld [vmem:[%s3 + $0x8] sm:$0xff]
    %v200 = vld [vmem:[%s3 + $0x10] sm:$0xff]
    %v201 = vld [vmem:[%s3 + $0x18] sm:$0xff]
    %v202 = vld [vmem:[%s4] sm:$0x1]
    %v203 = vld [vmem:[%s5] sm:$0x1]
    %v204 = vld [vmem:[#allocation2] sm:$0x3]
    %v205 = vld [vmem:[#allocation6] sm:$0x3]
    %vm206 = vcmask 261120
    %v208 = vsel %vm206, %v204, 0
    %210 = vmatprep.subr.mxu0 0.0
    %211 = vmatpush1.msra.mxu0 %v194
    %212 = vmatprep.subr.mxu0 0.0
    %213 = vmatpush1.msra.mxu0 %v195
    %214 = vmatprep.subr.mxu0 0.0
    %215 = vmatpush1.msra.mxu0 %v196
    %216 = vmatprep.subr.mxu0 0.0
    %217 = vmatpush1.msra.mxu0 %v197
    %218 = vmatprep.subr.mxu0 0.0
    %219 = vmatpush1.msra.mxu0 0.0
    %220 = vmatprep.subr.mxu0 0.0
    %221 = vmatpush1.msra.mxu0 0.0
    %222 = vmatprep.subr.mxu0 0.0
    %223 = vmatpush1.msra.mxu0 0.0
    %224 = vmatprep.subr.mxu0 0.0
    %225 = vmatpush1.msra.mxu0 0.0
    %226 = vmatprep.subr.mxu0 0.0
    %227 = vmatpush1.msra.mxu0 0.0
    %228 = vmatprep.subr.mxu0 0.0
    %229 = vmatpush1.msra.mxu0 0.0
    %230 = vmatprep.subr.mxu0 0.0
    %231 = vmatpush1.msra.mxu0 0.0
    %232 = vmatprep.subr.mxu0 0.0
    %233 = vmatpush1.msra.mxu0 0.0
    %234 = vmatprep.subr.mxu0 0.0
    %235 = vmatpush1.msra.mxu0 0.0
    %236 = vmatprep.subr.mxu0 0.0
    %237 = vmatpush1.msra.mxu0 0.0
    %238 = vmatprep.subr.mxu0 0.0
    %239 = vmatpush1.msra.mxu0 0.0
    %240 = vmatprep.subr.mxu0 0.0
    %241 = vmatpush1.msra.mxu0 0.0
    %242 = vmatprep.subr.mxu0 0.0
    %243 = vmatpush1.msra.mxu0 0.0
    %244 = vmatprep.subr.mxu0 0.0
    %245 = vmatpush1.msra.mxu0 0.0
    %246 = vmatprep.subr.mxu0 0.0
    %247 = vmatpush1.msra.mxu0 0.0
    %248 = vmatprep.subr.mxu0 0.0
    %249 = vmatpush1.msra.mxu0 0.0
    %250 = vmatprep.subr.mxu0 0.0
    %251 = vmatpush1.msra.mxu0 0.0
    %252 = vmatprep.subr.mxu0 0.0
    %253 = vmatpush1.msra.mxu0 0.0
    %254 = vmatprep.subr.mxu0 0.0
    %255 = vmatpush1.msra.mxu0 0.0
    %256 = vmatprep.subr.mxu0 0.0
    %257 = vmatpush1.msra.mxu0 0.0
    %258 = vmatprep.subr.mxu0 0.0
    %259 = vmatpush1.msra.mxu0 0.0
    %260 = vmatprep.subr.mxu0 0.0
    %261 = vmatpush1.msra.mxu0 0.0
    %262 = vmatprep.subr.mxu0 0.0
    %263 = vmatpush1.msra.mxu0 0.0
    %264 = vmatprep.subr.mxu0 0.0
    %265 = vmatpush1.msra.mxu0 0.0
    %266 = vmatprep.subr.mxu0 0.0
    %267 = vmatpush1.msra.mxu0 0.0
    %268 = vmatprep.subr.mxu0 0.0
    %269 = vmatpush1.msra.mxu0 0.0
    %270 = vmatprep.subr.mxu0 0.0
    %271 = vmatpush1.msra.mxu0 0.0
    %272 = vmatprep.subr.mxu0 0.0
    %273 = vmatpush1.msra.mxu0 0.0
    %274 = vmatprep.mubr.f32.mxu0 0.0
    %275 = vmatmul.mubr.f32.gmra.mrb[0].mxu0 %v208
    %v276 = vpop.f32.mrb[0].mxu0
    %v277 = vadd.f32 %v205, %v276
    %v278 = vpop.f32.mrb[0].mxu0
    %279 = vdwg.mxu0
    %v281 = vlaneseq
    %v282 = vshrl.u32 %v281, 7
    %v283 = vsub.s32 0, %v282
    %v284 = vrot.slane %v202, %v283
    %v286 = vadd.f32 %v277, %v284
    %v287 = vld [vmem:[#allocation4] sm:$0x3]
    %v288 = vxor.u32 %v286, 2147483648
    %v289 = vmul.f32 %v288, 1.442695
    %v290 = vpow.pop %v289
    %v291 = vadd.f32 %v290, 1.0
    %v292 = vrcp.pop %v291
    %v293 = vmul.f32 1.0, %v292
    %v294 = vtanh.pop %v286
    %296 = vrot.lane.b32.xlu0 %v287, 32
    %v297 = vpop.permute.xlu0 %296
    %v299 = vmul.f32 %v293, %v297
    %301 = vrot.lane.b32.xlu0 %v294, 64
    %v302 = vpop.permute.xlu0 %301
    %v304 = vmul.f32 %v293, %v302
    %306 = vrot.lane.b32.xlu0 %v304, 32
    %v307 = vpop.permute.xlu0 %306
    %v309 = vadd.f32 %v299, %v307
    %v310 = vtanh.pop %v309
    %312 = vrot.lane.b32.xlu0 %v310, 64
    %v313 = vpop.permute.xlu0 %312
    %v315 = vmul.f32 %v293, %v313
    %317 = vrot.lane.b32.xlu0 %v315, 32
    %v318 = vpop.permute.xlu0 %317
    %vm320 = vcmask 254976
    %321 = vst.msk [vmem:[#allocation2] sm:$0x3] %vm320, %v318
    %323 = vrot.lane.b32.xlu0 %v309, 96
    %v324 = vpop.permute.xlu0 %323
    %326 = vst.msk [vmem:[#allocation4] sm:$0x3] %vm320, %v324
    %327 = vst.msk [vmem:[#allocation8] sm:$0x3] %vm320, %v318
    %v328 = vld [vmem:[#allocation3] sm:$0x3]
    %s329 = scalar_lea.vmem [#allocation7], 14
    %v330 = vld [vmem:[%s329] sm:$0x3]
    %v332 = vsel %vm206, %v328, 0
    %334 = vmatprep.subr.mxu0 0.0
    %335 = vmatpush1.msra.mxu0 %v198
    %336 = vmatprep.subr.mxu0 0.0
    %337 = vmatpush1.msra.mxu0 %v199
    %338 = vmatprep.subr.mxu0 0.0
    %339 = vmatpush1.msra.mxu0 %v200
    %340 = vmatprep.subr.mxu0 0.0
    %341 = vmatpush1.msra.mxu0 %v201
    %342 = vmatprep.subr.mxu0 0.0
    %343 = vmatpush1.msra.mxu0 0.0
    %344 = vmatprep.subr.mxu0 0.0
    %345 = vmatpush1.msra.mxu0 0.0
    %346 = vmatprep.subr.mxu0 0.0
    %347 = vmatpush1.msra.mxu0 0.0
    %348 = vmatprep.subr.mxu0 0.0
    %349 = vmatpush1.msra.mxu0 0.0
    %350 = vmatprep.subr.mxu0 0.0
    %351 = vmatpush1.msra.mxu0 0.0
    %352 = vmatprep.subr.mxu0 0.0
    %353 = vmatpush1.msra.mxu0 0.0
    %354 = vmatprep.subr.mxu0 0.0
    %355 = vmatpush1.msra.mxu0 0.0
    %356 = vmatprep.subr.mxu0 0.0
    %357 = vmatpush1.msra.mxu0 0.0
    %358 = vmatprep.subr.mxu0 0.0
    %359 = vmatpush1.msra.mxu0 0.0
    %360 = vmatprep.subr.mxu0 0.0
    %361 = vmatpush1.msra.mxu0 0.0
    %362 = vmatprep.subr.mxu0 0.0
    %363 = vmatpush1.msra.mxu0 0.0
    %364 = vmatprep.subr.mxu0 0.0
    %365 = vmatpush1.msra.mxu0 0.0
    %366 = vmatprep.subr.mxu0 0.0
    %367 = vmatpush1.msra.mxu0 0.0
    %368 = vmatprep.subr.mxu0 0.0
    %369 = vmatpush1.msra.mxu0 0.0
    %370 = vmatprep.subr.mxu0 0.0
    %371 = vmatpush1.msra.mxu0 0.0
    %372 = vmatprep.subr.mxu0 0.0
    %373 = vmatpush1.msra.mxu0 0.0
    %374 = vmatprep.subr.mxu0 0.0
    %375 = vmatpush1.msra.mxu0 0.0
    %376 = vmatprep.subr.mxu0 0.0
    %377 = vmatpush1.msra.mxu0 0.0
    %378 = vmatprep.subr.mxu0 0.0
    %379 = vmatpush1.msra.mxu0 0.0
    %380 = vmatprep.subr.mxu0 0.0
    %381 = vmatpush1.msra.mxu0 0.0
    %382 = vmatprep.subr.mxu0 0.0
    %383 = vmatpush1.msra.mxu0 0.0
    %384 = vmatprep.subr.mxu0 0.0
    %385 = vmatpush1.msra.mxu0 0.0
    %386 = vmatprep.subr.mxu0 0.0
    %387 = vmatpush1.msra.mxu0 0.0
    %388 = vmatprep.subr.mxu0 0.0
    %389 = vmatpush1.msra.mxu0 0.0
    %390 = vmatprep.subr.mxu0 0.0
    %391 = vmatpush1.msra.mxu0 0.0
    %392 = vmatprep.subr.mxu0 0.0
    %393 = vmatpush1.msra.mxu0 0.0
    %394 = vmatprep.subr.mxu0 0.0
    %395 = vmatpush1.msra.mxu0 0.0
    %396 = vmatprep.subr.mxu0 0.0
    %397 = vmatpush1.msra.mxu0 0.0
    %398 = vmatprep.mubr.f32.mxu0 0.0
    %399 = vmatmul.mubr.f32.gmra.mrb[0].mxu0 %v332
    %v400 = vpop.f32.mrb[0].mxu0
    %v401 = vadd.f32 %v330, %v400
    %v402 = vpop.f32.mrb[0].mxu0
    %403 = vdwg.mxu0
    %v405 = vlaneseq
    %v406 = vshrl.u32 %v405, 7
    %v407 = vsub.s32 0, %v406
    %v408 = vrot.slane %v203, %v407
    %v410 = vadd.f32 %v401, %v408
    %v411 = vld [vmem:[#allocation5] sm:$0x3]
    %v412 = vxor.u32 %v410, 2147483648
    %v413 = vmul.f32 %v412, 1.442695
    %v414 = vpow.pop %v413
    %v415 = vadd.f32 %v414, 1.0
    %v416 = vrcp.pop %v415
    %v417 = vmul.f32 1.0, %v416
    %v418 = vtanh.pop %v410
    %420 = vrot.lane.b32.xlu0 %v411, 32
    %v421 = vpop.permute.xlu0 %420
    %v423 = vmul.f32 %v417, %v421
    %425 = vrot.lane.b32.xlu0 %v418, 64
    %v426 = vpop.permute.xlu0 %425
    %v428 = vmul.f32 %v417, %v426
    %430 = vrot.lane.b32.xlu0 %v428, 32
    %v431 = vpop.permute.xlu0 %430
    %v433 = vadd.f32 %v423, %v431
    %v434 = vtanh.pop %v433
    %436 = vrot.lane.b32.xlu0 %v434, 64
    %v437 = vpop.permute.xlu0 %436
    %v439 = vmul.f32 %v417, %v437
    %441 = vrot.lane.b32.xlu0 %v439, 32
    %v442 = vpop.permute.xlu0 %441
    %444 = vst.msk [vmem:[#allocation3] sm:$0x3] %vm320, %v442
    %446 = vrot.lane.b32.xlu0 %v433, 96
    %v447 = vpop.permute.xlu0 %446
    %449 = vst.msk [vmem:[#allocation5] sm:$0x3] %vm320, %v447
    %s450 = scalar_lea.vmem [#allocation10], 14
    %451 = vst.msk [vmem:[%s450] sm:$0x3] %vm320, %v442
    %v452 = vld [vmem:[#allocation2] sm:$0x3]
    %s453 = scalar_lea.vmem [#allocation6], 2
    %v454 = vld [vmem:[%s453] sm:$0x3]
    %v456 = vsel %vm206, %v452, 0
    %458 = vmatprep.subr.mxu0 0.0
    %459 = vmatpush1.msra.mxu0 %v194
    %460 = vmatprep.subr.mxu0 0.0
    %461 = vmatpush1.msra.mxu0 %v195
    %462 = vmatprep.subr.mxu0 0.0
    %463 = vmatpush1.msra.mxu0 %v196
    %464 = vmatprep.subr.mxu0 0.0
    %465 = vmatpush1.msra.mxu0 %v197
    %466 = vmatprep.subr.mxu0 0.0
    %467 = vmatpush1.msra.mxu0 0.0
    %468 = vmatprep.subr.mxu0 0.0
    %469 = vmatpush1.msra.mxu0 0.0
    %470 = vmatprep.subr.mxu0 0.0
    %471 = vmatpush1.msra.mxu0 0.0
    %472 = vmatprep.subr.mxu0 0.0
    %473 = vmatpush1.msra.mxu0 0.0
    %474 = vmatprep.subr.mxu0 0.0
    %475 = vmatpush1.msra.mxu0 0.0
    %476 = vmatprep.subr.mxu0 0.0
    %477 = vmatpush1.msra.mxu0 0.0
    %478 = vmatprep.subr.mxu0 0.0
    %479 = vmatpush1.msra.mxu0 0.0
    %480 = vmatprep.subr.mxu0 0.0
    %481 = vmatpush1.msra.mxu0 0.0
    %482 = vmatprep.subr.mxu0 0.0
    %483 = vmatpush1.msra.mxu0 0.0
    %484 = vmatprep.subr.mxu0 0.0
    %485 = vmatpush1.msra.mxu0 0.0
    %486 = vmatprep.subr.mxu0 0.0
    %487 = vmatpush1.msra.mxu0 0.0
    %488 = vmatprep.subr.mxu0 0.0
    %489 = vmatpush1.msra.mxu0 0.0
    %490 = vmatprep.subr.mxu0 0.0
    %491 = vmatpush1.msra.mxu0 0.0
    %492 = vmatprep.subr.mxu0 0.0
    %493 = vmatpush1.msra.mxu0 0.0
    %494 = vmatprep.subr.mxu0 0.0
    %495 = vmatpush1.msra.mxu0 0.0
    %496 = vmatprep.subr.mxu0 0.0
    %497 = vmatpush1.msra.mxu0 0.0
    %498 = vmatprep.subr.mxu0 0.0
    %499 = vmatpush1.msra.mxu0 0.0
    %500 = vmatprep.subr.mxu0 0.0
    %501 = vmatpush1.msra.mxu0 0.0
    %502 = vmatprep.subr.mxu0 0.0
    %503 = vmatpush1.msra.mxu0 0.0
    %504 = vmatprep.subr.mxu0 0.0
    %505 = vmatpush1.msra.mxu0 0.0
    %506 = vmatprep.subr.mxu0 0.0
    %507 = vmatpush1.msra.mxu0 0.0
    %508 = vmatprep.subr.mxu0 0.0
    %509 = vmatpush1.msra.mxu0 0.0
    %510 = vmatprep.subr.mxu0 0.0
    %511 = vmatpush1.msra.mxu0 0.0
    %512 = vmatprep.subr.mxu0 0.0
    %513 = vmatpush1.msra.mxu0 0.0
    %514 = vmatprep.subr.mxu0 0.0
    %515 = vmatpush1.msra.mxu0 0.0
    %516 = vmatprep.subr.mxu0 0.0
    %517 = vmatpush1.msra.mxu0 0.0
    %518 = vmatprep.subr.mxu0 0.0
    %519 = vmatpush1.msra.mxu0 0.0
    %520 = vmatprep.subr.mxu0 0.0
    %521 = vmatpush1.msra.mxu0 0.0
    %522 = vmatprep.mubr.f32.mxu0 0.0
    %523 = vmatmul.mubr.f32.gmra.mrb[0].mxu0 %v456
    %v524 = vpop.f32.mrb[0].mxu0
    %v525 = vadd.f32 %v454, %v524
    %v526 = vpop.f32.mrb[0].mxu0
    %527 = vdwg.mxu0
    %v528 = vadd.f32 %v525, %v284
    %v529 = vld [vmem:[#allocation4] sm:$0x3]
    %v530 = vxor.u32 %v528, 2147483648
    %v531 = vmul.f32 %v530, 1.442695
    %v532 = vpow.pop %v531
    %v533 = vadd.f32 %v532, 1.0
    %v534 = vrcp.pop %v533
    %v535 = vmul.f32 1.0, %v534
    %v536 = vtanh.pop %v528
    %538 = vrot.lane.b32.xlu0 %v529, 32
    %v539 = vpop.permute.xlu0 %538
    %v541 = vmul.f32 %v535, %v539
    %543 = vrot.lane.b32.xlu0 %v536, 64
    %v544 = vpop.permute.xlu0 %543
    %v546 = vmul.f32 %v535, %v544
    %548 = vrot.lane.b32.xlu0 %v546, 32
    %v549 = vpop.permute.xlu0 %548
    %v551 = vadd.f32 %v541, %v549
    %v552 = vtanh.pop %v551
    %554 = vrot.lane.b32.xlu0 %v552, 64
    %v555 = vpop.permute.xlu0 %554
    %v557 = vmul.f32 %v535, %v555
    %559 = vrot.lane.b32.xlu0 %v557, 32
    %v560 = vpop.permute.xlu0 %559
    %562 = vst.msk [vmem:[#allocation2] sm:$0x3] %vm320, %v560
    %564 = vrot.lane.b32.xlu0 %v551, 96
    %v565 = vpop.permute.xlu0 %564
    %567 = vst.msk [vmem:[#allocation4] sm:$0x3] %vm320, %v565
    %s568 = scalar_lea.vmem [#allocation8], 2
    %569 = vst.msk [vmem:[%s568] sm:$0x3] %vm320, %v560
    %v570 = vld [vmem:[#allocation3] sm:$0x3]
    %s571 = scalar_lea.vmem [#allocation7], 12
    %v572 = vld [vmem:[%s571] sm:$0x3]
    %v574 = vsel %vm206, %v570, 0
    %576 = vmatprep.subr.mxu0 0.0
    %577 = vmatpush1.msra.mxu0 %v198
    %578 = vmatprep.subr.mxu0 0.0
    %579 = vmatpush1.msra.mxu0 %v199
    %580 = vmatprep.subr.mxu0 0.0
    %581 = vmatpush1.msra.mxu0 %v200
    %582 = vmatprep.subr.mxu0 0.0
    %583 = vmatpush1.msra.mxu0 %v201
    %584 = vmatprep.subr.mxu0 0.0
    %585 = vmatpush1.msra.mxu0 0.0
    %586 = vmatprep.subr.mxu0 0.0
    %587 = vmatpush1.msra.mxu0 0.0
    %588 = vmatprep.subr.mxu0 0.0
    %589 = vmatpush1.msra.mxu0 0.0
    %590 = vmatprep.subr.mxu0 0.0
    %591 = vmatpush1.msra.mxu0 0.0
    %592 = vmatprep.subr.mxu0 0.0
    %593 = vmatpush1.msra.mxu0 0.0
    %594 = vmatprep.subr.mxu0 0.0
    %595 = vmatpush1.msra.mxu0 0.0
    %596 = vmatprep.subr.mxu0 0.0
    %597 = vmatpush1.msra.mxu0 0.0
    %598 = vmatprep.subr.mxu0 0.0
    %599 = vmatpush1.msra.mxu0 0.0
    %600 = vmatprep.subr.mxu0 0.0
    %601 = vmatpush1.msra.mxu0 0.0
    %602 = vmatprep.subr.mxu0 0.0
    %603 = vmatpush1.msra.mxu0 0.0
    %604 = vmatprep.subr.mxu0 0.0
    %605 = vmatpush1.msra.mxu0 0.0
    %606 = vmatprep.subr.mxu0 0.0
    %607 = vmatpush1.msra.mxu0 0.0
    %608 = vmatprep.subr.mxu0 0.0
    %609 = vmatpush1.msra.mxu0 0.0
    %610 = vmatprep.subr.mxu0 0.0
    %611 = vmatpush1.msra.mxu0 0.0
    %612 = vmatprep.subr.mxu0 0.0
    %613 = vmatpush1.msra.mxu0 0.0
    %614 = vmatprep.subr.mxu0 0.0
    %615 = vmatpush1.msra.mxu0 0.0
    %616 = vmatprep.subr.mxu0 0.0
    %617 = vmatpush1.msra.mxu0 0.0
    %618 = vmatprep.subr.mxu0 0.0
    %619 = vmatpush1.msra.mxu0 0.0
    %620 = vmatprep.subr.mxu0 0.0
    %621 = vmatpush1.msra.mxu0 0.0
    %622 = vmatprep.subr.mxu0 0.0
    %623 = vmatpush1.msra.mxu0 0.0
    %624 = vmatprep.subr.mxu0 0.0
    %625 = vmatpush1.msra.mxu0 0.0
    %626 = vmatprep.subr.mxu0 0.0
    %627 = vmatpush1.msra.mxu0 0.0
    %628 = vmatprep.subr.mxu0 0.0
    %629 = vmatpush1.msra.mxu0 0.0
    %630 = vmatprep.subr.mxu0 0.0
    %631 = vmatpush1.msra.mxu0 0.0
    %632 = vmatprep.subr.mxu0 0.0
    %633 = vmatpush1.msra.mxu0 0.0
    %634 = vmatprep.subr.mxu0 0.0
    %635 = vmatpush1.msra.mxu0 0.0
    %636 = vmatprep.subr.mxu0 0.0
    %637 = vmatpush1.msra.mxu0 0.0
    %638 = vmatprep.subr.mxu0 0.0
    %639 = vmatpush1.msra.mxu0 0.0
    %640 = vmatprep.mubr.f32.mxu0 0.0
    %641 = vmatmul.mubr.f32.gmra.mrb[0].mxu0 %v574
    %v642 = vpop.f32.mrb[0].mxu0
    %v643 = vadd.f32 %v572, %v642
    %v644 = vpop.f32.mrb[0].mxu0
    %645 = vdwg.mxu0
    %v646 = vadd.f32 %v643, %v408
    %v647 = vld [vmem:[#allocation5] sm:$0x3]
    %v648 = vxor.u32 %v646, 2147483648
    %v649 = vmul.f32 %v648, 1.442695
    %v650 = vpow.pop %v649
    %v651 = vadd.f32 %v650, 1.0
    %v652 = vrcp.pop %v651
    %v653 = vmul.f32 1.0, %v652
    %v654 = vtanh.pop %v646
    %656 = vrot.lane.b32.xlu0 %v647, 32
    %v657 = vpop.permute.xlu0 %656
    %v659 = vmul.f32 %v653, %v657
    %661 = vrot.lane.b32.xlu0 %v654, 64
    %v662 = vpop.permute.xlu0 %661
    %v664 = vmul.f32 %v653, %v662
    %666 = vrot.lane.b32.xlu0 %v664, 32
    %v667 = vpop.permute.xlu0 %666
    %v669 = vadd.f32 %v659, %v667
    %v670 = vtanh.pop %v669
    %672 = vrot.lane.b32.xlu0 %v670, 64
    %v673 = vpop.permute.xlu0 %672
    %v675 = vmul.f32 %v653, %v673
    %677 = vrot.lane.b32.xlu0 %v675, 32
    %v678 = vpop.permute.xlu0 %677
    %680 = vst.msk [vmem:[#allocation3] sm:$0x3] %vm320, %v678
    %682 = vrot.lane.b32.xlu0 %v669, 96
    %v683 = vpop.permute.xlu0 %682
    %685 = vst.msk [vmem:[#allocation5] sm:$0x3] %vm320, %v683
    %s686 = scalar_lea.vmem [#allocation10], 12
    %687 = vst.msk [vmem:[%s686] sm:$0x3] %vm320, %v678
    %v688 = vld [vmem:[#allocation2] sm:$0x3]
    %s689 = scalar_lea.vmem [#allocation6], 4
    %v690 = vld [vmem:[%s689] sm:$0x3]
    %v692 = vsel %vm206, %v688, 0
    %694 = vmatprep.subr.mxu0 0.0
    %695 = vmatpush1.msra.mxu0 %v194
    %696 = vmatprep.subr.mxu0 0.0
    %697 = vmatpush1.msra.mxu0 %v195
    %698 = vmatprep.subr.mxu0 0.0
    %699 = vmatpush1.msra.mxu0 %v196
    %700 = vmatprep.subr.mxu0 0.0
    %701 = vmatpush1.msra.mxu0 %v197
    %702 = vmatprep.subr.mxu0 0.0
    %703 = vmatpush1.msra.mxu0 0.0
    %704 = vmatprep.subr.mxu0 0.0
    %705 = vmatpush1.msra.mxu0 0.0
    %706 = vmatprep.subr.mxu0 0.0
    %707 = vmatpush1.msra.mxu0 0.0
    %708 = vmatprep.subr.mxu0 0.0
    %709 = vmatpush1.msra.mxu0 0.0
    %710 = vmatprep.subr.mxu0 0.0
    %711 = vmatpush1.msra.mxu0 0.0
    %712 = vmatprep.subr.mxu0 0.0
    %713 = vmatpush1.msra.mxu0 0.0
    %714 = vmatprep.subr.mxu0 0.0
    %715 = vmatpush1.msra.mxu0 0.0
    %716 = vmatprep.subr.mxu0 0.0
    %717 = vmatpush1.msra.mxu0 0.0
    %718 = vmatprep.subr.mxu0 0.0
    %719 = vmatpush1.msra.mxu0 0.0
    %720 = vmatprep.subr.mxu0 0.0
    %721 = vmatpush1.msra.mxu0 0.0
    %722 = vmatprep.subr.mxu0 0.0
    %723 = vmatpush1.msra.mxu0 0.0
    %724 = vmatprep.subr.mxu0 0.0
    %725 = vmatpush1.msra.mxu0 0.0
    %726 = vmatprep.subr.mxu0 0.0
    %727 = vmatpush1.msra.mxu0 0.0
    %728 = vmatprep.subr.mxu0 0.0
    %729 = vmatpush1.msra.mxu0 0.0
    %730 = vmatprep.subr.mxu0 0.0
    %731 = vmatpush1.msra.mxu0 0.0
    %732 = vmatprep.subr.mxu0 0.0
    %733 = vmatpush1.msra.mxu0 0.0
    %734 = vmatprep.subr.mxu0 0.0
    %735 = vmatpush1.msra.mxu0 0.0
    %736 = vmatprep.subr.mxu0 0.0
    %737 = vmatpush1.msra.mxu0 0.0
    %738 = vmatprep.subr.mxu0 0.0
    %739 = vmatpush1.msra.mxu0 0.0
    %740 = vmatprep.subr.mxu0 0.0
    %741 = vmatpush1.msra.mxu0 0.0
    %742 = vmatprep.subr.mxu0 0.0
    %743 = vmatpush1.msra.mxu0 0.0
    %744 = vmatprep.subr.mxu0 0.0
    %745 = vmatpush1.msra.mxu0 0.0
    %746 = vmatprep.subr.mxu0 0.0
    %747 = vmatpush1.msra.mxu0 0.0
    %748 = vmatprep.subr.mxu0 0.0
    %749 = vmatpush1.msra.mxu0 0.0
    %750 = vmatprep.subr.mxu0 0.0
    %751 = vmatpush1.msra.mxu0 0.0
    %752 = vmatprep.subr.mxu0 0.0
    %753 = vmatpush1.msra.mxu0 0.0
    %754 = vmatprep.subr.mxu0 0.0
    %755 = vmatpush1.msra.mxu0 0.0
    %756 = vmatprep.subr.mxu0 0.0
    %757 = vmatpush1.msra.mxu0 0.0
    %758 = vmatprep.mubr.f32.mxu0 0.0
    %759 = vmatmul.mubr.f32.gmra.mrb[0].mxu0 %v692
    %v760 = vpop.f32.mrb[0].mxu0
    %v761 = vadd.f32 %v690, %v760
    %v762 = vpop.f32.mrb[0].mxu0
    %763 = vdwg.mxu0
    %v764 = vadd.f32 %v761, %v284
    %v765 = vld [vmem:[#allocation4] sm:$0x3]
    %v766 = vxor.u32 %v764, 2147483648
    %v767 = vmul.f32 %v766, 1.442695
    %v768 = vpow.pop %v767
    %v769 = vadd.f32 %v768, 1.0
    %v770 = vrcp.pop %v769
    %v771 = vmul.f32 1.0, %v770
    %v772 = vtanh.pop %v764
    %774 = vrot.lane.b32.xlu0 %v765, 32
    %v775 = vpop.permute.xlu0 %774
    %v777 = vmul.f32 %v771, %v775
    %779 = vrot.lane.b32.xlu0 %v772, 64
    %v780 = vpop.permute.xlu0 %779
    %v782 = vmul.f32 %v771, %v780
    %784 = vrot.lane.b32.xlu0 %v782, 32
    %v785 = vpop.permute.xlu0 %784
    %v787 = vadd.f32 %v777, %v785
    %v788 = vtanh.pop %v787
    %790 = vrot.lane.b32.xlu0 %v788, 64
    %v791 = vpop.permute.xlu0 %790
    %v793 = vmul.f32 %v771, %v791
    %795 = vrot.lane.b32.xlu0 %v793, 32
    %v796 = vpop.permute.xlu0 %795
    %798 = vst.msk [vmem:[#allocation2] sm:$0x3] %vm320, %v796
    %800 = vrot.lane.b32.xlu0 %v787, 96
    %v801 = vpop.permute.xlu0 %800
    %803 = vst.msk [vmem:[#allocation4] sm:$0x3] %vm320, %v801
    %s804 = scalar_lea.vmem [#allocation8], 4
    %805 = vst.msk [vmem:[%s804] sm:$0x3] %vm320, %v796
    %v806 = vld [vmem:[#allocation3] sm:$0x3]
    %s807 = scalar_lea.vmem [#allocation7], 10
    %v808 = vld [vmem:[%s807] sm:$0x3]
    %v810 = vsel %vm206, %v806, 0
    %812 = vmatprep.subr.mxu0 0.0
    %813 = vmatpush1.msra.mxu0 %v198
    %814 = vmatprep.subr.mxu0 0.0
    %815 = vmatpush1.msra.mxu0 %v199
    %816 = vmatprep.subr.mxu0 0.0
    %817 = vmatpush1.msra.mxu0 %v200
    %818 = vmatprep.subr.mxu0 0.0
    %819 = vmatpush1.msra.mxu0 %v201
    %820 = vmatprep.subr.mxu0 0.0
    %821 = vmatpush1.msra.mxu0 0.0
    %822 = vmatprep.subr.mxu0 0.0
    %823 = vmatpush1.msra.mxu0 0.0
    %824 = vmatprep.subr.mxu0 0.0
    %825 = vmatpush1.msra.mxu0 0.0
    %826 = vmatprep.subr.mxu0 0.0
    %827 = vmatpush1.msra.mxu0 0.0
    %828 = vmatprep.subr.mxu0 0.0
    %829 = vmatpush1.msra.mxu0 0.0
    %830 = vmatprep.subr.mxu0 0.0
    %831 = vmatpush1.msra.mxu0 0.0
    %832 = vmatprep.subr.mxu0 0.0
    %833 = vmatpush1.msra.mxu0 0.0
    %834 = vmatprep.subr.mxu0 0.0
    %835 = vmatpush1.msra.mxu0 0.0
    %836 = vmatprep.subr.mxu0 0.0
    %837 = vmatpush1.msra.mxu0 0.0
    %838 = vmatprep.subr.mxu0 0.0
    %839 = vmatpush1.msra.mxu0 0.0
    %840 = vmatprep.subr.mxu0 0.0
    %841 = vmatpush1.msra.mxu0 0.0
    %842 = vmatprep.subr.mxu0 0.0
    %843 = vmatpush1.msra.mxu0 0.0
    %844 = vmatprep.subr.mxu0 0.0
    %845 = vmatpush1.msra.mxu0 0.0
    %846 = vmatprep.subr.mxu0 0.0
    %847 = vmatpush1.msra.mxu0 0.0
    %848 = vmatprep.subr.mxu0 0.0
    %849 = vmatpush1.msra.mxu0 0.0
    %850 = vmatprep.subr.mxu0 0.0
    %851 = vmatpush1.msra.mxu0 0.0
    %852 = vmatprep.subr.mxu0 0.0
    %853 = vmatpush1.msra.mxu0 0.0
    %854 = vmatprep.subr.mxu0 0.0
    %855 = vmatpush1.msra.mxu0 0.0
    %856 = vmatprep.subr.mxu0 0.0
    %857 = vmatpush1.msra.mxu0 0.0
    %858 = vmatprep.subr.mxu0 0.0
    %859 = vmatpush1.msra.mxu0 0.0
    %860 = vmatprep.subr.mxu0 0.0
    %861 = vmatpush1.msra.mxu0 0.0
    %862 = vmatprep.subr.mxu0 0.0
    %863 = vmatpush1.msra.mxu0 0.0
    %864 = vmatprep.subr.mxu0 0.0
    %865 = vmatpush1.msra.mxu0 0.0
    %866 = vmatprep.subr.mxu0 0.0
    %867 = vmatpush1.msra.mxu0 0.0
    %868 = vmatprep.subr.mxu0 0.0
    %869 = vmatpush1.msra.mxu0 0.0
    %870 = vmatprep.subr.mxu0 0.0
    %871 = vmatpush1.msra.mxu0 0.0
    %872 = vmatprep.subr.mxu0 0.0
    %873 = vmatpush1.msra.mxu0 0.0
    %874 = vmatprep.subr.mxu0 0.0
    %875 = vmatpush1.msra.mxu0 0.0
    %876 = vmatprep.mubr.f32.mxu0 0.0
    %877 = vmatmul.mubr.f32.gmra.mrb[0].mxu0 %v810
    %v878 = vpop.f32.mrb[0].mxu0
    %v879 = vadd.f32 %v808, %v878
    %v880 = vpop.f32.mrb[0].mxu0
    %881 = vdwg.mxu0
    %v882 = vadd.f32 %v879, %v408
    %v883 = vld [vmem:[#allocation5] sm:$0x3]
    %v884 = vxor.u32 %v882, 2147483648
    %v885 = vmul.f32 %v884, 1.442695
    %v886 = vpow.pop %v885
    %v887 = vadd.f32 %v886, 1.0
    %v888 = vrcp.pop %v887
    %v889 = vmul.f32 1.0, %v888
    %v890 = vtanh.pop %v882
    %892 = vrot.lane.b32.xlu0 %v883, 32
    %v893 = vpop.permute.xlu0 %892
    %v895 = vmul.f32 %v889, %v893
    %897 = vrot.lane.b32.xlu0 %v890, 64
    %v898 = vpop.permute.xlu0 %897
    %v900 = vmul.f32 %v889, %v898
    %902 = vrot.lane.b32.xlu0 %v900, 32
    %v903 = vpop.permute.xlu0 %902
    %v905 = vadd.f32 %v895, %v903
    %v906 = vtanh.pop %v905
    %908 = vrot.lane.b32.xlu0 %v906, 64
    %v909 = vpop.permute.xlu0 %908
    %v911 = vmul.f32 %v889, %v909
    %913 = vrot.lane.b32.xlu0 %v911, 32
    %v914 = vpop.permute.xlu0 %913
    %916 = vst.msk [vmem:[#allocation3] sm:$0x3] %vm320, %v914
    %918 = vrot.lane.b32.xlu0 %v905, 96
    %v919 = vpop.permute.xlu0 %918
    %921 = vst.msk [vmem:[#allocation5] sm:$0x3] %vm320, %v919
    %s922 = scalar_lea.vmem [#allocation10], 10
    %923 = vst.msk [vmem:[%s922] sm:$0x3] %vm320, %v914
    %v924 = vld [vmem:[#allocation2] sm:$0x3]
    %s925 = scalar_lea.vmem [#allocation6], 6
    %v926 = vld [vmem:[%s925] sm:$0x3]
    %v928 = vsel %vm206, %v924, 0
    %930 = vmatprep.subr.mxu0 0.0
    %931 = vmatpush1.msra.mxu0 %v194
    %932 = vmatprep.subr.mxu0 0.0
    %933 = vmatpush1.msra.mxu0 %v195
    %934 = vmatprep.subr.mxu0 0.0
    %935 = vmatpush1.msra.mxu0 %v196
    %936 = vmatprep.subr.mxu0 0.0
    %937 = vmatpush1.msra.mxu0 %v197
    %938 = vmatprep.subr.mxu0 0.0
    %939 = vmatpush1.msra.mxu0 0.0
    %940 = vmatprep.subr.mxu0 0.0
    %941 = vmatpush1.msra.mxu0 0.0
    %942 = vmatprep.subr.mxu0 0.0
    %943 = vmatpush1.msra.mxu0 0.0
    %944 = vmatprep.subr.mxu0 0.0
    %945 = vmatpush1.msra.mxu0 0.0
    %946 = vmatprep.subr.mxu0 0.0
    %947 = vmatpush1.msra.mxu0 0.0
    %948 = vmatprep.subr.mxu0 0.0
    %949 = vmatpush1.msra.mxu0 0.0
    %950 = vmatprep.subr.mxu0 0.0
    %951 = vmatpush1.msra.mxu0 0.0
    %952 = vmatprep.subr.mxu0 0.0
    %953 = vmatpush1.msra.mxu0 0.0
    %954 = vmatprep.subr.mxu0 0.0
    %955 = vmatpush1.msra.mxu0 0.0
    %956 = vmatprep.subr.mxu0 0.0
    %957 = vmatpush1.msra.mxu0 0.0
    %958 = vmatprep.subr.mxu0 0.0
    %959 = vmatpush1.msra.mxu0 0.0
    %960 = vmatprep.subr.mxu0 0.0
    %961 = vmatpush1.msra.mxu0 0.0
    %962 = vmatprep.subr.mxu0 0.0
    %963 = vmatpush1.msra.mxu0 0.0
    %964 = vmatprep.subr.mxu0 0.0
    %965 = vmatpush1.msra.mxu0 0.0
    %966 = vmatprep.subr.mxu0 0.0
    %967 = vmatpush1.msra.mxu0 0.0
    %968 = vmatprep.subr.mxu0 0.0
    %969 = vmatpush1.msra.mxu0 0.0
    %970 = vmatprep.subr.mxu0 0.0
    %971 = vmatpush1.msra.mxu0 0.0
    %972 = vmatprep.subr.mxu0 0.0
    %973 = vmatpush1.msra.mxu0 0.0
    %974 = vmatprep.subr.mxu0 0.0
    %975 = vmatpush1.msra.mxu0 0.0
    %976 = vmatprep.subr.mxu0 0.0
    %977 = vmatpush1.msra.mxu0 0.0
    %978 = vmatprep.subr.mxu0 0.0
    %979 = vmatpush1.msra.mxu0 0.0
    %980 = vmatprep.subr.mxu0 0.0
    %981 = vmatpush1.msra.mxu0 0.0
    %982 = vmatprep.subr.mxu0 0.0
    %983 = vmatpush1.msra.mxu0 0.0
    %984 = vmatprep.subr.mxu0 0.0
    %985 = vmatpush1.msra.mxu0 0.0
    %986 = vmatprep.subr.mxu0 0.0
    %987 = vmatpush1.msra.mxu0 0.0
    %988 = vmatprep.subr.mxu0 0.0
    %989 = vmatpush1.msra.mxu0 0.0
    %990 = vmatprep.subr.mxu0 0.0
    %991 = vmatpush1.msra.mxu0 0.0
    %992 = vmatprep.subr.mxu0 0.0
    %993 = vmatpush1.msra.mxu0 0.0
    %994 = vmatprep.mubr.f32.mxu0 0.0
    %995 = vmatmul.mubr.f32.gmra.mrb[0].mxu0 %v928
    %v996 = vpop.f32.mrb[0].mxu0
    %v997 = vadd.f32 %v926, %v996
    %v998 = vpop.f32.mrb[0].mxu0
    %999 = vdwg.mxu0
    %v1000 = vadd.f32 %v997, %v284
    %v1001 = vld [vmem:[#allocation4] sm:$0x3]
    %v1002 = vxor.u32 %v1000, 2147483648
    %v1003 = vmul.f32 %v1002, 1.442695
    %v1004 = vpow.pop %v1003
    %v1005 = vadd.f32 %v1004, 1.0
    %v1006 = vrcp.pop %v1005
    %v1007 = vmul.f32 1.0, %v1006
    %v1008 = vtanh.pop %v1000
    %1010 = vrot.lane.b32.xlu0 %v1001, 32
    %v1011 = vpop.permute.xlu0 %1010
    %v1013 = vmul.f32 %v1007, %v1011
    %1015 = vrot.lane.b32.xlu0 %v1008, 64
    %v1016 = vpop.permute.xlu0 %1015
    %v1018 = vmul.f32 %v1007, %v1016
    %1020 = vrot.lane.b32.xlu0 %v1018, 32
    %v1021 = vpop.permute.xlu0 %1020
    %v1023 = vadd.f32 %v1013, %v1021
    %v1024 = vtanh.pop %v1023
    %1026 = vrot.lane.b32.xlu0 %v1024, 64
    %v1027 = vpop.permute.xlu0 %1026
    %v1029 = vmul.f32 %v1007, %v1027
    %1031 = vrot.lane.b32.xlu0 %v1029, 32
    %v1032 = vpop.permute.xlu0 %1031
    %1034 = vst.msk [vmem:[#allocation2] sm:$0x3] %vm320, %v1032
    %1036 = vrot.lane.b32.xlu0 %v1023, 96
    %v1037 = vpop.permute.xlu0 %1036
    %1039 = vst.msk [vmem:[#allocation4] sm:$0x3] %vm320, %v1037
    %s1040 = scalar_lea.vmem [#allocation8], 6
    %1041 = vst.msk [vmem:[%s1040] sm:$0x3] %vm320, %v1032
    %v1042 = vld [vmem:[#allocation3] sm:$0x3]
    %s1043 = scalar_lea.vmem [#allocation7], 8
    %v1044 = vld [vmem:[%s1043] sm:$0x3]
    %v1046 = vsel %vm206, %v1042, 0
    %1048 = vmatprep.subr.mxu0 0.0
    %1049 = vmatpush1.msra.mxu0 %v198
    %1050 = vmatprep.subr.mxu0 0.0
    %1051 = vmatpush1.msra.mxu0 %v199
    %1052 = vmatprep.subr.mxu0 0.0
    %1053 = vmatpush1.msra.mxu0 %v200
    %1054 = vmatprep.subr.mxu0 0.0
    %1055 = vmatpush1.msra.mxu0 %v201
    %1056 = vmatprep.subr.mxu0 0.0
    %1057 = vmatpush1.msra.mxu0 0.0
    %1058 = vmatprep.subr.mxu0 0.0
    %1059 = vmatpush1.msra.mxu0 0.0
    %1060 = vmatprep.subr.mxu0 0.0
    %1061 = vmatpush1.msra.mxu0 0.0
    %1062 = vmatprep.subr.mxu0 0.0
    %1063 = vmatpush1.msra.mxu0 0.0
    %1064 = vmatprep.subr.mxu0 0.0
    %1065 = vmatpush1.msra.mxu0 0.0
    %1066 = vmatprep.subr.mxu0 0.0
    %1067 = vmatpush1.msra.mxu0 0.0
    %1068 = vmatprep.subr.mxu0 0.0
    %1069 = vmatpush1.msra.mxu0 0.0
    %1070 = vmatprep.subr.mxu0 0.0
    %1071 = vmatpush1.msra.mxu0 0.0
    %1072 = vmatprep.subr.mxu0 0.0
    %1073 = vmatpush1.msra.mxu0 0.0
    %1074 = vmatprep.subr.mxu0 0.0
    %1075 = vmatpush1.msra.mxu0 0.0
    %1076 = vmatprep.subr.mxu0 0.0
    %1077 = vmatpush1.msra.mxu0 0.0
    %1078 = vmatprep.subr.mxu0 0.0
    %1079 = vmatpush1.msra.mxu0 0.0
    %1080 = vmatprep.subr.mxu0 0.0
    %1081 = vmatpush1.msra.mxu0 0.0
    %1082 = vmatprep.subr.mxu0 0.0
    %1083 = vmatpush1.msra.mxu0 0.0
    %1084 = vmatprep.subr.mxu0 0.0
    %1085 = vmatpush1.msra.mxu0 0.0
    %1086 = vmatprep.subr.mxu0 0.0
    %1087 = vmatpush1.msra.mxu0 0.0
    %1088 = vmatprep.subr.mxu0 0.0
    %1089 = vmatpush1.msra.mxu0 0.0
    %1090 = vmatprep.subr.mxu0 0.0
    %1091 = vmatpush1.msra.mxu0 0.0
    %1092 = vmatprep.subr.mxu0 0.0
    %1093 = vmatpush1.msra.mxu0 0.0
    %1094 = vmatprep.subr.mxu0 0.0
    %1095 = vmatpush1.msra.mxu0 0.0
    %1096 = vmatprep.subr.mxu0 0.0
    %1097 = vmatpush1.msra.mxu0 0.0
    %1098 = vmatprep.subr.mxu0 0.0
    %1099 = vmatpush1.msra.mxu0 0.0
    %1100 = vmatprep.subr.mxu0 0.0
    %1101 = vmatpush1.msra.mxu0 0.0
    %1102 = vmatprep.subr.mxu0 0.0
    %1103 = vmatpush1.msra.mxu0 0.0
    %1104 = vmatprep.subr.mxu0 0.0
    %1105 = vmatpush1.msra.mxu0 0.0
    %1106 = vmatprep.subr.mxu0 0.0
    %1107 = vmatpush1.msra.mxu0 0.0
    %1108 = vmatprep.subr.mxu0 0.0
    %1109 = vmatpush1.msra.mxu0 0.0
    %1110 = vmatprep.subr.mxu0 0.0
    %1111 = vmatpush1.msra.mxu0 0.0
    %1112 = vmatprep.mubr.f32.mxu0 0.0
    %1113 = vmatmul.mubr.f32.gmra.mrb[0].mxu0 %v1046
    %v1114 = vpop.f32.mrb[0].mxu0
    %v1115 = vadd.f32 %v1044, %v1114
    %v1116 = vpop.f32.mrb[0].mxu0
    %1117 = vdwg.mxu0
    %v1118 = vadd.f32 %v1115, %v408
    %v1119 = vld [vmem:[#allocation5] sm:$0x3]
    %v1120 = vxor.u32 %v1118, 2147483648
    %v1121 = vmul.f32 %v1120, 1.442695
    %v1122 = vpow.pop %v1121
    %v1123 = vadd.f32 %v1122, 1.0
    %v1124 = vrcp.pop %v1123
    %v1125 = vmul.f32 1.0, %v1124
    %v1126 = vtanh.pop %v1118
    %1128 = vrot.lane.b32.xlu0 %v1119, 32
    %v1129 = vpop.permute.xlu0 %1128
    %v1131 = vmul.f32 %v1125, %v1129
    %1133 = vrot.lane.b32.xlu0 %v1126, 64
    %v1134 = vpop.permute.xlu0 %1133
    %v1136 = vmul.f32 %v1125, %v1134
    %1138 = vrot.lane.b32.xlu0 %v1136, 32
    %v1139 = vpop.permute.xlu0 %1138
    %v1141 = vadd.f32 %v1131, %v1139
    %v1142 = vtanh.pop %v1141
    %1144 = vrot.lane.b32.xlu0 %v1142, 64
    %v1145 = vpop.permute.xlu0 %1144
    %v1147 = vmul.f32 %v1125, %v1145
    %1149 = vrot.lane.b32.xlu0 %v1147, 32
    %v1150 = vpop.permute.xlu0 %1149
    %1152 = vst.msk [vmem:[#allocation3] sm:$0x3] %vm320, %v1150
    %1154 = vrot.lane.b32.xlu0 %v1141, 96
    %v1155 = vpop.permute.xlu0 %1154
    %1157 = vst.msk [vmem:[#allocation5] sm:$0x3] %vm320, %v1155
    %s1158 = scalar_lea.vmem [#allocation10], 8
    %1159 = vst.msk [vmem:[%s1158] sm:$0x3] %vm320, %v1150
    %v1160 = vld [vmem:[#allocation2] sm:$0x3]
    %s1161 = scalar_lea.vmem [#allocation6], 8
    %v1162 = vld [vmem:[%s1161] sm:$0x3]
    %v1164 = vsel %vm206, %v1160, 0
    %1166 = vmatprep.subr.mxu0 0.0
    %1167 = vmatpush1.msra.mxu0 %v194
    %1168 = vmatprep.subr.mxu0 0.0
    %1169 = vmatpush1.msra.mxu0 %v195
    %1170 = vmatprep.subr.mxu0 0.0
    %1171 = vmatpush1.msra.mxu0 %v196
    %1172 = vmatprep.subr.mxu0 0.0
    %1173 = vmatpush1.msra.mxu0 %v197
    %1174 = vmatprep.subr.mxu0 0.0
    %1175 = vmatpush1.msra.mxu0 0.0
    %1176 = vmatprep.subr.mxu0 0.0
    %1177 = vmatpush1.msra.mxu0 0.0
    %1178 = vmatprep.subr.mxu0 0.0
    %1179 = vmatpush1.msra.mxu0 0.0
    %1180 = vmatprep.subr.mxu0 0.0
    %1181 = vmatpush1.msra.mxu0 0.0
    %1182 = vmatprep.subr.mxu0 0.0
    %1183 = vmatpush1.msra.mxu0 0.0
    %1184 = vmatprep.subr.mxu0 0.0
    %1185 = vmatpush1.msra.mxu0 0.0
    %1186 = vmatprep.subr.mxu0 0.0
    %1187 = vmatpush1.msra.mxu0 0.0
    %1188 = vmatprep.subr.mxu0 0.0
    %1189 = vmatpush1.msra.mxu0 0.0
    %1190 = vmatprep.subr.mxu0 0.0
    %1191 = vmatpush1.msra.mxu0 0.0
    %1192 = vmatprep.subr.mxu0 0.0
    %1193 = vmatpush1.msra.mxu0 0.0
    %1194 = vmatprep.subr.mxu0 0.0
    %1195 = vmatpush1.msra.mxu0 0.0
    %1196 = vmatprep.subr.mxu0 0.0
    %1197 = vmatpush1.msra.mxu0 0.0
    %1198 = vmatprep.subr.mxu0 0.0
    %1199 = vmatpush1.msra.mxu0 0.0
    %1200 = vmatprep.subr.mxu0 0.0
    %1201 = vmatpush1.msra.mxu0 0.0
    %1202 = vmatprep.subr.mxu0 0.0
    %1203 = vmatpush1.msra.mxu0 0.0
    %1204 = vmatprep.subr.mxu0 0.0
    %1205 = vmatpush1.msra.mxu0 0.0
    %1206 = vmatprep.subr.mxu0 0.0
    %1207 = vmatpush1.msra.mxu0 0.0
    %1208 = vmatprep.subr.mxu0 0.0
    %1209 = vmatpush1.msra.mxu0 0.0
    %1210 = vmatprep.subr.mxu0 0.0
    %1211 = vmatpush1.msra.mxu0 0.0
    %1212 = vmatprep.subr.mxu0 0.0
    %1213 = vmatpush1.msra.mxu0 0.0
    %1214 = vmatprep.subr.mxu0 0.0
    %1215 = vmatpush1.msra.mxu0 0.0
    %1216 = vmatprep.subr.mxu0 0.0
    %1217 = vmatpush1.msra.mxu0 0.0
    %1218 = vmatprep.subr.mxu0 0.0
    %1219 = vmatpush1.msra.mxu0 0.0
    %1220 = vmatprep.subr.mxu0 0.0
    %1221 = vmatpush1.msra.mxu0 0.0
    %1222 = vmatprep.subr.mxu0 0.0
    %1223 = vmatpush1.msra.mxu0 0.0
    %1224 = vmatprep.subr.mxu0 0.0
    %1225 = vmatpush1.msra.mxu0 0.0
    %1226 = vmatprep.subr.mxu0 0.0
    %1227 = vmatpush1.msra.mxu0 0.0
    %1228 = vmatprep.subr.mxu0 0.0
    %1229 = vmatpush1.msra.mxu0 0.0
    %1230 = vmatprep.mubr.f32.mxu0 0.0
    %1231 = vmatmul.mubr.f32.gmra.mrb[0].mxu0 %v1164
    %v1232 = vpop.f32.mrb[0].mxu0
    %v1233 = vadd.f32 %v1162, %v1232
    %v1234 = vpop.f32.mrb[0].mxu0
    %1235 = vdwg.mxu0
    %v1236 = vadd.f32 %v1233, %v284
    %v1237 = vld [vmem:[#allocation4] sm:$0x3]
    %v1238 = vxor.u32 %v1236, 2147483648
    %v1239 = vmul.f32 %v1238, 1.442695
    %v1240 = vpow.pop %v1239
    %v1241 = vadd.f32 %v1240, 1.0
    %v1242 = vrcp.pop %v1241
    %v1243 = vmul.f32 1.0, %v1242
    %v1244 = vtanh.pop %v1236
    %1246 = vrot.lane.b32.xlu0 %v1237, 32
    %v1247 = vpop.permute.xlu0 %1246
    %v1249 = vmul.f32 %v1243, %v1247
    %1251 = vrot.lane.b32.xlu0 %v1244, 64
    %v1252 = vpop.permute.xlu0 %1251
    %v1254 = vmul.f32 %v1243, %v1252
    %1256 = vrot.lane.b32.xlu0 %v1254, 32
    %v1257 = vpop.permute.xlu0 %1256
    %v1259 = vadd.f32 %v1249, %v1257
    %v1260 = vtanh.pop %v1259
    %1262 = vrot.lane.b32.xlu0 %v1260, 64
    %v1263 = vpop.permute.xlu0 %1262
    %v1265 = vmul.f32 %v1243, %v1263
    %1267 = vrot.lane.b32.xlu0 %v1265, 32
    %v1268 = vpop.permute.xlu0 %1267
    %1270 = vst.msk [vmem:[#allocation2] sm:$0x3] %vm320, %v1268
    %1272 = vrot.lane.b32.xlu0 %v1259, 96
    %v1273 = vpop.permute.xlu0 %1272
    %1275 = vst.msk [vmem:[#allocation4] sm:$0x3] %vm320, %v1273
    %s1276 = scalar_lea.vmem [#allocation8], 8
    %1277 = vst.msk [vmem:[%s1276] sm:$0x3] %vm320, %v1268
    %v1278 = vld [vmem:[#allocation3] sm:$0x3]
    %s1279 = scalar_lea.vmem [#allocation7], 6
    %v1280 = vld [vmem:[%s1279] sm:$0x3]
    %v1282 = vsel %vm206, %v1278, 0
    %1284 = vmatprep.subr.mxu0 0.0
    %1285 = vmatpush1.msra.mxu0 %v198
    %1286 = vmatprep.subr.mxu0 0.0
    %1287 = vmatpush1.msra.mxu0 %v199
    %1288 = vmatprep.subr.mxu0 0.0
    %1289 = vmatpush1.msra.mxu0 %v200
    %1290 = vmatprep.subr.mxu0 0.0
    %1291 = vmatpush1.msra.mxu0 %v201
    %1292 = vmatprep.subr.mxu0 0.0
    %1293 = vmatpush1.msra.mxu0 0.0
    %1294 = vmatprep.subr.mxu0 0.0
    %1295 = vmatpush1.msra.mxu0 0.0
    %1296 = vmatprep.subr.mxu0 0.0
    %1297 = vmatpush1.msra.mxu0 0.0
    %1298 = vmatprep.subr.mxu0 0.0
    %1299 = vmatpush1.msra.mxu0 0.0
    %1300 = vmatprep.subr.mxu0 0.0
    %1301 = vmatpush1.msra.mxu0 0.0
    %1302 = vmatprep.subr.mxu0 0.0
    %1303 = vmatpush1.msra.mxu0 0.0
    %1304 = vmatprep.subr.mxu0 0.0
    %1305 = vmatpush1.msra.mxu0 0.0
    %1306 = vmatprep.subr.mxu0 0.0
    %1307 = vmatpush1.msra.mxu0 0.0
    %1308 = vmatprep.subr.mxu0 0.0
    %1309 = vmatpush1.msra.mxu0 0.0
    %1310 = vmatprep.subr.mxu0 0.0
    %1311 = vmatpush1.msra.mxu0 0.0
    %1312 = vmatprep.subr.mxu0 0.0
    %1313 = vmatpush1.msra.mxu0 0.0
    %1314 = vmatprep.subr.mxu0 0.0
    %1315 = vmatpush1.msra.mxu0 0.0
    %1316 = vmatprep.subr.mxu0 0.0
    %1317 = vmatpush1.msra.mxu0 0.0
    %1318 = vmatprep.subr.mxu0 0.0
    %1319 = vmatpush1.msra.mxu0 0.0
    %1320 = vmatprep.subr.mxu0 0.0
    %1321 = vmatpush1.msra.mxu0 0.0
    %1322 = vmatprep.subr.mxu0 0.0
    %1323 = vmatpush1.msra.mxu0 0.0
    %1324 = vmatprep.subr.mxu0 0.0
    %1325 = vmatpush1.msra.mxu0 0.0
    %1326 = vmatprep.subr.mxu0 0.0
    %1327 = vmatpush1.msra.mxu0 0.0
    %1328 = vmatprep.subr.mxu0 0.0
    %1329 = vmatpush1.msra.mxu0 0.0
    %1330 = vmatprep.subr.mxu0 0.0
    %1331 = vmatpush1.msra.mxu0 0.0
    %1332 = vmatprep.subr.mxu0 0.0
    %1333 = vmatpush1.msra.mxu0 0.0
    %1334 = vmatprep.subr.mxu0 0.0
    %1335 = vmatpush1.msra.mxu0 0.0
    %1336 = vmatprep.subr.mxu0 0.0
    %1337 = vmatpush1.msra.mxu0 0.0
    %1338 = vmatprep.subr.mxu0 0.0
    %1339 = vmatpush1.msra.mxu0 0.0
    %1340 = vmatprep.subr.mxu0 0.0
    %1341 = vmatpush1.msra.mxu0 0.0
    %1342 = vmatprep.subr.mxu0 0.0
    %1343 = vmatpush1.msra.mxu0 0.0
    %1344 = vmatprep.subr.mxu0 0.0
    %1345 = vmatpush1.msra.mxu0 0.0
    %1346 = vmatprep.subr.mxu0 0.0
    %1347 = vmatpush1.msra.mxu0 0.0
    %1348 = vmatprep.mubr.f32.mxu0 0.0
    %1349 = vmatmul.mubr.f32.gmra.mrb[0].mxu0 %v1282
    %v1350 = vpop.f32.mrb[0].mxu0
    %v1351 = vadd.f32 %v1280, %v1350
    %v1352 = vpop.f32.mrb[0].mxu0
    %1353 = vdwg.mxu0
    %v1354 = vadd.f32 %v1351, %v408
    %v1355 = vld [vmem:[#allocation5] sm:$0x3]
    %v1356 = vxor.u32 %v1354, 2147483648
    %v1357 = vmul.f32 %v1356, 1.442695
    %v1358 = vpow.pop %v1357
    %v1359 = vadd.f32 %v1358, 1.0
    %v1360 = vrcp.pop %v1359
    %v1361 = vmul.f32 1.0, %v1360
    %v1362 = vtanh.pop %v1354
    %1364 = vrot.lane.b32.xlu0 %v1355, 32
    %v1365 = vpop.permute.xlu0 %1364
    %v1367 = vmul.f32 %v1361, %v1365
    %1369 = vrot.lane.b32.xlu0 %v1362, 64
    %v1370 = vpop.permute.xlu0 %1369
    %v1372 = vmul.f32 %v1361, %v1370
    %1374 = vrot.lane.b32.xlu0 %v1372, 32
    %v1375 = vpop.permute.xlu0 %1374
    %v1377 = vadd.f32 %v1367, %v1375
    %v1378 = vtanh.pop %v1377
    %1380 = vrot.lane.b32.xlu0 %v1378, 64
    %v1381 = vpop.permute.xlu0 %1380
    %v1383 = vmul.f32 %v1361, %v1381
    %1385 = vrot.lane.b32.xlu0 %v1383, 32
    %v1386 = vpop.permute.xlu0 %1385
    %1388 = vst.msk [vmem:[#allocation3] sm:$0x3] %vm320, %v1386
    %1390 = vrot.lane.b32.xlu0 %v1377, 96
    %v1391 = vpop.permute.xlu0 %1390
    %1393 = vst.msk [vmem:[#allocation5] sm:$0x3] %vm320, %v1391
    %s1394 = scalar_lea.vmem [#allocation10], 6
    %1395 = vst.msk [vmem:[%s1394] sm:$0x3] %vm320, %v1386
    %v1396 = vld [vmem:[#allocation2] sm:$0x3]
    %s1397 = scalar_lea.vmem [#allocation6], 10
    %v1398 = vld [vmem:[%s1397] sm:$0x3]
    %v1400 = vsel %vm206, %v1396, 0
    %1402 = vmatprep.subr.mxu0 0.0
    %1403 = vmatpush1.msra.mxu0 %v194
    %1404 = vmatprep.subr.mxu0 0.0
    %1405 = vmatpush1.msra.mxu0 %v195
    %1406 = vmatprep.subr.mxu0 0.0
    %1407 = vmatpush1.msra.mxu0 %v196
    %1408 = vmatprep.subr.mxu0 0.0
    %1409 = vmatpush1.msra.mxu0 %v197
    %1410 = vmatprep.subr.mxu0 0.0
    %1411 = vmatpush1.msra.mxu0 0.0
    %1412 = vmatprep.subr.mxu0 0.0
    %1413 = vmatpush1.msra.mxu0 0.0
    %1414 = vmatprep.subr.mxu0 0.0
    %1415 = vmatpush1.msra.mxu0 0.0
    %1416 = vmatprep.subr.mxu0 0.0
    %1417 = vmatpush1.msra.mxu0 0.0
    %1418 = vmatprep.subr.mxu0 0.0
    %1419 = vmatpush1.msra.mxu0 0.0
    %1420 = vmatprep.subr.mxu0 0.0
    %1421 = vmatpush1.msra.mxu0 0.0
    %1422 = vmatprep.subr.mxu0 0.0
    %1423 = vmatpush1.msra.mxu0 0.0
    %1424 = vmatprep.subr.mxu0 0.0
    %1425 = vmatpush1.msra.mxu0 0.0
    %1426 = vmatprep.subr.mxu0 0.0
    %1427 = vmatpush1.msra.mxu0 0.0
    %1428 = vmatprep.subr.mxu0 0.0
    %1429 = vmatpush1.msra.mxu0 0.0
    %1430 = vmatprep.subr.mxu0 0.0
    %1431 = vmatpush1.msra.mxu0 0.0
    %1432 = vmatprep.subr.mxu0 0.0
    %1433 = vmatpush1.msra.mxu0 0.0
    %1434 = vmatprep.subr.mxu0 0.0
    %1435 = vmatpush1.msra.mxu0 0.0
    %1436 = vmatprep.subr.mxu0 0.0
    %1437 = vmatpush1.msra.mxu0 0.0
    %1438 = vmatprep.subr.mxu0 0.0
    %1439 = vmatpush1.msra.mxu0 0.0
    %1440 = vmatprep.subr.mxu0 0.0
    %1441 = vmatpush1.msra.mxu0 0.0
    %1442 = vmatprep.subr.mxu0 0.0
    %1443 = vmatpush1.msra.mxu0 0.0
    %1444 = vmatprep.subr.mxu0 0.0
    %1445 = vmatpush1.msra.mxu0 0.0
    %1446 = vmatprep.subr.mxu0 0.0
    %1447 = vmatpush1.msra.mxu0 0.0
    %1448 = vmatprep.subr.mxu0 0.0
    %1449 = vmatpush1.msra.mxu0 0.0
    %1450 = vmatprep.subr.mxu0 0.0
    %1451 = vmatpush1.msra.mxu0 0.0
    %1452 = vmatprep.subr.mxu0 0.0
    %1453 = vmatpush1.msra.mxu0 0.0
    %1454 = vmatprep.subr.mxu0 0.0
    %1455 = vmatpush1.msra.mxu0 0.0
    %1456 = vmatprep.subr.mxu0 0.0
    %1457 = vmatpush1.msra.mxu0 0.0
    %1458 = vmatprep.subr.mxu0 0.0
    %1459 = vmatpush1.msra.mxu0 0.0
    %1460 = vmatprep.subr.mxu0 0.0
    %1461 = vmatpush1.msra.mxu0 0.0
    %1462 = vmatprep.subr.mxu0 0.0
    %1463 = vmatpush1.msra.mxu0 0.0
    %1464 = vmatprep.subr.mxu0 0.0
    %1465 = vmatpush1.msra.mxu0 0.0
    %1466 = vmatprep.mubr.f32.mxu0 0.0
    %1467 = vmatmul.mubr.f32.gmra.mrb[0].mxu0 %v1400
    %v1468 = vpop.f32.mrb[0].mxu0
    %v1469 = vadd.f32 %v1398, %v1468
    %v1470 = vpop.f32.mrb[0].mxu0
    %1471 = vdwg.mxu0
    %v1472 = vadd.f32 %v1469, %v284
    %v1473 = vld [vmem:[#allocation4] sm:$0x3]
    %v1474 = vxor.u32 %v1472, 2147483648
    %v1475 = vmul.f32 %v1474, 1.442695
    %v1476 = vpow.pop %v1475
    %v1477 = vadd.f32 %v1476, 1.0
    %v1478 = vrcp.pop %v1477
    %v1479 = vmul.f32 1.0, %v1478
    %v1480 = vtanh.pop %v1472
    %1482 = vrot.lane.b32.xlu0 %v1473, 32
    %v1483 = vpop.permute.xlu0 %1482
    %v1485 = vmul.f32 %v1479, %v1483
    %1487 = vrot.lane.b32.xlu0 %v1480, 64
    %v1488 = vpop.permute.xlu0 %1487
    %v1490 = vmul.f32 %v1479, %v1488
    %1492 = vrot.lane.b32.xlu0 %v1490, 32
    %v1493 = vpop.permute.xlu0 %1492
    %v1495 = vadd.f32 %v1485, %v1493
    %v1496 = vtanh.pop %v1495
    %1498 = vrot.lane.b32.xlu0 %v1496, 64
    %v1499 = vpop.permute.xlu0 %1498
    %v1501 = vmul.f32 %v1479, %v1499
    %1503 = vrot.lane.b32.xlu0 %v1501, 32
    %v1504 = vpop.permute.xlu0 %1503
    %1506 = vst.msk [vmem:[#allocation2] sm:$0x3] %vm320, %v1504
    %1508 = vrot.lane.b32.xlu0 %v1495, 96
    %v1509 = vpop.permute.xlu0 %1508
    %1511 = vst.msk [vmem:[#allocation4] sm:$0x3] %vm320, %v1509
    %s1512 = scalar_lea.vmem [#allocation8], 10
    %1513 = vst.msk [vmem:[%s1512] sm:$0x3] %vm320, %v1504
    %v1514 = vld [vmem:[#allocation3] sm:$0x3]
    %s1515 = scalar_lea.vmem [#allocation7], 4
    %v1516 = vld [vmem:[%s1515] sm:$0x3]
    %v1518 = vsel %vm206, %v1514, 0
    %1520 = vmatprep.subr.mxu0 0.0
    %1521 = vmatpush1.msra.mxu0 %v198
    %1522 = vmatprep.subr.mxu0 0.0
    %1523 = vmatpush1.msra.mxu0 %v199
    %1524 = vmatprep.subr.mxu0 0.0
    %1525 = vmatpush1.msra.mxu0 %v200
    %1526 = vmatprep.subr.mxu0 0.0
    %1527 = vmatpush1.msra.mxu0 %v201
    %1528 = vmatprep.subr.mxu0 0.0
    %1529 = vmatpush1.msra.mxu0 0.0
    %1530 = vmatprep.subr.mxu0 0.0
    %1531 = vmatpush1.msra.mxu0 0.0
    %1532 = vmatprep.subr.mxu0 0.0
    %1533 = vmatpush1.msra.mxu0 0.0
    %1534 = vmatprep.subr.mxu0 0.0
    %1535 = vmatpush1.msra.mxu0 0.0
    %1536 = vmatprep.subr.mxu0 0.0
    %1537 = vmatpush1.msra.mxu0 0.0
    %1538 = vmatprep.subr.mxu0 0.0
    %1539 = vmatpush1.msra.mxu0 0.0
    %1540 = vmatprep.subr.mxu0 0.0
    %1541 = vmatpush1.msra.mxu0 0.0
    %1542 = vmatprep.subr.mxu0 0.0
    %1543 = vmatpush1.msra.mxu0 0.0
    %1544 = vmatprep.subr.mxu0 0.0
    %1545 = vmatpush1.msra.mxu0 0.0
    %1546 = vmatprep.subr.mxu0 0.0
    %1547 = vmatpush1.msra.mxu0 0.0
    %1548 = vmatprep.subr.mxu0 0.0
    %1549 = vmatpush1.msra.mxu0 0.0
    %1550 = vmatprep.subr.mxu0 0.0
    %1551 = vmatpush1.msra.mxu0 0.0
    %1552 = vmatprep.subr.mxu0 0.0
    %1553 = vmatpush1.msra.mxu0 0.0
    %1554 = vmatprep.subr.mxu0 0.0
    %1555 = vmatpush1.msra.mxu0 0.0
    %1556 = vmatprep.subr.mxu0 0.0
    %1557 = vmatpush1.msra.mxu0 0.0
    %1558 = vmatprep.subr.mxu0 0.0
    %1559 = vmatpush1.msra.mxu0 0.0
    %1560 = vmatprep.subr.mxu0 0.0
    %1561 = vmatpush1.msra.mxu0 0.0
    %1562 = vmatprep.subr.mxu0 0.0
    %1563 = vmatpush1.msra.mxu0 0.0
    %1564 = vmatprep.subr.mxu0 0.0
    %1565 = vmatpush1.msra.mxu0 0.0
    %1566 = vmatprep.subr.mxu0 0.0
    %1567 = vmatpush1.msra.mxu0 0.0
    %1568 = vmatprep.subr.mxu0 0.0
    %1569 = vmatpush1.msra.mxu0 0.0
    %1570 = vmatprep.subr.mxu0 0.0
    %1571 = vmatpush1.msra.mxu0 0.0
    %1572 = vmatprep.subr.mxu0 0.0
    %1573 = vmatpush1.msra.mxu0 0.0
    %1574 = vmatprep.subr.mxu0 0.0
    %1575 = vmatpush1.msra.mxu0 0.0
    %1576 = vmatprep.subr.mxu0 0.0
    %1577 = vmatpush1.msra.mxu0 0.0
    %1578 = vmatprep.subr.mxu0 0.0
    %1579 = vmatpush1.msra.mxu0 0.0
    %1580 = vmatprep.subr.mxu0 0.0
    %1581 = vmatpush1.msra.mxu0 0.0
    %1582 = vmatprep.subr.mxu0 0.0
    %1583 = vmatpush1.msra.mxu0 0.0
    %1584 = vmatprep.mubr.f32.mxu0 0.0
    %1585 = vmatmul.mubr.f32.gmra.mrb[0].mxu0 %v1518
    %v1586 = vpop.f32.mrb[0].mxu0
    %v1587 = vadd.f32 %v1516, %v1586
    %v1588 = vpop.f32.mrb[0].mxu0
    %1589 = vdwg.mxu0
    %v1590 = vadd.f32 %v1587, %v408
    %v1591 = vld [vmem:[#allocation5] sm:$0x3]
    %v1592 = vxor.u32 %v1590, 2147483648
    %v1593 = vmul.f32 %v1592, 1.442695
    %v1594 = vpow.pop %v1593
    %v1595 = vadd.f32 %v1594, 1.0
    %v1596 = vrcp.pop %v1595
    %v1597 = vmul.f32 1.0, %v1596
    %v1598 = vtanh.pop %v1590
    %1600 = vrot.lane.b32.xlu0 %v1591, 32
    %v1601 = vpop.permute.xlu0 %1600
    %v1603 = vmul.f32 %v1597, %v1601
    %1605 = vrot.lane.b32.xlu0 %v1598, 64
    %v1606 = vpop.permute.xlu0 %1605
    %v1608 = vmul.f32 %v1597, %v1606
    %1610 = vrot.lane.b32.xlu0 %v1608, 32
    %v1611 = vpop.permute.xlu0 %1610
    %v1613 = vadd.f32 %v1603, %v1611
    %v1614 = vtanh.pop %v1613
    %1616 = vrot.lane.b32.xlu0 %v1614, 64
    %v1617 = vpop.permute.xlu0 %1616
    %v1619 = vmul.f32 %v1597, %v1617
    %1621 = vrot.lane.b32.xlu0 %v1619, 32
    %v1622 = vpop.permute.xlu0 %1621
    %1624 = vst.msk [vmem:[#allocation3] sm:$0x3] %vm320, %v1622
    %1626 = vrot.lane.b32.xlu0 %v1613, 96
    %v1627 = vpop.permute.xlu0 %1626
    %1629 = vst.msk [vmem:[#allocation5] sm:$0x3] %vm320, %v1627
    %s1630 = scalar_lea.vmem [#allocation10], 4
    %1631 = vst.msk [vmem:[%s1630] sm:$0x3] %vm320, %v1622
    %v1632 = vld [vmem:[#allocation2] sm:$0x3]
    %s1633 = scalar_lea.vmem [#allocation6], 12
    %v1634 = vld [vmem:[%s1633] sm:$0x3]
    %v1636 = vsel %vm206, %v1632, 0
    %1638 = vmatprep.subr.mxu0 0.0
    %1639 = vmatpush1.msra.mxu0 %v194
    %1640 = vmatprep.subr.mxu0 0.0
    %1641 = vmatpush1.msra.mxu0 %v195
    %1642 = vmatprep.subr.mxu0 0.0
    %1643 = vmatpush1.msra.mxu0 %v196
    %1644 = vmatprep.subr.mxu0 0.0
    %1645 = vmatpush1.msra.mxu0 %v197
    %1646 = vmatprep.subr.mxu0 0.0
    %1647 = vmatpush1.msra.mxu0 0.0
    %1648 = vmatprep.subr.mxu0 0.0
    %1649 = vmatpush1.msra.mxu0 0.0
    %1650 = vmatprep.subr.mxu0 0.0
    %1651 = vmatpush1.msra.mxu0 0.0
    %1652 = vmatprep.subr.mxu0 0.0
    %1653 = vmatpush1.msra.mxu0 0.0
    %1654 = vmatprep.subr.mxu0 0.0
    %1655 = vmatpush1.msra.mxu0 0.0
    %1656 = vmatprep.subr.mxu0 0.0
    %1657 = vmatpush1.msra.mxu0 0.0
    %1658 = vmatprep.subr.mxu0 0.0
    %1659 = vmatpush1.msra.mxu0 0.0
    %1660 = vmatprep.subr.mxu0 0.0
    %1661 = vmatpush1.msra.mxu0 0.0
    %1662 = vmatprep.subr.mxu0 0.0
    %1663 = vmatpush1.msra.mxu0 0.0
    %1664 = vmatprep.subr.mxu0 0.0
    %1665 = vmatpush1.msra.mxu0 0.0
    %1666 = vmatprep.subr.mxu0 0.0
    %1667 = vmatpush1.msra.mxu0 0.0
    %1668 = vmatprep.subr.mxu0 0.0
    %1669 = vmatpush1.msra.mxu0 0.0
    %1670 = vmatprep.subr.mxu0 0.0
    %1671 = vmatpush1.msra.mxu0 0.0
    %1672 = vmatprep.subr.mxu0 0.0
    %1673 = vmatpush1.msra.mxu0 0.0
    %1674 = vmatprep.subr.mxu0 0.0
    %1675 = vmatpush1.msra.mxu0 0.0
    %1676 = vmatprep.subr.mxu0 0.0
    %1677 = vmatpush1.msra.mxu0 0.0
    %1678 = vmatprep.subr.mxu0 0.0
    %1679 = vmatpush1.msra.mxu0 0.0
    %1680 = vmatprep.subr.mxu0 0.0
    %1681 = vmatpush1.msra.mxu0 0.0
    %1682 = vmatprep.subr.mxu0 0.0
    %1683 = vmatpush1.msra.mxu0 0.0
    %1684 = vmatprep.subr.mxu0 0.0
    %1685 = vmatpush1.msra.mxu0 0.0
    %1686 = vmatprep.subr.mxu0 0.0
    %1687 = vmatpush1.msra.mxu0 0.0
    %1688 = vmatprep.subr.mxu0 0.0
    %1689 = vmatpush1.msra.mxu0 0.0
    %1690 = vmatprep.subr.mxu0 0.0
    %1691 = vmatpush1.msra.mxu0 0.0
    %1692 = vmatprep.subr.mxu0 0.0
    %1693 = vmatpush1.msra.mxu0 0.0
    %1694 = vmatprep.subr.mxu0 0.0
    %1695 = vmatpush1.msra.mxu0 0.0
    %1696 = vmatprep.subr.mxu0 0.0
    %1697 = vmatpush1.msra.mxu0 0.0
    %1698 = vmatprep.subr.mxu0 0.0
    %1699 = vmatpush1.msra.mxu0 0.0
    %1700 = vmatprep.subr.mxu0 0.0
    %1701 = vmatpush1.msra.mxu0 0.0
    %1702 = vmatprep.mubr.f32.mxu0 0.0
    %1703 = vmatmul.mubr.f32.gmra.mrb[0].mxu0 %v1636
    %v1704 = vpop.f32.mrb[0].mxu0
    %v1705 = vadd.f32 %v1634, %v1704
    %v1706 = vpop.f32.mrb[0].mxu0
    %1707 = vdwg.mxu0
    %v1708 = vadd.f32 %v1705, %v284
    %v1709 = vld [vmem:[#allocation4] sm:$0x3]
    %v1710 = vxor.u32 %v1708, 2147483648
    %v1711 = vmul.f32 %v1710, 1.442695
    %v1712 = vpow.pop %v1711
    %v1713 = vadd.f32 %v1712, 1.0
    %v1714 = vrcp.pop %v1713
    %v1715 = vmul.f32 1.0, %v1714
    %v1716 = vtanh.pop %v1708
    %1718 = vrot.lane.b32.xlu0 %v1709, 32
    %v1719 = vpop.permute.xlu0 %1718
    %v1721 = vmul.f32 %v1715, %v1719
    %1723 = vrot.lane.b32.xlu0 %v1716, 64
    %v1724 = vpop.permute.xlu0 %1723
    %v1726 = vmul.f32 %v1715, %v1724
    %1728 = vrot.lane.b32.xlu0 %v1726, 32
    %v1729 = vpop.permute.xlu0 %1728
    %v1731 = vadd.f32 %v1721, %v1729
    %v1732 = vtanh.pop %v1731
    %1734 = vrot.lane.b32.xlu0 %v1732, 64
    %v1735 = vpop.permute.xlu0 %1734
    %v1737 = vmul.f32 %v1715, %v1735
    %1739 = vrot.lane.b32.xlu0 %v1737, 32
    %v1740 = vpop.permute.xlu0 %1739
    %1742 = vst.msk [vmem:[#allocation2] sm:$0x3] %vm320, %v1740
    %1744 = vrot.lane.b32.xlu0 %v1731, 96
    %v1745 = vpop.permute.xlu0 %1744
    %1747 = vst.msk [vmem:[#allocation4] sm:$0x3] %vm320, %v1745
    %s1748 = scalar_lea.vmem [#allocation8], 12
    %1749 = vst.msk [vmem:[%s1748] sm:$0x3] %vm320, %v1740
    %v1750 = vld [vmem:[#allocation3] sm:$0x3]
    %s1751 = scalar_lea.vmem [#allocation7], 2
    %v1752 = vld [vmem:[%s1751] sm:$0x3]
    %v1754 = vsel %vm206, %v1750, 0
    %1756 = vmatprep.subr.mxu0 0.0
    %1757 = vmatpush1.msra.mxu0 %v198
    %1758 = vmatprep.subr.mxu0 0.0
    %1759 = vmatpush1.msra.mxu0 %v199
    %1760 = vmatprep.subr.mxu0 0.0
    %1761 = vmatpush1.msra.mxu0 %v200
    %1762 = vmatprep.subr.mxu0 0.0
    %1763 = vmatpush1.msra.mxu0 %v201
    %1764 = vmatprep.subr.mxu0 0.0
    %1765 = vmatpush1.msra.mxu0 0.0
    %1766 = vmatprep.subr.mxu0 0.0
    %1767 = vmatpush1.msra.mxu0 0.0
    %1768 = vmatprep.subr.mxu0 0.0
    %1769 = vmatpush1.msra.mxu0 0.0
    %1770 = vmatprep.subr.mxu0 0.0
    %1771 = vmatpush1.msra.mxu0 0.0
    %1772 = vmatprep.subr.mxu0 0.0
    %1773 = vmatpush1.msra.mxu0 0.0
    %1774 = vmatprep.subr.mxu0 0.0
    %1775 = vmatpush1.msra.mxu0 0.0
    %1776 = vmatprep.subr.mxu0 0.0
    %1777 = vmatpush1.msra.mxu0 0.0
    %1778 = vmatprep.subr.mxu0 0.0
    %1779 = vmatpush1.msra.mxu0 0.0
    %1780 = vmatprep.subr.mxu0 0.0
    %1781 = vmatpush1.msra.mxu0 0.0
    %1782 = vmatprep.subr.mxu0 0.0
    %1783 = vmatpush1.msra.mxu0 0.0
    %1784 = vmatprep.subr.mxu0 0.0
    %1785 = vmatpush1.msra.mxu0 0.0
    %1786 = vmatprep.subr.mxu0 0.0
    %1787 = vmatpush1.msra.mxu0 0.0
    %1788 = vmatprep.subr.mxu0 0.0
    %1789 = vmatpush1.msra.mxu0 0.0
    %1790 = vmatprep.subr.mxu0 0.0
    %1791 = vmatpush1.msra.mxu0 0.0
    %1792 = vmatprep.subr.mxu0 0.0
    %1793 = vmatpush1.msra.mxu0 0.0
    %1794 = vmatprep.subr.mxu0 0.0
    %1795 = vmatpush1.msra.mxu0 0.0
    %1796 = vmatprep.subr.mxu0 0.0
    %1797 = vmatpush1.msra.mxu0 0.0
    %1798 = vmatprep.subr.mxu0 0.0
    %1799 = vmatpush1.msra.mxu0 0.0
    %1800 = vmatprep.subr.mxu0 0.0
    %1801 = vmatpush1.msra.mxu0 0.0
    %1802 = vmatprep.subr.mxu0 0.0
    %1803 = vmatpush1.msra.mxu0 0.0
    %1804 = vmatprep.subr.mxu0 0.0
    %1805 = vmatpush1.msra.mxu0 0.0
    %1806 = vmatprep.subr.mxu0 0.0
    %1807 = vmatpush1.msra.mxu0 0.0
    %1808 = vmatprep.subr.mxu0 0.0
    %1809 = vmatpush1.msra.mxu0 0.0
    %1810 = vmatprep.subr.mxu0 0.0
    %1811 = vmatpush1.msra.mxu0 0.0
    %1812 = vmatprep.subr.mxu0 0.0
    %1813 = vmatpush1.msra.mxu0 0.0
    %1814 = vmatprep.subr.mxu0 0.0
    %1815 = vmatpush1.msra.mxu0 0.0
    %1816 = vmatprep.subr.mxu0 0.0
    %1817 = vmatpush1.msra.mxu0 0.0
    %1818 = vmatprep.subr.mxu0 0.0
    %1819 = vmatpush1.msra.mxu0 0.0
    %1820 = vmatprep.mubr.f32.mxu0 0.0
    %1821 = vmatmul.mubr.f32.gmra.mrb[0].mxu0 %v1754
    %v1822 = vpop.f32.mrb[0].mxu0
    %v1823 = vadd.f32 %v1752, %v1822
    %v1824 = vpop.f32.mrb[0].mxu0
    %1825 = vdwg.mxu0
    %v1826 = vadd.f32 %v1823, %v408
    %v1827 = vld [vmem:[#allocation5] sm:$0x3]
    %v1828 = vxor.u32 %v1826, 2147483648
    %v1829 = vmul.f32 %v1828, 1.442695
    %v1830 = vpow.pop %v1829
    %v1831 = vadd.f32 %v1830, 1.0
    %v1832 = vrcp.pop %v1831
    %v1833 = vmul.f32 1.0, %v1832
    %v1834 = vtanh.pop %v1826
    %1836 = vrot.lane.b32.xlu0 %v1827, 32
    %v1837 = vpop.permute.xlu0 %1836
    %v1839 = vmul.f32 %v1833, %v1837
    %1841 = vrot.lane.b32.xlu0 %v1834, 64
    %v1842 = vpop.permute.xlu0 %1841
    %v1844 = vmul.f32 %v1833, %v1842
    %1846 = vrot.lane.b32.xlu0 %v1844, 32
    %v1847 = vpop.permute.xlu0 %1846
    %v1849 = vadd.f32 %v1839, %v1847
    %v1850 = vtanh.pop %v1849
    %1852 = vrot.lane.b32.xlu0 %v1850, 64
    %v1853 = vpop.permute.xlu0 %1852
    %v1855 = vmul.f32 %v1833, %v1853
    %1857 = vrot.lane.b32.xlu0 %v1855, 32
    %v1858 = vpop.permute.xlu0 %1857
    %1860 = vst.msk [vmem:[#allocation3] sm:$0x3] %vm320, %v1858
    %1862 = vrot.lane.b32.xlu0 %v1849, 96
    %v1863 = vpop.permute.xlu0 %1862
    %1865 = vst.msk [vmem:[#allocation5] sm:$0x3] %vm320, %v1863
    %s1866 = scalar_lea.vmem [#allocation10], 2
    %1867 = vst.msk [vmem:[%s1866] sm:$0x3] %vm320, %v1858
    %v1868 = vld [vmem:[#allocation2] sm:$0x3]
    %s1869 = scalar_lea.vmem [#allocation6], 14
    %v1870 = vld [vmem:[%s1869] sm:$0x3]
    %v1872 = vsel %vm206, %v1868, 0
    %1874 = vmatprep.subr.mxu0 0.0
    %1875 = vmatpush1.msra.mxu0 %v194
    %1876 = vmatprep.subr.mxu0 0.0
    %1877 = vmatpush1.msra.mxu0 %v195
    %1878 = vmatprep.subr.mxu0 0.0
    %1879 = vmatpush1.msra.mxu0 %v196
    %1880 = vmatprep.subr.mxu0 0.0
    %1881 = vmatpush1.msra.mxu0 %v197
    %1882 = vmatprep.subr.mxu0 0.0
    %1883 = vmatpush1.msra.mxu0 0.0
    %1884 = vmatprep.subr.mxu0 0.0
    %1885 = vmatpush1.msra.mxu0 0.0
    %1886 = vmatprep.subr.mxu0 0.0
    %1887 = vmatpush1.msra.mxu0 0.0
    %1888 = vmatprep.subr.mxu0 0.0
    %1889 = vmatpush1.msra.mxu0 0.0
    %1890 = vmatprep.subr.mxu0 0.0
    %1891 = vmatpush1.msra.mxu0 0.0
    %1892 = vmatprep.subr.mxu0 0.0
    %1893 = vmatpush1.msra.mxu0 0.0
    %1894 = vmatprep.subr.mxu0 0.0
    %1895 = vmatpush1.msra.mxu0 0.0
    %1896 = vmatprep.subr.mxu0 0.0
    %1897 = vmatpush1.msra.mxu0 0.0
    %1898 = vmatprep.subr.mxu0 0.0
    %1899 = vmatpush1.msra.mxu0 0.0
    %1900 = vmatprep.subr.mxu0 0.0
    %1901 = vmatpush1.msra.mxu0 0.0
    %1902 = vmatprep.subr.mxu0 0.0
    %1903 = vmatpush1.msra.mxu0 0.0
    %1904 = vmatprep.subr.mxu0 0.0
    %1905 = vmatpush1.msra.mxu0 0.0
    %1906 = vmatprep.subr.mxu0 0.0
    %1907 = vmatpush1.msra.mxu0 0.0
    %1908 = vmatprep.subr.mxu0 0.0
    %1909 = vmatpush1.msra.mxu0 0.0
    %1910 = vmatprep.subr.mxu0 0.0
    %1911 = vmatpush1.msra.mxu0 0.0
    %1912 = vmatprep.subr.mxu0 0.0
    %1913 = vmatpush1.msra.mxu0 0.0
    %1914 = vmatprep.subr.mxu0 0.0
    %1915 = vmatpush1.msra.mxu0 0.0
    %1916 = vmatprep.subr.mxu0 0.0
    %1917 = vmatpush1.msra.mxu0 0.0
    %1918 = vmatprep.subr.mxu0 0.0
    %1919 = vmatpush1.msra.mxu0 0.0
    %1920 = vmatprep.subr.mxu0 0.0
    %1921 = vmatpush1.msra.mxu0 0.0
    %1922 = vmatprep.subr.mxu0 0.0
    %1923 = vmatpush1.msra.mxu0 0.0
    %1924 = vmatprep.subr.mxu0 0.0
    %1925 = vmatpush1.msra.mxu0 0.0
    %1926 = vmatprep.subr.mxu0 0.0
    %1927 = vmatpush1.msra.mxu0 0.0
    %1928 = vmatprep.subr.mxu0 0.0
    %1929 = vmatpush1.msra.mxu0 0.0
    %1930 = vmatprep.subr.mxu0 0.0
    %1931 = vmatpush1.msra.mxu0 0.0
    %1932 = vmatprep.subr.mxu0 0.0
    %1933 = vmatpush1.msra.mxu0 0.0
    %1934 = vmatprep.subr.mxu0 0.0
    %1935 = vmatpush1.msra.mxu0 0.0
    %1936 = vmatprep.subr.mxu0 0.0
    %1937 = vmatpush1.msra.mxu0 0.0
    %1938 = vmatprep.mubr.f32.mxu0 0.0
    %1939 = vmatmul.mubr.f32.gmra.mrb[0].mxu0 %v1872
    %v1940 = vpop.f32.mrb[0].mxu0
    %v1941 = vadd.f32 %v1870, %v1940
    %v1942 = vpop.f32.mrb[0].mxu0
    %1943 = vdwg.mxu0
    %v1944 = vadd.f32 %v1941, %v284
    %v1945 = vld [vmem:[#allocation4] sm:$0x3]
    %v1946 = vxor.u32 %v1944, 2147483648
    %v1947 = vmul.f32 %v1946, 1.442695
    %v1948 = vpow.pop %v1947
    %v1949 = vadd.f32 %v1948, 1.0
    %v1950 = vrcp.pop %v1949
    %v1951 = vmul.f32 1.0, %v1950
    %v1952 = vtanh.pop %v1944
    %1954 = vrot.lane.b32.xlu0 %v1945, 32
    %v1955 = vpop.permute.xlu0 %1954
    %v1957 = vmul.f32 %v1951, %v1955
    %1959 = vrot.lane.b32.xlu0 %v1952, 64
    %v1960 = vpop.permute.xlu0 %1959
    %v1962 = vmul.f32 %v1951, %v1960
    %1964 = vrot.lane.b32.xlu0 %v1962, 32
    %v1965 = vpop.permute.xlu0 %1964
    %v1967 = vadd.f32 %v1957, %v1965
    %v1968 = vtanh.pop %v1967
    %1970 = vrot.lane.b32.xlu0 %v1968, 64
    %v1971 = vpop.permute.xlu0 %1970
    %v1973 = vmul.f32 %v1951, %v1971
    %1975 = vrot.lane.b32.xlu0 %v1973, 32
    %v1976 = vpop.permute.xlu0 %1975
    %1978 = vst.msk [vmem:[#allocation2] sm:$0x3] %vm320, %v1976
    %1980 = vrot.lane.b32.xlu0 %v1967, 96
    %v1981 = vpop.permute.xlu0 %1980
    %1983 = vst.msk [vmem:[#allocation4] sm:$0x3] %vm320, %v1981
    %s1984 = scalar_lea.vmem [#allocation8], 14
    %1985 = vst.msk [vmem:[%s1984] sm:$0x3] %vm320, %v1976
    %v1986 = vld [vmem:[#allocation3] sm:$0x3]
    %v1987 = vld [vmem:[#allocation7] sm:$0x3]
    %v1989 = vsel %vm206, %v1986, 0
    %1991 = vmatprep.subr.mxu0 0.0
    %1992 = vmatpush1.msra.mxu0 %v198
    %1993 = vmatprep.subr.mxu0 0.0
    %1994 = vmatpush1.msra.mxu0 %v199
    %1995 = vmatprep.subr.mxu0 0.0
    %1996 = vmatpush1.msra.mxu0 %v200
    %1997 = vmatprep.subr.mxu0 0.0
    %1998 = vmatpush1.msra.mxu0 %v201
    %1999 = vmatprep.subr.mxu0 0.0
    %2000 = vmatpush1.msra.mxu0 0.0
    %2001 = vmatprep.subr.mxu0 0.0
    %2002 = vmatpush1.msra.mxu0 0.0
    %2003 = vmatprep.subr.mxu0 0.0
    %2004 = vmatpush1.msra.mxu0 0.0
    %2005 = vmatprep.subr.mxu0 0.0
    %2006 = vmatpush1.msra.mxu0 0.0
    %2007 = vmatprep.subr.mxu0 0.0
    %2008 = vmatpush1.msra.mxu0 0.0
    %2009 = vmatprep.subr.mxu0 0.0
    %2010 = vmatpush1.msra.mxu0 0.0
    %2011 = vmatprep.subr.mxu0 0.0
    %2012 = vmatpush1.msra.mxu0 0.0
    %2013 = vmatprep.subr.mxu0 0.0
    %2014 = vmatpush1.msra.mxu0 0.0
    %2015 = vmatprep.subr.mxu0 0.0
    %2016 = vmatpush1.msra.mxu0 0.0
    %2017 = vmatprep.subr.mxu0 0.0
    %2018 = vmatpush1.msra.mxu0 0.0
    %2019 = vmatprep.subr.mxu0 0.0
    %2020 = vmatpush1.msra.mxu0 0.0
    %2021 = vmatprep.subr.mxu0 0.0
    %2022 = vmatpush1.msra.mxu0 0.0
    %2023 = vmatprep.subr.mxu0 0.0
    %2024 = vmatpush1.msra.mxu0 0.0
    %2025 = vmatprep.subr.mxu0 0.0
    %2026 = vmatpush1.msra.mxu0 0.0
    %2027 = vmatprep.subr.mxu0 0.0
    %2028 = vmatpush1.msra.mxu0 0.0
    %2029 = vmatprep.subr.mxu0 0.0
    %2030 = vmatpush1.msra.mxu0 0.0
    %2031 = vmatprep.subr.mxu0 0.0
    %2032 = vmatpush1.msra.mxu0 0.0
    %2033 = vmatprep.subr.mxu0 0.0
    %2034 = vmatpush1.msra.mxu0 0.0
    %2035 = vmatprep.subr.mxu0 0.0
    %2036 = vmatpush1.msra.mxu0 0.0
    %2037 = vmatprep.subr.mxu0 0.0
    %2038 = vmatpush1.msra.mxu0 0.0
    %2039 = vmatprep.subr.mxu0 0.0
    %2040 = vmatpush1.msra.mxu0 0.0
    %2041 = vmatprep.subr.mxu0 0.0
    %2042 = vmatpush1.msra.mxu0 0.0
    %2043 = vmatprep.subr.mxu0 0.0
    %2044 = vmatpush1.msra.mxu0 0.0
    %2045 = vmatprep.subr.mxu0 0.0
    %2046 = vmatpush1.msra.mxu0 0.0
    %2047 = vmatprep.subr.mxu0 0.0
    %2048 = vmatpush1.msra.mxu0 0.0
    %2049 = vmatprep.subr.mxu0 0.0
    %2050 = vmatpush1.msra.mxu0 0.0
    %2051 = vmatprep.subr.mxu0 0.0
    %2052 = vmatpush1.msra.mxu0 0.0
    %2053 = vmatprep.subr.mxu0 0.0
    %2054 = vmatpush1.msra.mxu0 0.0
    %2055 = vmatprep.mubr.f32.mxu0 0.0
    %2056 = vmatmul.mubr.f32.gmra.mrb[0].mxu0 %v1989
    %v2057 = vpop.f32.mrb[0].mxu0
    %v2058 = vadd.f32 %v1987, %v2057
    %v2059 = vpop.f32.mrb[0].mxu0
    %2060 = vdwg.mxu0
    %v2061 = vadd.f32 %v2058, %v408
    %v2062 = vld [vmem:[#allocation5] sm:$0x3]
    %v2063 = vxor.u32 %v2061, 2147483648
    %v2064 = vmul.f32 %v2063, 1.442695
    %v2065 = vpow.pop %v2064
    %v2066 = vadd.f32 %v2065, 1.0
    %v2067 = vrcp.pop %v2066
    %v2068 = vmul.f32 1.0, %v2067
    %v2069 = vtanh.pop %v2061
    %2071 = vrot.lane.b32.xlu0 %v2062, 32
    %v2072 = vpop.permute.xlu0 %2071
    %v2074 = vmul.f32 %v2068, %v2072
    %2076 = vrot.lane.b32.xlu0 %v2069, 64
    %v2077 = vpop.permute.xlu0 %2076
    %v2079 = vmul.f32 %v2068, %v2077
    %2081 = vrot.lane.b32.xlu0 %v2079, 32
    %v2082 = vpop.permute.xlu0 %2081
    %v2084 = vadd.f32 %v2074, %v2082
    %v2085 = vtanh.pop %v2084
    %2087 = vrot.lane.b32.xlu0 %v2085, 64
    %v2088 = vpop.permute.xlu0 %2087
    %v2090 = vmul.f32 %v2068, %v2088
    %2092 = vrot.lane.b32.xlu0 %v2090, 32
    %v2093 = vpop.permute.xlu0 %2092
    %2095 = vst.msk [vmem:[#allocation3] sm:$0x3] %vm320, %v2093
    %2097 = vrot.lane.b32.xlu0 %v2084, 96
    %v2098 = vpop.permute.xlu0 %2097
    %2100 = vst.msk [vmem:[#allocation5] sm:$0x3] %vm320, %v2098
    %2101 = vst.msk [vmem:[#allocation10] sm:$0x3] %vm320, %v2093
    // Predicated region
    $region124: #{rnn_forward.7} parent=1 // pred_check
      %p2102 = pneg %p185
    $region125: #{rnn_forward.7} parent=1 // pred_check_branch
      %2104 = sbr.rel (%p2102) target = $region127
    $region126: #{rnn_forward.7} parent=1 // pred_region
      %v2105 = vld [vmem:[%s8] sm:$0x1]
      %v2106 = vld [vmem:[#allocation2] sm:$0x3]
      %v2107 = vld [vmem:[%s6] sm:$0xff]
      %v2108 = vld [vmem:[%s6 + $0x8] sm:$0xff]
      %v2109 = vld [vmem:[%s6 + $0x10] sm:$0xff]
      %v2110 = vld [vmem:[%s6 + $0x18] sm:$0xff]
      %v2112 = vsel %vm206, %v2106, 0
      %2114 = vmatprep.subr.mxu0 0.0
      %2115 = vmatpush1.msra.mxu0 %v2107
      %2116 = vmatprep.subr.mxu0 0.0
      %2117 = vmatpush1.msra.mxu0 %v2108
      %2118 = vmatprep.subr.mxu0 0.0
      %2119 = vmatpush1.msra.mxu0 %v2109
      %2120 = vmatprep.subr.mxu0 0.0
      %2121 = vmatpush1.msra.mxu0 %v2110
      %2122 = vmatprep.subr.mxu0 0.0
      %2123 = vmatpush1.msra.mxu0 0.0
      %2124 = vmatprep.subr.mxu0 0.0
      %2125 = vmatpush1.msra.mxu0 0.0
      %2126 = vmatprep.subr.mxu0 0.0
      %2127 = vmatpush1.msra.mxu0 0.0
      %2128 = vmatprep.subr.mxu0 0.0
      %2129 = vmatpush1.msra.mxu0 0.0
      %2130 = vmatprep.subr.mxu0 0.0
      %2131 = vmatpush1.msra.mxu0 0.0
      %2132 = vmatprep.subr.mxu0 0.0
      %2133 = vmatpush1.msra.mxu0 0.0
      %2134 = vmatprep.subr.mxu0 0.0
      %2135 = vmatpush1.msra.mxu0 0.0
      %2136 = vmatprep.subr.mxu0 0.0
      %2137 = vmatpush1.msra.mxu0 0.0
      %2138 = vmatprep.subr.mxu0 0.0
      %2139 = vmatpush1.msra.mxu0 0.0
      %2140 = vmatprep.subr.mxu0 0.0
      %2141 = vmatpush1.msra.mxu0 0.0
      %2142 = vmatprep.subr.mxu0 0.0
      %2143 = vmatpush1.msra.mxu0 0.0
      %2144 = vmatprep.subr.mxu0 0.0
      %2145 = vmatpush1.msra.mxu0 0.0
      %2146 = vmatprep.subr.mxu0 0.0
      %2147 = vmatpush1.msra.mxu0 0.0
      %2148 = vmatprep.subr.mxu0 0.0
      %2149 = vmatpush1.msra.mxu0 0.0
      %2150 = vmatprep.subr.mxu0 0.0
      %2151 = vmatpush1.msra.mxu0 0.0
      %2152 = vmatprep.subr.mxu0 0.0
      %2153 = vmatpush1.msra.mxu0 0.0
      %2154 = vmatprep.subr.mxu0 0.0
      %2155 = vmatpush1.msra.mxu0 0.0
      %2156 = vmatprep.subr.mxu0 0.0
      %2157 = vmatpush1.msra.mxu0 0.0
      %2158 = vmatprep.subr.mxu0 0.0
      %2159 = vmatpush1.msra.mxu0 0.0
      %2160 = vmatprep.subr.mxu0 0.0
      %2161 = vmatpush1.msra.mxu0 0.0
      %2162 = vmatprep.subr.mxu0 0.0
      %2163 = vmatpush1.msra.mxu0 0.0
      %2164 = vmatprep.subr.mxu0 0.0
      %2165 = vmatpush1.msra.mxu0 0.0
      %2166 = vmatprep.subr.mxu0 0.0
      %2167 = vmatpush1.msra.mxu0 0.0
      %2168 = vmatprep.subr.mxu0 0.0
      %2169 = vmatpush1.msra.mxu0 0.0
      %2170 = vmatprep.subr.mxu0 0.0
      %2171 = vmatpush1.msra.mxu0 0.0
      %2172 = vmatprep.subr.mxu0 0.0
      %2173 = vmatpush1.msra.mxu0 0.0
      %2174 = vmatprep.subr.mxu0 0.0
      %2175 = vmatpush1.msra.mxu0 0.0
      %2176 = vmatprep.subr.mxu0 0.0
      %2177 = vmatpush1.msra.mxu0 0.0
      %2178 = vmatprep.mubr.f32.mxu0 0.0
      %2179 = vmatmul.mubr.f32.gmra.mrb[0].mxu0 %v2112
      %v2180 = vpop.f32.mrb[0].mxu0
      %v2181 = vadd.f32 0.0, %v2180
      %v2182 = vpop.f32.mrb[0].mxu0
      %2183 = vdwg.mxu0
      %v2185 = vlaneseq
      %v2186 = vshrl.u32 %v2185, 7
      %v2187 = vsub.s32 0, %v2186
      %v2188 = vrot.slane %v2105, %v2187
      %v2190 = vadd.f32 %v2188, %v2181
      %v2191 = vld [vmem:[#allocation3] sm:$0x3]
      %v2192 = vld [vmem:[%s7] sm:$0xff]
      %v2193 = vld [vmem:[%s7 + $0x8] sm:$0xff]
      %v2194 = vld [vmem:[%s7 + $0x10] sm:$0xff]
      %v2195 = vld [vmem:[%s7 + $0x18] sm:$0xff]
      %v2197 = vsel %vm206, %v2191, 0
      %2199 = vmatprep.subr.mxu0 0.0
      %2200 = vmatpush1.msra.mxu0 %v2192
      %2201 = vmatprep.subr.mxu0 0.0
      %2202 = vmatpush1.msra.mxu0 %v2193
      %2203 = vmatprep.subr.mxu0 0.0
      %2204 = vmatpush1.msra.mxu0 %v2194
      %2205 = vmatprep.subr.mxu0 0.0
      %2206 = vmatpush1.msra.mxu0 %v2195
      %2207 = vmatprep.subr.mxu0 0.0
      %2208 = vmatpush1.msra.mxu0 0.0
      %2209 = vmatprep.subr.mxu0 0.0
      %2210 = vmatpush1.msra.mxu0 0.0
      %2211 = vmatprep.subr.mxu0 0.0
      %2212 = vmatpush1.msra.mxu0 0.0
      %2213 = vmatprep.subr.mxu0 0.0
      %2214 = vmatpush1.msra.mxu0 0.0
      %2215 = vmatprep.subr.mxu0 0.0
      %2216 = vmatpush1.msra.mxu0 0.0
      %2217 = vmatprep.subr.mxu0 0.0
      %2218 = vmatpush1.msra.mxu0 0.0
      %2219 = vmatprep.subr.mxu0 0.0
      %2220 = vmatpush1.msra.mxu0 0.0
      %2221 = vmatprep.subr.mxu0 0.0
      %2222 = vmatpush1.msra.mxu0 0.0
      %2223 = vmatprep.subr.mxu0 0.0
      %2224 = vmatpush1.msra.mxu0 0.0
      %2225 = vmatprep.subr.mxu0 0.0
      %2226 = vmatpush1.msra.mxu0 0.0
      %2227 = vmatprep.subr.mxu0 0.0
      %2228 = vmatpush1.msra.mxu0 0.0
      %2229 = vmatprep.subr.mxu0 0.0
      %2230 = vmatpush1.msra.mxu0 0.0
      %2231 = vmatprep.subr.mxu0 0.0
      %2232 = vmatpush1.msra.mxu0 0.0
      %2233 = vmatprep.subr.mxu0 0.0
      %2234 = vmatpush1.msra.mxu0 0.0
      %2235 = vmatprep.subr.mxu0 0.0
      %2236 = vmatpush1.msra.mxu0 0.0
      %2237 = vmatprep.subr.mxu0 0.0
      %2238 = vmatpush1.msra.mxu0 0.0
      %2239 = vmatprep.subr.mxu0 0.0
      %2240 = vmatpush1.msra.mxu0 0.0
      %2241 = vmatprep.subr.mxu0 0.0
      %2242 = vmatpush1.msra.mxu0 0.0
      %2243 = vmatprep.subr.mxu0 0.0
      %2244 = vmatpush1.msra.mxu0 0.0
      %2245 = vmatprep.subr.mxu0 0.0
      %2246 = vmatpush1.msra.mxu0 0.0
      %2247 = vmatprep.subr.mxu0 0.0
      %2248 = vmatpush1.msra.mxu0 0.0
      %2249 = vmatprep.subr.mxu0 0.0
      %2250 = vmatpush1.msra.mxu0 0.0
      %2251 = vmatprep.subr.mxu0 0.0
      %2252 = vmatpush1.msra.mxu0 0.0
      %2253 = vmatprep.subr.mxu0 0.0
      %2254 = vmatpush1.msra.mxu0 0.0
      %2255 = vmatprep.subr.mxu0 0.0
      %2256 = vmatpush1.msra.mxu0 0.0
      %2257 = vmatprep.subr.mxu0 0.0
      %2258 = vmatpush1.msra.mxu0 0.0
      %2259 = vmatprep.subr.mxu0 0.0
      %2260 = vmatpush1.msra.mxu0 0.0
      %2261 = vmatprep.subr.mxu0 0.0
      %2262 = vmatpush1.msra.mxu0 0.0
      %2263 = vmatprep.mubr.f32.mxu0 0.0
      %2264 = vmatmul.mubr.f32.gmra.mrb[0].mxu0 %v2197
      %v2265 = vpop.f32.mrb[0].mxu0
      %v2266 = vadd.f32 0.0, %v2265
      %v2267 = vpop.f32.mrb[0].mxu0
      %2268 = vdwg.mxu0
      %v2269 = vadd.f32 %v2190, %v2266
      %vm2270 = vcmask 33792
      %2271 = vst.msk [vmem:[#allocation12] sm:$0x3] %vm2270, %v2269
    $region127: #{rnn_forward.7} parent=1 // pred_fallthru
      _
    // Predicated region
    $region128: #{rnn_forward.7} parent=1 // pred_check
      _
    $region129: #{rnn_forward.7} parent=1 // pred_check_branch
      %2273 = sbr.rel (0) target = $region131
    $region130: #{rnn_forward.7} parent=1 // pred_region
      %s2275 = ssub.s32 256, 256
      %2276 = vsyncadd [#allocation9], %s2275
      %s2277 = sshll.u32 [#allocation8], 4
      %s2278 = int_to_ptr.vmem [resolvable:$true] %s2277
      %2283 = dma.vmem_to_hbm [thread:$0]  %s2278, 256, %s9, [#allocation9], 32, 32, 2
    $region131: #{rnn_forward.7} parent=1 // pred_fallthru
      _
    // Predicated region
    $region132: #{rnn_forward.7} parent=1 // pred_check
      _
    $region133: #{rnn_forward.7} parent=1 // pred_check_branch
      %2285 = sbr.rel (0) target = $region135
    $region134: #{rnn_forward.7} parent=1 // pred_region
      %s2286 = ssub.s32 0, 0
      %s2287 = smul.u32 8, %s2286
      %s2289 = ssub.s32 256, 256
      %2290 = vsyncadd [#allocation11], %s2289
      %s2291 = smul.addr %s2287, 32
      %s2292 = scalar_lea.hbm %s10, %s2291
      %s2293 = sshll.u32 [#allocation10], 4
      %s2294 = int_to_ptr.vmem [resolvable:$true] %s2293
      %2299 = dma.vmem_to_hbm [thread:$0]  %s2294, 256, %s2292, [#allocation11], 32, 32, 2
    $region135: #{rnn_forward.7} parent=1 // pred_fallthru
      _
    // Predicated region
    $region136: #{rnn_forward.7} parent=1 // pred_check
      _
    $region137: #{rnn_forward.7} parent=1 // pred_check_branch
      %2301 = sbr.rel (0) target = $region139
    $region138: #{rnn_forward.7} parent=1 // pred_region
      %s2303 = ssub.s32 32, 32
      %2304 = vsyncadd [#allocation11], %s2303
      %s2306 = sshll.u32 [#allocation12], 4
      %s2307 = int_to_ptr.vmem [resolvable:$true] %s2306
      %2309 = dma.vmem_to_hbm [thread:$0]  %s2307, 32, %s11, [#allocation11]
    $region139: #{rnn_forward.7} parent=1 // pred_fallthru
      _
    // Predicated region
    $region140: #{rnn_forward.7} parent=1 // pred_check
      _
    $region141: #{rnn_forward.7} parent=1 // pred_check_branch
      %2311 = sbr.rel (0) target = $region143
    $region142: #{rnn_forward.7} parent=1 // pred_region
      %2312 = dma.done [#allocation9], 256
    $region143: #{rnn_forward.7} parent=1 // pred_fallthru
      _
    // Predicated region
    $region144: #{rnn_forward.7} parent=1 // pred_check
      _
    $region145: #{rnn_forward.7} parent=1 // pred_check_branch
      %2314 = sbr.rel (0) target = $region147
    $region146: #{rnn_forward.7} parent=1 // pred_region
      %2315 = dma.done [#allocation11], 256
    $region147: #{rnn_forward.7} parent=1 // pred_fallthru
      _
    // Predicated region
    $region148: #{rnn_forward.7} parent=1 // pred_check
      _
    $region149: #{rnn_forward.7} parent=1 // pred_check_branch
      %2317 = sbr.rel (0) target = $region151
    $region150: #{rnn_forward.7} parent=1 // pred_region
      %2318 = dma.done [#allocation11], 32
    $region151: #{rnn_forward.7} parent=1 // pred_fallthru
      _
    %2319 = vsyncpa [#allocation9], 1
    %2320 = vsyncpa [#allocation11], 1

</llo_original>
